<compile_context>
chip_gen: v5e
topology: v5e:2x2
jax: 0.10.0
libtpu: 0.0.40
codegen_flags: <defaults>
</compile_context>

<pallas_src>
from functools import partial

import jax
import jax.numpy as jnp
from jax.experimental import pallas as pl
from jax.experimental.pallas import tpu as pltpu


def decoder_step_kernel(emb_ref, ctx_ref, h_ref,
                        w_ih_e_ref, w_ctx_ref, w_hh_ref,
                        b_ih_ref, b_hh_ref,
                        w_fc_h_ref, b_fc_ref,
                        out_ref, h_new_ref):
    """One GRU step + output projection.

    emb    : [B, E]  f32   embedded tokens (dropout = identity at inference)
    ctx    : [B, H]  f32   encoder context
    h      : [B, H]  f32   previous hidden state
    w_ih_e : [E, 3H] bf16  rows of GRU weight_ih feeding the embedding
    w_ctx  : [H, 3H + Vp]  bf16  [ w_ih ctx-rows | fc_out ctx-rows ] fused
    w_hh   : [H, 3H] bf16
    b_ih   : [1, 3H] f32,  b_hh : [1, 3H] f32
    w_fc_h : [H, Vp] bf16  fc_out rows multiplying the new hidden state
    b_fc   : [1, Vp] f32
    out    : [B, Vp] f32,  h_new : [B, H] f32
    """
    H = h_ref.shape[1]
    G = 3 * H  # first G columns of w_ctx are the GRU input-gate contribution

    emb = emb_ref[...].astype(jnp.bfloat16)
    ctx = ctx_ref[...].astype(jnp.bfloat16)
    h = h_ref[...]                                   # keep f32 for gate math

    # Single MXU pass for everything that multiplies `ctx`
    # (GRU input gates + fc_out context half).
    ctx_proj = jnp.dot(ctx, w_ctx_ref[...], preferred_element_type=jnp.float32)

    gi = (jnp.dot(emb, w_ih_e_ref[...], preferred_element_type=jnp.float32)
          + ctx_proj[:, :G] + b_ih_ref[...])
    gh = (jnp.dot(h.astype(jnp.bfloat16), w_hh_ref[...],
                  preferred_element_type=jnp.float32)
          + b_hh_ref[...])

    # PyTorch GRU gate order: reset, update, new.  Slices are lane-aligned
    # because H is a multiple of 128.
    r = jax.nn.sigmoid(gi[:, 0:H] + gh[:, 0:H])
    z = jax.nn.sigmoid(gi[:, H:2 * H] + gh[:, H:2 * H])
    n = jnp.tanh(gi[:, 2 * H:3 * H] + r * gh[:, 2 * H:3 * H])
    h_new = (1.0 - z) * n + z * h
    h_new_ref[...] = h_new

    # fc_out(cat(h_new, ctx)) == h_new @ Wfc[:H] + ctx @ Wfc[H:] + b
    out_ref[...] = (jnp.dot(h_new.astype(jnp.bfloat16), w_fc_h_ref[...],
                            preferred_element_type=jnp.float32)
                    + ctx_proj[:, G:] + b_fc_ref[...])


def pack_decoder_params(pt, *, num_words, embedding_dim, rnn_hidden_size):
    """Convert PyTorch-layout f32 params into the kernel layout (bf16, split,
    fused, lane-padded)."""
    E, H, V = embedding_dim, rnn_hidden_size, num_words
    assert H % 128 == 0 and E % 128 == 0, "gate slices must be lane-aligned"
    v_pad = ((V + 127) // 128) * 128

    w_ih = pt["weight_ih_l0"].T          # [E+H, 3H]
    w_hh = pt["weight_hh_l0"].T          # [H,   3H]
    w_fc = pt["fc_weight"].T             # [2H,  V]
    w_fc_p = jnp.zeros((2 * H, v_pad), jnp.float32).at[:, :V].set(w_fc)
    b_fc_p = jnp.zeros((1, v_pad), jnp.float32).at[:, :V].set(pt["fc_bias"][None, :])

    return {
        "embedding": pt["embedding"],                                  # [Vocab, E] f32
        "w_ih_e": w_ih[:E].astype(jnp.bfloat16),                       # [E, 3H]
        "w_ctx": jnp.concatenate([w_ih[E:], w_fc_p[H:]],
                                 axis=1).astype(jnp.bfloat16),         # [H, 3H+Vp]
        "w_hh": w_hh.astype(jnp.bfloat16),                             # [H, 3H]
        "b_ih": pt["bias_ih_l0"][None, :].astype(jnp.float32),         # [1, 3H]
        "b_hh": pt["bias_hh_l0"][None, :].astype(jnp.float32),         # [1, 3H]
        "w_fc_h": w_fc_p[:H].astype(jnp.bfloat16),                     # [H, Vp]
        "b_fc": b_fc_p,                                                # [1, Vp]
    }


@partial(jax.jit, static_argnames=("num_words",))
def decoder_forward(x_ids, hidden, context, kp, *, num_words):
    """x_ids: [B] int32, hidden: [1,B,H], context: [1,B,H] -> ([1,B,V], [1,B,H])."""
    emb = jnp.take(kp["embedding"], x_ids, axis=0)   # [B, E]
    # TODO(synk): nn.Dropout(p=0.5) skipped (eval/inference semantics -> identity).
    ctx = context[0]                                  # [B, H]
    h = hidden[0]                                     # [B, H]

    B = emb.shape[0]
    H = h.shape[1]
    v_pad = kp["w_fc_h"].shape[1]

    vmem = pl.BlockSpec(memory_space=pltpu.MemorySpace.VMEM)
    out_p, h_new = pl.pallas_call(
        decoder_step_kernel,
        out_shape=(jax.ShapeDtypeStruct((B, v_pad), jnp.float32),
                   jax.ShapeDtypeStruct((B, H), jnp.float32)),
        in_specs=[vmem] * 10,
        out_specs=(vmem, vmem),
        # hidden-state input (index 2) aliased to the new-hidden output (index 1)
        input_output_aliases={2: 1},
    )(emb, ctx, h,
      kp["w_ih_e"], kp["w_ctx"], kp["w_hh"],
      kp["b_ih"], kp["b_hh"], kp["w_fc_h"], kp["b_fc"])

    # Strip the vocab lane-padding and re-add the seq dim of 1 (PyTorch layout).
    return out_p[:, :num_words][None, :, :], h_new[None, :, :]


def decoder_reference(x_ids, hidden, context, pt):
    """Pure-JAX f32 reference of the PyTorch math for a sanity check."""
    emb = jnp.take(pt["embedding"], x_ids, axis=0)
    ctx = context[0]
    h = hidden[0]
    H = h.shape[1]
    x = jnp.concatenate([emb, ctx], axis=1)
    gi = x @ pt["weight_ih_l0"].T + pt["bias_ih_l0"]
    gh = h @ pt["weight_hh_l0"].T + pt["bias_hh_l0"]
    r = jax.nn.sigmoid(gi[:, :H] + gh[:, :H])
    z = jax.nn.sigmoid(gi[:, H:2 * H] + gh[:, H:2 * H])
    n = jnp.tanh(gi[:, 2 * H:] + r * gh[:, 2 * H:])
    h_new = (1.0 - z) * n + z * h
    out = jnp.concatenate([h_new, ctx], axis=1) @ pt["fc_weight"].T + pt["fc_bias"]
    return out[None], h_new[None]


if __name__ == "__main__":
    # Real module dims from the spec (they are already small).
    decoder_params = {'num_words': 1016, 'embedding_dim': 256,
                      'rnn_hidden_size': 512, 'dropout_ratio': 0.5}
    V = decoder_params['num_words']
    E = decoder_params['embedding_dim']
    H = decoder_params['rnn_hidden_size']
    B = 8

    key = jax.random.PRNGKey(0)
    ks = jax.random.split(key, 11)
    s = 0.02
    # PyTorch-layout f32 parameters.
    pt_params = {
        "embedding":    jax.random.normal(ks[0], (V, E), jnp.float32) * s,
        "weight_ih_l0": jax.random.normal(ks[1], (3 * H, E + H), jnp.float32) * s,
        "weight_hh_l0": jax.random.normal(ks[2], (3 * H, H), jnp.float32) * s,
        "bias_ih_l0":   jax.random.normal(ks[3], (3 * H,), jnp.float32) * s,
        "bias_hh_l0":   jax.random.normal(ks[4], (3 * H,), jnp.float32) * s,
        "fc_weight":    jax.random.normal(ks[5], (V, 2 * H), jnp.float32) * s,
        "fc_bias":      jax.random.normal(ks[6], (V,), jnp.float32) * s,
    }
    kparams = pack_decoder_params(pt_params, num_words=V,
                                  embedding_dim=E, rnn_hidden_size=H)

    x_ids = jax.random.randint(ks[7], (B,), 0, V, dtype=jnp.int32)
    hidden = jax.random.normal(ks[8], (1, B, H), jnp.float32)
    context = jax.random.normal(ks[9], (1, B, H), jnp.float32)

    out, out_hidden = decoder_forward(x_ids, hidden, context, kparams, num_words=V)
    out = jax.block_until_ready(out)
    out_hidden = jax.block_until_ready(out_hidden)

    ref_out, ref_hidden = decoder_reference(x_ids, hidden, context, pt_params)

    assert out.shape == (1, B, V), out.shape
    assert out_hidden.shape == (1, B, H), out_hidden.shape
    # Weights run through bf16 on the MXU -> tolerance looser than pure f32.
    assert jnp.allclose(out, ref_out, rtol=2e-2, atol=2e-2)
    assert jnp.allclose(out_hidden, ref_hidden, rtol=2e-2, atol=2e-2)

    print("KERNEL_OK")
</pallas_src>

<mosaic_0001>
module attributes {stable_mosaic.version = 11 : i64} {
  func.func @decoder_step_kernel(%arg0: memref<8x256xf32, #tpu.memory_space<vmem>>, %arg1: memref<8x512xf32, #tpu.memory_space<vmem>>, %arg2: memref<8x512xf32, #tpu.memory_space<vmem>>, %arg3: memref<256x1536xbf16, #tpu.memory_space<vmem>>, %arg4: memref<512x2560xbf16, #tpu.memory_space<vmem>>, %arg5: memref<512x1536xbf16, #tpu.memory_space<vmem>>, %arg6: memref<1x1536xf32, #tpu.memory_space<vmem>>, %arg7: memref<1x1536xf32, #tpu.memory_space<vmem>>, %arg8: memref<512x1024xbf16, #tpu.memory_space<vmem>>, %arg9: memref<1x1024xf32, #tpu.memory_space<vmem>>, %arg10: memref<8x1024xf32, #tpu.memory_space<vmem>>, %arg11: memref<8x512xf32, #tpu.memory_space<vmem>>) attributes {dimension_semantics = [], scalar_prefetch = 0 : i64, scratch_operands = 0 : i64, tpu.core_type = #tpu.core_type<tc>} {
    %c0 = arith.constant 0 : index
    %c0_0 = arith.constant 0 : index
    %0 = vector.load %arg0[%c0, %c0_0] : memref<8x256xf32, #tpu.memory_space<vmem>>, vector<8x256xf32>
    %1 = arith.truncf %0 : vector<8x256xf32> to vector<8x256xbf16>
    %c0_1 = arith.constant 0 : index
    %c0_2 = arith.constant 0 : index
    %2 = vector.load %arg1[%c0_1, %c0_2] : memref<8x512xf32, #tpu.memory_space<vmem>>, vector<8x512xf32>
    %3 = arith.truncf %2 : vector<8x512xf32> to vector<8x512xbf16>
    %c0_3 = arith.constant 0 : index
    %c0_4 = arith.constant 0 : index
    %4 = vector.load %arg2[%c0_3, %c0_4] : memref<8x512xf32, #tpu.memory_space<vmem>>, vector<8x512xf32>
    %c0_5 = arith.constant 0 : index
    %c0_6 = arith.constant 0 : index
    %5 = vector.load %arg4[%c0_5, %c0_6] : memref<512x2560xbf16, #tpu.memory_space<vmem>>, vector<512x2560xbf16>
    %cst = arith.constant dense<0.000000e+00> : vector<8x2560xf32>
    %6 = tpu.matmul %3, %5, %cst {dimension_numbers = #tpu.dot_dimension_numbers<[1], [0], [0], [1], [0, 0, 1, 1], [], []>} : vector<8x512xbf16>, vector<512x2560xbf16>, vector<8x2560xf32> -> vector<8x2560xf32>
    %c0_7 = arith.constant 0 : index
    %c0_8 = arith.constant 0 : index
    %7 = vector.load %arg3[%c0_7, %c0_8] : memref<256x1536xbf16, #tpu.memory_space<vmem>>, vector<256x1536xbf16>
    %cst_9 = arith.constant dense<0.000000e+00> : vector<8x1536xf32>
    %8 = tpu.matmul %1, %7, %cst_9 {dimension_numbers = #tpu.dot_dimension_numbers<[1], [0], [0], [1], [0, 0, 1, 1], [], []>} : vector<8x256xbf16>, vector<256x1536xbf16>, vector<8x1536xf32> -> vector<8x1536xf32>
    %9 = vector.extract_strided_slice %6 {offsets = [0, 0], sizes = [8, 1536], strides = [1, 1]} : vector<8x2560xf32> to vector<8x1536xf32>
    %10 = arith.addf %8, %9 : vector<8x1536xf32>
    %c0_10 = arith.constant 0 : index
    %c0_11 = arith.constant 0 : index
    %11 = vector.load %arg6[%c0_10, %c0_11] : memref<1x1536xf32, #tpu.memory_space<vmem>>, vector<1x1536xf32>
    %12 = vector.broadcast %11 : vector<1x1536xf32> to vector<8x1536xf32>
    %13 = arith.addf %10, %12 : vector<8x1536xf32>
    %14 = arith.truncf %4 : vector<8x512xf32> to vector<8x512xbf16>
    %c0_12 = arith.constant 0 : index
    %c0_13 = arith.constant 0 : index
    %15 = vector.load %arg5[%c0_12, %c0_13] : memref<512x1536xbf16, #tpu.memory_space<vmem>>, vector<512x1536xbf16>
    %cst_14 = arith.constant dense<0.000000e+00> : vector<8x1536xf32>
    %16 = tpu.matmul %14, %15, %cst_14 {dimension_numbers = #tpu.dot_dimension_numbers<[1], [0], [0], [1], [0, 0, 1, 1], [], []>} : vector<8x512xbf16>, vector<512x1536xbf16>, vector<8x1536xf32> -> vector<8x1536xf32>
    %c0_15 = arith.constant 0 : index
    %c0_16 = arith.constant 0 : index
    %17 = vector.load %arg7[%c0_15, %c0_16] : memref<1x1536xf32, #tpu.memory_space<vmem>>, vector<1x1536xf32>
    %18 = vector.broadcast %17 : vector<1x1536xf32> to vector<8x1536xf32>
    %19 = arith.addf %16, %18 : vector<8x1536xf32>
    %20 = vector.extract_strided_slice %13 {offsets = [0, 0], sizes = [8, 512], strides = [1, 1]} : vector<8x1536xf32> to vector<8x512xf32>
    %21 = vector.extract_strided_slice %19 {offsets = [0, 0], sizes = [8, 512], strides = [1, 1]} : vector<8x1536xf32> to vector<8x512xf32>
    %22 = arith.addf %20, %21 : vector<8x512xf32>
    %23 = arith.negf %22 : vector<8x512xf32>
    %24 = math.exp %23 : vector<8x512xf32>
    %cst_17 = arith.constant 1.000000e+00 : f32
    %25 = vector.broadcast %cst_17 : f32 to vector<8x512xf32>
    %26 = arith.addf %25, %24 : vector<8x512xf32>
    %27 = arith.divf %25, %26 : vector<8x512xf32>
    %28 = vector.extract_strided_slice %13 {offsets = [0, 512], sizes = [8, 512], strides = [1, 1]} : vector<8x1536xf32> to vector<8x512xf32>
    %29 = vector.extract_strided_slice %19 {offsets = [0, 512], sizes = [8, 512], strides = [1, 1]} : vector<8x1536xf32> to vector<8x512xf32>
    %30 = arith.addf %28, %29 : vector<8x512xf32>
    %31 = arith.negf %30 : vector<8x512xf32>
    %32 = math.exp %31 : vector<8x512xf32>
    %cst_18 = arith.constant 1.000000e+00 : f32
    %33 = vector.broadcast %cst_18 : f32 to vector<8x512xf32>
    %34 = arith.addf %33, %32 : vector<8x512xf32>
    %35 = arith.divf %33, %34 : vector<8x512xf32>
    %36 = vector.extract_strided_slice %13 {offsets = [0, 1024], sizes = [8, 512], strides = [1, 1]} : vector<8x1536xf32> to vector<8x512xf32>
    %37 = vector.extract_strided_slice %19 {offsets = [0, 1024], sizes = [8, 512], strides = [1, 1]} : vector<8x1536xf32> to vector<8x512xf32>
    %38 = arith.mulf %27, %37 : vector<8x512xf32>
    %39 = arith.addf %36, %38 : vector<8x512xf32>
    %40 = math.tanh %39 : vector<8x512xf32>
    %cst_19 = arith.constant 1.000000e+00 : f32
    %41 = vector.broadcast %cst_19 : f32 to vector<8x512xf32>
    %42 = arith.subf %41, %35 : vector<8x512xf32>
    %43 = arith.mulf %42, %40 : vector<8x512xf32>
    %44 = arith.mulf %35, %4 : vector<8x512xf32>
    %45 = arith.addf %43, %44 : vector<8x512xf32>
    %c0_20 = arith.constant 0 : index
    %c0_21 = arith.constant 0 : index
    %46 = vector.load %arg11[%c0_20, %c0_21] : memref<8x512xf32, #tpu.memory_space<vmem>>, vector<8x512xf32>
    tpu.vector_store %arg11[%c0_20, %c0_21], %45 {strides = array<i32>} : memref<8x512xf32, #tpu.memory_space<vmem>>, vector<8x512xf32>,
    %47 = arith.truncf %45 : vector<8x512xf32> to vector<8x512xbf16>
    %c0_22 = arith.constant 0 : index
    %c0_23 = arith.constant 0 : index
    %48 = vector.load %arg8[%c0_22, %c0_23] : memref<512x1024xbf16, #tpu.memory_space<vmem>>, vector<512x1024xbf16>
    %cst_24 = arith.constant dense<0.000000e+00> : vector<8x1024xf32>
    %49 = tpu.matmul %47, %48, %cst_24 {dimension_numbers = #tpu.dot_dimension_numbers<[1], [0], [0], [1], [0, 0, 1, 1], [], []>} : vector<8x512xbf16>, vector<512x1024xbf16>, vector<8x1024xf32> -> vector<8x1024xf32>
    %50 = vector.extract_strided_slice %6 {offsets = [0, 1536], sizes = [8, 1024], strides = [1, 1]} : vector<8x2560xf32> to vector<8x1024xf32>
    %51 = arith.addf %49, %50 : vector<8x1024xf32>
    %c0_25 = arith.constant 0 : index
    %c0_26 = arith.constant 0 : index
    %52 = vector.load %arg9[%c0_25, %c0_26] : memref<1x1024xf32, #tpu.memory_space<vmem>>, vector<1x1024xf32>
    %53 = vector.broadcast %52 : vector<1x1024xf32> to vector<8x1024xf32>
    %54 = arith.addf %51, %53 : vector<8x1024xf32>
    %c0_27 = arith.constant 0 : index
    %c0_28 = arith.constant 0 : index
    %55 = vector.load %arg10[%c0_27, %c0_28] : memref<8x1024xf32, #tpu.memory_space<vmem>>, vector<8x1024xf32>
    tpu.vector_store %arg10[%c0_27, %c0_28], %54 {strides = array<i32>} : memref<8x1024xf32, #tpu.memory_space<vmem>>, vector<8x1024xf32>,
    return
  }
}

</mosaic_0001>

<llo_original>
// kernel: decoder_forward.1
$region0: #{decoder_forward.1}
  #allocation0 [shape = 'u32[]', space=smem, size = 0x4, offset = 0x4, fixed_abs, tag = 'smem constant byte address 0x4 - core index']
  #allocation1 [shape = 'u32[72,128]{1,0:T(1,128)}', space=vmem, size = 0x9000, scoped, tag = 'internal scratch']
  %s0 = inlined_call_operand.vmem [shape: f32[8,256], index: 0, kind: input, shape index: {}]
  %s1 = inlined_call_operand.hbm [shape: f32[8,512], index: 1, kind: input, shape index: {}]
  %s2 = inlined_call_operand.vmem [shape: f32[8,512], index: 2, kind: input, shape index: {}, may-alias: {2,11}]
  %s3 = inlined_call_operand.hbm [shape: bf16[256,1536], index: 3, kind: input, shape index: {}]
  %s4 = inlined_call_operand.hbm [shape: bf16[512,2560], index: 4, kind: input, shape index: {}]
  %s5 = inlined_call_operand.hbm [shape: bf16[512,1536], index: 5, kind: input, shape index: {}]
  %s6 = inlined_call_operand.hbm [shape: f32[1,1536], index: 6, kind: input, shape index: {}]
  %s7 = inlined_call_operand.hbm [shape: f32[1,1536], index: 7, kind: input, shape index: {}]
  %s8 = inlined_call_operand.hbm [shape: bf16[512,1024], index: 8, kind: input, shape index: {}]
  %s9 = inlined_call_operand.hbm [shape: f32[1,1024], index: 9, kind: input, shape index: {}]
  %s10 = inlined_call_operand.vmem [shape: f32[8,1024], index: 10, kind: output, shape index: {0}]
  %s11 = inlined_call_operand.vmem [shape: f32[8,512], index: 11, kind: output, shape index: {1}, may-alias: {2,11}]
  %12 = xla_tuple %s10, %s11
  %s13 = sld [smem:[#allocation0]]
  $region90: #{decoder_forward.1} parent=0
    _
  %s15 = ssub.s32 1, %s13
  %s16 = scalar_select 0, %s15, %s13
  $region1: #{decoder_forward.1} parent=0
    #allocation2 [shape = 'u8[16384]{0}', space=vmem, size = 0x4000, scoped, tag = 'input window, operand 1, single buffered']
    #allocation3 [shape = 's32[1]{0}', space=sflag, size = 0x4, scoped, tag = 'scoped memory for decoder_forward.1']
    #allocation4 [shape = 'u8[786432]{0}', space=vmem, size = 0xc0000, scoped, tag = 'input window, operand 3, single buffered']
    #allocation5 [shape = 's32[1]{0}', space=sflag, size = 0x4, scoped, tag = 'scoped memory for decoder_forward.1']
    #allocation6 [shape = 'u8[2621440]{0}', space=vmem, size = 0x280000, scoped, tag = 'input window, operand 4, single buffered']
    #allocation7 [shape = 'u8[1572864]{0}', space=vmem, size = 0x180000, scoped, tag = 'input window, operand 5, single buffered']
    #allocation8 [shape = 's32[1]{0}', space=sflag, size = 0x4, scoped, tag = 'scoped memory for decoder_forward.1']
    #allocation9 [shape = 'u8[6144]{0}', space=vmem, size = 0x1800, scoped, tag = 'input window, operand 6, single buffered']
    #allocation10 [shape = 'u8[6144]{0}', space=vmem, size = 0x1800, scoped, tag = 'input window, operand 7, single buffered']
    #allocation11 [shape = 's32[1]{0}', space=sflag, size = 0x4, scoped, tag = 'scoped memory for decoder_forward.1']
    #allocation12 [shape = 'u8[1048576]{0}', space=vmem, size = 0x100000, scoped, tag = 'input window, operand 8, single buffered']
    #allocation13 [shape = 'u8[4096]{0}', space=vmem, size = 0x1000, scoped, tag = 'input window, operand 9, single buffered']
    #allocation14 [shape = 's32[1]{0}', space=sflag, size = 0x4, scoped, tag = 'scoped memory for decoder_forward.1']
    %17 = vsyncpa [#allocation3], 0
    %18 = vsyncpa [#allocation5], 0
    %19 = vsyncpa [#allocation8], 0
    %20 = vsyncpa [#allocation11], 0
    %21 = vsyncpa [#allocation14], 0
    // Predicated region
    $region2: #{decoder_forward.1} parent=1 // pred_check
      _
    $region3: #{decoder_forward.1} parent=1 // pred_check_branch
      %23 = sbr.rel (0) target = $region5
    $region4: #{decoder_forward.1} parent=1 // pred_region
      _
    $region5: #{decoder_forward.1} parent=1 // pred_fallthru
      _
    // Predicated region
    $region6: #{decoder_forward.1} parent=1 // pred_check
      _
    $region7: #{decoder_forward.1} parent=1 // pred_check_branch
      %25 = sbr.rel (0) target = $region9
    $region8: #{decoder_forward.1} parent=1 // pred_region
      %27 = vsyncadd [#allocation3], 0
      %s29 = sshll.u32 %s1, 4
      %s30 = int_to_ptr.hbm [resolvable:$true] %s29
      %s31 = sshll.u32 [#allocation2], 4
      %s32 = int_to_ptr.vmem [resolvable:$true] %s31
      %34 = dma.hbm_to_vmem [thread:$0]  %s30, 512, %s32, [#allocation3]
    $region9: #{decoder_forward.1} parent=1 // pred_fallthru
      _
    // Predicated region
    $region10: #{decoder_forward.1} parent=1 // pred_check
      _
    $region11: #{decoder_forward.1} parent=1 // pred_check_branch
      %36 = sbr.rel (0) target = $region13
    $region12: #{decoder_forward.1} parent=1 // pred_region
      _
    $region13: #{decoder_forward.1} parent=1 // pred_fallthru
      _
    // Predicated region
    $region14: #{decoder_forward.1} parent=1 // pred_check
      _
    $region15: #{decoder_forward.1} parent=1 // pred_check_branch
      %38 = sbr.rel (0) target = $region17
    $region16: #{decoder_forward.1} parent=1 // pred_region
      %40 = vsyncadd [#allocation5], 0
      %s41 = sshll.u32 %s3, 4
      %s42 = int_to_ptr.hbm [resolvable:$true] %s41
      %s43 = sshll.u32 [#allocation4], 4
      %s44 = int_to_ptr.vmem [resolvable:$true] %s43
      %49 = dma.hbm_to_vmem [thread:$0]  %s42, 24576, %s44, [#allocation5], 768, 768, 48
    $region17: #{decoder_forward.1} parent=1 // pred_fallthru
      _
    // Predicated region
    $region18: #{decoder_forward.1} parent=1 // pred_check
      _
    $region19: #{decoder_forward.1} parent=1 // pred_check_branch
      %51 = sbr.rel (0) target = $region21
    $region20: #{decoder_forward.1} parent=1 // pred_region
      %53 = vsyncadd [#allocation5], 0
      %s54 = sshll.u32 %s4, 4
      %s55 = int_to_ptr.hbm [resolvable:$true] %s54
      %s56 = sshll.u32 [#allocation6], 4
      %s57 = int_to_ptr.vmem [resolvable:$true] %s56
      %62 = dma.hbm_to_vmem [thread:$0]  %s55, 81920, %s57, [#allocation5], 1280, 1280, 80
    $region21: #{decoder_forward.1} parent=1 // pred_fallthru
      _
    // Predicated region
    $region22: #{decoder_forward.1} parent=1 // pred_check
      _
    $region23: #{decoder_forward.1} parent=1 // pred_check_branch
      %64 = sbr.rel (0) target = $region25
    $region24: #{decoder_forward.1} parent=1 // pred_region
      %66 = vsyncadd [#allocation8], 0
      %s67 = sshll.u32 %s5, 4
      %s68 = int_to_ptr.hbm [resolvable:$true] %s67
      %s69 = sshll.u32 [#allocation7], 4
      %s70 = int_to_ptr.vmem [resolvable:$true] %s69
      %75 = dma.hbm_to_vmem [thread:$0]  %s68, 49152, %s70, [#allocation8], 768, 768, 48
    $region25: #{decoder_forward.1} parent=1 // pred_fallthru
      _
    // Predicated region
    $region26: #{decoder_forward.1} parent=1 // pred_check
      _
    $region27: #{decoder_forward.1} parent=1 // pred_check_branch
      %77 = sbr.rel (0) target = $region29
    $region28: #{decoder_forward.1} parent=1 // pred_region
      %79 = vsyncadd [#allocation8], 0
      %s81 = sshll.u32 %s6, 4
      %s82 = int_to_ptr.hbm [resolvable:$true] %s81
      %s83 = sshll.u32 [#allocation9], 4
      %s84 = int_to_ptr.vmem [resolvable:$true] %s83
      %86 = dma.hbm_to_vmem [thread:$0]  %s82, 192, %s84, [#allocation8]
    $region29: #{decoder_forward.1} parent=1 // pred_fallthru
      _
    // Predicated region
    $region30: #{decoder_forward.1} parent=1 // pred_check
      _
    $region31: #{decoder_forward.1} parent=1 // pred_check_branch
      %88 = sbr.rel (0) target = $region33
    $region32: #{decoder_forward.1} parent=1 // pred_region
      %90 = vsyncadd [#allocation11], 0
      %s92 = sshll.u32 %s7, 4
      %s93 = int_to_ptr.hbm [resolvable:$true] %s92
      %s94 = sshll.u32 [#allocation10], 4
      %s95 = int_to_ptr.vmem [resolvable:$true] %s94
      %97 = dma.hbm_to_vmem [thread:$0]  %s93, 192, %s95, [#allocation11]
    $region33: #{decoder_forward.1} parent=1 // pred_fallthru
      _
    // Predicated region
    $region34: #{decoder_forward.1} parent=1 // pred_check
      _
    $region35: #{decoder_forward.1} parent=1 // pred_check_branch
      %99 = sbr.rel (0) target = $region37
    $region36: #{decoder_forward.1} parent=1 // pred_region
      %101 = vsyncadd [#allocation11], 0
      %s102 = sshll.u32 %s8, 4
      %s103 = int_to_ptr.hbm [resolvable:$true] %s102
      %s104 = sshll.u32 [#allocation12], 4
      %s105 = int_to_ptr.vmem [resolvable:$true] %s104
      %110 = dma.hbm_to_vmem [thread:$0]  %s103, 32768, %s105, [#allocation11], 512, 512, 32
    $region37: #{decoder_forward.1} parent=1 // pred_fallthru
      _
    // Predicated region
    $region38: #{decoder_forward.1} parent=1 // pred_check
      _
    $region39: #{decoder_forward.1} parent=1 // pred_check_branch
      %112 = sbr.rel (0) target = $region41
    $region40: #{decoder_forward.1} parent=1 // pred_region
      %114 = vsyncadd [#allocation14], 0
      %s116 = sshll.u32 %s9, 4
      %s117 = int_to_ptr.hbm [resolvable:$true] %s116
      %s118 = sshll.u32 [#allocation13], 4
      %s119 = int_to_ptr.vmem [resolvable:$true] %s118
      %121 = dma.hbm_to_vmem [thread:$0]  %s117, 128, %s119, [#allocation14]
    $region41: #{decoder_forward.1} parent=1 // pred_fallthru
      _
    // Predicated region
    $region42: #{decoder_forward.1} parent=1 // pred_check
      _
    $region43: #{decoder_forward.1} parent=1 // pred_check_branch
      %123 = sbr.rel (0) target = $region45
    $region44: #{decoder_forward.1} parent=1 // pred_region
      %125 = dma.done [#allocation3], 512
    $region45: #{decoder_forward.1} parent=1 // pred_fallthru
      _
    // Predicated region
    $region46: #{decoder_forward.1} parent=1 // pred_check
      _
    $region47: #{decoder_forward.1} parent=1 // pred_check_branch
      %127 = sbr.rel (0) target = $region49
    $region48: #{decoder_forward.1} parent=1 // pred_region
      %129 = dma.done [#allocation5], 24576
    $region49: #{decoder_forward.1} parent=1 // pred_fallthru
      _
    // Predicated region
    $region50: #{decoder_forward.1} parent=1 // pred_check
      _
    $region51: #{decoder_forward.1} parent=1 // pred_check_branch
      %131 = sbr.rel (0) target = $region53
    $region52: #{decoder_forward.1} parent=1 // pred_region
      %133 = dma.done [#allocation5], 81920
    $region53: #{decoder_forward.1} parent=1 // pred_fallthru
      _
    // Predicated region
    $region54: #{decoder_forward.1} parent=1 // pred_check
      _
    $region55: #{decoder_forward.1} parent=1 // pred_check_branch
      %135 = sbr.rel (0) target = $region57
    $region56: #{decoder_forward.1} parent=1 // pred_region
      %137 = dma.done [#allocation8], 49152
    $region57: #{decoder_forward.1} parent=1 // pred_fallthru
      _
    // Predicated region
    $region58: #{decoder_forward.1} parent=1 // pred_check
      _
    $region59: #{decoder_forward.1} parent=1 // pred_check_branch
      %139 = sbr.rel (0) target = $region61
    $region60: #{decoder_forward.1} parent=1 // pred_region
      %141 = dma.done [#allocation8], 192
    $region61: #{decoder_forward.1} parent=1 // pred_fallthru
      _
    // Predicated region
    $region62: #{decoder_forward.1} parent=1 // pred_check
      _
    $region63: #{decoder_forward.1} parent=1 // pred_check_branch
      %143 = sbr.rel (0) target = $region65
    $region64: #{decoder_forward.1} parent=1 // pred_region
      %145 = dma.done [#allocation11], 192
    $region65: #{decoder_forward.1} parent=1 // pred_fallthru
      _
    // Predicated region
    $region66: #{decoder_forward.1} parent=1 // pred_check
      _
    $region67: #{decoder_forward.1} parent=1 // pred_check_branch
      %147 = sbr.rel (0) target = $region69
    $region68: #{decoder_forward.1} parent=1 // pred_region
      %149 = dma.done [#allocation11], 32768
    $region69: #{decoder_forward.1} parent=1 // pred_fallthru
      _
    // Predicated region
    $region70: #{decoder_forward.1} parent=1 // pred_check
      _
    $region71: #{decoder_forward.1} parent=1 // pred_check_branch
      %151 = sbr.rel (0) target = $region73
    $region72: #{decoder_forward.1} parent=1 // pred_region
      %153 = dma.done [#allocation14], 128
    $region73: #{decoder_forward.1} parent=1 // pred_fallthru
      _
    %v154 = vld [vmem:[%s0] sm:$0xff]
    %v155 = vld [vmem:[%s0 + $0x8] sm:$0xff]
    %v156 = vpack.c.bf16 %v154, %v154
    %v157 = vpack.c.bf16 %v155, %v155
    %v158 = vld [vmem:[#allocation2] sm:$0xff]
    %v159 = vld [vmem:[#allocation2 + $0x8] sm:$0xff]
    %v160 = vld [vmem:[#allocation2 + $0x10] sm:$0xff]
    %v161 = vld [vmem:[#allocation2 + $0x18] sm:$0xff]
    %v162 = vpack.c.bf16 %v158, %v158
    %v163 = vpack.c.bf16 %v159, %v159
    %v164 = vpack.c.bf16 %v160, %v160
    %v165 = vpack.c.bf16 %v161, %v161
    %v166 = vld [vmem:[%s2] sm:$0xff]
    %v167 = vld [vmem:[%s2 + $0x8] sm:$0xff]
    %v168 = vld [vmem:[%s2 + $0x10] sm:$0xff]
    %v169 = vld [vmem:[%s2 + $0x18] sm:$0xff]
    %v170 = vld [vmem:[#allocation6] sm:$0xff]
    %v171 = vld [vmem:[#allocation6 + $0x8] sm:$0xff]
    %v172 = vld [vmem:[#allocation6 + $0x10] sm:$0xff]
    %v173 = vld [vmem:[#allocation6 + $0x18] sm:$0xff]
    %v174 = vld [vmem:[#allocation6 + $0x20] sm:$0xff]
    %v175 = vld [vmem:[#allocation6 + $0x28] sm:$0xff]
    %v176 = vld [vmem:[#allocation6 + $0x30] sm:$0xff]
    %v177 = vld [vmem:[#allocation6 + $0x38] sm:$0xff]
    %v178 = vld [vmem:[#allocation6 + $0x40] sm:$0xff]
    %v179 = vld [vmem:[#allocation6 + $0x48] sm:$0xff]
    %v180 = vld [vmem:[#allocation6 + $0x50] sm:$0xff]
    %v181 = vld [vmem:[#allocation6 + $0x58] sm:$0xff]
    %v182 = vld [vmem:[#allocation6 + $0x60] sm:$0xff]
    %v183 = vld [vmem:[#allocation6 + $0x68] sm:$0xff]
    %v184 = vld [vmem:[#allocation6 + $0x70] sm:$0xff]
    %v185 = vld [vmem:[#allocation6 + $0x78] sm:$0xff]
    %v186 = vld [vmem:[#allocation6 + $0x80] sm:$0xff]
    %v187 = vld [vmem:[#allocation6 + $0x88] sm:$0xff]
    %v188 = vld [vmem:[#allocation6 + $0x90] sm:$0xff]
    %v189 = vld [vmem:[#allocation6 + $0x98] sm:$0xff]
    %v190 = vld [vmem:[#allocation6 + $0xa0] sm:$0xff]
    %v191 = vld [vmem:[#allocation6 + $0xa8] sm:$0xff]
    %v192 = vld [vmem:[#allocation6 + $0xb0] sm:$0xff]
    %v193 = vld [vmem:[#allocation6 + $0xb8] sm:$0xff]
    %v194 = vld [vmem:[#allocation6 + $0xc0] sm:$0xff]
    %v195 = vld [vmem:[#allocation6 + $0xc8] sm:$0xff]
    %v196 = vld [vmem:[#allocation6 + $0xd0] sm:$0xff]
    %v197 = vld [vmem:[#allocation6 + $0xd8] sm:$0xff]
    %v198 = vld [vmem:[#allocation6 + $0xe0] sm:$0xff]
    %v199 = vld [vmem:[#allocation6 + $0xe8] sm:$0xff]
    %v200 = vld [vmem:[#allocation6 + $0xf0] sm:$0xff]
    %v201 = vld [vmem:[#allocation6 + $0xf8] sm:$0xff]
    %v202 = vld [vmem:[#allocation6 + $0x100] sm:$0xff]
    %v203 = vld [vmem:[#allocation6 + $0x108] sm:$0xff]
    %v204 = vld [vmem:[#allocation6 + $0x110] sm:$0xff]
    %v205 = vld [vmem:[#allocation6 + $0x118] sm:$0xff]
    %v206 = vld [vmem:[#allocation6 + $0x120] sm:$0xff]
    %v207 = vld [vmem:[#allocation6 + $0x128] sm:$0xff]
    %v208 = vld [vmem:[#allocation6 + $0x130] sm:$0xff]
    %v209 = vld [vmem:[#allocation6 + $0x138] sm:$0xff]
    %v210 = vld [vmem:[#allocation6 + $0x140] sm:$0xff]
    %v211 = vld [vmem:[#allocation6 + $0x148] sm:$0xff]
    %v212 = vld [vmem:[#allocation6 + $0x150] sm:$0xff]
    %v213 = vld [vmem:[#allocation6 + $0x158] sm:$0xff]
    %v214 = vld [vmem:[#allocation6 + $0x160] sm:$0xff]
    %v215 = vld [vmem:[#allocation6 + $0x168] sm:$0xff]
    %v216 = vld [vmem:[#allocation6 + $0x170] sm:$0xff]
    %v217 = vld [vmem:[#allocation6 + $0x178] sm:$0xff]
    %v218 = vld [vmem:[#allocation6 + $0x180] sm:$0xff]
    %v219 = vld [vmem:[#allocation6 + $0x188] sm:$0xff]
    %v220 = vld [vmem:[#allocation6 + $0x190] sm:$0xff]
    %v221 = vld [vmem:[#allocation6 + $0x198] sm:$0xff]
    %v222 = vld [vmem:[#allocation6 + $0x1a0] sm:$0xff]
    %v223 = vld [vmem:[#allocation6 + $0x1a8] sm:$0xff]
    %v224 = vld [vmem:[#allocation6 + $0x1b0] sm:$0xff]
    %v225 = vld [vmem:[#allocation6 + $0x1b8] sm:$0xff]
    %v226 = vld [vmem:[#allocation6 + $0x1c0] sm:$0xff]
    %v227 = vld [vmem:[#allocation6 + $0x1c8] sm:$0xff]
    %v228 = vld [vmem:[#allocation6 + $0x1d0] sm:$0xff]
    %v229 = vld [vmem:[#allocation6 + $0x1d8] sm:$0xff]
    %v230 = vld [vmem:[#allocation6 + $0x1e0] sm:$0xff]
    %v231 = vld [vmem:[#allocation6 + $0x1e8] sm:$0xff]
    %v232 = vld [vmem:[#allocation6 + $0x1f0] sm:$0xff]
    %v233 = vld [vmem:[#allocation6 + $0x1f8] sm:$0xff]
    %v234 = vld [vmem:[#allocation6 + $0x200] sm:$0xff]
    %v235 = vld [vmem:[#allocation6 + $0x208] sm:$0xff]
    %v236 = vld [vmem:[#allocation6 + $0x210] sm:$0xff]
    %v237 = vld [vmem:[#allocation6 + $0x218] sm:$0xff]
    %v238 = vld [vmem:[#allocation6 + $0x220] sm:$0xff]
    %v239 = vld [vmem:[#allocation6 + $0x228] sm:$0xff]
    %v240 = vld [vmem:[#allocation6 + $0x230] sm:$0xff]
    %v241 = vld [vmem:[#allocation6 + $0x238] sm:$0xff]
    %v242 = vld [vmem:[#allocation6 + $0x240] sm:$0xff]
    %v243 = vld [vmem:[#allocation6 + $0x248] sm:$0xff]
    %v244 = vld [vmem:[#allocation6 + $0x250] sm:$0xff]
    %v245 = vld [vmem:[#allocation6 + $0x258] sm:$0xff]
    %v246 = vld [vmem:[#allocation6 + $0x260] sm:$0xff]
    %v247 = vld [vmem:[#allocation6 + $0x268] sm:$0xff]
    %v248 = vld [vmem:[#allocation6 + $0x270] sm:$0xff]
    %v249 = vld [vmem:[#allocation6 + $0x278] sm:$0xff]
    %v250 = vld [vmem:[#allocation6 + $0x280] sm:$0xff]
    %v251 = vld [vmem:[#allocation6 + $0x288] sm:$0xff]
    %v252 = vld [vmem:[#allocation6 + $0x290] sm:$0xff]
    %v253 = vld [vmem:[#allocation6 + $0x298] sm:$0xff]
    %v254 = vld [vmem:[#allocation6 + $0x2a0] sm:$0xff]
    %v255 = vld [vmem:[#allocation6 + $0x2a8] sm:$0xff]
    %v256 = vld [vmem:[#allocation6 + $0x2b0] sm:$0xff]
    %v257 = vld [vmem:[#allocation6 + $0x2b8] sm:$0xff]
    %v258 = vld [vmem:[#allocation6 + $0x2c0] sm:$0xff]
    %v259 = vld [vmem:[#allocation6 + $0x2c8] sm:$0xff]
    %v260 = vld [vmem:[#allocation6 + $0x2d0] sm:$0xff]
    %v261 = vld [vmem:[#allocation6 + $0x2d8] sm:$0xff]
    %v262 = vld [vmem:[#allocation6 + $0x2e0] sm:$0xff]
    %v263 = vld [vmem:[#allocation6 + $0x2e8] sm:$0xff]
    %v264 = vld [vmem:[#allocation6 + $0x2f0] sm:$0xff]
    %v265 = vld [vmem:[#allocation6 + $0x2f8] sm:$0xff]
    %v266 = vld [vmem:[#allocation6 + $0x300] sm:$0xff]
    %v267 = vld [vmem:[#allocation6 + $0x308] sm:$0xff]
    %v268 = vld [vmem:[#allocation6 + $0x310] sm:$0xff]
    %v269 = vld [vmem:[#allocation6 + $0x318] sm:$0xff]
    %v270 = vld [vmem:[#allocation6 + $0x320] sm:$0xff]
    %v271 = vld [vmem:[#allocation6 + $0x328] sm:$0xff]
    %v272 = vld [vmem:[#allocation6 + $0x330] sm:$0xff]
    %v273 = vld [vmem:[#allocation6 + $0x338] sm:$0xff]
    %v274 = vld [vmem:[#allocation6 + $0x340] sm:$0xff]
    %v275 = vld [vmem:[#allocation6 + $0x348] sm:$0xff]
    %v276 = vld [vmem:[#allocation6 + $0x350] sm:$0xff]
    %v277 = vld [vmem:[#allocation6 + $0x358] sm:$0xff]
    %v278 = vld [vmem:[#allocation6 + $0x360] sm:$0xff]
    %v279 = vld [vmem:[#allocation6 + $0x368] sm:$0xff]
    %v280 = vld [vmem:[#allocation6 + $0x370] sm:$0xff]
    %v281 = vld [vmem:[#allocation6 + $0x378] sm:$0xff]
    %v282 = vld [vmem:[#allocation6 + $0x380] sm:$0xff]
    %v283 = vld [vmem:[#allocation6 + $0x388] sm:$0xff]
    %v284 = vld [vmem:[#allocation6 + $0x390] sm:$0xff]
    %v285 = vld [vmem:[#allocation6 + $0x398] sm:$0xff]
    %v286 = vld [vmem:[#allocation6 + $0x3a0] sm:$0xff]
    %v287 = vld [vmem:[#allocation6 + $0x3a8] sm:$0xff]
    %v288 = vld [vmem:[#allocation6 + $0x3b0] sm:$0xff]
    %v289 = vld [vmem:[#allocation6 + $0x3b8] sm:$0xff]
    %v290 = vld [vmem:[#allocation6 + $0x3c0] sm:$0xff]
    %v291 = vld [vmem:[#allocation6 + $0x3c8] sm:$0xff]
    %v292 = vld [vmem:[#allocation6 + $0x3d0] sm:$0xff]
    %v293 = vld [vmem:[#allocation6 + $0x3d8] sm:$0xff]
    %v294 = vld [vmem:[#allocation6 + $0x3e0] sm:$0xff]
    %v295 = vld [vmem:[#allocation6 + $0x3e8] sm:$0xff]
    %v296 = vld [vmem:[#allocation6 + $0x3f0] sm:$0xff]
    %v297 = vld [vmem:[#allocation6 + $0x3f8] sm:$0xff]
    %v298 = vld [vmem:[#allocation6 + $0x400] sm:$0xff]
    %v299 = vld [vmem:[#allocation6 + $0x408] sm:$0xff]
    %v300 = vld [vmem:[#allocation6 + $0x410] sm:$0xff]
    %v301 = vld [vmem:[#allocation6 + $0x418] sm:$0xff]
    %v302 = vld [vmem:[#allocation6 + $0x420] sm:$0xff]
    %v303 = vld [vmem:[#allocation6 + $0x428] sm:$0xff]
    %v304 = vld [vmem:[#allocation6 + $0x430] sm:$0xff]
    %v305 = vld [vmem:[#allocation6 + $0x438] sm:$0xff]
    %v306 = vld [vmem:[#allocation6 + $0x440] sm:$0xff]
    %v307 = vld [vmem:[#allocation6 + $0x448] sm:$0xff]
    %v308 = vld [vmem:[#allocation6 + $0x450] sm:$0xff]
    %v309 = vld [vmem:[#allocation6 + $0x458] sm:$0xff]
    %v310 = vld [vmem:[#allocation6 + $0x460] sm:$0xff]
    %v311 = vld [vmem:[#allocation6 + $0x468] sm:$0xff]
    %v312 = vld [vmem:[#allocation6 + $0x470] sm:$0xff]
    %v313 = vld [vmem:[#allocation6 + $0x478] sm:$0xff]
    %v314 = vld [vmem:[#allocation6 + $0x480] sm:$0xff]
    %v315 = vld [vmem:[#allocation6 + $0x488] sm:$0xff]
    %v316 = vld [vmem:[#allocation6 + $0x490] sm:$0xff]
    %v317 = vld [vmem:[#allocation6 + $0x498] sm:$0xff]
    %v318 = vld [vmem:[#allocation6 + $0x4a0] sm:$0xff]
    %v319 = vld [vmem:[#allocation6 + $0x4a8] sm:$0xff]
    %v320 = vld [vmem:[#allocation6 + $0x4b0] sm:$0xff]
    %v321 = vld [vmem:[#allocation6 + $0x4b8] sm:$0xff]
    %v322 = vld [vmem:[#allocation6 + $0x4c0] sm:$0xff]
    %v323 = vld [vmem:[#allocation6 + $0x4c8] sm:$0xff]
    %v324 = vld [vmem:[#allocation6 + $0x4d0] sm:$0xff]
    %v325 = vld [vmem:[#allocation6 + $0x4d8] sm:$0xff]
    %v326 = vld [vmem:[#allocation6 + $0x4e0] sm:$0xff]
    %v327 = vld [vmem:[#allocation6 + $0x4e8] sm:$0xff]
    %v328 = vld [vmem:[#allocation6 + $0x4f0] sm:$0xff]
    %v329 = vld [vmem:[#allocation6 + $0x4f8] sm:$0xff]
    %v330 = vld [vmem:[#allocation6 + $0x500] sm:$0xff]
    %v331 = vld [vmem:[#allocation6 + $0x508] sm:$0xff]
    %v332 = vld [vmem:[#allocation6 + $0x510] sm:$0xff]
    %v333 = vld [vmem:[#allocation6 + $0x518] sm:$0xff]
    %v334 = vld [vmem:[#allocation6 + $0x520] sm:$0xff]
    %v335 = vld [vmem:[#allocation6 + $0x528] sm:$0xff]
    %v336 = vld [vmem:[#allocation6 + $0x530] sm:$0xff]
    %v337 = vld [vmem:[#allocation6 + $0x538] sm:$0xff]
    %v338 = vld [vmem:[#allocation6 + $0x540] sm:$0xff]
    %v339 = vld [vmem:[#allocation6 + $0x548] sm:$0xff]
    %v340 = vld [vmem:[#allocation6 + $0x550] sm:$0xff]
    %v341 = vld [vmem:[#allocation6 + $0x558] sm:$0xff]
    %v342 = vld [vmem:[#allocation6 + $0x560] sm:$0xff]
    %v343 = vld [vmem:[#allocation6 + $0x568] sm:$0xff]
    %v344 = vld [vmem:[#allocation6 + $0x570] sm:$0xff]
    %v345 = vld [vmem:[#allocation6 + $0x578] sm:$0xff]
    %v346 = vld [vmem:[#allocation6 + $0x580] sm:$0xff]
    %v347 = vld [vmem:[#allocation6 + $0x588] sm:$0xff]
    %v348 = vld [vmem:[#allocation6 + $0x590] sm:$0xff]
    %v349 = vld [vmem:[#allocation6 + $0x598] sm:$0xff]
    %v350 = vld [vmem:[#allocation6 + $0x5a0] sm:$0xff]
    %v351 = vld [vmem:[#allocation6 + $0x5a8] sm:$0xff]
    %v352 = vld [vmem:[#allocation6 + $0x5b0] sm:$0xff]
    %v353 = vld [vmem:[#allocation6 + $0x5b8] sm:$0xff]
    %v354 = vld [vmem:[#allocation6 + $0x5c0] sm:$0xff]
    %v355 = vld [vmem:[#allocation6 + $0x5c8] sm:$0xff]
    %v356 = vld [vmem:[#allocation6 + $0x5d0] sm:$0xff]
    %v357 = vld [vmem:[#allocation6 + $0x5d8] sm:$0xff]
    %v358 = vld [vmem:[#allocation6 + $0x5e0] sm:$0xff]
    %v359 = vld [vmem:[#allocation6 + $0x5e8] sm:$0xff]
    %v360 = vld [vmem:[#allocation6 + $0x5f0] sm:$0xff]
    %v361 = vld [vmem:[#allocation6 + $0x5f8] sm:$0xff]
    %v362 = vld [vmem:[#allocation6 + $0x600] sm:$0xff]
    %v363 = vld [vmem:[#allocation6 + $0x608] sm:$0xff]
    %v364 = vld [vmem:[#allocation6 + $0x610] sm:$0xff]
    %v365 = vld [vmem:[#allocation6 + $0x618] sm:$0xff]
    %v366 = vld [vmem:[#allocation6 + $0x620] sm:$0xff]
    %v367 = vld [vmem:[#allocation6 + $0x628] sm:$0xff]
    %v368 = vld [vmem:[#allocation6 + $0x630] sm:$0xff]
    %v369 = vld [vmem:[#allocation6 + $0x638] sm:$0xff]
    %v370 = vld [vmem:[#allocation6 + $0x640] sm:$0xff]
    %v371 = vld [vmem:[#allocation6 + $0x648] sm:$0xff]
    %v372 = vld [vmem:[#allocation6 + $0x650] sm:$0xff]
    %v373 = vld [vmem:[#allocation6 + $0x658] sm:$0xff]
    %v374 = vld [vmem:[#allocation6 + $0x660] sm:$0xff]
    %v375 = vld [vmem:[#allocation6 + $0x668] sm:$0xff]
    %v376 = vld [vmem:[#allocation6 + $0x670] sm:$0xff]
    %v377 = vld [vmem:[#allocation6 + $0x678] sm:$0xff]
    %v378 = vld [vmem:[#allocation6 + $0x680] sm:$0xff]
    %v379 = vld [vmem:[#allocation6 + $0x688] sm:$0xff]
    %v380 = vld [vmem:[#allocation6 + $0x690] sm:$0xff]
    %v381 = vld [vmem:[#allocation6 + $0x698] sm:$0xff]
    %v382 = vld [vmem:[#allocation6 + $0x6a0] sm:$0xff]
    %v383 = vld [vmem:[#allocation6 + $0x6a8] sm:$0xff]
    %v384 = vld [vmem:[#allocation6 + $0x6b0] sm:$0xff]
    %v385 = vld [vmem:[#allocation6 + $0x6b8] sm:$0xff]
    %v386 = vld [vmem:[#allocation6 + $0x6c0] sm:$0xff]
    %v387 = vld [vmem:[#allocation6 + $0x6c8] sm:$0xff]
    %v388 = vld [vmem:[#allocation6 + $0x6d0] sm:$0xff]
    %v389 = vld [vmem:[#allocation6 + $0x6d8] sm:$0xff]
    %v390 = vld [vmem:[#allocation6 + $0x6e0] sm:$0xff]
    %v391 = vld [vmem:[#allocation6 + $0x6e8] sm:$0xff]
    %v392 = vld [vmem:[#allocation6 + $0x6f0] sm:$0xff]
    %v393 = vld [vmem:[#allocation6 + $0x6f8] sm:$0xff]
    %v394 = vld [vmem:[#allocation6 + $0x700] sm:$0xff]
    %v395 = vld [vmem:[#allocation6 + $0x708] sm:$0xff]
    %v396 = vld [vmem:[#allocation6 + $0x710] sm:$0xff]
    %v397 = vld [vmem:[#allocation6 + $0x718] sm:$0xff]
    %v398 = vld [vmem:[#allocation6 + $0x720] sm:$0xff]
    %v399 = vld [vmem:[#allocation6 + $0x728] sm:$0xff]
    %v400 = vld [vmem:[#allocation6 + $0x730] sm:$0xff]
    %v401 = vld [vmem:[#allocation6 + $0x738] sm:$0xff]
    %v402 = vld [vmem:[#allocation6 + $0x740] sm:$0xff]
    %v403 = vld [vmem:[#allocation6 + $0x748] sm:$0xff]
    %v404 = vld [vmem:[#allocation6 + $0x750] sm:$0xff]
    %v405 = vld [vmem:[#allocation6 + $0x758] sm:$0xff]
    %v406 = vld [vmem:[#allocation6 + $0x760] sm:$0xff]
    %v407 = vld [vmem:[#allocation6 + $0x768] sm:$0xff]
    %v408 = vld [vmem:[#allocation6 + $0x770] sm:$0xff]
    %v409 = vld [vmem:[#allocation6 + $0x778] sm:$0xff]
    %v410 = vld [vmem:[#allocation6 + $0x780] sm:$0xff]
    %v411 = vld [vmem:[#allocation6 + $0x788] sm:$0xff]
    %v412 = vld [vmem:[#allocation6 + $0x790] sm:$0xff]
    %v413 = vld [vmem:[#allocation6 + $0x798] sm:$0xff]
    %v414 = vld [vmem:[#allocation6 + $0x7a0] sm:$0xff]
    %v415 = vld [vmem:[#allocation6 + $0x7a8] sm:$0xff]
    %v416 = vld [vmem:[#allocation6 + $0x7b0] sm:$0xff]
    %v417 = vld [vmem:[#allocation6 + $0x7b8] sm:$0xff]
    %v418 = vld [vmem:[#allocation6 + $0x7c0] sm:$0xff]
    %v419 = vld [vmem:[#allocation6 + $0x7c8] sm:$0xff]
    %v420 = vld [vmem:[#allocation6 + $0x7d0] sm:$0xff]
    %v421 = vld [vmem:[#allocation6 + $0x7d8] sm:$0xff]
    %v422 = vld [vmem:[#allocation6 + $0x7e0] sm:$0xff]
    %v423 = vld [vmem:[#allocation6 + $0x7e8] sm:$0xff]
    %v424 = vld [vmem:[#allocation6 + $0x7f0] sm:$0xff]
    %v425 = vld [vmem:[#allocation6 + $0x7f8] sm:$0xff]
    %v426 = vld [vmem:[#allocation6 + $0x800] sm:$0xff]
    %v427 = vld [vmem:[#allocation6 + $0x808] sm:$0xff]
    %v428 = vld [vmem:[#allocation6 + $0x810] sm:$0xff]
    %v429 = vld [vmem:[#allocation6 + $0x818] sm:$0xff]
    %v430 = vld [vmem:[#allocation6 + $0x820] sm:$0xff]
    %v431 = vld [vmem:[#allocation6 + $0x828] sm:$0xff]
    %v432 = vld [vmem:[#allocation6 + $0x830] sm:$0xff]
    %v433 = vld [vmem:[#allocation6 + $0x838] sm:$0xff]
    %v434 = vld [vmem:[#allocation6 + $0x840] sm:$0xff]
    %v435 = vld [vmem:[#allocation6 + $0x848] sm:$0xff]
    %v436 = vld [vmem:[#allocation6 + $0x850] sm:$0xff]
    %v437 = vld [vmem:[#allocation6 + $0x858] sm:$0xff]
    %v438 = vld [vmem:[#allocation6 + $0x860] sm:$0xff]
    %v439 = vld [vmem:[#allocation6 + $0x868] sm:$0xff]
    %v440 = vld [vmem:[#allocation6 + $0x870] sm:$0xff]
    %v441 = vld [vmem:[#allocation6 + $0x878] sm:$0xff]
    %v442 = vld [vmem:[#allocation6 + $0x880] sm:$0xff]
    %v443 = vld [vmem:[#allocation6 + $0x888] sm:$0xff]
    %v444 = vld [vmem:[#allocation6 + $0x890] sm:$0xff]
    %v445 = vld [vmem:[#allocation6 + $0x898] sm:$0xff]
    %v446 = vld [vmem:[#allocation6 + $0x8a0] sm:$0xff]
    %v447 = vld [vmem:[#allocation6 + $0x8a8] sm:$0xff]
    %v448 = vld [vmem:[#allocation6 + $0x8b0] sm:$0xff]
    %v449 = vld [vmem:[#allocation6 + $0x8b8] sm:$0xff]
    %v450 = vld [vmem:[#allocation6 + $0x8c0] sm:$0xff]
    %v451 = vld [vmem:[#allocation6 + $0x8c8] sm:$0xff]
    %v452 = vld [vmem:[#allocation6 + $0x8d0] sm:$0xff]
    %v453 = vld [vmem:[#allocation6 + $0x8d8] sm:$0xff]
    %v454 = vld [vmem:[#allocation6 + $0x8e0] sm:$0xff]
    %v455 = vld [vmem:[#allocation6 + $0x8e8] sm:$0xff]
    %v456 = vld [vmem:[#allocation6 + $0x8f0] sm:$0xff]
    %v457 = vld [vmem:[#allocation6 + $0x8f8] sm:$0xff]
    %v458 = vld [vmem:[#allocation6 + $0x900] sm:$0xff]
    %v459 = vld [vmem:[#allocation6 + $0x908] sm:$0xff]
    %v460 = vld [vmem:[#allocation6 + $0x910] sm:$0xff]
    %v461 = vld [vmem:[#allocation6 + $0x918] sm:$0xff]
    %v462 = vld [vmem:[#allocation6 + $0x920] sm:$0xff]
    %v463 = vld [vmem:[#allocation6 + $0x928] sm:$0xff]
    %v464 = vld [vmem:[#allocation6 + $0x930] sm:$0xff]
    %v465 = vld [vmem:[#allocation6 + $0x938] sm:$0xff]
    %v466 = vld [vmem:[#allocation6 + $0x940] sm:$0xff]
    %v467 = vld [vmem:[#allocation6 + $0x948] sm:$0xff]
    %v468 = vld [vmem:[#allocation6 + $0x950] sm:$0xff]
    %v469 = vld [vmem:[#allocation6 + $0x958] sm:$0xff]
    %v470 = vld [vmem:[#allocation6 + $0x960] sm:$0xff]
    %v471 = vld [vmem:[#allocation6 + $0x968] sm:$0xff]
    %v472 = vld [vmem:[#allocation6 + $0x970] sm:$0xff]
    %v473 = vld [vmem:[#allocation6 + $0x978] sm:$0xff]
    %v474 = vld [vmem:[#allocation6 + $0x980] sm:$0xff]
    %v475 = vld [vmem:[#allocation6 + $0x988] sm:$0xff]
    %v476 = vld [vmem:[#allocation6 + $0x990] sm:$0xff]
    %v477 = vld [vmem:[#allocation6 + $0x998] sm:$0xff]
    %v478 = vld [vmem:[#allocation6 + $0x9a0] sm:$0xff]
    %v479 = vld [vmem:[#allocation6 + $0x9a8] sm:$0xff]
    %v480 = vld [vmem:[#allocation6 + $0x9b0] sm:$0xff]
    %v481 = vld [vmem:[#allocation6 + $0x9b8] sm:$0xff]
    %v482 = vld [vmem:[#allocation6 + $0x9c0] sm:$0xff]
    %v483 = vld [vmem:[#allocation6 + $0x9c8] sm:$0xff]
    %v484 = vld [vmem:[#allocation6 + $0x9d0] sm:$0xff]
    %v485 = vld [vmem:[#allocation6 + $0x9d8] sm:$0xff]
    %v486 = vld [vmem:[#allocation6 + $0x9e0] sm:$0xff]
    %v487 = vld [vmem:[#allocation6 + $0x9e8] sm:$0xff]
    %v488 = vld [vmem:[#allocation6 + $0x9f0] sm:$0xff]
    %v489 = vld [vmem:[#allocation6 + $0x9f8] sm:$0xff]
    %v490 = vld [vmem:[#allocation6 + $0xa00] sm:$0xff]
    %v491 = vld [vmem:[#allocation6 + $0xa08] sm:$0xff]
    %v492 = vld [vmem:[#allocation6 + $0xa10] sm:$0xff]
    %v493 = vld [vmem:[#allocation6 + $0xa18] sm:$0xff]
    %v494 = vld [vmem:[#allocation6 + $0xa20] sm:$0xff]
    %v495 = vld [vmem:[#allocation6 + $0xa28] sm:$0xff]
    %v496 = vld [vmem:[#allocation6 + $0xa30] sm:$0xff]
    %v497 = vld [vmem:[#allocation6 + $0xa38] sm:$0xff]
    %v498 = vld [vmem:[#allocation6 + $0xa40] sm:$0xff]
    %v499 = vld [vmem:[#allocation6 + $0xa48] sm:$0xff]
    %v500 = vld [vmem:[#allocation6 + $0xa50] sm:$0xff]
    %v501 = vld [vmem:[#allocation6 + $0xa58] sm:$0xff]
    %v502 = vld [vmem:[#allocation6 + $0xa60] sm:$0xff]
    %v503 = vld [vmem:[#allocation6 + $0xa68] sm:$0xff]
    %v504 = vld [vmem:[#allocation6 + $0xa70] sm:$0xff]
    %v505 = vld [vmem:[#allocation6 + $0xa78] sm:$0xff]
    %v506 = vld [vmem:[#allocation6 + $0xa80] sm:$0xff]
    %v507 = vld [vmem:[#allocation6 + $0xa88] sm:$0xff]
    %v508 = vld [vmem:[#allocation6 + $0xa90] sm:$0xff]
    %v509 = vld [vmem:[#allocation6 + $0xa98] sm:$0xff]
    %v510 = vld [vmem:[#allocation6 + $0xaa0] sm:$0xff]
    %v511 = vld [vmem:[#allocation6 + $0xaa8] sm:$0xff]
    %v512 = vld [vmem:[#allocation6 + $0xab0] sm:$0xff]
    %v513 = vld [vmem:[#allocation6 + $0xab8] sm:$0xff]
    %v514 = vld [vmem:[#allocation6 + $0xac0] sm:$0xff]
    %v515 = vld [vmem:[#allocation6 + $0xac8] sm:$0xff]
    %v516 = vld [vmem:[#allocation6 + $0xad0] sm:$0xff]
    %v517 = vld [vmem:[#allocation6 + $0xad8] sm:$0xff]
    %v518 = vld [vmem:[#allocation6 + $0xae0] sm:$0xff]
    %v519 = vld [vmem:[#allocation6 + $0xae8] sm:$0xff]
    %v520 = vld [vmem:[#allocation6 + $0xaf0] sm:$0xff]
    %v521 = vld [vmem:[#allocation6 + $0xaf8] sm:$0xff]
    %v522 = vld [vmem:[#allocation6 + $0xb00] sm:$0xff]
    %v523 = vld [vmem:[#allocation6 + $0xb08] sm:$0xff]
    %v524 = vld [vmem:[#allocation6 + $0xb10] sm:$0xff]
    %v525 = vld [vmem:[#allocation6 + $0xb18] sm:$0xff]
    %v526 = vld [vmem:[#allocation6 + $0xb20] sm:$0xff]
    %v527 = vld [vmem:[#allocation6 + $0xb28] sm:$0xff]
    %v528 = vld [vmem:[#allocation6 + $0xb30] sm:$0xff]
    %v529 = vld [vmem:[#allocation6 + $0xb38] sm:$0xff]
    %v530 = vld [vmem:[#allocation6 + $0xb40] sm:$0xff]
    %v531 = vld [vmem:[#allocation6 + $0xb48] sm:$0xff]
    %v532 = vld [vmem:[#allocation6 + $0xb50] sm:$0xff]
    %v533 = vld [vmem:[#allocation6 + $0xb58] sm:$0xff]
    %v534 = vld [vmem:[#allocation6 + $0xb60] sm:$0xff]
    %v535 = vld [vmem:[#allocation6 + $0xb68] sm:$0xff]
    %v536 = vld [vmem:[#allocation6 + $0xb70] sm:$0xff]
    %v537 = vld [vmem:[#allocation6 + $0xb78] sm:$0xff]
    %v538 = vld [vmem:[#allocation6 + $0xb80] sm:$0xff]
    %v539 = vld [vmem:[#allocation6 + $0xb88] sm:$0xff]
    %v540 = vld [vmem:[#allocation6 + $0xb90] sm:$0xff]
    %v541 = vld [vmem:[#allocation6 + $0xb98] sm:$0xff]
    %v542 = vld [vmem:[#allocation6 + $0xba0] sm:$0xff]
    %v543 = vld [vmem:[#allocation6 + $0xba8] sm:$0xff]
    %v544 = vld [vmem:[#allocation6 + $0xbb0] sm:$0xff]
    %v545 = vld [vmem:[#allocation6 + $0xbb8] sm:$0xff]
    %v546 = vld [vmem:[#allocation6 + $0xbc0] sm:$0xff]
    %v547 = vld [vmem:[#allocation6 + $0xbc8] sm:$0xff]
    %v548 = vld [vmem:[#allocation6 + $0xbd0] sm:$0xff]
    %v549 = vld [vmem:[#allocation6 + $0xbd8] sm:$0xff]
    %v550 = vld [vmem:[#allocation6 + $0xbe0] sm:$0xff]
    %v551 = vld [vmem:[#allocation6 + $0xbe8] sm:$0xff]
    %v552 = vld [vmem:[#allocation6 + $0xbf0] sm:$0xff]
    %v553 = vld [vmem:[#allocation6 + $0xbf8] sm:$0xff]
    %v554 = vld [vmem:[#allocation6 + $0xc00] sm:$0xff]
    %v555 = vld [vmem:[#allocation6 + $0xc08] sm:$0xff]
    %v556 = vld [vmem:[#allocation6 + $0xc10] sm:$0xff]
    %v557 = vld [vmem:[#allocation6 + $0xc18] sm:$0xff]
    %v558 = vld [vmem:[#allocation6 + $0xc20] sm:$0xff]
    %v559 = vld [vmem:[#allocation6 + $0xc28] sm:$0xff]
    %v560 = vld [vmem:[#allocation6 + $0xc30] sm:$0xff]
    %v561 = vld [vmem:[#allocation6 + $0xc38] sm:$0xff]
    %v562 = vld [vmem:[#allocation6 + $0xc40] sm:$0xff]
    %v563 = vld [vmem:[#allocation6 + $0xc48] sm:$0xff]
    %v564 = vld [vmem:[#allocation6 + $0xc50] sm:$0xff]
    %v565 = vld [vmem:[#allocation6 + $0xc58] sm:$0xff]
    %v566 = vld [vmem:[#allocation6 + $0xc60] sm:$0xff]
    %v567 = vld [vmem:[#allocation6 + $0xc68] sm:$0xff]
    %v568 = vld [vmem:[#allocation6 + $0xc70] sm:$0xff]
    %v569 = vld [vmem:[#allocation6 + $0xc78] sm:$0xff]
    %v570 = vld [vmem:[#allocation6 + $0xc80] sm:$0xff]
    %v571 = vld [vmem:[#allocation6 + $0xc88] sm:$0xff]
    %v572 = vld [vmem:[#allocation6 + $0xc90] sm:$0xff]
    %v573 = vld [vmem:[#allocation6 + $0xc98] sm:$0xff]
    %v574 = vld [vmem:[#allocation6 + $0xca0] sm:$0xff]
    %v575 = vld [vmem:[#allocation6 + $0xca8] sm:$0xff]
    %v576 = vld [vmem:[#allocation6 + $0xcb0] sm:$0xff]
    %v577 = vld [vmem:[#allocation6 + $0xcb8] sm:$0xff]
    %v578 = vld [vmem:[#allocation6 + $0xcc0] sm:$0xff]
    %v579 = vld [vmem:[#allocation6 + $0xcc8] sm:$0xff]
    %v580 = vld [vmem:[#allocation6 + $0xcd0] sm:$0xff]
    %v581 = vld [vmem:[#allocation6 + $0xcd8] sm:$0xff]
    %v582 = vld [vmem:[#allocation6 + $0xce0] sm:$0xff]
    %v583 = vld [vmem:[#allocation6 + $0xce8] sm:$0xff]
    %v584 = vld [vmem:[#allocation6 + $0xcf0] sm:$0xff]
    %v585 = vld [vmem:[#allocation6 + $0xcf8] sm:$0xff]
    %v586 = vld [vmem:[#allocation6 + $0xd00] sm:$0xff]
    %v587 = vld [vmem:[#allocation6 + $0xd08] sm:$0xff]
    %v588 = vld [vmem:[#allocation6 + $0xd10] sm:$0xff]
    %v589 = vld [vmem:[#allocation6 + $0xd18] sm:$0xff]
    %v590 = vld [vmem:[#allocation6 + $0xd20] sm:$0xff]
    %v591 = vld [vmem:[#allocation6 + $0xd28] sm:$0xff]
    %v592 = vld [vmem:[#allocation6 + $0xd30] sm:$0xff]
    %v593 = vld [vmem:[#allocation6 + $0xd38] sm:$0xff]
    %v594 = vld [vmem:[#allocation6 + $0xd40] sm:$0xff]
    %v595 = vld [vmem:[#allocation6 + $0xd48] sm:$0xff]
    %v596 = vld [vmem:[#allocation6 + $0xd50] sm:$0xff]
    %v597 = vld [vmem:[#allocation6 + $0xd58] sm:$0xff]
    %v598 = vld [vmem:[#allocation6 + $0xd60] sm:$0xff]
    %v599 = vld [vmem:[#allocation6 + $0xd68] sm:$0xff]
    %v600 = vld [vmem:[#allocation6 + $0xd70] sm:$0xff]
    %v601 = vld [vmem:[#allocation6 + $0xd78] sm:$0xff]
    %v602 = vld [vmem:[#allocation6 + $0xd80] sm:$0xff]
    %v603 = vld [vmem:[#allocation6 + $0xd88] sm:$0xff]
    %v604 = vld [vmem:[#allocation6 + $0xd90] sm:$0xff]
    %v605 = vld [vmem:[#allocation6 + $0xd98] sm:$0xff]
    %v606 = vld [vmem:[#allocation6 + $0xda0] sm:$0xff]
    %v607 = vld [vmem:[#allocation6 + $0xda8] sm:$0xff]
    %v608 = vld [vmem:[#allocation6 + $0xdb0] sm:$0xff]
    %v609 = vld [vmem:[#allocation6 + $0xdb8] sm:$0xff]
    %v610 = vld [vmem:[#allocation6 + $0xdc0] sm:$0xff]
    %v611 = vld [vmem:[#allocation6 + $0xdc8] sm:$0xff]
    %v612 = vld [vmem:[#allocation6 + $0xdd0] sm:$0xff]
    %v613 = vld [vmem:[#allocation6 + $0xdd8] sm:$0xff]
    %v614 = vld [vmem:[#allocation6 + $0xde0] sm:$0xff]
    %v615 = vld [vmem:[#allocation6 + $0xde8] sm:$0xff]
    %v616 = vld [vmem:[#allocation6 + $0xdf0] sm:$0xff]
    %v617 = vld [vmem:[#allocation6 + $0xdf8] sm:$0xff]
    %v618 = vld [vmem:[#allocation6 + $0xe00] sm:$0xff]
    %v619 = vld [vmem:[#allocation6 + $0xe08] sm:$0xff]
    %v620 = vld [vmem:[#allocation6 + $0xe10] sm:$0xff]
    %v621 = vld [vmem:[#allocation6 + $0xe18] sm:$0xff]
    %v622 = vld [vmem:[#allocation6 + $0xe20] sm:$0xff]
    %v623 = vld [vmem:[#allocation6 + $0xe28] sm:$0xff]
    %v624 = vld [vmem:[#allocation6 + $0xe30] sm:$0xff]
    %v625 = vld [vmem:[#allocation6 + $0xe38] sm:$0xff]
    %v626 = vld [vmem:[#allocation6 + $0xe40] sm:$0xff]
    %v627 = vld [vmem:[#allocation6 + $0xe48] sm:$0xff]
    %v628 = vld [vmem:[#allocation6 + $0xe50] sm:$0xff]
    %v629 = vld [vmem:[#allocation6 + $0xe58] sm:$0xff]
    %v630 = vld [vmem:[#allocation6 + $0xe60] sm:$0xff]
    %v631 = vld [vmem:[#allocation6 + $0xe68] sm:$0xff]
    %v632 = vld [vmem:[#allocation6 + $0xe70] sm:$0xff]
    %v633 = vld [vmem:[#allocation6 + $0xe78] sm:$0xff]
    %v634 = vld [vmem:[#allocation6 + $0xe80] sm:$0xff]
    %v635 = vld [vmem:[#allocation6 + $0xe88] sm:$0xff]
    %v636 = vld [vmem:[#allocation6 + $0xe90] sm:$0xff]
    %v637 = vld [vmem:[#allocation6 + $0xe98] sm:$0xff]
    %v638 = vld [vmem:[#allocation6 + $0xea0] sm:$0xff]
    %v639 = vld [vmem:[#allocation6 + $0xea8] sm:$0xff]
    %v640 = vld [vmem:[#allocation6 + $0xeb0] sm:$0xff]
    %v641 = vld [vmem:[#allocation6 + $0xeb8] sm:$0xff]
    %v642 = vld [vmem:[#allocation6 + $0xec0] sm:$0xff]
    %v643 = vld [vmem:[#allocation6 + $0xec8] sm:$0xff]
    %v644 = vld [vmem:[#allocation6 + $0xed0] sm:$0xff]
    %v645 = vld [vmem:[#allocation6 + $0xed8] sm:$0xff]
    %v646 = vld [vmem:[#allocation6 + $0xee0] sm:$0xff]
    %v647 = vld [vmem:[#allocation6 + $0xee8] sm:$0xff]
    %v648 = vld [vmem:[#allocation6 + $0xef0] sm:$0xff]
    %v649 = vld [vmem:[#allocation6 + $0xef8] sm:$0xff]
    %v650 = vld [vmem:[#allocation6 + $0xf00] sm:$0xff]
    %v651 = vld [vmem:[#allocation6 + $0xf08] sm:$0xff]
    %v652 = vld [vmem:[#allocation6 + $0xf10] sm:$0xff]
    %v653 = vld [vmem:[#allocation6 + $0xf18] sm:$0xff]
    %v654 = vld [vmem:[#allocation6 + $0xf20] sm:$0xff]
    %v655 = vld [vmem:[#allocation6 + $0xf28] sm:$0xff]
    %v656 = vld [vmem:[#allocation6 + $0xf30] sm:$0xff]
    %v657 = vld [vmem:[#allocation6 + $0xf38] sm:$0xff]
    %v658 = vld [vmem:[#allocation6 + $0xf40] sm:$0xff]
    %v659 = vld [vmem:[#allocation6 + $0xf48] sm:$0xff]
    %v660 = vld [vmem:[#allocation6 + $0xf50] sm:$0xff]
    %v661 = vld [vmem:[#allocation6 + $0xf58] sm:$0xff]
    %v662 = vld [vmem:[#allocation6 + $0xf60] sm:$0xff]
    %v663 = vld [vmem:[#allocation6 + $0xf68] sm:$0xff]
    %v664 = vld [vmem:[#allocation6 + $0xf70] sm:$0xff]
    %v665 = vld [vmem:[#allocation6 + $0xf78] sm:$0xff]
    %v666 = vld [vmem:[#allocation6 + $0xf80] sm:$0xff]
    %v667 = vld [vmem:[#allocation6 + $0xf88] sm:$0xff]
    %v668 = vld [vmem:[#allocation6 + $0xf90] sm:$0xff]
    %v669 = vld [vmem:[#allocation6 + $0xf98] sm:$0xff]
    %v670 = vld [vmem:[#allocation6 + $0xfa0] sm:$0xff]
    %v671 = vld [vmem:[#allocation6 + $0xfa8] sm:$0xff]
    %v672 = vld [vmem:[#allocation6 + $0xfb0] sm:$0xff]
    %v673 = vld [vmem:[#allocation6 + $0xfb8] sm:$0xff]
    %v674 = vld [vmem:[#allocation6 + $0xfc0] sm:$0xff]
    %v675 = vld [vmem:[#allocation6 + $0xfc8] sm:$0xff]
    %v676 = vld [vmem:[#allocation6 + $0xfd0] sm:$0xff]
    %v677 = vld [vmem:[#allocation6 + $0xfd8] sm:$0xff]
    %v678 = vld [vmem:[#allocation6 + $0xfe0] sm:$0xff]
    %v679 = vld [vmem:[#allocation6 + $0xfe8] sm:$0xff]
    %v680 = vld [vmem:[#allocation6 + $0xff0] sm:$0xff]
    %v681 = vld [vmem:[#allocation6 + $0xff8] sm:$0xff]
    %v682 = vld [vmem:[#allocation6 + $0x1000] sm:$0xff]
    %v683 = vld [vmem:[#allocation6 + $0x1008] sm:$0xff]
    %v684 = vld [vmem:[#allocation6 + $0x1010] sm:$0xff]
    %v685 = vld [vmem:[#allocation6 + $0x1018] sm:$0xff]
    %v686 = vld [vmem:[#allocation6 + $0x1020] sm:$0xff]
    %v687 = vld [vmem:[#allocation6 + $0x1028] sm:$0xff]
    %v688 = vld [vmem:[#allocation6 + $0x1030] sm:$0xff]
    %v689 = vld [vmem:[#allocation6 + $0x1038] sm:$0xff]
    %v690 = vld [vmem:[#allocation6 + $0x1040] sm:$0xff]
    %v691 = vld [vmem:[#allocation6 + $0x1048] sm:$0xff]
    %v692 = vld [vmem:[#allocation6 + $0x1050] sm:$0xff]
    %v693 = vld [vmem:[#allocation6 + $0x1058] sm:$0xff]
    %v694 = vld [vmem:[#allocation6 + $0x1060] sm:$0xff]
    %v695 = vld [vmem:[#allocation6 + $0x1068] sm:$0xff]
    %v696 = vld [vmem:[#allocation6 + $0x1070] sm:$0xff]
    %v697 = vld [vmem:[#allocation6 + $0x1078] sm:$0xff]
    %v698 = vld [vmem:[#allocation6 + $0x1080] sm:$0xff]
    %v699 = vld [vmem:[#allocation6 + $0x1088] sm:$0xff]
    %v700 = vld [vmem:[#allocation6 + $0x1090] sm:$0xff]
    %v701 = vld [vmem:[#allocation6 + $0x1098] sm:$0xff]
    %v702 = vld [vmem:[#allocation6 + $0x10a0] sm:$0xff]
    %v703 = vld [vmem:[#allocation6 + $0x10a8] sm:$0xff]
    %v704 = vld [vmem:[#allocation6 + $0x10b0] sm:$0xff]
    %v705 = vld [vmem:[#allocation6 + $0x10b8] sm:$0xff]
    %v706 = vld [vmem:[#allocation6 + $0x10c0] sm:$0xff]
    %v707 = vld [vmem:[#allocation6 + $0x10c8] sm:$0xff]
    %v708 = vld [vmem:[#allocation6 + $0x10d0] sm:$0xff]
    %v709 = vld [vmem:[#allocation6 + $0x10d8] sm:$0xff]
    %v710 = vld [vmem:[#allocation6 + $0x10e0] sm:$0xff]
    %v711 = vld [vmem:[#allocation6 + $0x10e8] sm:$0xff]
    %v712 = vld [vmem:[#allocation6 + $0x10f0] sm:$0xff]
    %v713 = vld [vmem:[#allocation6 + $0x10f8] sm:$0xff]
    %v714 = vld [vmem:[#allocation6 + $0x1100] sm:$0xff]
    %v715 = vld [vmem:[#allocation6 + $0x1108] sm:$0xff]
    %v716 = vld [vmem:[#allocation6 + $0x1110] sm:$0xff]
    %v717 = vld [vmem:[#allocation6 + $0x1118] sm:$0xff]
    %v718 = vld [vmem:[#allocation6 + $0x1120] sm:$0xff]
    %v719 = vld [vmem:[#allocation6 + $0x1128] sm:$0xff]
    %v720 = vld [vmem:[#allocation6 + $0x1130] sm:$0xff]
    %v721 = vld [vmem:[#allocation6 + $0x1138] sm:$0xff]
    %v722 = vld [vmem:[#allocation6 + $0x1140] sm:$0xff]
    %v723 = vld [vmem:[#allocation6 + $0x1148] sm:$0xff]
    %v724 = vld [vmem:[#allocation6 + $0x1150] sm:$0xff]
    %v725 = vld [vmem:[#allocation6 + $0x1158] sm:$0xff]
    %v726 = vld [vmem:[#allocation6 + $0x1160] sm:$0xff]
    %v727 = vld [vmem:[#allocation6 + $0x1168] sm:$0xff]
    %v728 = vld [vmem:[#allocation6 + $0x1170] sm:$0xff]
    %v729 = vld [vmem:[#allocation6 + $0x1178] sm:$0xff]
    %v730 = vld [vmem:[#allocation6 + $0x1180] sm:$0xff]
    %v731 = vld [vmem:[#allocation6 + $0x1188] sm:$0xff]
    %v732 = vld [vmem:[#allocation6 + $0x1190] sm:$0xff]
    %v733 = vld [vmem:[#allocation6 + $0x1198] sm:$0xff]
    %v734 = vld [vmem:[#allocation6 + $0x11a0] sm:$0xff]
    %v735 = vld [vmem:[#allocation6 + $0x11a8] sm:$0xff]
    %v736 = vld [vmem:[#allocation6 + $0x11b0] sm:$0xff]
    %v737 = vld [vmem:[#allocation6 + $0x11b8] sm:$0xff]
    %v738 = vld [vmem:[#allocation6 + $0x11c0] sm:$0xff]
    %v739 = vld [vmem:[#allocation6 + $0x11c8] sm:$0xff]
    %v740 = vld [vmem:[#allocation6 + $0x11d0] sm:$0xff]
    %v741 = vld [vmem:[#allocation6 + $0x11d8] sm:$0xff]
    %v742 = vld [vmem:[#allocation6 + $0x11e0] sm:$0xff]
    %v743 = vld [vmem:[#allocation6 + $0x11e8] sm:$0xff]
    %v744 = vld [vmem:[#allocation6 + $0x11f0] sm:$0xff]
    %v745 = vld [vmem:[#allocation6 + $0x11f8] sm:$0xff]
    %v746 = vld [vmem:[#allocation6 + $0x1200] sm:$0xff]
    %v747 = vld [vmem:[#allocation6 + $0x1208] sm:$0xff]
    %v748 = vld [vmem:[#allocation6 + $0x1210] sm:$0xff]
    %v749 = vld [vmem:[#allocation6 + $0x1218] sm:$0xff]
    %v750 = vld [vmem:[#allocation6 + $0x1220] sm:$0xff]
    %v751 = vld [vmem:[#allocation6 + $0x1228] sm:$0xff]
    %v752 = vld [vmem:[#allocation6 + $0x1230] sm:$0xff]
    %v753 = vld [vmem:[#allocation6 + $0x1238] sm:$0xff]
    %v754 = vld [vmem:[#allocation6 + $0x1240] sm:$0xff]
    %v755 = vld [vmem:[#allocation6 + $0x1248] sm:$0xff]
    %v756 = vld [vmem:[#allocation6 + $0x1250] sm:$0xff]
    %v757 = vld [vmem:[#allocation6 + $0x1258] sm:$0xff]
    %v758 = vld [vmem:[#allocation6 + $0x1260] sm:$0xff]
    %v759 = vld [vmem:[#allocation6 + $0x1268] sm:$0xff]
    %v760 = vld [vmem:[#allocation6 + $0x1270] sm:$0xff]
    %v761 = vld [vmem:[#allocation6 + $0x1278] sm:$0xff]
    %v762 = vld [vmem:[#allocation6 + $0x1280] sm:$0xff]
    %v763 = vld [vmem:[#allocation6 + $0x1288] sm:$0xff]
    %v764 = vld [vmem:[#allocation6 + $0x1290] sm:$0xff]
    %v765 = vld [vmem:[#allocation6 + $0x1298] sm:$0xff]
    %v766 = vld [vmem:[#allocation6 + $0x12a0] sm:$0xff]
    %v767 = vld [vmem:[#allocation6 + $0x12a8] sm:$0xff]
    %v768 = vld [vmem:[#allocation6 + $0x12b0] sm:$0xff]
    %v769 = vld [vmem:[#allocation6 + $0x12b8] sm:$0xff]
    %v770 = vld [vmem:[#allocation6 + $0x12c0] sm:$0xff]
    %v771 = vld [vmem:[#allocation6 + $0x12c8] sm:$0xff]
    %v772 = vld [vmem:[#allocation6 + $0x12d0] sm:$0xff]
    %v773 = vld [vmem:[#allocation6 + $0x12d8] sm:$0xff]
    %v774 = vld [vmem:[#allocation6 + $0x12e0] sm:$0xff]
    %v775 = vld [vmem:[#allocation6 + $0x12e8] sm:$0xff]
    %v776 = vld [vmem:[#allocation6 + $0x12f0] sm:$0xff]
    %v777 = vld [vmem:[#allocation6 + $0x12f8] sm:$0xff]
    %v778 = vld [vmem:[#allocation6 + $0x1300] sm:$0xff]
    %v779 = vld [vmem:[#allocation6 + $0x1308] sm:$0xff]
    %v780 = vld [vmem:[#allocation6 + $0x1310] sm:$0xff]
    %v781 = vld [vmem:[#allocation6 + $0x1318] sm:$0xff]
    %v782 = vld [vmem:[#allocation6 + $0x1320] sm:$0xff]
    %v783 = vld [vmem:[#allocation6 + $0x1328] sm:$0xff]
    %v784 = vld [vmem:[#allocation6 + $0x1330] sm:$0xff]
    %v785 = vld [vmem:[#allocation6 + $0x1338] sm:$0xff]
    %v786 = vld [vmem:[#allocation6 + $0x1340] sm:$0xff]
    %v787 = vld [vmem:[#allocation6 + $0x1348] sm:$0xff]
    %v788 = vld [vmem:[#allocation6 + $0x1350] sm:$0xff]
    %v789 = vld [vmem:[#allocation6 + $0x1358] sm:$0xff]
    %v790 = vld [vmem:[#allocation6 + $0x1360] sm:$0xff]
    %v791 = vld [vmem:[#allocation6 + $0x1368] sm:$0xff]
    %v792 = vld [vmem:[#allocation6 + $0x1370] sm:$0xff]
    %v793 = vld [vmem:[#allocation6 + $0x1378] sm:$0xff]
    %v794 = vld [vmem:[#allocation6 + $0x1380] sm:$0xff]
    %v795 = vld [vmem:[#allocation6 + $0x1388] sm:$0xff]
    %v796 = vld [vmem:[#allocation6 + $0x1390] sm:$0xff]
    %v797 = vld [vmem:[#allocation6 + $0x1398] sm:$0xff]
    %v798 = vld [vmem:[#allocation6 + $0x13a0] sm:$0xff]
    %v799 = vld [vmem:[#allocation6 + $0x13a8] sm:$0xff]
    %v800 = vld [vmem:[#allocation6 + $0x13b0] sm:$0xff]
    %v801 = vld [vmem:[#allocation6 + $0x13b8] sm:$0xff]
    %v802 = vld [vmem:[#allocation6 + $0x13c0] sm:$0xff]
    %v803 = vld [vmem:[#allocation6 + $0x13c8] sm:$0xff]
    %v804 = vld [vmem:[#allocation6 + $0x13d0] sm:$0xff]
    %v805 = vld [vmem:[#allocation6 + $0x13d8] sm:$0xff]
    %v806 = vld [vmem:[#allocation6 + $0x13e0] sm:$0xff]
    %v807 = vld [vmem:[#allocation6 + $0x13e8] sm:$0xff]
    %v808 = vld [vmem:[#allocation6 + $0x13f0] sm:$0xff]
    %v809 = vld [vmem:[#allocation6 + $0x13f8] sm:$0xff]
    %v1450 = vunpack.c.l.b16 %v170
    %v1451 = vunpack.c.h.b16 %v170
    %v1452 = vunpack.c.l.b16 %v171
    %v1453 = vunpack.c.h.b16 %v171
    %v1454 = vunpack.c.l.b16 %v172
    %v1455 = vunpack.c.h.b16 %v172
    %v1456 = vunpack.c.l.b16 %v173
    %v1457 = vunpack.c.h.b16 %v173
    %v1458 = vunpack.c.l.b16 %v174
    %v1459 = vunpack.c.h.b16 %v174
    %v1460 = vunpack.c.l.b16 %v175
    %v1461 = vunpack.c.h.b16 %v175
    %v1462 = vunpack.c.l.b16 %v176
    %v1463 = vunpack.c.h.b16 %v176
    %v1464 = vunpack.c.l.b16 %v177
    %v1465 = vunpack.c.h.b16 %v177
    %v1466 = vunpack.c.l.b16 %v178
    %v1467 = vunpack.c.h.b16 %v178
    %v1468 = vunpack.c.l.b16 %v179
    %v1469 = vunpack.c.h.b16 %v179
    %v1470 = vunpack.c.l.b16 %v180
    %v1471 = vunpack.c.h.b16 %v180
    %v1472 = vunpack.c.l.b16 %v181
    %v1473 = vunpack.c.h.b16 %v181
    %v1474 = vunpack.c.l.b16 %v182
    %v1475 = vunpack.c.h.b16 %v182
    %v1476 = vunpack.c.l.b16 %v183
    %v1477 = vunpack.c.h.b16 %v183
    %v1478 = vunpack.c.l.b16 %v184
    %v1479 = vunpack.c.h.b16 %v184
    %v1480 = vunpack.c.l.b16 %v185
    %v1481 = vunpack.c.h.b16 %v185
    %v1482 = vunpack.c.l.b16 %v186
    %v1483 = vunpack.c.h.b16 %v186
    %v1484 = vunpack.c.l.b16 %v187
    %v1485 = vunpack.c.h.b16 %v187
    %v1486 = vunpack.c.l.b16 %v188
    %v1487 = vunpack.c.h.b16 %v188
    %v1488 = vunpack.c.l.b16 %v189
    %v1489 = vunpack.c.h.b16 %v189
    %v1490 = vunpack.c.l.b16 %v190
    %v1491 = vunpack.c.h.b16 %v190
    %v1492 = vunpack.c.l.b16 %v191
    %v1493 = vunpack.c.h.b16 %v191
    %v1494 = vunpack.c.l.b16 %v192
    %v1495 = vunpack.c.h.b16 %v192
    %v1496 = vunpack.c.l.b16 %v193
    %v1497 = vunpack.c.h.b16 %v193
    %v1498 = vunpack.c.l.b16 %v194
    %v1499 = vunpack.c.h.b16 %v194
    %v1500 = vunpack.c.l.b16 %v195
    %v1501 = vunpack.c.h.b16 %v195
    %v1502 = vunpack.c.l.b16 %v196
    %v1503 = vunpack.c.h.b16 %v196
    %v1504 = vunpack.c.l.b16 %v197
    %v1505 = vunpack.c.h.b16 %v197
    %v1506 = vunpack.c.l.b16 %v198
    %v1507 = vunpack.c.h.b16 %v198
    %v1508 = vunpack.c.l.b16 %v199
    %v1509 = vunpack.c.h.b16 %v199
    %v1510 = vunpack.c.l.b16 %v200
    %v1511 = vunpack.c.h.b16 %v200
    %v1512 = vunpack.c.l.b16 %v201
    %v1513 = vunpack.c.h.b16 %v201
    %v1514 = vunpack.c.l.b16 %v202
    %v1515 = vunpack.c.h.b16 %v202
    %v1516 = vunpack.c.l.b16 %v203
    %v1517 = vunpack.c.h.b16 %v203
    %v1518 = vunpack.c.l.b16 %v204
    %v1519 = vunpack.c.h.b16 %v204
    %v1520 = vunpack.c.l.b16 %v205
    %v1521 = vunpack.c.h.b16 %v205
    %v1522 = vunpack.c.l.b16 %v206
    %v1523 = vunpack.c.h.b16 %v206
    %v1524 = vunpack.c.l.b16 %v207
    %v1525 = vunpack.c.h.b16 %v207
    %v1526 = vunpack.c.l.b16 %v208
    %v1527 = vunpack.c.h.b16 %v208
    %v1528 = vunpack.c.l.b16 %v209
    %v1529 = vunpack.c.h.b16 %v209
    %v1530 = vunpack.c.l.b16 %v210
    %v1531 = vunpack.c.h.b16 %v210
    %v1532 = vunpack.c.l.b16 %v211
    %v1533 = vunpack.c.h.b16 %v211
    %v1534 = vunpack.c.l.b16 %v212
    %v1535 = vunpack.c.h.b16 %v212
    %v1536 = vunpack.c.l.b16 %v213
    %v1537 = vunpack.c.h.b16 %v213
    %v1538 = vunpack.c.l.b16 %v214
    %v1539 = vunpack.c.h.b16 %v214
    %v1540 = vunpack.c.l.b16 %v215
    %v1541 = vunpack.c.h.b16 %v215
    %v1542 = vunpack.c.l.b16 %v216
    %v1543 = vunpack.c.h.b16 %v216
    %v1544 = vunpack.c.l.b16 %v217
    %v1545 = vunpack.c.h.b16 %v217
    %v1546 = vunpack.c.l.b16 %v218
    %v1547 = vunpack.c.h.b16 %v218
    %v1548 = vunpack.c.l.b16 %v219
    %v1549 = vunpack.c.h.b16 %v219
    %v1550 = vunpack.c.l.b16 %v220
    %v1551 = vunpack.c.h.b16 %v220
    %v1552 = vunpack.c.l.b16 %v221
    %v1553 = vunpack.c.h.b16 %v221
    %v1554 = vunpack.c.l.b16 %v222
    %v1555 = vunpack.c.h.b16 %v222
    %v1556 = vunpack.c.l.b16 %v223
    %v1557 = vunpack.c.h.b16 %v223
    %v1558 = vunpack.c.l.b16 %v224
    %v1559 = vunpack.c.h.b16 %v224
    %v1560 = vunpack.c.l.b16 %v225
    %v1561 = vunpack.c.h.b16 %v225
    %v1562 = vunpack.c.l.b16 %v226
    %v1563 = vunpack.c.h.b16 %v226
    %v1564 = vunpack.c.l.b16 %v227
    %v1565 = vunpack.c.h.b16 %v227
    %v1566 = vunpack.c.l.b16 %v228
    %v1567 = vunpack.c.h.b16 %v228
    %v1568 = vunpack.c.l.b16 %v229
    %v1569 = vunpack.c.h.b16 %v229
    %v1570 = vunpack.c.l.b16 %v230
    %v1571 = vunpack.c.h.b16 %v230
    %v1572 = vunpack.c.l.b16 %v231
    %v1573 = vunpack.c.h.b16 %v231
    %v1574 = vunpack.c.l.b16 %v232
    %v1575 = vunpack.c.h.b16 %v232
    %v1576 = vunpack.c.l.b16 %v233
    %v1577 = vunpack.c.h.b16 %v233
    %v1578 = vunpack.c.l.b16 %v234
    %v1579 = vunpack.c.h.b16 %v234
    %v1580 = vunpack.c.l.b16 %v235
    %v1581 = vunpack.c.h.b16 %v235
    %v1582 = vunpack.c.l.b16 %v236
    %v1583 = vunpack.c.h.b16 %v236
    %v1584 = vunpack.c.l.b16 %v237
    %v1585 = vunpack.c.h.b16 %v237
    %v1586 = vunpack.c.l.b16 %v238
    %v1587 = vunpack.c.h.b16 %v238
    %v1588 = vunpack.c.l.b16 %v239
    %v1589 = vunpack.c.h.b16 %v239
    %v1590 = vunpack.c.l.b16 %v240
    %v1591 = vunpack.c.h.b16 %v240
    %v1592 = vunpack.c.l.b16 %v241
    %v1593 = vunpack.c.h.b16 %v241
    %v1594 = vunpack.c.l.b16 %v242
    %v1595 = vunpack.c.h.b16 %v242
    %v1596 = vunpack.c.l.b16 %v243
    %v1597 = vunpack.c.h.b16 %v243
    %v1598 = vunpack.c.l.b16 %v244
    %v1599 = vunpack.c.h.b16 %v244
    %v1600 = vunpack.c.l.b16 %v245
    %v1601 = vunpack.c.h.b16 %v245
    %v1602 = vunpack.c.l.b16 %v246
    %v1603 = vunpack.c.h.b16 %v246
    %v1604 = vunpack.c.l.b16 %v247
    %v1605 = vunpack.c.h.b16 %v247
    %v1606 = vunpack.c.l.b16 %v248
    %v1607 = vunpack.c.h.b16 %v248
    %v1608 = vunpack.c.l.b16 %v249
    %v1609 = vunpack.c.h.b16 %v249
    %v1610 = vunpack.c.l.b16 %v250
    %v1611 = vunpack.c.h.b16 %v250
    %v1612 = vunpack.c.l.b16 %v251
    %v1613 = vunpack.c.h.b16 %v251
    %v1614 = vunpack.c.l.b16 %v252
    %v1615 = vunpack.c.h.b16 %v252
    %v1616 = vunpack.c.l.b16 %v253
    %v1617 = vunpack.c.h.b16 %v253
    %v1618 = vunpack.c.l.b16 %v254
    %v1619 = vunpack.c.h.b16 %v254
    %v1620 = vunpack.c.l.b16 %v255
    %v1621 = vunpack.c.h.b16 %v255
    %v1622 = vunpack.c.l.b16 %v256
    %v1623 = vunpack.c.h.b16 %v256
    %v1624 = vunpack.c.l.b16 %v257
    %v1625 = vunpack.c.h.b16 %v257
    %v1626 = vunpack.c.l.b16 %v258
    %v1627 = vunpack.c.h.b16 %v258
    %v1628 = vunpack.c.l.b16 %v259
    %v1629 = vunpack.c.h.b16 %v259
    %v1630 = vunpack.c.l.b16 %v260
    %v1631 = vunpack.c.h.b16 %v260
    %v1632 = vunpack.c.l.b16 %v261
    %v1633 = vunpack.c.h.b16 %v261
    %v1634 = vunpack.c.l.b16 %v262
    %v1635 = vunpack.c.h.b16 %v262
    %v1636 = vunpack.c.l.b16 %v263
    %v1637 = vunpack.c.h.b16 %v263
    %v1638 = vunpack.c.l.b16 %v264
    %v1639 = vunpack.c.h.b16 %v264
    %v1640 = vunpack.c.l.b16 %v265
    %v1641 = vunpack.c.h.b16 %v265
    %v1642 = vunpack.c.l.b16 %v266
    %v1643 = vunpack.c.h.b16 %v266
    %v1644 = vunpack.c.l.b16 %v267
    %v1645 = vunpack.c.h.b16 %v267
    %v1646 = vunpack.c.l.b16 %v268
    %v1647 = vunpack.c.h.b16 %v268
    %v1648 = vunpack.c.l.b16 %v269
    %v1649 = vunpack.c.h.b16 %v269
    %v1650 = vunpack.c.l.b16 %v270
    %v1651 = vunpack.c.h.b16 %v270
    %v1652 = vunpack.c.l.b16 %v271
    %v1653 = vunpack.c.h.b16 %v271
    %v1654 = vunpack.c.l.b16 %v272
    %v1655 = vunpack.c.h.b16 %v272
    %v1656 = vunpack.c.l.b16 %v273
    %v1657 = vunpack.c.h.b16 %v273
    %v1658 = vunpack.c.l.b16 %v274
    %v1659 = vunpack.c.h.b16 %v274
    %v1660 = vunpack.c.l.b16 %v275
    %v1661 = vunpack.c.h.b16 %v275
    %v1662 = vunpack.c.l.b16 %v276
    %v1663 = vunpack.c.h.b16 %v276
    %v1664 = vunpack.c.l.b16 %v277
    %v1665 = vunpack.c.h.b16 %v277
    %v1666 = vunpack.c.l.b16 %v278
    %v1667 = vunpack.c.h.b16 %v278
    %v1668 = vunpack.c.l.b16 %v279
    %v1669 = vunpack.c.h.b16 %v279
    %v1670 = vunpack.c.l.b16 %v280
    %v1671 = vunpack.c.h.b16 %v280
    %v1672 = vunpack.c.l.b16 %v281
    %v1673 = vunpack.c.h.b16 %v281
    %v1674 = vunpack.c.l.b16 %v282
    %v1675 = vunpack.c.h.b16 %v282
    %v1676 = vunpack.c.l.b16 %v283
    %v1677 = vunpack.c.h.b16 %v283
    %v1678 = vunpack.c.l.b16 %v284
    %v1679 = vunpack.c.h.b16 %v284
    %v1680 = vunpack.c.l.b16 %v285
    %v1681 = vunpack.c.h.b16 %v285
    %v1682 = vunpack.c.l.b16 %v286
    %v1683 = vunpack.c.h.b16 %v286
    %v1684 = vunpack.c.l.b16 %v287
    %v1685 = vunpack.c.h.b16 %v287
    %v1686 = vunpack.c.l.b16 %v288
    %v1687 = vunpack.c.h.b16 %v288
    %v1688 = vunpack.c.l.b16 %v289
    %v1689 = vunpack.c.h.b16 %v289
    %v1690 = vunpack.c.l.b16 %v290
    %v1691 = vunpack.c.h.b16 %v290
    %v1692 = vunpack.c.l.b16 %v291
    %v1693 = vunpack.c.h.b16 %v291
    %v1694 = vunpack.c.l.b16 %v292
    %v1695 = vunpack.c.h.b16 %v292
    %v1696 = vunpack.c.l.b16 %v293
    %v1697 = vunpack.c.h.b16 %v293
    %v1698 = vunpack.c.l.b16 %v294
    %v1699 = vunpack.c.h.b16 %v294
    %v1700 = vunpack.c.l.b16 %v295
    %v1701 = vunpack.c.h.b16 %v295
    %v1702 = vunpack.c.l.b16 %v296
    %v1703 = vunpack.c.h.b16 %v296
    %v1704 = vunpack.c.l.b16 %v297
    %v1705 = vunpack.c.h.b16 %v297
    %v1706 = vunpack.c.l.b16 %v298
    %v1707 = vunpack.c.h.b16 %v298
    %v1708 = vunpack.c.l.b16 %v299
    %v1709 = vunpack.c.h.b16 %v299
    %v1710 = vunpack.c.l.b16 %v300
    %v1711 = vunpack.c.h.b16 %v300
    %v1712 = vunpack.c.l.b16 %v301
    %v1713 = vunpack.c.h.b16 %v301
    %v1714 = vunpack.c.l.b16 %v302
    %v1715 = vunpack.c.h.b16 %v302
    %v1716 = vunpack.c.l.b16 %v303
    %v1717 = vunpack.c.h.b16 %v303
    %v1718 = vunpack.c.l.b16 %v304
    %v1719 = vunpack.c.h.b16 %v304
    %v1720 = vunpack.c.l.b16 %v305
    %v1721 = vunpack.c.h.b16 %v305
    %v1722 = vunpack.c.l.b16 %v306
    %v1723 = vunpack.c.h.b16 %v306
    %v1724 = vunpack.c.l.b16 %v307
    %v1725 = vunpack.c.h.b16 %v307
    %v1726 = vunpack.c.l.b16 %v308
    %v1727 = vunpack.c.h.b16 %v308
    %v1728 = vunpack.c.l.b16 %v309
    %v1729 = vunpack.c.h.b16 %v309
    %v1730 = vunpack.c.l.b16 %v310
    %v1731 = vunpack.c.h.b16 %v310
    %v1732 = vunpack.c.l.b16 %v311
    %v1733 = vunpack.c.h.b16 %v311
    %v1734 = vunpack.c.l.b16 %v312
    %v1735 = vunpack.c.h.b16 %v312
    %v1736 = vunpack.c.l.b16 %v313
    %v1737 = vunpack.c.h.b16 %v313
    %v1738 = vunpack.c.l.b16 %v314
    %v1739 = vunpack.c.h.b16 %v314
    %v1740 = vunpack.c.l.b16 %v315
    %v1741 = vunpack.c.h.b16 %v315
    %v1742 = vunpack.c.l.b16 %v316
    %v1743 = vunpack.c.h.b16 %v316
    %v1744 = vunpack.c.l.b16 %v317
    %v1745 = vunpack.c.h.b16 %v317
    %v1746 = vunpack.c.l.b16 %v318
    %v1747 = vunpack.c.h.b16 %v318
    %v1748 = vunpack.c.l.b16 %v319
    %v1749 = vunpack.c.h.b16 %v319
    %v1750 = vunpack.c.l.b16 %v320
    %v1751 = vunpack.c.h.b16 %v320
    %v1752 = vunpack.c.l.b16 %v321
    %v1753 = vunpack.c.h.b16 %v321
    %v1754 = vunpack.c.l.b16 %v322
    %v1755 = vunpack.c.h.b16 %v322
    %v1756 = vunpack.c.l.b16 %v323
    %v1757 = vunpack.c.h.b16 %v323
    %v1758 = vunpack.c.l.b16 %v324
    %v1759 = vunpack.c.h.b16 %v324
    %v1760 = vunpack.c.l.b16 %v325
    %v1761 = vunpack.c.h.b16 %v325
    %v1762 = vunpack.c.l.b16 %v326
    %v1763 = vunpack.c.h.b16 %v326
    %v1764 = vunpack.c.l.b16 %v327
    %v1765 = vunpack.c.h.b16 %v327
    %v1766 = vunpack.c.l.b16 %v328
    %v1767 = vunpack.c.h.b16 %v328
    %v1768 = vunpack.c.l.b16 %v329
    %v1769 = vunpack.c.h.b16 %v329
    %v1770 = vunpack.c.l.b16 %v330
    %v1771 = vunpack.c.h.b16 %v330
    %v1772 = vunpack.c.l.b16 %v331
    %v1773 = vunpack.c.h.b16 %v331
    %v1774 = vunpack.c.l.b16 %v332
    %v1775 = vunpack.c.h.b16 %v332
    %v1776 = vunpack.c.l.b16 %v333
    %v1777 = vunpack.c.h.b16 %v333
    %v1778 = vunpack.c.l.b16 %v334
    %v1779 = vunpack.c.h.b16 %v334
    %v1780 = vunpack.c.l.b16 %v335
    %v1781 = vunpack.c.h.b16 %v335
    %v1782 = vunpack.c.l.b16 %v336
    %v1783 = vunpack.c.h.b16 %v336
    %v1784 = vunpack.c.l.b16 %v337
    %v1785 = vunpack.c.h.b16 %v337
    %v1786 = vunpack.c.l.b16 %v338
    %v1787 = vunpack.c.h.b16 %v338
    %v1788 = vunpack.c.l.b16 %v339
    %v1789 = vunpack.c.h.b16 %v339
    %v1790 = vunpack.c.l.b16 %v340
    %v1791 = vunpack.c.h.b16 %v340
    %v1792 = vunpack.c.l.b16 %v341
    %v1793 = vunpack.c.h.b16 %v341
    %v1794 = vunpack.c.l.b16 %v342
    %v1795 = vunpack.c.h.b16 %v342
    %v1796 = vunpack.c.l.b16 %v343
    %v1797 = vunpack.c.h.b16 %v343
    %v1798 = vunpack.c.l.b16 %v344
    %v1799 = vunpack.c.h.b16 %v344
    %v1800 = vunpack.c.l.b16 %v345
    %v1801 = vunpack.c.h.b16 %v345
    %v1802 = vunpack.c.l.b16 %v346
    %v1803 = vunpack.c.h.b16 %v346
    %v1804 = vunpack.c.l.b16 %v347
    %v1805 = vunpack.c.h.b16 %v347
    %v1806 = vunpack.c.l.b16 %v348
    %v1807 = vunpack.c.h.b16 %v348
    %v1808 = vunpack.c.l.b16 %v349
    %v1809 = vunpack.c.h.b16 %v349
    %v1810 = vunpack.c.l.b16 %v350
    %v1811 = vunpack.c.h.b16 %v350
    %v1812 = vunpack.c.l.b16 %v351
    %v1813 = vunpack.c.h.b16 %v351
    %v1814 = vunpack.c.l.b16 %v352
    %v1815 = vunpack.c.h.b16 %v352
    %v1816 = vunpack.c.l.b16 %v353
    %v1817 = vunpack.c.h.b16 %v353
    %v1818 = vunpack.c.l.b16 %v354
    %v1819 = vunpack.c.h.b16 %v354
    %v1820 = vunpack.c.l.b16 %v355
    %v1821 = vunpack.c.h.b16 %v355
    %v1822 = vunpack.c.l.b16 %v356
    %v1823 = vunpack.c.h.b16 %v356
    %v1824 = vunpack.c.l.b16 %v357
    %v1825 = vunpack.c.h.b16 %v357
    %v1826 = vunpack.c.l.b16 %v358
    %v1827 = vunpack.c.h.b16 %v358
    %v1828 = vunpack.c.l.b16 %v359
    %v1829 = vunpack.c.h.b16 %v359
    %v1830 = vunpack.c.l.b16 %v360
    %v1831 = vunpack.c.h.b16 %v360
    %v1832 = vunpack.c.l.b16 %v361
    %v1833 = vunpack.c.h.b16 %v361
    %v1834 = vunpack.c.l.b16 %v362
    %v1835 = vunpack.c.h.b16 %v362
    %v1836 = vunpack.c.l.b16 %v363
    %v1837 = vunpack.c.h.b16 %v363
    %v1838 = vunpack.c.l.b16 %v364
    %v1839 = vunpack.c.h.b16 %v364
    %v1840 = vunpack.c.l.b16 %v365
    %v1841 = vunpack.c.h.b16 %v365
    %v1842 = vunpack.c.l.b16 %v366
    %v1843 = vunpack.c.h.b16 %v366
    %v1844 = vunpack.c.l.b16 %v367
    %v1845 = vunpack.c.h.b16 %v367
    %v1846 = vunpack.c.l.b16 %v368
    %v1847 = vunpack.c.h.b16 %v368
    %v1848 = vunpack.c.l.b16 %v369
    %v1849 = vunpack.c.h.b16 %v369
    %v1850 = vunpack.c.l.b16 %v370
    %v1851 = vunpack.c.h.b16 %v370
    %v1852 = vunpack.c.l.b16 %v371
    %v1853 = vunpack.c.h.b16 %v371
    %v1854 = vunpack.c.l.b16 %v372
    %v1855 = vunpack.c.h.b16 %v372
    %v1856 = vunpack.c.l.b16 %v373
    %v1857 = vunpack.c.h.b16 %v373
    %v1858 = vunpack.c.l.b16 %v374
    %v1859 = vunpack.c.h.b16 %v374
    %v1860 = vunpack.c.l.b16 %v375
    %v1861 = vunpack.c.h.b16 %v375
    %v1862 = vunpack.c.l.b16 %v376
    %v1863 = vunpack.c.h.b16 %v376
    %v1864 = vunpack.c.l.b16 %v377
    %v1865 = vunpack.c.h.b16 %v377
    %v1866 = vunpack.c.l.b16 %v378
    %v1867 = vunpack.c.h.b16 %v378
    %v1868 = vunpack.c.l.b16 %v379
    %v1869 = vunpack.c.h.b16 %v379
    %v1870 = vunpack.c.l.b16 %v380
    %v1871 = vunpack.c.h.b16 %v380
    %v1872 = vunpack.c.l.b16 %v381
    %v1873 = vunpack.c.h.b16 %v381
    %v1874 = vunpack.c.l.b16 %v382
    %v1875 = vunpack.c.h.b16 %v382
    %v1876 = vunpack.c.l.b16 %v383
    %v1877 = vunpack.c.h.b16 %v383
    %v1878 = vunpack.c.l.b16 %v384
    %v1879 = vunpack.c.h.b16 %v384
    %v1880 = vunpack.c.l.b16 %v385
    %v1881 = vunpack.c.h.b16 %v385
    %v1882 = vunpack.c.l.b16 %v386
    %v1883 = vunpack.c.h.b16 %v386
    %v1884 = vunpack.c.l.b16 %v387
    %v1885 = vunpack.c.h.b16 %v387
    %v1886 = vunpack.c.l.b16 %v388
    %v1887 = vunpack.c.h.b16 %v388
    %v1888 = vunpack.c.l.b16 %v389
    %v1889 = vunpack.c.h.b16 %v389
    %v1890 = vunpack.c.l.b16 %v390
    %v1891 = vunpack.c.h.b16 %v390
    %v1892 = vunpack.c.l.b16 %v391
    %v1893 = vunpack.c.h.b16 %v391
    %v1894 = vunpack.c.l.b16 %v392
    %v1895 = vunpack.c.h.b16 %v392
    %v1896 = vunpack.c.l.b16 %v393
    %v1897 = vunpack.c.h.b16 %v393
    %v1898 = vunpack.c.l.b16 %v394
    %v1899 = vunpack.c.h.b16 %v394
    %v1900 = vunpack.c.l.b16 %v395
    %v1901 = vunpack.c.h.b16 %v395
    %v1902 = vunpack.c.l.b16 %v396
    %v1903 = vunpack.c.h.b16 %v396
    %v1904 = vunpack.c.l.b16 %v397
    %v1905 = vunpack.c.h.b16 %v397
    %v1906 = vunpack.c.l.b16 %v398
    %v1907 = vunpack.c.h.b16 %v398
    %v1908 = vunpack.c.l.b16 %v399
    %v1909 = vunpack.c.h.b16 %v399
    %v1910 = vunpack.c.l.b16 %v400
    %v1911 = vunpack.c.h.b16 %v400
    %v1912 = vunpack.c.l.b16 %v401
    %v1913 = vunpack.c.h.b16 %v401
    %v1914 = vunpack.c.l.b16 %v402
    %v1915 = vunpack.c.h.b16 %v402
    %v1916 = vunpack.c.l.b16 %v403
    %v1917 = vunpack.c.h.b16 %v403
    %v1918 = vunpack.c.l.b16 %v404
    %v1919 = vunpack.c.h.b16 %v404
    %v1920 = vunpack.c.l.b16 %v405
    %v1921 = vunpack.c.h.b16 %v405
    %v1922 = vunpack.c.l.b16 %v406
    %v1923 = vunpack.c.h.b16 %v406
    %v1924 = vunpack.c.l.b16 %v407
    %v1925 = vunpack.c.h.b16 %v407
    %v1926 = vunpack.c.l.b16 %v408
    %v1927 = vunpack.c.h.b16 %v408
    %v1928 = vunpack.c.l.b16 %v409
    %v1929 = vunpack.c.h.b16 %v409
    %v1930 = vunpack.c.l.b16 %v410
    %v1931 = vunpack.c.h.b16 %v410
    %v1932 = vunpack.c.l.b16 %v411
    %v1933 = vunpack.c.h.b16 %v411
    %v1934 = vunpack.c.l.b16 %v412
    %v1935 = vunpack.c.h.b16 %v412
    %v1936 = vunpack.c.l.b16 %v413
    %v1937 = vunpack.c.h.b16 %v413
    %v1938 = vunpack.c.l.b16 %v414
    %v1939 = vunpack.c.h.b16 %v414
    %v1940 = vunpack.c.l.b16 %v415
    %v1941 = vunpack.c.h.b16 %v415
    %v1942 = vunpack.c.l.b16 %v416
    %v1943 = vunpack.c.h.b16 %v416
    %v1944 = vunpack.c.l.b16 %v417
    %v1945 = vunpack.c.h.b16 %v417
    %v1946 = vunpack.c.l.b16 %v418
    %v1947 = vunpack.c.h.b16 %v418
    %v1948 = vunpack.c.l.b16 %v419
    %v1949 = vunpack.c.h.b16 %v419
    %v1950 = vunpack.c.l.b16 %v420
    %v1951 = vunpack.c.h.b16 %v420
    %v1952 = vunpack.c.l.b16 %v421
    %v1953 = vunpack.c.h.b16 %v421
    %v1954 = vunpack.c.l.b16 %v422
    %v1955 = vunpack.c.h.b16 %v422
    %v1956 = vunpack.c.l.b16 %v423
    %v1957 = vunpack.c.h.b16 %v423
    %v1958 = vunpack.c.l.b16 %v424
    %v1959 = vunpack.c.h.b16 %v424
    %v1960 = vunpack.c.l.b16 %v425
    %v1961 = vunpack.c.h.b16 %v425
    %v1962 = vunpack.c.l.b16 %v426
    %v1963 = vunpack.c.h.b16 %v426
    %v1964 = vunpack.c.l.b16 %v427
    %v1965 = vunpack.c.h.b16 %v427
    %v1966 = vunpack.c.l.b16 %v428
    %v1967 = vunpack.c.h.b16 %v428
    %v1968 = vunpack.c.l.b16 %v429
    %v1969 = vunpack.c.h.b16 %v429
    %v1970 = vunpack.c.l.b16 %v430
    %v1971 = vunpack.c.h.b16 %v430
    %v1972 = vunpack.c.l.b16 %v431
    %v1973 = vunpack.c.h.b16 %v431
    %v1974 = vunpack.c.l.b16 %v432
    %v1975 = vunpack.c.h.b16 %v432
    %v1976 = vunpack.c.l.b16 %v433
    %v1977 = vunpack.c.h.b16 %v433
    %v1978 = vunpack.c.l.b16 %v434
    %v1979 = vunpack.c.h.b16 %v434
    %v1980 = vunpack.c.l.b16 %v435
    %v1981 = vunpack.c.h.b16 %v435
    %v1982 = vunpack.c.l.b16 %v436
    %v1983 = vunpack.c.h.b16 %v436
    %v1984 = vunpack.c.l.b16 %v437
    %v1985 = vunpack.c.h.b16 %v437
    %v1986 = vunpack.c.l.b16 %v438
    %v1987 = vunpack.c.h.b16 %v438
    %v1988 = vunpack.c.l.b16 %v439
    %v1989 = vunpack.c.h.b16 %v439
    %v1990 = vunpack.c.l.b16 %v440
    %v1991 = vunpack.c.h.b16 %v440
    %v1992 = vunpack.c.l.b16 %v441
    %v1993 = vunpack.c.h.b16 %v441
    %v1994 = vunpack.c.l.b16 %v442
    %v1995 = vunpack.c.h.b16 %v442
    %v1996 = vunpack.c.l.b16 %v443
    %v1997 = vunpack.c.h.b16 %v443
    %v1998 = vunpack.c.l.b16 %v444
    %v1999 = vunpack.c.h.b16 %v444
    %v2000 = vunpack.c.l.b16 %v445
    %v2001 = vunpack.c.h.b16 %v445
    %v2002 = vunpack.c.l.b16 %v446
    %v2003 = vunpack.c.h.b16 %v446
    %v2004 = vunpack.c.l.b16 %v447
    %v2005 = vunpack.c.h.b16 %v447
    %v2006 = vunpack.c.l.b16 %v448
    %v2007 = vunpack.c.h.b16 %v448
    %v2008 = vunpack.c.l.b16 %v449
    %v2009 = vunpack.c.h.b16 %v449
    %v2010 = vunpack.c.l.b16 %v450
    %v2011 = vunpack.c.h.b16 %v450
    %v2012 = vunpack.c.l.b16 %v451
    %v2013 = vunpack.c.h.b16 %v451
    %v2014 = vunpack.c.l.b16 %v452
    %v2015 = vunpack.c.h.b16 %v452
    %v2016 = vunpack.c.l.b16 %v453
    %v2017 = vunpack.c.h.b16 %v453
    %v2018 = vunpack.c.l.b16 %v454
    %v2019 = vunpack.c.h.b16 %v454
    %v2020 = vunpack.c.l.b16 %v455
    %v2021 = vunpack.c.h.b16 %v455
    %v2022 = vunpack.c.l.b16 %v456
    %v2023 = vunpack.c.h.b16 %v456
    %v2024 = vunpack.c.l.b16 %v457
    %v2025 = vunpack.c.h.b16 %v457
    %v2026 = vunpack.c.l.b16 %v458
    %v2027 = vunpack.c.h.b16 %v458
    %v2028 = vunpack.c.l.b16 %v459
    %v2029 = vunpack.c.h.b16 %v459
    %v2030 = vunpack.c.l.b16 %v460
    %v2031 = vunpack.c.h.b16 %v460
    %v2032 = vunpack.c.l.b16 %v461
    %v2033 = vunpack.c.h.b16 %v461
    %v2034 = vunpack.c.l.b16 %v462
    %v2035 = vunpack.c.h.b16 %v462
    %v2036 = vunpack.c.l.b16 %v463
    %v2037 = vunpack.c.h.b16 %v463
    %v2038 = vunpack.c.l.b16 %v464
    %v2039 = vunpack.c.h.b16 %v464
    %v2040 = vunpack.c.l.b16 %v465
    %v2041 = vunpack.c.h.b16 %v465
    %v2042 = vunpack.c.l.b16 %v466
    %v2043 = vunpack.c.h.b16 %v466
    %v2044 = vunpack.c.l.b16 %v467
    %v2045 = vunpack.c.h.b16 %v467
    %v2046 = vunpack.c.l.b16 %v468
    %v2047 = vunpack.c.h.b16 %v468
    %v2048 = vunpack.c.l.b16 %v469
    %v2049 = vunpack.c.h.b16 %v469
    %v2050 = vunpack.c.l.b16 %v470
    %v2051 = vunpack.c.h.b16 %v470
    %v2052 = vunpack.c.l.b16 %v471
    %v2053 = vunpack.c.h.b16 %v471
    %v2054 = vunpack.c.l.b16 %v472
    %v2055 = vunpack.c.h.b16 %v472
    %v2056 = vunpack.c.l.b16 %v473
    %v2057 = vunpack.c.h.b16 %v473
    %v2058 = vunpack.c.l.b16 %v474
    %v2059 = vunpack.c.h.b16 %v474
    %v2060 = vunpack.c.l.b16 %v475
    %v2061 = vunpack.c.h.b16 %v475
    %v2062 = vunpack.c.l.b16 %v476
    %v2063 = vunpack.c.h.b16 %v476
    %v2064 = vunpack.c.l.b16 %v477
    %v2065 = vunpack.c.h.b16 %v477
    %v2066 = vunpack.c.l.b16 %v478
    %v2067 = vunpack.c.h.b16 %v478
    %v2068 = vunpack.c.l.b16 %v479
    %v2069 = vunpack.c.h.b16 %v479
    %v2070 = vunpack.c.l.b16 %v480
    %v2071 = vunpack.c.h.b16 %v480
    %v2072 = vunpack.c.l.b16 %v481
    %v2073 = vunpack.c.h.b16 %v481
    %v2074 = vunpack.c.l.b16 %v482
    %v2075 = vunpack.c.h.b16 %v482
    %v2076 = vunpack.c.l.b16 %v483
    %v2077 = vunpack.c.h.b16 %v483
    %v2078 = vunpack.c.l.b16 %v484
    %v2079 = vunpack.c.h.b16 %v484
    %v2080 = vunpack.c.l.b16 %v485
    %v2081 = vunpack.c.h.b16 %v485
    %v2082 = vunpack.c.l.b16 %v486
    %v2083 = vunpack.c.h.b16 %v486
    %v2084 = vunpack.c.l.b16 %v487
    %v2085 = vunpack.c.h.b16 %v487
    %v2086 = vunpack.c.l.b16 %v488
    %v2087 = vunpack.c.h.b16 %v488
    %v2088 = vunpack.c.l.b16 %v489
    %v2089 = vunpack.c.h.b16 %v489
    %v2090 = vunpack.c.l.b16 %v490
    %v2091 = vunpack.c.h.b16 %v490
    %v2092 = vunpack.c.l.b16 %v491
    %v2093 = vunpack.c.h.b16 %v491
    %v2094 = vunpack.c.l.b16 %v492
    %v2095 = vunpack.c.h.b16 %v492
    %v2096 = vunpack.c.l.b16 %v493
    %v2097 = vunpack.c.h.b16 %v493
    %v2098 = vunpack.c.l.b16 %v494
    %v2099 = vunpack.c.h.b16 %v494
    %v2100 = vunpack.c.l.b16 %v495
    %v2101 = vunpack.c.h.b16 %v495
    %v2102 = vunpack.c.l.b16 %v496
    %v2103 = vunpack.c.h.b16 %v496
    %v2104 = vunpack.c.l.b16 %v497
    %v2105 = vunpack.c.h.b16 %v497
    %v2106 = vunpack.c.l.b16 %v498
    %v2107 = vunpack.c.h.b16 %v498
    %v2108 = vunpack.c.l.b16 %v499
    %v2109 = vunpack.c.h.b16 %v499
    %v2110 = vunpack.c.l.b16 %v500
    %v2111 = vunpack.c.h.b16 %v500
    %v2112 = vunpack.c.l.b16 %v501
    %v2113 = vunpack.c.h.b16 %v501
    %v2114 = vunpack.c.l.b16 %v502
    %v2115 = vunpack.c.h.b16 %v502
    %v2116 = vunpack.c.l.b16 %v503
    %v2117 = vunpack.c.h.b16 %v503
    %v2118 = vunpack.c.l.b16 %v504
    %v2119 = vunpack.c.h.b16 %v504
    %v2120 = vunpack.c.l.b16 %v505
    %v2121 = vunpack.c.h.b16 %v505
    %v2122 = vunpack.c.l.b16 %v506
    %v2123 = vunpack.c.h.b16 %v506
    %v2124 = vunpack.c.l.b16 %v507
    %v2125 = vunpack.c.h.b16 %v507
    %v2126 = vunpack.c.l.b16 %v508
    %v2127 = vunpack.c.h.b16 %v508
    %v2128 = vunpack.c.l.b16 %v509
    %v2129 = vunpack.c.h.b16 %v509
    %v2130 = vunpack.c.l.b16 %v510
    %v2131 = vunpack.c.h.b16 %v510
    %v2132 = vunpack.c.l.b16 %v511
    %v2133 = vunpack.c.h.b16 %v511
    %v2134 = vunpack.c.l.b16 %v512
    %v2135 = vunpack.c.h.b16 %v512
    %v2136 = vunpack.c.l.b16 %v513
    %v2137 = vunpack.c.h.b16 %v513
    %v2138 = vunpack.c.l.b16 %v514
    %v2139 = vunpack.c.h.b16 %v514
    %v2140 = vunpack.c.l.b16 %v515
    %v2141 = vunpack.c.h.b16 %v515
    %v2142 = vunpack.c.l.b16 %v516
    %v2143 = vunpack.c.h.b16 %v516
    %v2144 = vunpack.c.l.b16 %v517
    %v2145 = vunpack.c.h.b16 %v517
    %v2146 = vunpack.c.l.b16 %v518
    %v2147 = vunpack.c.h.b16 %v518
    %v2148 = vunpack.c.l.b16 %v519
    %v2149 = vunpack.c.h.b16 %v519
    %v2150 = vunpack.c.l.b16 %v520
    %v2151 = vunpack.c.h.b16 %v520
    %v2152 = vunpack.c.l.b16 %v521
    %v2153 = vunpack.c.h.b16 %v521
    %v2154 = vunpack.c.l.b16 %v522
    %v2155 = vunpack.c.h.b16 %v522
    %v2156 = vunpack.c.l.b16 %v523
    %v2157 = vunpack.c.h.b16 %v523
    %v2158 = vunpack.c.l.b16 %v524
    %v2159 = vunpack.c.h.b16 %v524
    %v2160 = vunpack.c.l.b16 %v525
    %v2161 = vunpack.c.h.b16 %v525
    %v2162 = vunpack.c.l.b16 %v526
    %v2163 = vunpack.c.h.b16 %v526
    %v2164 = vunpack.c.l.b16 %v527
    %v2165 = vunpack.c.h.b16 %v527
    %v2166 = vunpack.c.l.b16 %v528
    %v2167 = vunpack.c.h.b16 %v528
    %v2168 = vunpack.c.l.b16 %v529
    %v2169 = vunpack.c.h.b16 %v529
    %v2170 = vunpack.c.l.b16 %v530
    %v2171 = vunpack.c.h.b16 %v530
    %v2172 = vunpack.c.l.b16 %v531
    %v2173 = vunpack.c.h.b16 %v531
    %v2174 = vunpack.c.l.b16 %v532
    %v2175 = vunpack.c.h.b16 %v532
    %v2176 = vunpack.c.l.b16 %v533
    %v2177 = vunpack.c.h.b16 %v533
    %v2178 = vunpack.c.l.b16 %v534
    %v2179 = vunpack.c.h.b16 %v534
    %v2180 = vunpack.c.l.b16 %v535
    %v2181 = vunpack.c.h.b16 %v535
    %v2182 = vunpack.c.l.b16 %v536
    %v2183 = vunpack.c.h.b16 %v536
    %v2184 = vunpack.c.l.b16 %v537
    %v2185 = vunpack.c.h.b16 %v537
    %v2186 = vunpack.c.l.b16 %v538
    %v2187 = vunpack.c.h.b16 %v538
    %v2188 = vunpack.c.l.b16 %v539
    %v2189 = vunpack.c.h.b16 %v539
    %v2190 = vunpack.c.l.b16 %v540
    %v2191 = vunpack.c.h.b16 %v540
    %v2192 = vunpack.c.l.b16 %v541
    %v2193 = vunpack.c.h.b16 %v541
    %v2194 = vunpack.c.l.b16 %v542
    %v2195 = vunpack.c.h.b16 %v542
    %v2196 = vunpack.c.l.b16 %v543
    %v2197 = vunpack.c.h.b16 %v543
    %v2198 = vunpack.c.l.b16 %v544
    %v2199 = vunpack.c.h.b16 %v544
    %v2200 = vunpack.c.l.b16 %v545
    %v2201 = vunpack.c.h.b16 %v545
    %v2202 = vunpack.c.l.b16 %v546
    %v2203 = vunpack.c.h.b16 %v546
    %v2204 = vunpack.c.l.b16 %v547
    %v2205 = vunpack.c.h.b16 %v547
    %v2206 = vunpack.c.l.b16 %v548
    %v2207 = vunpack.c.h.b16 %v548
    %v2208 = vunpack.c.l.b16 %v549
    %v2209 = vunpack.c.h.b16 %v549
    %v2210 = vunpack.c.l.b16 %v550
    %v2211 = vunpack.c.h.b16 %v550
    %v2212 = vunpack.c.l.b16 %v551
    %v2213 = vunpack.c.h.b16 %v551
    %v2214 = vunpack.c.l.b16 %v552
    %v2215 = vunpack.c.h.b16 %v552
    %v2216 = vunpack.c.l.b16 %v553
    %v2217 = vunpack.c.h.b16 %v553
    %v2218 = vunpack.c.l.b16 %v554
    %v2219 = vunpack.c.h.b16 %v554
    %v2220 = vunpack.c.l.b16 %v555
    %v2221 = vunpack.c.h.b16 %v555
    %v2222 = vunpack.c.l.b16 %v556
    %v2223 = vunpack.c.h.b16 %v556
    %v2224 = vunpack.c.l.b16 %v557
    %v2225 = vunpack.c.h.b16 %v557
    %v2226 = vunpack.c.l.b16 %v558
    %v2227 = vunpack.c.h.b16 %v558
    %v2228 = vunpack.c.l.b16 %v559
    %v2229 = vunpack.c.h.b16 %v559
    %v2230 = vunpack.c.l.b16 %v560
    %v2231 = vunpack.c.h.b16 %v560
    %v2232 = vunpack.c.l.b16 %v561
    %v2233 = vunpack.c.h.b16 %v561
    %v2234 = vunpack.c.l.b16 %v562
    %v2235 = vunpack.c.h.b16 %v562
    %v2236 = vunpack.c.l.b16 %v563
    %v2237 = vunpack.c.h.b16 %v563
    %v2238 = vunpack.c.l.b16 %v564
    %v2239 = vunpack.c.h.b16 %v564
    %v2240 = vunpack.c.l.b16 %v565
    %v2241 = vunpack.c.h.b16 %v565
    %v2242 = vunpack.c.l.b16 %v566
    %v2243 = vunpack.c.h.b16 %v566
    %v2244 = vunpack.c.l.b16 %v567
    %v2245 = vunpack.c.h.b16 %v567
    %v2246 = vunpack.c.l.b16 %v568
    %v2247 = vunpack.c.h.b16 %v568
    %v2248 = vunpack.c.l.b16 %v569
    %v2249 = vunpack.c.h.b16 %v569
    %v2250 = vunpack.c.l.b16 %v570
    %v2251 = vunpack.c.h.b16 %v570
    %v2252 = vunpack.c.l.b16 %v571
    %v2253 = vunpack.c.h.b16 %v571
    %v2254 = vunpack.c.l.b16 %v572
    %v2255 = vunpack.c.h.b16 %v572
    %v2256 = vunpack.c.l.b16 %v573
    %v2257 = vunpack.c.h.b16 %v573
    %v2258 = vunpack.c.l.b16 %v574
    %v2259 = vunpack.c.h.b16 %v574
    %v2260 = vunpack.c.l.b16 %v575
    %v2261 = vunpack.c.h.b16 %v575
    %v2262 = vunpack.c.l.b16 %v576
    %v2263 = vunpack.c.h.b16 %v576
    %v2264 = vunpack.c.l.b16 %v577
    %v2265 = vunpack.c.h.b16 %v577
    %v2266 = vunpack.c.l.b16 %v578
    %v2267 = vunpack.c.h.b16 %v578
    %v2268 = vunpack.c.l.b16 %v579
    %v2269 = vunpack.c.h.b16 %v579
    %v2270 = vunpack.c.l.b16 %v580
    %v2271 = vunpack.c.h.b16 %v580
    %v2272 = vunpack.c.l.b16 %v581
    %v2273 = vunpack.c.h.b16 %v581
    %v2274 = vunpack.c.l.b16 %v582
    %v2275 = vunpack.c.h.b16 %v582
    %v2276 = vunpack.c.l.b16 %v583
    %v2277 = vunpack.c.h.b16 %v583
    %v2278 = vunpack.c.l.b16 %v584
    %v2279 = vunpack.c.h.b16 %v584
    %v2280 = vunpack.c.l.b16 %v585
    %v2281 = vunpack.c.h.b16 %v585
    %v2282 = vunpack.c.l.b16 %v586
    %v2283 = vunpack.c.h.b16 %v586
    %v2284 = vunpack.c.l.b16 %v587
    %v2285 = vunpack.c.h.b16 %v587
    %v2286 = vunpack.c.l.b16 %v588
    %v2287 = vunpack.c.h.b16 %v588
    %v2288 = vunpack.c.l.b16 %v589
    %v2289 = vunpack.c.h.b16 %v589
    %v2290 = vunpack.c.l.b16 %v590
    %v2291 = vunpack.c.h.b16 %v590
    %v2292 = vunpack.c.l.b16 %v591
    %v2293 = vunpack.c.h.b16 %v591
    %v2294 = vunpack.c.l.b16 %v592
    %v2295 = vunpack.c.h.b16 %v592
    %v2296 = vunpack.c.l.b16 %v593
    %v2297 = vunpack.c.h.b16 %v593
    %v2298 = vunpack.c.l.b16 %v594
    %v2299 = vunpack.c.h.b16 %v594
    %v2300 = vunpack.c.l.b16 %v595
    %v2301 = vunpack.c.h.b16 %v595
    %v2302 = vunpack.c.l.b16 %v596
    %v2303 = vunpack.c.h.b16 %v596
    %v2304 = vunpack.c.l.b16 %v597
    %v2305 = vunpack.c.h.b16 %v597
    %v2306 = vunpack.c.l.b16 %v598
    %v2307 = vunpack.c.h.b16 %v598
    %v2308 = vunpack.c.l.b16 %v599
    %v2309 = vunpack.c.h.b16 %v599
    %v2310 = vunpack.c.l.b16 %v600
    %v2311 = vunpack.c.h.b16 %v600
    %v2312 = vunpack.c.l.b16 %v601
    %v2313 = vunpack.c.h.b16 %v601
    %v2314 = vunpack.c.l.b16 %v602
    %v2315 = vunpack.c.h.b16 %v602
    %v2316 = vunpack.c.l.b16 %v603
    %v2317 = vunpack.c.h.b16 %v603
    %v2318 = vunpack.c.l.b16 %v604
    %v2319 = vunpack.c.h.b16 %v604
    %v2320 = vunpack.c.l.b16 %v605
    %v2321 = vunpack.c.h.b16 %v605
    %v2322 = vunpack.c.l.b16 %v606
    %v2323 = vunpack.c.h.b16 %v606
    %v2324 = vunpack.c.l.b16 %v607
    %v2325 = vunpack.c.h.b16 %v607
    %v2326 = vunpack.c.l.b16 %v608
    %v2327 = vunpack.c.h.b16 %v608
    %v2328 = vunpack.c.l.b16 %v609
    %v2329 = vunpack.c.h.b16 %v609
    %v2330 = vunpack.c.l.b16 %v610
    %v2331 = vunpack.c.h.b16 %v610
    %v2332 = vunpack.c.l.b16 %v611
    %v2333 = vunpack.c.h.b16 %v611
    %v2334 = vunpack.c.l.b16 %v612
    %v2335 = vunpack.c.h.b16 %v612
    %v2336 = vunpack.c.l.b16 %v613
    %v2337 = vunpack.c.h.b16 %v613
    %v2338 = vunpack.c.l.b16 %v614
    %v2339 = vunpack.c.h.b16 %v614
    %v2340 = vunpack.c.l.b16 %v615
    %v2341 = vunpack.c.h.b16 %v615
    %v2342 = vunpack.c.l.b16 %v616
    %v2343 = vunpack.c.h.b16 %v616
    %v2344 = vunpack.c.l.b16 %v617
    %v2345 = vunpack.c.h.b16 %v617
    %v2346 = vunpack.c.l.b16 %v618
    %v2347 = vunpack.c.h.b16 %v618
    %v2348 = vunpack.c.l.b16 %v619
    %v2349 = vunpack.c.h.b16 %v619
    %v2350 = vunpack.c.l.b16 %v620
    %v2351 = vunpack.c.h.b16 %v620
    %v2352 = vunpack.c.l.b16 %v621
    %v2353 = vunpack.c.h.b16 %v621
    %v2354 = vunpack.c.l.b16 %v622
    %v2355 = vunpack.c.h.b16 %v622
    %v2356 = vunpack.c.l.b16 %v623
    %v2357 = vunpack.c.h.b16 %v623
    %v2358 = vunpack.c.l.b16 %v624
    %v2359 = vunpack.c.h.b16 %v624
    %v2360 = vunpack.c.l.b16 %v625
    %v2361 = vunpack.c.h.b16 %v625
    %v2362 = vunpack.c.l.b16 %v626
    %v2363 = vunpack.c.h.b16 %v626
    %v2364 = vunpack.c.l.b16 %v627
    %v2365 = vunpack.c.h.b16 %v627
    %v2366 = vunpack.c.l.b16 %v628
    %v2367 = vunpack.c.h.b16 %v628
    %v2368 = vunpack.c.l.b16 %v629
    %v2369 = vunpack.c.h.b16 %v629
    %v2370 = vunpack.c.l.b16 %v630
    %v2371 = vunpack.c.h.b16 %v630
    %v2372 = vunpack.c.l.b16 %v631
    %v2373 = vunpack.c.h.b16 %v631
    %v2374 = vunpack.c.l.b16 %v632
    %v2375 = vunpack.c.h.b16 %v632
    %v2376 = vunpack.c.l.b16 %v633
    %v2377 = vunpack.c.h.b16 %v633
    %v2378 = vunpack.c.l.b16 %v634
    %v2379 = vunpack.c.h.b16 %v634
    %v2380 = vunpack.c.l.b16 %v635
    %v2381 = vunpack.c.h.b16 %v635
    %v2382 = vunpack.c.l.b16 %v636
    %v2383 = vunpack.c.h.b16 %v636
    %v2384 = vunpack.c.l.b16 %v637
    %v2385 = vunpack.c.h.b16 %v637
    %v2386 = vunpack.c.l.b16 %v638
    %v2387 = vunpack.c.h.b16 %v638
    %v2388 = vunpack.c.l.b16 %v639
    %v2389 = vunpack.c.h.b16 %v639
    %v2390 = vunpack.c.l.b16 %v640
    %v2391 = vunpack.c.h.b16 %v640
    %v2392 = vunpack.c.l.b16 %v641
    %v2393 = vunpack.c.h.b16 %v641
    %v2394 = vunpack.c.l.b16 %v642
    %v2395 = vunpack.c.h.b16 %v642
    %v2396 = vunpack.c.l.b16 %v643
    %v2397 = vunpack.c.h.b16 %v643
    %v2398 = vunpack.c.l.b16 %v644
    %v2399 = vunpack.c.h.b16 %v644
    %v2400 = vunpack.c.l.b16 %v645
    %v2401 = vunpack.c.h.b16 %v645
    %v2402 = vunpack.c.l.b16 %v646
    %v2403 = vunpack.c.h.b16 %v646
    %v2404 = vunpack.c.l.b16 %v647
    %v2405 = vunpack.c.h.b16 %v647
    %v2406 = vunpack.c.l.b16 %v648
    %v2407 = vunpack.c.h.b16 %v648
    %v2408 = vunpack.c.l.b16 %v649
    %v2409 = vunpack.c.h.b16 %v649
    %v2410 = vunpack.c.l.b16 %v650
    %v2411 = vunpack.c.h.b16 %v650
    %v2412 = vunpack.c.l.b16 %v651
    %v2413 = vunpack.c.h.b16 %v651
    %v2414 = vunpack.c.l.b16 %v652
    %v2415 = vunpack.c.h.b16 %v652
    %v2416 = vunpack.c.l.b16 %v653
    %v2417 = vunpack.c.h.b16 %v653
    %v2418 = vunpack.c.l.b16 %v654
    %v2419 = vunpack.c.h.b16 %v654
    %v2420 = vunpack.c.l.b16 %v655
    %v2421 = vunpack.c.h.b16 %v655
    %v2422 = vunpack.c.l.b16 %v656
    %v2423 = vunpack.c.h.b16 %v656
    %v2424 = vunpack.c.l.b16 %v657
    %v2425 = vunpack.c.h.b16 %v657
    %v2426 = vunpack.c.l.b16 %v658
    %v2427 = vunpack.c.h.b16 %v658
    %v2428 = vunpack.c.l.b16 %v659
    %v2429 = vunpack.c.h.b16 %v659
    %v2430 = vunpack.c.l.b16 %v660
    %v2431 = vunpack.c.h.b16 %v660
    %v2432 = vunpack.c.l.b16 %v661
    %v2433 = vunpack.c.h.b16 %v661
    %v2434 = vunpack.c.l.b16 %v662
    %v2435 = vunpack.c.h.b16 %v662
    %v2436 = vunpack.c.l.b16 %v663
    %v2437 = vunpack.c.h.b16 %v663
    %v2438 = vunpack.c.l.b16 %v664
    %v2439 = vunpack.c.h.b16 %v664
    %v2440 = vunpack.c.l.b16 %v665
    %v2441 = vunpack.c.h.b16 %v665
    %v2442 = vunpack.c.l.b16 %v666
    %v2443 = vunpack.c.h.b16 %v666
    %v2444 = vunpack.c.l.b16 %v667
    %v2445 = vunpack.c.h.b16 %v667
    %v2446 = vunpack.c.l.b16 %v668
    %v2447 = vunpack.c.h.b16 %v668
    %v2448 = vunpack.c.l.b16 %v669
    %v2449 = vunpack.c.h.b16 %v669
    %v2450 = vunpack.c.l.b16 %v670
    %v2451 = vunpack.c.h.b16 %v670
    %v2452 = vunpack.c.l.b16 %v671
    %v2453 = vunpack.c.h.b16 %v671
    %v2454 = vunpack.c.l.b16 %v672
    %v2455 = vunpack.c.h.b16 %v672
    %v2456 = vunpack.c.l.b16 %v673
    %v2457 = vunpack.c.h.b16 %v673
    %v2458 = vunpack.c.l.b16 %v674
    %v2459 = vunpack.c.h.b16 %v674
    %v2460 = vunpack.c.l.b16 %v675
    %v2461 = vunpack.c.h.b16 %v675
    %v2462 = vunpack.c.l.b16 %v676
    %v2463 = vunpack.c.h.b16 %v676
    %v2464 = vunpack.c.l.b16 %v677
    %v2465 = vunpack.c.h.b16 %v677
    %v2466 = vunpack.c.l.b16 %v678
    %v2467 = vunpack.c.h.b16 %v678
    %v2468 = vunpack.c.l.b16 %v679
    %v2469 = vunpack.c.h.b16 %v679
    %v2470 = vunpack.c.l.b16 %v680
    %v2471 = vunpack.c.h.b16 %v680
    %v2472 = vunpack.c.l.b16 %v681
    %v2473 = vunpack.c.h.b16 %v681
    %v2474 = vunpack.c.l.b16 %v682
    %v2475 = vunpack.c.h.b16 %v682
    %v2476 = vunpack.c.l.b16 %v683
    %v2477 = vunpack.c.h.b16 %v683
    %v2478 = vunpack.c.l.b16 %v684
    %v2479 = vunpack.c.h.b16 %v684
    %v2480 = vunpack.c.l.b16 %v685
    %v2481 = vunpack.c.h.b16 %v685
    %v2482 = vunpack.c.l.b16 %v686
    %v2483 = vunpack.c.h.b16 %v686
    %v2484 = vunpack.c.l.b16 %v687
    %v2485 = vunpack.c.h.b16 %v687
    %v2486 = vunpack.c.l.b16 %v688
    %v2487 = vunpack.c.h.b16 %v688
    %v2488 = vunpack.c.l.b16 %v689
    %v2489 = vunpack.c.h.b16 %v689
    %v2490 = vunpack.c.l.b16 %v690
    %v2491 = vunpack.c.h.b16 %v690
    %v2492 = vunpack.c.l.b16 %v691
    %v2493 = vunpack.c.h.b16 %v691
    %v2494 = vunpack.c.l.b16 %v692
    %v2495 = vunpack.c.h.b16 %v692
    %v2496 = vunpack.c.l.b16 %v693
    %v2497 = vunpack.c.h.b16 %v693
    %v2498 = vunpack.c.l.b16 %v694
    %v2499 = vunpack.c.h.b16 %v694
    %v2500 = vunpack.c.l.b16 %v695
    %v2501 = vunpack.c.h.b16 %v695
    %v2502 = vunpack.c.l.b16 %v696
    %v2503 = vunpack.c.h.b16 %v696
    %v2504 = vunpack.c.l.b16 %v697
    %v2505 = vunpack.c.h.b16 %v697
    %v2506 = vunpack.c.l.b16 %v698
    %v2507 = vunpack.c.h.b16 %v698
    %v2508 = vunpack.c.l.b16 %v699
    %v2509 = vunpack.c.h.b16 %v699
    %v2510 = vunpack.c.l.b16 %v700
    %v2511 = vunpack.c.h.b16 %v700
    %v2512 = vunpack.c.l.b16 %v701
    %v2513 = vunpack.c.h.b16 %v701
    %v2514 = vunpack.c.l.b16 %v702
    %v2515 = vunpack.c.h.b16 %v702
    %v2516 = vunpack.c.l.b16 %v703
    %v2517 = vunpack.c.h.b16 %v703
    %v2518 = vunpack.c.l.b16 %v704
    %v2519 = vunpack.c.h.b16 %v704
    %v2520 = vunpack.c.l.b16 %v705
    %v2521 = vunpack.c.h.b16 %v705
    %v2522 = vunpack.c.l.b16 %v706
    %v2523 = vunpack.c.h.b16 %v706
    %v2524 = vunpack.c.l.b16 %v707
    %v2525 = vunpack.c.h.b16 %v707
    %v2526 = vunpack.c.l.b16 %v708
    %v2527 = vunpack.c.h.b16 %v708
    %v2528 = vunpack.c.l.b16 %v709
    %v2529 = vunpack.c.h.b16 %v709
    %v2530 = vunpack.c.l.b16 %v710
    %v2531 = vunpack.c.h.b16 %v710
    %v2532 = vunpack.c.l.b16 %v711
    %v2533 = vunpack.c.h.b16 %v711
    %v2534 = vunpack.c.l.b16 %v712
    %v2535 = vunpack.c.h.b16 %v712
    %v2536 = vunpack.c.l.b16 %v713
    %v2537 = vunpack.c.h.b16 %v713
    %v2538 = vunpack.c.l.b16 %v714
    %v2539 = vunpack.c.h.b16 %v714
    %v2540 = vunpack.c.l.b16 %v715
    %v2541 = vunpack.c.h.b16 %v715
    %v2542 = vunpack.c.l.b16 %v716
    %v2543 = vunpack.c.h.b16 %v716
    %v2544 = vunpack.c.l.b16 %v717
    %v2545 = vunpack.c.h.b16 %v717
    %v2546 = vunpack.c.l.b16 %v718
    %v2547 = vunpack.c.h.b16 %v718
    %v2548 = vunpack.c.l.b16 %v719
    %v2549 = vunpack.c.h.b16 %v719
    %v2550 = vunpack.c.l.b16 %v720
    %v2551 = vunpack.c.h.b16 %v720
    %v2552 = vunpack.c.l.b16 %v721
    %v2553 = vunpack.c.h.b16 %v721
    %v2554 = vunpack.c.l.b16 %v722
    %v2555 = vunpack.c.h.b16 %v722
    %v2556 = vunpack.c.l.b16 %v723
    %v2557 = vunpack.c.h.b16 %v723
    %v2558 = vunpack.c.l.b16 %v724
    %v2559 = vunpack.c.h.b16 %v724
    %v2560 = vunpack.c.l.b16 %v725
    %v2561 = vunpack.c.h.b16 %v725
    %v2562 = vunpack.c.l.b16 %v726
    %v2563 = vunpack.c.h.b16 %v726
    %v2564 = vunpack.c.l.b16 %v727
    %v2565 = vunpack.c.h.b16 %v727
    %v2566 = vunpack.c.l.b16 %v728
    %v2567 = vunpack.c.h.b16 %v728
    %v2568 = vunpack.c.l.b16 %v729
    %v2569 = vunpack.c.h.b16 %v729
    %v2570 = vunpack.c.l.b16 %v730
    %v2571 = vunpack.c.h.b16 %v730
    %v2572 = vunpack.c.l.b16 %v731
    %v2573 = vunpack.c.h.b16 %v731
    %v2574 = vunpack.c.l.b16 %v732
    %v2575 = vunpack.c.h.b16 %v732
    %v2576 = vunpack.c.l.b16 %v733
    %v2577 = vunpack.c.h.b16 %v733
    %v2578 = vunpack.c.l.b16 %v734
    %v2579 = vunpack.c.h.b16 %v734
    %v2580 = vunpack.c.l.b16 %v735
    %v2581 = vunpack.c.h.b16 %v735
    %v2582 = vunpack.c.l.b16 %v736
    %v2583 = vunpack.c.h.b16 %v736
    %v2584 = vunpack.c.l.b16 %v737
    %v2585 = vunpack.c.h.b16 %v737
    %v2586 = vunpack.c.l.b16 %v738
    %v2587 = vunpack.c.h.b16 %v738
    %v2588 = vunpack.c.l.b16 %v739
    %v2589 = vunpack.c.h.b16 %v739
    %v2590 = vunpack.c.l.b16 %v740
    %v2591 = vunpack.c.h.b16 %v740
    %v2592 = vunpack.c.l.b16 %v741
    %v2593 = vunpack.c.h.b16 %v741
    %v2594 = vunpack.c.l.b16 %v742
    %v2595 = vunpack.c.h.b16 %v742
    %v2596 = vunpack.c.l.b16 %v743
    %v2597 = vunpack.c.h.b16 %v743
    %v2598 = vunpack.c.l.b16 %v744
    %v2599 = vunpack.c.h.b16 %v744
    %v2600 = vunpack.c.l.b16 %v745
    %v2601 = vunpack.c.h.b16 %v745
    %v2602 = vunpack.c.l.b16 %v746
    %v2603 = vunpack.c.h.b16 %v746
    %v2604 = vunpack.c.l.b16 %v747
    %v2605 = vunpack.c.h.b16 %v747
    %v2606 = vunpack.c.l.b16 %v748
    %v2607 = vunpack.c.h.b16 %v748
    %v2608 = vunpack.c.l.b16 %v749
    %v2609 = vunpack.c.h.b16 %v749
    %v2610 = vunpack.c.l.b16 %v750
    %v2611 = vunpack.c.h.b16 %v750
    %v2612 = vunpack.c.l.b16 %v751
    %v2613 = vunpack.c.h.b16 %v751
    %v2614 = vunpack.c.l.b16 %v752
    %v2615 = vunpack.c.h.b16 %v752
    %v2616 = vunpack.c.l.b16 %v753
    %v2617 = vunpack.c.h.b16 %v753
    %v2618 = vunpack.c.l.b16 %v754
    %v2619 = vunpack.c.h.b16 %v754
    %v2620 = vunpack.c.l.b16 %v755
    %v2621 = vunpack.c.h.b16 %v755
    %v2622 = vunpack.c.l.b16 %v756
    %v2623 = vunpack.c.h.b16 %v756
    %v2624 = vunpack.c.l.b16 %v757
    %v2625 = vunpack.c.h.b16 %v757
    %v2626 = vunpack.c.l.b16 %v758
    %v2627 = vunpack.c.h.b16 %v758
    %v2628 = vunpack.c.l.b16 %v759
    %v2629 = vunpack.c.h.b16 %v759
    %v2630 = vunpack.c.l.b16 %v760
    %v2631 = vunpack.c.h.b16 %v760
    %v2632 = vunpack.c.l.b16 %v761
    %v2633 = vunpack.c.h.b16 %v761
    %v2634 = vunpack.c.l.b16 %v762
    %v2635 = vunpack.c.h.b16 %v762
    %v2636 = vunpack.c.l.b16 %v763
    %v2637 = vunpack.c.h.b16 %v763
    %v2638 = vunpack.c.l.b16 %v764
    %v2639 = vunpack.c.h.b16 %v764
    %v2640 = vunpack.c.l.b16 %v765
    %v2641 = vunpack.c.h.b16 %v765
    %v2642 = vunpack.c.l.b16 %v766
    %v2643 = vunpack.c.h.b16 %v766
    %v2644 = vunpack.c.l.b16 %v767
    %v2645 = vunpack.c.h.b16 %v767
    %v2646 = vunpack.c.l.b16 %v768
    %v2647 = vunpack.c.h.b16 %v768
    %v2648 = vunpack.c.l.b16 %v769
    %v2649 = vunpack.c.h.b16 %v769
    %v2650 = vunpack.c.l.b16 %v770
    %v2651 = vunpack.c.h.b16 %v770
    %v2652 = vunpack.c.l.b16 %v771
    %v2653 = vunpack.c.h.b16 %v771
    %v2654 = vunpack.c.l.b16 %v772
    %v2655 = vunpack.c.h.b16 %v772
    %v2656 = vunpack.c.l.b16 %v773
    %v2657 = vunpack.c.h.b16 %v773
    %v2658 = vunpack.c.l.b16 %v774
    %v2659 = vunpack.c.h.b16 %v774
    %v2660 = vunpack.c.l.b16 %v775
    %v2661 = vunpack.c.h.b16 %v775
    %v2662 = vunpack.c.l.b16 %v776
    %v2663 = vunpack.c.h.b16 %v776
    %v2664 = vunpack.c.l.b16 %v777
    %v2665 = vunpack.c.h.b16 %v777
    %v2666 = vunpack.c.l.b16 %v778
    %v2667 = vunpack.c.h.b16 %v778
    %v2668 = vunpack.c.l.b16 %v779
    %v2669 = vunpack.c.h.b16 %v779
    %v2670 = vunpack.c.l.b16 %v780
    %v2671 = vunpack.c.h.b16 %v780
    %v2672 = vunpack.c.l.b16 %v781
    %v2673 = vunpack.c.h.b16 %v781
    %v2674 = vunpack.c.l.b16 %v782
    %v2675 = vunpack.c.h.b16 %v782
    %v2676 = vunpack.c.l.b16 %v783
    %v2677 = vunpack.c.h.b16 %v783
    %v2678 = vunpack.c.l.b16 %v784
    %v2679 = vunpack.c.h.b16 %v784
    %v2680 = vunpack.c.l.b16 %v785
    %v2681 = vunpack.c.h.b16 %v785
    %v2682 = vunpack.c.l.b16 %v786
    %v2683 = vunpack.c.h.b16 %v786
    %v2684 = vunpack.c.l.b16 %v787
    %v2685 = vunpack.c.h.b16 %v787
    %v2686 = vunpack.c.l.b16 %v788
    %v2687 = vunpack.c.h.b16 %v788
    %v2688 = vunpack.c.l.b16 %v789
    %v2689 = vunpack.c.h.b16 %v789
    %v2690 = vunpack.c.l.b16 %v790
    %v2691 = vunpack.c.h.b16 %v790
    %v2692 = vunpack.c.l.b16 %v791
    %v2693 = vunpack.c.h.b16 %v791
    %v2694 = vunpack.c.l.b16 %v792
    %v2695 = vunpack.c.h.b16 %v792
    %v2696 = vunpack.c.l.b16 %v793
    %v2697 = vunpack.c.h.b16 %v793
    %v2698 = vunpack.c.l.b16 %v794
    %v2699 = vunpack.c.h.b16 %v794
    %v2700 = vunpack.c.l.b16 %v795
    %v2701 = vunpack.c.h.b16 %v795
    %v2702 = vunpack.c.l.b16 %v796
    %v2703 = vunpack.c.h.b16 %v796
    %v2704 = vunpack.c.l.b16 %v797
    %v2705 = vunpack.c.h.b16 %v797
    %v2706 = vunpack.c.l.b16 %v798
    %v2707 = vunpack.c.h.b16 %v798
    %v2708 = vunpack.c.l.b16 %v799
    %v2709 = vunpack.c.h.b16 %v799
    %v2710 = vunpack.c.l.b16 %v800
    %v2711 = vunpack.c.h.b16 %v800
    %v2712 = vunpack.c.l.b16 %v801
    %v2713 = vunpack.c.h.b16 %v801
    %v2714 = vunpack.c.l.b16 %v802
    %v2715 = vunpack.c.h.b16 %v802
    %v2716 = vunpack.c.l.b16 %v803
    %v2717 = vunpack.c.h.b16 %v803
    %v2718 = vunpack.c.l.b16 %v804
    %v2719 = vunpack.c.h.b16 %v804
    %v2720 = vunpack.c.l.b16 %v805
    %v2721 = vunpack.c.h.b16 %v805
    %v2722 = vunpack.c.l.b16 %v806
    %v2723 = vunpack.c.h.b16 %v806
    %v2724 = vunpack.c.l.b16 %v807
    %v2725 = vunpack.c.h.b16 %v807
    %v2726 = vunpack.c.l.b16 %v808
    %v2727 = vunpack.c.h.b16 %v808
    %v2728 = vunpack.c.l.b16 %v809
    %v2729 = vunpack.c.h.b16 %v809
    %v2730 = vpack.c.b16 %v1470, %v1450
    %v2731 = vpack.c.b16 %v1471, %v1451
    %v2732 = vpack.c.b16 %v1472, %v1452
    %v2733 = vpack.c.b16 %v1473, %v1453
    %v2734 = vpack.c.b16 %v1474, %v1454
    %v2735 = vpack.c.b16 %v1475, %v1455
    %v2736 = vpack.c.b16 %v1476, %v1456
    %v2737 = vpack.c.b16 %v1477, %v1457
    %v2738 = vpack.c.b16 %v1478, %v1458
    %v2739 = vpack.c.b16 %v1479, %v1459
    %v2740 = vpack.c.b16 %v1480, %v1460
    %v2741 = vpack.c.b16 %v1481, %v1461
    %v2742 = vpack.c.b16 %v1482, %v1462
    %v2743 = vpack.c.b16 %v1483, %v1463
    %v2744 = vpack.c.b16 %v1484, %v1464
    %v2745 = vpack.c.b16 %v1485, %v1465
    %v2746 = vpack.c.b16 %v1486, %v1466
    %v2747 = vpack.c.b16 %v1487, %v1467
    %v2748 = vpack.c.b16 %v1488, %v1468
    %v2749 = vpack.c.b16 %v1489, %v1469
    %v2750 = vpack.c.b16 %v1510, %v1490
    %v2751 = vpack.c.b16 %v1511, %v1491
    %v2752 = vpack.c.b16 %v1512, %v1492
    %v2753 = vpack.c.b16 %v1513, %v1493
    %v2754 = vpack.c.b16 %v1514, %v1494
    %v2755 = vpack.c.b16 %v1515, %v1495
    %v2756 = vpack.c.b16 %v1516, %v1496
    %v2757 = vpack.c.b16 %v1517, %v1497
    %v2758 = vpack.c.b16 %v1518, %v1498
    %v2759 = vpack.c.b16 %v1519, %v1499
    %v2760 = vpack.c.b16 %v1520, %v1500
    %v2761 = vpack.c.b16 %v1521, %v1501
    %v2762 = vpack.c.b16 %v1522, %v1502
    %v2763 = vpack.c.b16 %v1523, %v1503
    %v2764 = vpack.c.b16 %v1524, %v1504
    %v2765 = vpack.c.b16 %v1525, %v1505
    %v2766 = vpack.c.b16 %v1526, %v1506
    %v2767 = vpack.c.b16 %v1527, %v1507
    %v2768 = vpack.c.b16 %v1528, %v1508
    %v2769 = vpack.c.b16 %v1529, %v1509
    %v2770 = vpack.c.b16 %v1550, %v1530
    %v2771 = vpack.c.b16 %v1551, %v1531
    %v2772 = vpack.c.b16 %v1552, %v1532
    %v2773 = vpack.c.b16 %v1553, %v1533
    %v2774 = vpack.c.b16 %v1554, %v1534
    %v2775 = vpack.c.b16 %v1555, %v1535
    %v2776 = vpack.c.b16 %v1556, %v1536
    %v2777 = vpack.c.b16 %v1557, %v1537
    %v2778 = vpack.c.b16 %v1558, %v1538
    %v2779 = vpack.c.b16 %v1559, %v1539
    %v2780 = vpack.c.b16 %v1560, %v1540
    %v2781 = vpack.c.b16 %v1561, %v1541
    %v2782 = vpack.c.b16 %v1562, %v1542
    %v2783 = vpack.c.b16 %v1563, %v1543
    %v2784 = vpack.c.b16 %v1564, %v1544
    %v2785 = vpack.c.b16 %v1565, %v1545
    %v2786 = vpack.c.b16 %v1566, %v1546
    %v2787 = vpack.c.b16 %v1567, %v1547
    %v2788 = vpack.c.b16 %v1568, %v1548
    %v2789 = vpack.c.b16 %v1569, %v1549
    %v2790 = vpack.c.b16 %v1590, %v1570
    %v2791 = vpack.c.b16 %v1591, %v1571
    %v2792 = vpack.c.b16 %v1592, %v1572
    %v2793 = vpack.c.b16 %v1593, %v1573
    %v2794 = vpack.c.b16 %v1594, %v1574
    %v2795 = vpack.c.b16 %v1595, %v1575
    %v2796 = vpack.c.b16 %v1596, %v1576
    %v2797 = vpack.c.b16 %v1597, %v1577
    %v2798 = vpack.c.b16 %v1598, %v1578
    %v2799 = vpack.c.b16 %v1599, %v1579
    %v2800 = vpack.c.b16 %v1600, %v1580
    %v2801 = vpack.c.b16 %v1601, %v1581
    %v2802 = vpack.c.b16 %v1602, %v1582
    %v2803 = vpack.c.b16 %v1603, %v1583
    %v2804 = vpack.c.b16 %v1604, %v1584
    %v2805 = vpack.c.b16 %v1605, %v1585
    %v2806 = vpack.c.b16 %v1606, %v1586
    %v2807 = vpack.c.b16 %v1607, %v1587
    %v2808 = vpack.c.b16 %v1608, %v1588
    %v2809 = vpack.c.b16 %v1609, %v1589
    %v2810 = vpack.c.b16 %v1630, %v1610
    %v2811 = vpack.c.b16 %v1631, %v1611
    %v2812 = vpack.c.b16 %v1632, %v1612
    %v2813 = vpack.c.b16 %v1633, %v1613
    %v2814 = vpack.c.b16 %v1634, %v1614
    %v2815 = vpack.c.b16 %v1635, %v1615
    %v2816 = vpack.c.b16 %v1636, %v1616
    %v2817 = vpack.c.b16 %v1637, %v1617
    %v2818 = vpack.c.b16 %v1638, %v1618
    %v2819 = vpack.c.b16 %v1639, %v1619
    %v2820 = vpack.c.b16 %v1640, %v1620
    %v2821 = vpack.c.b16 %v1641, %v1621
    %v2822 = vpack.c.b16 %v1642, %v1622
    %v2823 = vpack.c.b16 %v1643, %v1623
    %v2824 = vpack.c.b16 %v1644, %v1624
    %v2825 = vpack.c.b16 %v1645, %v1625
    %v2826 = vpack.c.b16 %v1646, %v1626
    %v2827 = vpack.c.b16 %v1647, %v1627
    %v2828 = vpack.c.b16 %v1648, %v1628
    %v2829 = vpack.c.b16 %v1649, %v1629
    %v2830 = vpack.c.b16 %v1670, %v1650
    %v2831 = vpack.c.b16 %v1671, %v1651
    %v2832 = vpack.c.b16 %v1672, %v1652
    %v2833 = vpack.c.b16 %v1673, %v1653
    %v2834 = vpack.c.b16 %v1674, %v1654
    %v2835 = vpack.c.b16 %v1675, %v1655
    %v2836 = vpack.c.b16 %v1676, %v1656
    %v2837 = vpack.c.b16 %v1677, %v1657
    %v2838 = vpack.c.b16 %v1678, %v1658
    %v2839 = vpack.c.b16 %v1679, %v1659
    %v2840 = vpack.c.b16 %v1680, %v1660
    %v2841 = vpack.c.b16 %v1681, %v1661
    %v2842 = vpack.c.b16 %v1682, %v1662
    %v2843 = vpack.c.b16 %v1683, %v1663
    %v2844 = vpack.c.b16 %v1684, %v1664
    %v2845 = vpack.c.b16 %v1685, %v1665
    %v2846 = vpack.c.b16 %v1686, %v1666
    %v2847 = vpack.c.b16 %v1687, %v1667
    %v2848 = vpack.c.b16 %v1688, %v1668
    %v2849 = vpack.c.b16 %v1689, %v1669
    %v2850 = vpack.c.b16 %v1710, %v1690
    %v2851 = vpack.c.b16 %v1711, %v1691
    %v2852 = vpack.c.b16 %v1712, %v1692
    %v2853 = vpack.c.b16 %v1713, %v1693
    %v2854 = vpack.c.b16 %v1714, %v1694
    %v2855 = vpack.c.b16 %v1715, %v1695
    %v2856 = vpack.c.b16 %v1716, %v1696
    %v2857 = vpack.c.b16 %v1717, %v1697
    %v2858 = vpack.c.b16 %v1718, %v1698
    %v2859 = vpack.c.b16 %v1719, %v1699
    %v2860 = vpack.c.b16 %v1720, %v1700
    %v2861 = vpack.c.b16 %v1721, %v1701
    %v2862 = vpack.c.b16 %v1722, %v1702
    %v2863 = vpack.c.b16 %v1723, %v1703
    %v2864 = vpack.c.b16 %v1724, %v1704
    %v2865 = vpack.c.b16 %v1725, %v1705
    %v2866 = vpack.c.b16 %v1726, %v1706
    %v2867 = vpack.c.b16 %v1727, %v1707
    %v2868 = vpack.c.b16 %v1728, %v1708
    %v2869 = vpack.c.b16 %v1729, %v1709
    %v2870 = vpack.c.b16 %v1750, %v1730
    %v2871 = vpack.c.b16 %v1751, %v1731
    %v2872 = vpack.c.b16 %v1752, %v1732
    %v2873 = vpack.c.b16 %v1753, %v1733
    %v2874 = vpack.c.b16 %v1754, %v1734
    %v2875 = vpack.c.b16 %v1755, %v1735
    %v2876 = vpack.c.b16 %v1756, %v1736
    %v2877 = vpack.c.b16 %v1757, %v1737
    %v2878 = vpack.c.b16 %v1758, %v1738
    %v2879 = vpack.c.b16 %v1759, %v1739
    %v2880 = vpack.c.b16 %v1760, %v1740
    %v2881 = vpack.c.b16 %v1761, %v1741
    %v2882 = vpack.c.b16 %v1762, %v1742
    %v2883 = vpack.c.b16 %v1763, %v1743
    %v2884 = vpack.c.b16 %v1764, %v1744
    %v2885 = vpack.c.b16 %v1765, %v1745
    %v2886 = vpack.c.b16 %v1766, %v1746
    %v2887 = vpack.c.b16 %v1767, %v1747
    %v2888 = vpack.c.b16 %v1768, %v1748
    %v2889 = vpack.c.b16 %v1769, %v1749
    %v2890 = vpack.c.b16 %v1790, %v1770
    %v2891 = vpack.c.b16 %v1791, %v1771
    %v2892 = vpack.c.b16 %v1792, %v1772
    %v2893 = vpack.c.b16 %v1793, %v1773
    %v2894 = vpack.c.b16 %v1794, %v1774
    %v2895 = vpack.c.b16 %v1795, %v1775
    %v2896 = vpack.c.b16 %v1796, %v1776
    %v2897 = vpack.c.b16 %v1797, %v1777
    %v2898 = vpack.c.b16 %v1798, %v1778
    %v2899 = vpack.c.b16 %v1799, %v1779
    %v2900 = vpack.c.b16 %v1800, %v1780
    %v2901 = vpack.c.b16 %v1801, %v1781
    %v2902 = vpack.c.b16 %v1802, %v1782
    %v2903 = vpack.c.b16 %v1803, %v1783
    %v2904 = vpack.c.b16 %v1804, %v1784
    %v2905 = vpack.c.b16 %v1805, %v1785
    %v2906 = vpack.c.b16 %v1806, %v1786
    %v2907 = vpack.c.b16 %v1807, %v1787
    %v2908 = vpack.c.b16 %v1808, %v1788
    %v2909 = vpack.c.b16 %v1809, %v1789
    %v2910 = vpack.c.b16 %v1830, %v1810
    %v2911 = vpack.c.b16 %v1831, %v1811
    %v2912 = vpack.c.b16 %v1832, %v1812
    %v2913 = vpack.c.b16 %v1833, %v1813
    %v2914 = vpack.c.b16 %v1834, %v1814
    %v2915 = vpack.c.b16 %v1835, %v1815
    %v2916 = vpack.c.b16 %v1836, %v1816
    %v2917 = vpack.c.b16 %v1837, %v1817
    %v2918 = vpack.c.b16 %v1838, %v1818
    %v2919 = vpack.c.b16 %v1839, %v1819
    %v2920 = vpack.c.b16 %v1840, %v1820
    %v2921 = vpack.c.b16 %v1841, %v1821
    %v2922 = vpack.c.b16 %v1842, %v1822
    %v2923 = vpack.c.b16 %v1843, %v1823
    %v2924 = vpack.c.b16 %v1844, %v1824
    %v2925 = vpack.c.b16 %v1845, %v1825
    %v2926 = vpack.c.b16 %v1846, %v1826
    %v2927 = vpack.c.b16 %v1847, %v1827
    %v2928 = vpack.c.b16 %v1848, %v1828
    %v2929 = vpack.c.b16 %v1849, %v1829
    %v2930 = vpack.c.b16 %v1870, %v1850
    %v2931 = vpack.c.b16 %v1871, %v1851
    %v2932 = vpack.c.b16 %v1872, %v1852
    %v2933 = vpack.c.b16 %v1873, %v1853
    %v2934 = vpack.c.b16 %v1874, %v1854
    %v2935 = vpack.c.b16 %v1875, %v1855
    %v2936 = vpack.c.b16 %v1876, %v1856
    %v2937 = vpack.c.b16 %v1877, %v1857
    %v2938 = vpack.c.b16 %v1878, %v1858
    %v2939 = vpack.c.b16 %v1879, %v1859
    %v2940 = vpack.c.b16 %v1880, %v1860
    %v2941 = vpack.c.b16 %v1881, %v1861
    %v2942 = vpack.c.b16 %v1882, %v1862
    %v2943 = vpack.c.b16 %v1883, %v1863
    %v2944 = vpack.c.b16 %v1884, %v1864
    %v2945 = vpack.c.b16 %v1885, %v1865
    %v2946 = vpack.c.b16 %v1886, %v1866
    %v2947 = vpack.c.b16 %v1887, %v1867
    %v2948 = vpack.c.b16 %v1888, %v1868
    %v2949 = vpack.c.b16 %v1889, %v1869
    %v2950 = vpack.c.b16 %v1910, %v1890
    %v2951 = vpack.c.b16 %v1911, %v1891
    %v2952 = vpack.c.b16 %v1912, %v1892
    %v2953 = vpack.c.b16 %v1913, %v1893
    %v2954 = vpack.c.b16 %v1914, %v1894
    %v2955 = vpack.c.b16 %v1915, %v1895
    %v2956 = vpack.c.b16 %v1916, %v1896
    %v2957 = vpack.c.b16 %v1917, %v1897
    %v2958 = vpack.c.b16 %v1918, %v1898
    %v2959 = vpack.c.b16 %v1919, %v1899
    %v2960 = vpack.c.b16 %v1920, %v1900
    %v2961 = vpack.c.b16 %v1921, %v1901
    %v2962 = vpack.c.b16 %v1922, %v1902
    %v2963 = vpack.c.b16 %v1923, %v1903
    %v2964 = vpack.c.b16 %v1924, %v1904
    %v2965 = vpack.c.b16 %v1925, %v1905
    %v2966 = vpack.c.b16 %v1926, %v1906
    %v2967 = vpack.c.b16 %v1927, %v1907
    %v2968 = vpack.c.b16 %v1928, %v1908
    %v2969 = vpack.c.b16 %v1929, %v1909
    %v2970 = vpack.c.b16 %v1950, %v1930
    %v2971 = vpack.c.b16 %v1951, %v1931
    %v2972 = vpack.c.b16 %v1952, %v1932
    %v2973 = vpack.c.b16 %v1953, %v1933
    %v2974 = vpack.c.b16 %v1954, %v1934
    %v2975 = vpack.c.b16 %v1955, %v1935
    %v2976 = vpack.c.b16 %v1956, %v1936
    %v2977 = vpack.c.b16 %v1957, %v1937
    %v2978 = vpack.c.b16 %v1958, %v1938
    %v2979 = vpack.c.b16 %v1959, %v1939
    %v2980 = vpack.c.b16 %v1960, %v1940
    %v2981 = vpack.c.b16 %v1961, %v1941
    %v2982 = vpack.c.b16 %v1962, %v1942
    %v2983 = vpack.c.b16 %v1963, %v1943
    %v2984 = vpack.c.b16 %v1964, %v1944
    %v2985 = vpack.c.b16 %v1965, %v1945
    %v2986 = vpack.c.b16 %v1966, %v1946
    %v2987 = vpack.c.b16 %v1967, %v1947
    %v2988 = vpack.c.b16 %v1968, %v1948
    %v2989 = vpack.c.b16 %v1969, %v1949
    %v2990 = vpack.c.b16 %v1990, %v1970
    %v2991 = vpack.c.b16 %v1991, %v1971
    %v2992 = vpack.c.b16 %v1992, %v1972
    %v2993 = vpack.c.b16 %v1993, %v1973
    %v2994 = vpack.c.b16 %v1994, %v1974
    %v2995 = vpack.c.b16 %v1995, %v1975
    %v2996 = vpack.c.b16 %v1996, %v1976
    %v2997 = vpack.c.b16 %v1997, %v1977
    %v2998 = vpack.c.b16 %v1998, %v1978
    %v2999 = vpack.c.b16 %v1999, %v1979
    %v3000 = vpack.c.b16 %v2000, %v1980
    %v3001 = vpack.c.b16 %v2001, %v1981
    %v3002 = vpack.c.b16 %v2002, %v1982
    %v3003 = vpack.c.b16 %v2003, %v1983
    %v3004 = vpack.c.b16 %v2004, %v1984
    %v3005 = vpack.c.b16 %v2005, %v1985
    %v3006 = vpack.c.b16 %v2006, %v1986
    %v3007 = vpack.c.b16 %v2007, %v1987
    %v3008 = vpack.c.b16 %v2008, %v1988
    %v3009 = vpack.c.b16 %v2009, %v1989
    %v3010 = vpack.c.b16 %v2030, %v2010
    %v3011 = vpack.c.b16 %v2031, %v2011
    %v3012 = vpack.c.b16 %v2032, %v2012
    %v3013 = vpack.c.b16 %v2033, %v2013
    %v3014 = vpack.c.b16 %v2034, %v2014
    %v3015 = vpack.c.b16 %v2035, %v2015
    %v3016 = vpack.c.b16 %v2036, %v2016
    %v3017 = vpack.c.b16 %v2037, %v2017
    %v3018 = vpack.c.b16 %v2038, %v2018
    %v3019 = vpack.c.b16 %v2039, %v2019
    %v3020 = vpack.c.b16 %v2040, %v2020
    %v3021 = vpack.c.b16 %v2041, %v2021
    %v3022 = vpack.c.b16 %v2042, %v2022
    %v3023 = vpack.c.b16 %v2043, %v2023
    %v3024 = vpack.c.b16 %v2044, %v2024
    %v3025 = vpack.c.b16 %v2045, %v2025
    %v3026 = vpack.c.b16 %v2046, %v2026
    %v3027 = vpack.c.b16 %v2047, %v2027
    %v3028 = vpack.c.b16 %v2048, %v2028
    %v3029 = vpack.c.b16 %v2049, %v2029
    %v3030 = vpack.c.b16 %v2070, %v2050
    %v3031 = vpack.c.b16 %v2071, %v2051
    %v3032 = vpack.c.b16 %v2072, %v2052
    %v3033 = vpack.c.b16 %v2073, %v2053
    %v3034 = vpack.c.b16 %v2074, %v2054
    %v3035 = vpack.c.b16 %v2075, %v2055
    %v3036 = vpack.c.b16 %v2076, %v2056
    %v3037 = vpack.c.b16 %v2077, %v2057
    %v3038 = vpack.c.b16 %v2078, %v2058
    %v3039 = vpack.c.b16 %v2079, %v2059
    %v3040 = vpack.c.b16 %v2080, %v2060
    %v3041 = vpack.c.b16 %v2081, %v2061
    %v3042 = vpack.c.b16 %v2082, %v2062
    %v3043 = vpack.c.b16 %v2083, %v2063
    %v3044 = vpack.c.b16 %v2084, %v2064
    %v3045 = vpack.c.b16 %v2085, %v2065
    %v3046 = vpack.c.b16 %v2086, %v2066
    %v3047 = vpack.c.b16 %v2087, %v2067
    %v3048 = vpack.c.b16 %v2088, %v2068
    %v3049 = vpack.c.b16 %v2089, %v2069
    %v3050 = vpack.c.b16 %v2110, %v2090
    %v3051 = vpack.c.b16 %v2111, %v2091
    %v3052 = vpack.c.b16 %v2112, %v2092
    %v3053 = vpack.c.b16 %v2113, %v2093
    %v3054 = vpack.c.b16 %v2114, %v2094
    %v3055 = vpack.c.b16 %v2115, %v2095
    %v3056 = vpack.c.b16 %v2116, %v2096
    %v3057 = vpack.c.b16 %v2117, %v2097
    %v3058 = vpack.c.b16 %v2118, %v2098
    %v3059 = vpack.c.b16 %v2119, %v2099
    %v3060 = vpack.c.b16 %v2120, %v2100
    %v3061 = vpack.c.b16 %v2121, %v2101
    %v3062 = vpack.c.b16 %v2122, %v2102
    %v3063 = vpack.c.b16 %v2123, %v2103
    %v3064 = vpack.c.b16 %v2124, %v2104
    %v3065 = vpack.c.b16 %v2125, %v2105
    %v3066 = vpack.c.b16 %v2126, %v2106
    %v3067 = vpack.c.b16 %v2127, %v2107
    %v3068 = vpack.c.b16 %v2128, %v2108
    %v3069 = vpack.c.b16 %v2129, %v2109
    %v3070 = vpack.c.b16 %v2150, %v2130
    %v3071 = vpack.c.b16 %v2151, %v2131
    %v3072 = vpack.c.b16 %v2152, %v2132
    %v3073 = vpack.c.b16 %v2153, %v2133
    %v3074 = vpack.c.b16 %v2154, %v2134
    %v3075 = vpack.c.b16 %v2155, %v2135
    %v3076 = vpack.c.b16 %v2156, %v2136
    %v3077 = vpack.c.b16 %v2157, %v2137
    %v3078 = vpack.c.b16 %v2158, %v2138
    %v3079 = vpack.c.b16 %v2159, %v2139
    %v3080 = vpack.c.b16 %v2160, %v2140
    %v3081 = vpack.c.b16 %v2161, %v2141
    %v3082 = vpack.c.b16 %v2162, %v2142
    %v3083 = vpack.c.b16 %v2163, %v2143
    %v3084 = vpack.c.b16 %v2164, %v2144
    %v3085 = vpack.c.b16 %v2165, %v2145
    %v3086 = vpack.c.b16 %v2166, %v2146
    %v3087 = vpack.c.b16 %v2167, %v2147
    %v3088 = vpack.c.b16 %v2168, %v2148
    %v3089 = vpack.c.b16 %v2169, %v2149
    %v3090 = vpack.c.b16 %v2190, %v2170
    %v3091 = vpack.c.b16 %v2191, %v2171
    %v3092 = vpack.c.b16 %v2192, %v2172
    %v3093 = vpack.c.b16 %v2193, %v2173
    %v3094 = vpack.c.b16 %v2194, %v2174
    %v3095 = vpack.c.b16 %v2195, %v2175
    %v3096 = vpack.c.b16 %v2196, %v2176
    %v3097 = vpack.c.b16 %v2197, %v2177
    %v3098 = vpack.c.b16 %v2198, %v2178
    %v3099 = vpack.c.b16 %v2199, %v2179
    %v3100 = vpack.c.b16 %v2200, %v2180
    %v3101 = vpack.c.b16 %v2201, %v2181
    %v3102 = vpack.c.b16 %v2202, %v2182
    %v3103 = vpack.c.b16 %v2203, %v2183
    %v3104 = vpack.c.b16 %v2204, %v2184
    %v3105 = vpack.c.b16 %v2205, %v2185
    %v3106 = vpack.c.b16 %v2206, %v2186
    %v3107 = vpack.c.b16 %v2207, %v2187
    %v3108 = vpack.c.b16 %v2208, %v2188
    %v3109 = vpack.c.b16 %v2209, %v2189
    %v3110 = vpack.c.b16 %v2230, %v2210
    %v3111 = vpack.c.b16 %v2231, %v2211
    %v3112 = vpack.c.b16 %v2232, %v2212
    %v3113 = vpack.c.b16 %v2233, %v2213
    %v3114 = vpack.c.b16 %v2234, %v2214
    %v3115 = vpack.c.b16 %v2235, %v2215
    %v3116 = vpack.c.b16 %v2236, %v2216
    %v3117 = vpack.c.b16 %v2237, %v2217
    %v3118 = vpack.c.b16 %v2238, %v2218
    %v3119 = vpack.c.b16 %v2239, %v2219
    %v3120 = vpack.c.b16 %v2240, %v2220
    %v3121 = vpack.c.b16 %v2241, %v2221
    %v3122 = vpack.c.b16 %v2242, %v2222
    %v3123 = vpack.c.b16 %v2243, %v2223
    %v3124 = vpack.c.b16 %v2244, %v2224
    %v3125 = vpack.c.b16 %v2245, %v2225
    %v3126 = vpack.c.b16 %v2246, %v2226
    %v3127 = vpack.c.b16 %v2247, %v2227
    %v3128 = vpack.c.b16 %v2248, %v2228
    %v3129 = vpack.c.b16 %v2249, %v2229
    %v3130 = vpack.c.b16 %v2270, %v2250
    %v3131 = vpack.c.b16 %v2271, %v2251
    %v3132 = vpack.c.b16 %v2272, %v2252
    %v3133 = vpack.c.b16 %v2273, %v2253
    %v3134 = vpack.c.b16 %v2274, %v2254
    %v3135 = vpack.c.b16 %v2275, %v2255
    %v3136 = vpack.c.b16 %v2276, %v2256
    %v3137 = vpack.c.b16 %v2277, %v2257
    %v3138 = vpack.c.b16 %v2278, %v2258
    %v3139 = vpack.c.b16 %v2279, %v2259
    %v3140 = vpack.c.b16 %v2280, %v2260
    %v3141 = vpack.c.b16 %v2281, %v2261
    %v3142 = vpack.c.b16 %v2282, %v2262
    %v3143 = vpack.c.b16 %v2283, %v2263
    %v3144 = vpack.c.b16 %v2284, %v2264
    %v3145 = vpack.c.b16 %v2285, %v2265
    %v3146 = vpack.c.b16 %v2286, %v2266
    %v3147 = vpack.c.b16 %v2287, %v2267
    %v3148 = vpack.c.b16 %v2288, %v2268
    %v3149 = vpack.c.b16 %v2289, %v2269
    %v3150 = vpack.c.b16 %v2310, %v2290
    %v3151 = vpack.c.b16 %v2311, %v2291
    %v3152 = vpack.c.b16 %v2312, %v2292
    %v3153 = vpack.c.b16 %v2313, %v2293
    %v3154 = vpack.c.b16 %v2314, %v2294
    %v3155 = vpack.c.b16 %v2315, %v2295
    %v3156 = vpack.c.b16 %v2316, %v2296
    %v3157 = vpack.c.b16 %v2317, %v2297
    %v3158 = vpack.c.b16 %v2318, %v2298
    %v3159 = vpack.c.b16 %v2319, %v2299
    %v3160 = vpack.c.b16 %v2320, %v2300
    %v3161 = vpack.c.b16 %v2321, %v2301
    %v3162 = vpack.c.b16 %v2322, %v2302
    %v3163 = vpack.c.b16 %v2323, %v2303
    %v3164 = vpack.c.b16 %v2324, %v2304
    %v3165 = vpack.c.b16 %v2325, %v2305
    %v3166 = vpack.c.b16 %v2326, %v2306
    %v3167 = vpack.c.b16 %v2327, %v2307
    %v3168 = vpack.c.b16 %v2328, %v2308
    %v3169 = vpack.c.b16 %v2329, %v2309
    %v3170 = vpack.c.b16 %v2350, %v2330
    %v3171 = vpack.c.b16 %v2351, %v2331
    %v3172 = vpack.c.b16 %v2352, %v2332
    %v3173 = vpack.c.b16 %v2353, %v2333
    %v3174 = vpack.c.b16 %v2354, %v2334
    %v3175 = vpack.c.b16 %v2355, %v2335
    %v3176 = vpack.c.b16 %v2356, %v2336
    %v3177 = vpack.c.b16 %v2357, %v2337
    %v3178 = vpack.c.b16 %v2358, %v2338
    %v3179 = vpack.c.b16 %v2359, %v2339
    %v3180 = vpack.c.b16 %v2360, %v2340
    %v3181 = vpack.c.b16 %v2361, %v2341
    %v3182 = vpack.c.b16 %v2362, %v2342
    %v3183 = vpack.c.b16 %v2363, %v2343
    %v3184 = vpack.c.b16 %v2364, %v2344
    %v3185 = vpack.c.b16 %v2365, %v2345
    %v3186 = vpack.c.b16 %v2366, %v2346
    %v3187 = vpack.c.b16 %v2367, %v2347
    %v3188 = vpack.c.b16 %v2368, %v2348
    %v3189 = vpack.c.b16 %v2369, %v2349
    %v3190 = vpack.c.b16 %v2390, %v2370
    %v3191 = vpack.c.b16 %v2391, %v2371
    %v3192 = vpack.c.b16 %v2392, %v2372
    %v3193 = vpack.c.b16 %v2393, %v2373
    %v3194 = vpack.c.b16 %v2394, %v2374
    %v3195 = vpack.c.b16 %v2395, %v2375
    %v3196 = vpack.c.b16 %v2396, %v2376
    %v3197 = vpack.c.b16 %v2397, %v2377
    %v3198 = vpack.c.b16 %v2398, %v2378
    %v3199 = vpack.c.b16 %v2399, %v2379
    %v3200 = vpack.c.b16 %v2400, %v2380
    %v3201 = vpack.c.b16 %v2401, %v2381
    %v3202 = vpack.c.b16 %v2402, %v2382
    %v3203 = vpack.c.b16 %v2403, %v2383
    %v3204 = vpack.c.b16 %v2404, %v2384
    %v3205 = vpack.c.b16 %v2405, %v2385
    %v3206 = vpack.c.b16 %v2406, %v2386
    %v3207 = vpack.c.b16 %v2407, %v2387
    %v3208 = vpack.c.b16 %v2408, %v2388
    %v3209 = vpack.c.b16 %v2409, %v2389
    %v3210 = vpack.c.b16 %v2430, %v2410
    %v3211 = vpack.c.b16 %v2431, %v2411
    %v3212 = vpack.c.b16 %v2432, %v2412
    %v3213 = vpack.c.b16 %v2433, %v2413
    %v3214 = vpack.c.b16 %v2434, %v2414
    %v3215 = vpack.c.b16 %v2435, %v2415
    %v3216 = vpack.c.b16 %v2436, %v2416
    %v3217 = vpack.c.b16 %v2437, %v2417
    %v3218 = vpack.c.b16 %v2438, %v2418
    %v3219 = vpack.c.b16 %v2439, %v2419
    %v3220 = vpack.c.b16 %v2440, %v2420
    %v3221 = vpack.c.b16 %v2441, %v2421
    %v3222 = vpack.c.b16 %v2442, %v2422
    %v3223 = vpack.c.b16 %v2443, %v2423
    %v3224 = vpack.c.b16 %v2444, %v2424
    %v3225 = vpack.c.b16 %v2445, %v2425
    %v3226 = vpack.c.b16 %v2446, %v2426
    %v3227 = vpack.c.b16 %v2447, %v2427
    %v3228 = vpack.c.b16 %v2448, %v2428
    %v3229 = vpack.c.b16 %v2449, %v2429
    %v3230 = vpack.c.b16 %v2470, %v2450
    %v3231 = vpack.c.b16 %v2471, %v2451
    %v3232 = vpack.c.b16 %v2472, %v2452
    %v3233 = vpack.c.b16 %v2473, %v2453
    %v3234 = vpack.c.b16 %v2474, %v2454
    %v3235 = vpack.c.b16 %v2475, %v2455
    %v3236 = vpack.c.b16 %v2476, %v2456
    %v3237 = vpack.c.b16 %v2477, %v2457
    %v3238 = vpack.c.b16 %v2478, %v2458
    %v3239 = vpack.c.b16 %v2479, %v2459
    %v3240 = vpack.c.b16 %v2480, %v2460
    %v3241 = vpack.c.b16 %v2481, %v2461
    %v3242 = vpack.c.b16 %v2482, %v2462
    %v3243 = vpack.c.b16 %v2483, %v2463
    %v3244 = vpack.c.b16 %v2484, %v2464
    %v3245 = vpack.c.b16 %v2485, %v2465
    %v3246 = vpack.c.b16 %v2486, %v2466
    %v3247 = vpack.c.b16 %v2487, %v2467
    %v3248 = vpack.c.b16 %v2488, %v2468
    %v3249 = vpack.c.b16 %v2489, %v2469
    %v3250 = vpack.c.b16 %v2510, %v2490
    %v3251 = vpack.c.b16 %v2511, %v2491
    %v3252 = vpack.c.b16 %v2512, %v2492
    %v3253 = vpack.c.b16 %v2513, %v2493
    %v3254 = vpack.c.b16 %v2514, %v2494
    %v3255 = vpack.c.b16 %v2515, %v2495
    %v3256 = vpack.c.b16 %v2516, %v2496
    %v3257 = vpack.c.b16 %v2517, %v2497
    %v3258 = vpack.c.b16 %v2518, %v2498
    %v3259 = vpack.c.b16 %v2519, %v2499
    %v3260 = vpack.c.b16 %v2520, %v2500
    %v3261 = vpack.c.b16 %v2521, %v2501
    %v3262 = vpack.c.b16 %v2522, %v2502
    %v3263 = vpack.c.b16 %v2523, %v2503
    %v3264 = vpack.c.b16 %v2524, %v2504
    %v3265 = vpack.c.b16 %v2525, %v2505
    %v3266 = vpack.c.b16 %v2526, %v2506
    %v3267 = vpack.c.b16 %v2527, %v2507
    %v3268 = vpack.c.b16 %v2528, %v2508
    %v3269 = vpack.c.b16 %v2529, %v2509
    %v3270 = vpack.c.b16 %v2550, %v2530
    %v3271 = vpack.c.b16 %v2551, %v2531
    %v3272 = vpack.c.b16 %v2552, %v2532
    %v3273 = vpack.c.b16 %v2553, %v2533
    %v3274 = vpack.c.b16 %v2554, %v2534
    %v3275 = vpack.c.b16 %v2555, %v2535
    %v3276 = vpack.c.b16 %v2556, %v2536
    %v3277 = vpack.c.b16 %v2557, %v2537
    %v3278 = vpack.c.b16 %v2558, %v2538
    %v3279 = vpack.c.b16 %v2559, %v2539
    %v3280 = vpack.c.b16 %v2560, %v2540
    %v3281 = vpack.c.b16 %v2561, %v2541
    %v3282 = vpack.c.b16 %v2562, %v2542
    %v3283 = vpack.c.b16 %v2563, %v2543
    %v3284 = vpack.c.b16 %v2564, %v2544
    %v3285 = vpack.c.b16 %v2565, %v2545
    %v3286 = vpack.c.b16 %v2566, %v2546
    %v3287 = vpack.c.b16 %v2567, %v2547
    %v3288 = vpack.c.b16 %v2568, %v2548
    %v3289 = vpack.c.b16 %v2569, %v2549
    %v3290 = vpack.c.b16 %v2590, %v2570
    %v3291 = vpack.c.b16 %v2591, %v2571
    %v3292 = vpack.c.b16 %v2592, %v2572
    %v3293 = vpack.c.b16 %v2593, %v2573
    %v3294 = vpack.c.b16 %v2594, %v2574
    %v3295 = vpack.c.b16 %v2595, %v2575
    %v3296 = vpack.c.b16 %v2596, %v2576
    %v3297 = vpack.c.b16 %v2597, %v2577
    %v3298 = vpack.c.b16 %v2598, %v2578
    %v3299 = vpack.c.b16 %v2599, %v2579
    %v3300 = vpack.c.b16 %v2600, %v2580
    %v3301 = vpack.c.b16 %v2601, %v2581
    %v3302 = vpack.c.b16 %v2602, %v2582
    %v3303 = vpack.c.b16 %v2603, %v2583
    %v3304 = vpack.c.b16 %v2604, %v2584
    %v3305 = vpack.c.b16 %v2605, %v2585
    %v3306 = vpack.c.b16 %v2606, %v2586
    %v3307 = vpack.c.b16 %v2607, %v2587
    %v3308 = vpack.c.b16 %v2608, %v2588
    %v3309 = vpack.c.b16 %v2609, %v2589
    %v3310 = vpack.c.b16 %v2630, %v2610
    %v3311 = vpack.c.b16 %v2631, %v2611
    %v3312 = vpack.c.b16 %v2632, %v2612
    %v3313 = vpack.c.b16 %v2633, %v2613
    %v3314 = vpack.c.b16 %v2634, %v2614
    %v3315 = vpack.c.b16 %v2635, %v2615
    %v3316 = vpack.c.b16 %v2636, %v2616
    %v3317 = vpack.c.b16 %v2637, %v2617
    %v3318 = vpack.c.b16 %v2638, %v2618
    %v3319 = vpack.c.b16 %v2639, %v2619
    %v3320 = vpack.c.b16 %v2640, %v2620
    %v3321 = vpack.c.b16 %v2641, %v2621
    %v3322 = vpack.c.b16 %v2642, %v2622
    %v3323 = vpack.c.b16 %v2643, %v2623
    %v3324 = vpack.c.b16 %v2644, %v2624
    %v3325 = vpack.c.b16 %v2645, %v2625
    %v3326 = vpack.c.b16 %v2646, %v2626
    %v3327 = vpack.c.b16 %v2647, %v2627
    %v3328 = vpack.c.b16 %v2648, %v2628
    %v3329 = vpack.c.b16 %v2649, %v2629
    %v3330 = vpack.c.b16 %v2670, %v2650
    %v3331 = vpack.c.b16 %v2671, %v2651
    %v3332 = vpack.c.b16 %v2672, %v2652
    %v3333 = vpack.c.b16 %v2673, %v2653
    %v3334 = vpack.c.b16 %v2674, %v2654
    %v3335 = vpack.c.b16 %v2675, %v2655
    %v3336 = vpack.c.b16 %v2676, %v2656
    %v3337 = vpack.c.b16 %v2677, %v2657
    %v3338 = vpack.c.b16 %v2678, %v2658
    %v3339 = vpack.c.b16 %v2679, %v2659
    %v3340 = vpack.c.b16 %v2680, %v2660
    %v3341 = vpack.c.b16 %v2681, %v2661
    %v3342 = vpack.c.b16 %v2682, %v2662
    %v3343 = vpack.c.b16 %v2683, %v2663
    %v3344 = vpack.c.b16 %v2684, %v2664
    %v3345 = vpack.c.b16 %v2685, %v2665
    %v3346 = vpack.c.b16 %v2686, %v2666
    %v3347 = vpack.c.b16 %v2687, %v2667
    %v3348 = vpack.c.b16 %v2688, %v2668
    %v3349 = vpack.c.b16 %v2689, %v2669
    %v3350 = vpack.c.b16 %v2710, %v2690
    %v3351 = vpack.c.b16 %v2711, %v2691
    %v3352 = vpack.c.b16 %v2712, %v2692
    %v3353 = vpack.c.b16 %v2713, %v2693
    %v3354 = vpack.c.b16 %v2714, %v2694
    %v3355 = vpack.c.b16 %v2715, %v2695
    %v3356 = vpack.c.b16 %v2716, %v2696
    %v3357 = vpack.c.b16 %v2717, %v2697
    %v3358 = vpack.c.b16 %v2718, %v2698
    %v3359 = vpack.c.b16 %v2719, %v2699
    %v3360 = vpack.c.b16 %v2720, %v2700
    %v3361 = vpack.c.b16 %v2721, %v2701
    %v3362 = vpack.c.b16 %v2722, %v2702
    %v3363 = vpack.c.b16 %v2723, %v2703
    %v3364 = vpack.c.b16 %v2724, %v2704
    %v3365 = vpack.c.b16 %v2725, %v2705
    %v3366 = vpack.c.b16 %v2726, %v2706
    %v3367 = vpack.c.b16 %v2727, %v2707
    %v3368 = vpack.c.b16 %v2728, %v2708
    %v3369 = vpack.c.b16 %v2729, %v2709
    %4010 = vmatpush.bf16.msra.mxu0 %v2870
    %4011 = vmatpush.bf16.msra.mxu0 %v2850
    %4012 = vmatpush.bf16.msra.mxu0 %v2830
    %4013 = vmatpush.bf16.msra.mxu0 %v2810
    %4014 = vmatpush.bf16.msra.mxu0 %v2790
    %4015 = vmatpush.bf16.msra.mxu0 %v2770
    %4016 = vmatpush.bf16.msra.mxu0 %v2750
    %4017 = vmatpush.bf16.msra.mxu0 %v2730
    %4018 = vmatmul.bf16.gmra.mxu0 %v162
    %v4019 = vpop.f32.mrf.mxu0
    %v4020 = vadd.f32 0.0, %v4019
    %v4021 = vpop.f32.mrf.mxu0
    %4022 = vdwg.mxu0
    %4023 = vmatpush.bf16.msra.mxu0 %v3030
    %4024 = vmatpush.bf16.msra.mxu0 %v3010
    %4025 = vmatpush.bf16.msra.mxu0 %v2990
    %4026 = vmatpush.bf16.msra.mxu0 %v2970
    %4027 = vmatpush.bf16.msra.mxu0 %v2950
    %4028 = vmatpush.bf16.msra.mxu0 %v2930
    %4029 = vmatpush.bf16.msra.mxu0 %v2910
    %4030 = vmatpush.bf16.msra.mxu0 %v2890
    %4031 = vmatmul.bf16.gmra.mxu0 %v163
    %v4032 = vpop.f32.mrf.mxu0
    %v4033 = vadd.f32 %v4020, %v4032
    %v4034 = vpop.f32.mrf.mxu0
    %4035 = vdwg.mxu0
    %4036 = vmatpush.bf16.msra.mxu0 %v3190
    %4037 = vmatpush.bf16.msra.mxu0 %v3170
    %4038 = vmatpush.bf16.msra.mxu0 %v3150
    %4039 = vmatpush.bf16.msra.mxu0 %v3130
    %4040 = vmatpush.bf16.msra.mxu0 %v3110
    %4041 = vmatpush.bf16.msra.mxu0 %v3090
    %4042 = vmatpush.bf16.msra.mxu0 %v3070
    %4043 = vmatpush.bf16.msra.mxu0 %v3050
    %4044 = vmatmul.bf16.gmra.mxu0 %v164
    %v4045 = vpop.f32.mrf.mxu0
    %v4046 = vadd.f32 %v4033, %v4045
    %v4047 = vpop.f32.mrf.mxu0
    %4048 = vdwg.mxu0
    %4049 = vmatpush.bf16.msra.mxu0 %v3350
    %4050 = vmatpush.bf16.msra.mxu0 %v3330
    %4051 = vmatpush.bf16.msra.mxu0 %v3310
    %4052 = vmatpush.bf16.msra.mxu0 %v3290
    %4053 = vmatpush.bf16.msra.mxu0 %v3270
    %4054 = vmatpush.bf16.msra.mxu0 %v3250
    %4055 = vmatpush.bf16.msra.mxu0 %v3230
    %4056 = vmatpush.bf16.msra.mxu0 %v3210
    %4057 = vmatmul.bf16.gmra.mxu0 %v165
    %v4058 = vpop.f32.mrf.mxu0
    %v4059 = vadd.f32 %v4046, %v4058
    %v4060 = vpop.f32.mrf.mxu0
    %4061 = vdwg.mxu0
    %4062 = vmatpush.bf16.msra.mxu0 %v2871
    %4063 = vmatpush.bf16.msra.mxu0 %v2851
    %4064 = vmatpush.bf16.msra.mxu0 %v2831
    %4065 = vmatpush.bf16.msra.mxu0 %v2811
    %4066 = vmatpush.bf16.msra.mxu0 %v2791
    %4067 = vmatpush.bf16.msra.mxu0 %v2771
    %4068 = vmatpush.bf16.msra.mxu0 %v2751
    %4069 = vmatpush.bf16.msra.mxu0 %v2731
    %4070 = vmatmul.bf16.gmra.mxu0 %v162
    %v4071 = vpop.f32.mrf.mxu0
    %v4072 = vadd.f32 0.0, %v4071
    %v4073 = vpop.f32.mrf.mxu0
    %4074 = vdwg.mxu0
    %4075 = vmatpush.bf16.msra.mxu0 %v3031
    %4076 = vmatpush.bf16.msra.mxu0 %v3011
    %4077 = vmatpush.bf16.msra.mxu0 %v2991
    %4078 = vmatpush.bf16.msra.mxu0 %v2971
    %4079 = vmatpush.bf16.msra.mxu0 %v2951
    %4080 = vmatpush.bf16.msra.mxu0 %v2931
    %4081 = vmatpush.bf16.msra.mxu0 %v2911
    %4082 = vmatpush.bf16.msra.mxu0 %v2891
    %4083 = vmatmul.bf16.gmra.mxu0 %v163
    %v4084 = vpop.f32.mrf.mxu0
    %v4085 = vadd.f32 %v4072, %v4084
    %v4086 = vpop.f32.mrf.mxu0
    %4087 = vdwg.mxu0
    %4088 = vmatpush.bf16.msra.mxu0 %v3191
    %4089 = vmatpush.bf16.msra.mxu0 %v3171
    %4090 = vmatpush.bf16.msra.mxu0 %v3151
    %4091 = vmatpush.bf16.msra.mxu0 %v3131
    %4092 = vmatpush.bf16.msra.mxu0 %v3111
    %4093 = vmatpush.bf16.msra.mxu0 %v3091
    %4094 = vmatpush.bf16.msra.mxu0 %v3071
    %4095 = vmatpush.bf16.msra.mxu0 %v3051
    %4096 = vmatmul.bf16.gmra.mxu0 %v164
    %v4097 = vpop.f32.mrf.mxu0
    %v4098 = vadd.f32 %v4085, %v4097
    %v4099 = vpop.f32.mrf.mxu0
    %4100 = vdwg.mxu0
    %4101 = vmatpush.bf16.msra.mxu0 %v3351
    %4102 = vmatpush.bf16.msra.mxu0 %v3331
    %4103 = vmatpush.bf16.msra.mxu0 %v3311
    %4104 = vmatpush.bf16.msra.mxu0 %v3291
    %4105 = vmatpush.bf16.msra.mxu0 %v3271
    %4106 = vmatpush.bf16.msra.mxu0 %v3251
    %4107 = vmatpush.bf16.msra.mxu0 %v3231
    %4108 = vmatpush.bf16.msra.mxu0 %v3211
    %4109 = vmatmul.bf16.gmra.mxu0 %v165
    %v4110 = vpop.f32.mrf.mxu0
    %v4111 = vadd.f32 %v4098, %v4110
    %v4112 = vpop.f32.mrf.mxu0
    %4113 = vdwg.mxu0
    %4114 = vmatpush.bf16.msra.mxu0 %v2872
    %4115 = vmatpush.bf16.msra.mxu0 %v2852
    %4116 = vmatpush.bf16.msra.mxu0 %v2832
    %4117 = vmatpush.bf16.msra.mxu0 %v2812
    %4118 = vmatpush.bf16.msra.mxu0 %v2792
    %4119 = vmatpush.bf16.msra.mxu0 %v2772
    %4120 = vmatpush.bf16.msra.mxu0 %v2752
    %4121 = vmatpush.bf16.msra.mxu0 %v2732
    %4122 = vmatmul.bf16.gmra.mxu0 %v162
    %v4123 = vpop.f32.mrf.mxu0
    %v4124 = vadd.f32 0.0, %v4123
    %v4125 = vpop.f32.mrf.mxu0
    %4126 = vdwg.mxu0
    %4127 = vmatpush.bf16.msra.mxu0 %v3032
    %4128 = vmatpush.bf16.msra.mxu0 %v3012
    %4129 = vmatpush.bf16.msra.mxu0 %v2992
    %4130 = vmatpush.bf16.msra.mxu0 %v2972
    %4131 = vmatpush.bf16.msra.mxu0 %v2952
    %4132 = vmatpush.bf16.msra.mxu0 %v2932
    %4133 = vmatpush.bf16.msra.mxu0 %v2912
    %4134 = vmatpush.bf16.msra.mxu0 %v2892
    %4135 = vmatmul.bf16.gmra.mxu0 %v163
    %v4136 = vpop.f32.mrf.mxu0
    %v4137 = vadd.f32 %v4124, %v4136
    %v4138 = vpop.f32.mrf.mxu0
    %4139 = vdwg.mxu0
    %4140 = vmatpush.bf16.msra.mxu0 %v3192
    %4141 = vmatpush.bf16.msra.mxu0 %v3172
    %4142 = vmatpush.bf16.msra.mxu0 %v3152
    %4143 = vmatpush.bf16.msra.mxu0 %v3132
    %4144 = vmatpush.bf16.msra.mxu0 %v3112
    %4145 = vmatpush.bf16.msra.mxu0 %v3092
    %4146 = vmatpush.bf16.msra.mxu0 %v3072
    %4147 = vmatpush.bf16.msra.mxu0 %v3052
    %4148 = vmatmul.bf16.gmra.mxu0 %v164
    %v4149 = vpop.f32.mrf.mxu0
    %v4150 = vadd.f32 %v4137, %v4149
    %v4151 = vpop.f32.mrf.mxu0
    %4152 = vdwg.mxu0
    %4153 = vmatpush.bf16.msra.mxu0 %v3352
    %4154 = vmatpush.bf16.msra.mxu0 %v3332
    %4155 = vmatpush.bf16.msra.mxu0 %v3312
    %4156 = vmatpush.bf16.msra.mxu0 %v3292
    %4157 = vmatpush.bf16.msra.mxu0 %v3272
    %4158 = vmatpush.bf16.msra.mxu0 %v3252
    %4159 = vmatpush.bf16.msra.mxu0 %v3232
    %4160 = vmatpush.bf16.msra.mxu0 %v3212
    %4161 = vmatmul.bf16.gmra.mxu0 %v165
    %v4162 = vpop.f32.mrf.mxu0
    %v4163 = vadd.f32 %v4150, %v4162
    %v4164 = vpop.f32.mrf.mxu0
    %4165 = vdwg.mxu0
    %4166 = vmatpush.bf16.msra.mxu0 %v2873
    %4167 = vmatpush.bf16.msra.mxu0 %v2853
    %4168 = vmatpush.bf16.msra.mxu0 %v2833
    %4169 = vmatpush.bf16.msra.mxu0 %v2813
    %4170 = vmatpush.bf16.msra.mxu0 %v2793
    %4171 = vmatpush.bf16.msra.mxu0 %v2773
    %4172 = vmatpush.bf16.msra.mxu0 %v2753
    %4173 = vmatpush.bf16.msra.mxu0 %v2733
    %4174 = vmatmul.bf16.gmra.mxu0 %v162
    %v4175 = vpop.f32.mrf.mxu0
    %v4176 = vadd.f32 0.0, %v4175
    %v4177 = vpop.f32.mrf.mxu0
    %4178 = vdwg.mxu0
    %4179 = vmatpush.bf16.msra.mxu0 %v3033
    %4180 = vmatpush.bf16.msra.mxu0 %v3013
    %4181 = vmatpush.bf16.msra.mxu0 %v2993
    %4182 = vmatpush.bf16.msra.mxu0 %v2973
    %4183 = vmatpush.bf16.msra.mxu0 %v2953
    %4184 = vmatpush.bf16.msra.mxu0 %v2933
    %4185 = vmatpush.bf16.msra.mxu0 %v2913
    %4186 = vmatpush.bf16.msra.mxu0 %v2893
    %4187 = vmatmul.bf16.gmra.mxu0 %v163
    %v4188 = vpop.f32.mrf.mxu0
    %v4189 = vadd.f32 %v4176, %v4188
    %v4190 = vpop.f32.mrf.mxu0
    %4191 = vdwg.mxu0
    %4192 = vmatpush.bf16.msra.mxu0 %v3193
    %4193 = vmatpush.bf16.msra.mxu0 %v3173
    %4194 = vmatpush.bf16.msra.mxu0 %v3153
    %4195 = vmatpush.bf16.msra.mxu0 %v3133
    %4196 = vmatpush.bf16.msra.mxu0 %v3113
    %4197 = vmatpush.bf16.msra.mxu0 %v3093
    %4198 = vmatpush.bf16.msra.mxu0 %v3073
    %4199 = vmatpush.bf16.msra.mxu0 %v3053
    %4200 = vmatmul.bf16.gmra.mxu0 %v164
    %v4201 = vpop.f32.mrf.mxu0
    %v4202 = vadd.f32 %v4189, %v4201
    %v4203 = vpop.f32.mrf.mxu0
    %4204 = vdwg.mxu0
    %4205 = vmatpush.bf16.msra.mxu0 %v3353
    %4206 = vmatpush.bf16.msra.mxu0 %v3333
    %4207 = vmatpush.bf16.msra.mxu0 %v3313
    %4208 = vmatpush.bf16.msra.mxu0 %v3293
    %4209 = vmatpush.bf16.msra.mxu0 %v3273
    %4210 = vmatpush.bf16.msra.mxu0 %v3253
    %4211 = vmatpush.bf16.msra.mxu0 %v3233
    %4212 = vmatpush.bf16.msra.mxu0 %v3213
    %4213 = vmatmul.bf16.gmra.mxu0 %v165
    %v4214 = vpop.f32.mrf.mxu0
    %v4215 = vadd.f32 %v4202, %v4214
    %v4216 = vpop.f32.mrf.mxu0
    %4217 = vdwg.mxu0
    %4218 = vmatpush.bf16.msra.mxu0 %v2874
    %4219 = vmatpush.bf16.msra.mxu0 %v2854
    %4220 = vmatpush.bf16.msra.mxu0 %v2834
    %4221 = vmatpush.bf16.msra.mxu0 %v2814
    %4222 = vmatpush.bf16.msra.mxu0 %v2794
    %4223 = vmatpush.bf16.msra.mxu0 %v2774
    %4224 = vmatpush.bf16.msra.mxu0 %v2754
    %4225 = vmatpush.bf16.msra.mxu0 %v2734
    %4226 = vmatmul.bf16.gmra.mxu0 %v162
    %v4227 = vpop.f32.mrf.mxu0
    %v4228 = vadd.f32 0.0, %v4227
    %v4229 = vpop.f32.mrf.mxu0
    %4230 = vdwg.mxu0
    %4231 = vmatpush.bf16.msra.mxu0 %v3034
    %4232 = vmatpush.bf16.msra.mxu0 %v3014
    %4233 = vmatpush.bf16.msra.mxu0 %v2994
    %4234 = vmatpush.bf16.msra.mxu0 %v2974
    %4235 = vmatpush.bf16.msra.mxu0 %v2954
    %4236 = vmatpush.bf16.msra.mxu0 %v2934
    %4237 = vmatpush.bf16.msra.mxu0 %v2914
    %4238 = vmatpush.bf16.msra.mxu0 %v2894
    %4239 = vmatmul.bf16.gmra.mxu0 %v163
    %v4240 = vpop.f32.mrf.mxu0
    %v4241 = vadd.f32 %v4228, %v4240
    %v4242 = vpop.f32.mrf.mxu0
    %4243 = vdwg.mxu0
    %4244 = vmatpush.bf16.msra.mxu0 %v3194
    %4245 = vmatpush.bf16.msra.mxu0 %v3174
    %4246 = vmatpush.bf16.msra.mxu0 %v3154
    %4247 = vmatpush.bf16.msra.mxu0 %v3134
    %4248 = vmatpush.bf16.msra.mxu0 %v3114
    %4249 = vmatpush.bf16.msra.mxu0 %v3094
    %4250 = vmatpush.bf16.msra.mxu0 %v3074
    %4251 = vmatpush.bf16.msra.mxu0 %v3054
    %4252 = vmatmul.bf16.gmra.mxu0 %v164
    %v4253 = vpop.f32.mrf.mxu0
    %v4254 = vadd.f32 %v4241, %v4253
    %v4255 = vpop.f32.mrf.mxu0
    %4256 = vdwg.mxu0
    %4257 = vmatpush.bf16.msra.mxu0 %v3354
    %4258 = vmatpush.bf16.msra.mxu0 %v3334
    %4259 = vmatpush.bf16.msra.mxu0 %v3314
    %4260 = vmatpush.bf16.msra.mxu0 %v3294
    %4261 = vmatpush.bf16.msra.mxu0 %v3274
    %4262 = vmatpush.bf16.msra.mxu0 %v3254
    %4263 = vmatpush.bf16.msra.mxu0 %v3234
    %4264 = vmatpush.bf16.msra.mxu0 %v3214
    %4265 = vmatmul.bf16.gmra.mxu0 %v165
    %v4266 = vpop.f32.mrf.mxu0
    %v4267 = vadd.f32 %v4254, %v4266
    %v4268 = vpop.f32.mrf.mxu0
    %4269 = vdwg.mxu0
    %4270 = vmatpush.bf16.msra.mxu0 %v2875
    %4271 = vmatpush.bf16.msra.mxu0 %v2855
    %4272 = vmatpush.bf16.msra.mxu0 %v2835
    %4273 = vmatpush.bf16.msra.mxu0 %v2815
    %4274 = vmatpush.bf16.msra.mxu0 %v2795
    %4275 = vmatpush.bf16.msra.mxu0 %v2775
    %4276 = vmatpush.bf16.msra.mxu0 %v2755
    %4277 = vmatpush.bf16.msra.mxu0 %v2735
    %4278 = vmatmul.bf16.gmra.mxu0 %v162
    %v4279 = vpop.f32.mrf.mxu0
    %v4280 = vadd.f32 0.0, %v4279
    %v4281 = vpop.f32.mrf.mxu0
    %4282 = vdwg.mxu0
    %4283 = vmatpush.bf16.msra.mxu0 %v3035
    %4284 = vmatpush.bf16.msra.mxu0 %v3015
    %4285 = vmatpush.bf16.msra.mxu0 %v2995
    %4286 = vmatpush.bf16.msra.mxu0 %v2975
    %4287 = vmatpush.bf16.msra.mxu0 %v2955
    %4288 = vmatpush.bf16.msra.mxu0 %v2935
    %4289 = vmatpush.bf16.msra.mxu0 %v2915
    %4290 = vmatpush.bf16.msra.mxu0 %v2895
    %4291 = vmatmul.bf16.gmra.mxu0 %v163
    %v4292 = vpop.f32.mrf.mxu0
    %v4293 = vadd.f32 %v4280, %v4292
    %v4294 = vpop.f32.mrf.mxu0
    %4295 = vdwg.mxu0
    %4296 = vmatpush.bf16.msra.mxu0 %v3195
    %4297 = vmatpush.bf16.msra.mxu0 %v3175
    %4298 = vmatpush.bf16.msra.mxu0 %v3155
    %4299 = vmatpush.bf16.msra.mxu0 %v3135
    %4300 = vmatpush.bf16.msra.mxu0 %v3115
    %4301 = vmatpush.bf16.msra.mxu0 %v3095
    %4302 = vmatpush.bf16.msra.mxu0 %v3075
    %4303 = vmatpush.bf16.msra.mxu0 %v3055
    %4304 = vmatmul.bf16.gmra.mxu0 %v164
    %v4305 = vpop.f32.mrf.mxu0
    %v4306 = vadd.f32 %v4293, %v4305
    %v4307 = vpop.f32.mrf.mxu0
    %4308 = vdwg.mxu0
    %4309 = vmatpush.bf16.msra.mxu0 %v3355
    %4310 = vmatpush.bf16.msra.mxu0 %v3335
    %4311 = vmatpush.bf16.msra.mxu0 %v3315
    %4312 = vmatpush.bf16.msra.mxu0 %v3295
    %4313 = vmatpush.bf16.msra.mxu0 %v3275
    %4314 = vmatpush.bf16.msra.mxu0 %v3255
    %4315 = vmatpush.bf16.msra.mxu0 %v3235
    %4316 = vmatpush.bf16.msra.mxu0 %v3215
    %4317 = vmatmul.bf16.gmra.mxu0 %v165
    %v4318 = vpop.f32.mrf.mxu0
    %v4319 = vadd.f32 %v4306, %v4318
    %v4320 = vpop.f32.mrf.mxu0
    %4321 = vdwg.mxu0
    %4322 = vmatpush.bf16.msra.mxu0 %v2876
    %4323 = vmatpush.bf16.msra.mxu0 %v2856
    %4324 = vmatpush.bf16.msra.mxu0 %v2836
    %4325 = vmatpush.bf16.msra.mxu0 %v2816
    %4326 = vmatpush.bf16.msra.mxu0 %v2796
    %4327 = vmatpush.bf16.msra.mxu0 %v2776
    %4328 = vmatpush.bf16.msra.mxu0 %v2756
    %4329 = vmatpush.bf16.msra.mxu0 %v2736
    %4330 = vmatmul.bf16.gmra.mxu0 %v162
    %v4331 = vpop.f32.mrf.mxu0
    %v4332 = vadd.f32 0.0, %v4331
    %v4333 = vpop.f32.mrf.mxu0
    %4334 = vdwg.mxu0
    %4335 = vmatpush.bf16.msra.mxu0 %v3036
    %4336 = vmatpush.bf16.msra.mxu0 %v3016
    %4337 = vmatpush.bf16.msra.mxu0 %v2996
    %4338 = vmatpush.bf16.msra.mxu0 %v2976
    %4339 = vmatpush.bf16.msra.mxu0 %v2956
    %4340 = vmatpush.bf16.msra.mxu0 %v2936
    %4341 = vmatpush.bf16.msra.mxu0 %v2916
    %4342 = vmatpush.bf16.msra.mxu0 %v2896
    %4343 = vmatmul.bf16.gmra.mxu0 %v163
    %v4344 = vpop.f32.mrf.mxu0
    %v4345 = vadd.f32 %v4332, %v4344
    %v4346 = vpop.f32.mrf.mxu0
    %4347 = vdwg.mxu0
    %4348 = vmatpush.bf16.msra.mxu0 %v3196
    %4349 = vmatpush.bf16.msra.mxu0 %v3176
    %4350 = vmatpush.bf16.msra.mxu0 %v3156
    %4351 = vmatpush.bf16.msra.mxu0 %v3136
    %4352 = vmatpush.bf16.msra.mxu0 %v3116
    %4353 = vmatpush.bf16.msra.mxu0 %v3096
    %4354 = vmatpush.bf16.msra.mxu0 %v3076
    %4355 = vmatpush.bf16.msra.mxu0 %v3056
    %4356 = vmatmul.bf16.gmra.mxu0 %v164
    %v4357 = vpop.f32.mrf.mxu0
    %v4358 = vadd.f32 %v4345, %v4357
    %v4359 = vpop.f32.mrf.mxu0
    %4360 = vdwg.mxu0
    %4361 = vmatpush.bf16.msra.mxu0 %v3356
    %4362 = vmatpush.bf16.msra.mxu0 %v3336
    %4363 = vmatpush.bf16.msra.mxu0 %v3316
    %4364 = vmatpush.bf16.msra.mxu0 %v3296
    %4365 = vmatpush.bf16.msra.mxu0 %v3276
    %4366 = vmatpush.bf16.msra.mxu0 %v3256
    %4367 = vmatpush.bf16.msra.mxu0 %v3236
    %4368 = vmatpush.bf16.msra.mxu0 %v3216
    %4369 = vmatmul.bf16.gmra.mxu0 %v165
    %v4370 = vpop.f32.mrf.mxu0
    %v4371 = vadd.f32 %v4358, %v4370
    %v4372 = vpop.f32.mrf.mxu0
    %4373 = vdwg.mxu0
    %4374 = vmatpush.bf16.msra.mxu0 %v2877
    %4375 = vmatpush.bf16.msra.mxu0 %v2857
    %4376 = vmatpush.bf16.msra.mxu0 %v2837
    %4377 = vmatpush.bf16.msra.mxu0 %v2817
    %4378 = vmatpush.bf16.msra.mxu0 %v2797
    %4379 = vmatpush.bf16.msra.mxu0 %v2777
    %4380 = vmatpush.bf16.msra.mxu0 %v2757
    %4381 = vmatpush.bf16.msra.mxu0 %v2737
    %4382 = vmatmul.bf16.gmra.mxu0 %v162
    %v4383 = vpop.f32.mrf.mxu0
    %v4384 = vadd.f32 0.0, %v4383
    %v4385 = vpop.f32.mrf.mxu0
    %4386 = vdwg.mxu0
    %4387 = vmatpush.bf16.msra.mxu0 %v3037
    %4388 = vmatpush.bf16.msra.mxu0 %v3017
    %4389 = vmatpush.bf16.msra.mxu0 %v2997
    %4390 = vmatpush.bf16.msra.mxu0 %v2977
    %4391 = vmatpush.bf16.msra.mxu0 %v2957
    %4392 = vmatpush.bf16.msra.mxu0 %v2937
    %4393 = vmatpush.bf16.msra.mxu0 %v2917
    %4394 = vmatpush.bf16.msra.mxu0 %v2897
    %4395 = vmatmul.bf16.gmra.mxu0 %v163
    %v4396 = vpop.f32.mrf.mxu0
    %v4397 = vadd.f32 %v4384, %v4396
    %v4398 = vpop.f32.mrf.mxu0
    %4399 = vdwg.mxu0
    %4400 = vmatpush.bf16.msra.mxu0 %v3197
    %4401 = vmatpush.bf16.msra.mxu0 %v3177
    %4402 = vmatpush.bf16.msra.mxu0 %v3157
    %4403 = vmatpush.bf16.msra.mxu0 %v3137
    %4404 = vmatpush.bf16.msra.mxu0 %v3117
    %4405 = vmatpush.bf16.msra.mxu0 %v3097
    %4406 = vmatpush.bf16.msra.mxu0 %v3077
    %4407 = vmatpush.bf16.msra.mxu0 %v3057
    %4408 = vmatmul.bf16.gmra.mxu0 %v164
    %v4409 = vpop.f32.mrf.mxu0
    %v4410 = vadd.f32 %v4397, %v4409
    %v4411 = vpop.f32.mrf.mxu0
    %4412 = vdwg.mxu0
    %4413 = vmatpush.bf16.msra.mxu0 %v3357
    %4414 = vmatpush.bf16.msra.mxu0 %v3337
    %4415 = vmatpush.bf16.msra.mxu0 %v3317
    %4416 = vmatpush.bf16.msra.mxu0 %v3297
    %4417 = vmatpush.bf16.msra.mxu0 %v3277
    %4418 = vmatpush.bf16.msra.mxu0 %v3257
    %4419 = vmatpush.bf16.msra.mxu0 %v3237
    %4420 = vmatpush.bf16.msra.mxu0 %v3217
    %4421 = vmatmul.bf16.gmra.mxu0 %v165
    %v4422 = vpop.f32.mrf.mxu0
    %v4423 = vadd.f32 %v4410, %v4422
    %v4424 = vpop.f32.mrf.mxu0
    %4425 = vdwg.mxu0
    %4426 = vmatpush.bf16.msra.mxu0 %v2878
    %4427 = vmatpush.bf16.msra.mxu0 %v2858
    %4428 = vmatpush.bf16.msra.mxu0 %v2838
    %4429 = vmatpush.bf16.msra.mxu0 %v2818
    %4430 = vmatpush.bf16.msra.mxu0 %v2798
    %4431 = vmatpush.bf16.msra.mxu0 %v2778
    %4432 = vmatpush.bf16.msra.mxu0 %v2758
    %4433 = vmatpush.bf16.msra.mxu0 %v2738
    %4434 = vmatmul.bf16.gmra.mxu0 %v162
    %v4435 = vpop.f32.mrf.mxu0
    %v4436 = vadd.f32 0.0, %v4435
    %v4437 = vpop.f32.mrf.mxu0
    %4438 = vdwg.mxu0
    %4439 = vmatpush.bf16.msra.mxu0 %v3038
    %4440 = vmatpush.bf16.msra.mxu0 %v3018
    %4441 = vmatpush.bf16.msra.mxu0 %v2998
    %4442 = vmatpush.bf16.msra.mxu0 %v2978
    %4443 = vmatpush.bf16.msra.mxu0 %v2958
    %4444 = vmatpush.bf16.msra.mxu0 %v2938
    %4445 = vmatpush.bf16.msra.mxu0 %v2918
    %4446 = vmatpush.bf16.msra.mxu0 %v2898
    %4447 = vmatmul.bf16.gmra.mxu0 %v163
    %v4448 = vpop.f32.mrf.mxu0
    %v4449 = vadd.f32 %v4436, %v4448
    %v4450 = vpop.f32.mrf.mxu0
    %4451 = vdwg.mxu0
    %4452 = vmatpush.bf16.msra.mxu0 %v3198
    %4453 = vmatpush.bf16.msra.mxu0 %v3178
    %4454 = vmatpush.bf16.msra.mxu0 %v3158
    %4455 = vmatpush.bf16.msra.mxu0 %v3138
    %4456 = vmatpush.bf16.msra.mxu0 %v3118
    %4457 = vmatpush.bf16.msra.mxu0 %v3098
    %4458 = vmatpush.bf16.msra.mxu0 %v3078
    %4459 = vmatpush.bf16.msra.mxu0 %v3058
    %4460 = vmatmul.bf16.gmra.mxu0 %v164
    %v4461 = vpop.f32.mrf.mxu0
    %v4462 = vadd.f32 %v4449, %v4461
    %v4463 = vpop.f32.mrf.mxu0
    %4464 = vdwg.mxu0
    %4465 = vmatpush.bf16.msra.mxu0 %v3358
    %4466 = vmatpush.bf16.msra.mxu0 %v3338
    %4467 = vmatpush.bf16.msra.mxu0 %v3318
    %4468 = vmatpush.bf16.msra.mxu0 %v3298
    %4469 = vmatpush.bf16.msra.mxu0 %v3278
    %4470 = vmatpush.bf16.msra.mxu0 %v3258
    %4471 = vmatpush.bf16.msra.mxu0 %v3238
    %4472 = vmatpush.bf16.msra.mxu0 %v3218
    %4473 = vmatmul.bf16.gmra.mxu0 %v165
    %v4474 = vpop.f32.mrf.mxu0
    %v4475 = vadd.f32 %v4462, %v4474
    %v4476 = vpop.f32.mrf.mxu0
    %4477 = vdwg.mxu0
    %4478 = vmatpush.bf16.msra.mxu0 %v2879
    %4479 = vmatpush.bf16.msra.mxu0 %v2859
    %4480 = vmatpush.bf16.msra.mxu0 %v2839
    %4481 = vmatpush.bf16.msra.mxu0 %v2819
    %4482 = vmatpush.bf16.msra.mxu0 %v2799
    %4483 = vmatpush.bf16.msra.mxu0 %v2779
    %4484 = vmatpush.bf16.msra.mxu0 %v2759
    %4485 = vmatpush.bf16.msra.mxu0 %v2739
    %4486 = vmatmul.bf16.gmra.mxu0 %v162
    %v4487 = vpop.f32.mrf.mxu0
    %v4488 = vadd.f32 0.0, %v4487
    %v4489 = vpop.f32.mrf.mxu0
    %4490 = vdwg.mxu0
    %4491 = vmatpush.bf16.msra.mxu0 %v3039
    %4492 = vmatpush.bf16.msra.mxu0 %v3019
    %4493 = vmatpush.bf16.msra.mxu0 %v2999
    %4494 = vmatpush.bf16.msra.mxu0 %v2979
    %4495 = vmatpush.bf16.msra.mxu0 %v2959
    %4496 = vmatpush.bf16.msra.mxu0 %v2939
    %4497 = vmatpush.bf16.msra.mxu0 %v2919
    %4498 = vmatpush.bf16.msra.mxu0 %v2899
    %4499 = vmatmul.bf16.gmra.mxu0 %v163
    %v4500 = vpop.f32.mrf.mxu0
    %v4501 = vadd.f32 %v4488, %v4500
    %v4502 = vpop.f32.mrf.mxu0
    %4503 = vdwg.mxu0
    %4504 = vmatpush.bf16.msra.mxu0 %v3199
    %4505 = vmatpush.bf16.msra.mxu0 %v3179
    %4506 = vmatpush.bf16.msra.mxu0 %v3159
    %4507 = vmatpush.bf16.msra.mxu0 %v3139
    %4508 = vmatpush.bf16.msra.mxu0 %v3119
    %4509 = vmatpush.bf16.msra.mxu0 %v3099
    %4510 = vmatpush.bf16.msra.mxu0 %v3079
    %4511 = vmatpush.bf16.msra.mxu0 %v3059
    %4512 = vmatmul.bf16.gmra.mxu0 %v164
    %v4513 = vpop.f32.mrf.mxu0
    %v4514 = vadd.f32 %v4501, %v4513
    %v4515 = vpop.f32.mrf.mxu0
    %4516 = vdwg.mxu0
    %4517 = vmatpush.bf16.msra.mxu0 %v3359
    %4518 = vmatpush.bf16.msra.mxu0 %v3339
    %4519 = vmatpush.bf16.msra.mxu0 %v3319
    %4520 = vmatpush.bf16.msra.mxu0 %v3299
    %4521 = vmatpush.bf16.msra.mxu0 %v3279
    %4522 = vmatpush.bf16.msra.mxu0 %v3259
    %4523 = vmatpush.bf16.msra.mxu0 %v3239
    %4524 = vmatpush.bf16.msra.mxu0 %v3219
    %4525 = vmatmul.bf16.gmra.mxu0 %v165
    %v4526 = vpop.f32.mrf.mxu0
    %v4527 = vadd.f32 %v4514, %v4526
    %v4528 = vpop.f32.mrf.mxu0
    %4529 = vdwg.mxu0
    %4530 = vmatpush.bf16.msra.mxu0 %v2880
    %4531 = vmatpush.bf16.msra.mxu0 %v2860
    %4532 = vmatpush.bf16.msra.mxu0 %v2840
    %4533 = vmatpush.bf16.msra.mxu0 %v2820
    %4534 = vmatpush.bf16.msra.mxu0 %v2800
    %4535 = vmatpush.bf16.msra.mxu0 %v2780
    %4536 = vmatpush.bf16.msra.mxu0 %v2760
    %4537 = vmatpush.bf16.msra.mxu0 %v2740
    %4538 = vmatmul.bf16.gmra.mxu0 %v162
    %v4539 = vpop.f32.mrf.mxu0
    %v4540 = vadd.f32 0.0, %v4539
    %v4541 = vpop.f32.mrf.mxu0
    %4542 = vdwg.mxu0
    %4543 = vmatpush.bf16.msra.mxu0 %v3040
    %4544 = vmatpush.bf16.msra.mxu0 %v3020
    %4545 = vmatpush.bf16.msra.mxu0 %v3000
    %4546 = vmatpush.bf16.msra.mxu0 %v2980
    %4547 = vmatpush.bf16.msra.mxu0 %v2960
    %4548 = vmatpush.bf16.msra.mxu0 %v2940
    %4549 = vmatpush.bf16.msra.mxu0 %v2920
    %4550 = vmatpush.bf16.msra.mxu0 %v2900
    %4551 = vmatmul.bf16.gmra.mxu0 %v163
    %v4552 = vpop.f32.mrf.mxu0
    %v4553 = vadd.f32 %v4540, %v4552
    %v4554 = vpop.f32.mrf.mxu0
    %4555 = vdwg.mxu0
    %4556 = vmatpush.bf16.msra.mxu0 %v3200
    %4557 = vmatpush.bf16.msra.mxu0 %v3180
    %4558 = vmatpush.bf16.msra.mxu0 %v3160
    %4559 = vmatpush.bf16.msra.mxu0 %v3140
    %4560 = vmatpush.bf16.msra.mxu0 %v3120
    %4561 = vmatpush.bf16.msra.mxu0 %v3100
    %4562 = vmatpush.bf16.msra.mxu0 %v3080
    %4563 = vmatpush.bf16.msra.mxu0 %v3060
    %4564 = vmatmul.bf16.gmra.mxu0 %v164
    %v4565 = vpop.f32.mrf.mxu0
    %v4566 = vadd.f32 %v4553, %v4565
    %v4567 = vpop.f32.mrf.mxu0
    %4568 = vdwg.mxu0
    %4569 = vmatpush.bf16.msra.mxu0 %v3360
    %4570 = vmatpush.bf16.msra.mxu0 %v3340
    %4571 = vmatpush.bf16.msra.mxu0 %v3320
    %4572 = vmatpush.bf16.msra.mxu0 %v3300
    %4573 = vmatpush.bf16.msra.mxu0 %v3280
    %4574 = vmatpush.bf16.msra.mxu0 %v3260
    %4575 = vmatpush.bf16.msra.mxu0 %v3240
    %4576 = vmatpush.bf16.msra.mxu0 %v3220
    %4577 = vmatmul.bf16.gmra.mxu0 %v165
    %v4578 = vpop.f32.mrf.mxu0
    %v4579 = vadd.f32 %v4566, %v4578
    %v4580 = vpop.f32.mrf.mxu0
    %4581 = vdwg.mxu0
    %4582 = vmatpush.bf16.msra.mxu0 %v2881
    %4583 = vmatpush.bf16.msra.mxu0 %v2861
    %4584 = vmatpush.bf16.msra.mxu0 %v2841
    %4585 = vmatpush.bf16.msra.mxu0 %v2821
    %4586 = vmatpush.bf16.msra.mxu0 %v2801
    %4587 = vmatpush.bf16.msra.mxu0 %v2781
    %4588 = vmatpush.bf16.msra.mxu0 %v2761
    %4589 = vmatpush.bf16.msra.mxu0 %v2741
    %4590 = vmatmul.bf16.gmra.mxu0 %v162
    %v4591 = vpop.f32.mrf.mxu0
    %v4592 = vadd.f32 0.0, %v4591
    %v4593 = vpop.f32.mrf.mxu0
    %4594 = vdwg.mxu0
    %4595 = vmatpush.bf16.msra.mxu0 %v3041
    %4596 = vmatpush.bf16.msra.mxu0 %v3021
    %4597 = vmatpush.bf16.msra.mxu0 %v3001
    %4598 = vmatpush.bf16.msra.mxu0 %v2981
    %4599 = vmatpush.bf16.msra.mxu0 %v2961
    %4600 = vmatpush.bf16.msra.mxu0 %v2941
    %4601 = vmatpush.bf16.msra.mxu0 %v2921
    %4602 = vmatpush.bf16.msra.mxu0 %v2901
    %4603 = vmatmul.bf16.gmra.mxu0 %v163
    %v4604 = vpop.f32.mrf.mxu0
    %v4605 = vadd.f32 %v4592, %v4604
    %v4606 = vpop.f32.mrf.mxu0
    %4607 = vdwg.mxu0
    %4608 = vmatpush.bf16.msra.mxu0 %v3201
    %4609 = vmatpush.bf16.msra.mxu0 %v3181
    %4610 = vmatpush.bf16.msra.mxu0 %v3161
    %4611 = vmatpush.bf16.msra.mxu0 %v3141
    %4612 = vmatpush.bf16.msra.mxu0 %v3121
    %4613 = vmatpush.bf16.msra.mxu0 %v3101
    %4614 = vmatpush.bf16.msra.mxu0 %v3081
    %4615 = vmatpush.bf16.msra.mxu0 %v3061
    %4616 = vmatmul.bf16.gmra.mxu0 %v164
    %v4617 = vpop.f32.mrf.mxu0
    %v4618 = vadd.f32 %v4605, %v4617
    %v4619 = vpop.f32.mrf.mxu0
    %4620 = vdwg.mxu0
    %4621 = vmatpush.bf16.msra.mxu0 %v3361
    %4622 = vmatpush.bf16.msra.mxu0 %v3341
    %4623 = vmatpush.bf16.msra.mxu0 %v3321
    %4624 = vmatpush.bf16.msra.mxu0 %v3301
    %4625 = vmatpush.bf16.msra.mxu0 %v3281
    %4626 = vmatpush.bf16.msra.mxu0 %v3261
    %4627 = vmatpush.bf16.msra.mxu0 %v3241
    %4628 = vmatpush.bf16.msra.mxu0 %v3221
    %4629 = vmatmul.bf16.gmra.mxu0 %v165
    %v4630 = vpop.f32.mrf.mxu0
    %v4631 = vadd.f32 %v4618, %v4630
    %v4632 = vpop.f32.mrf.mxu0
    %4633 = vdwg.mxu0
    %4634 = vmatpush.bf16.msra.mxu0 %v2882
    %4635 = vmatpush.bf16.msra.mxu0 %v2862
    %4636 = vmatpush.bf16.msra.mxu0 %v2842
    %4637 = vmatpush.bf16.msra.mxu0 %v2822
    %4638 = vmatpush.bf16.msra.mxu0 %v2802
    %4639 = vmatpush.bf16.msra.mxu0 %v2782
    %4640 = vmatpush.bf16.msra.mxu0 %v2762
    %4641 = vmatpush.bf16.msra.mxu0 %v2742
    %4642 = vmatmul.bf16.gmra.mxu0 %v162
    %v4643 = vpop.f32.mrf.mxu0
    %v4644 = vadd.f32 0.0, %v4643
    %v4645 = vpop.f32.mrf.mxu0
    %4646 = vdwg.mxu0
    %4647 = vmatpush.bf16.msra.mxu0 %v3042
    %4648 = vmatpush.bf16.msra.mxu0 %v3022
    %4649 = vmatpush.bf16.msra.mxu0 %v3002
    %4650 = vmatpush.bf16.msra.mxu0 %v2982
    %4651 = vmatpush.bf16.msra.mxu0 %v2962
    %4652 = vmatpush.bf16.msra.mxu0 %v2942
    %4653 = vmatpush.bf16.msra.mxu0 %v2922
    %4654 = vmatpush.bf16.msra.mxu0 %v2902
    %4655 = vmatmul.bf16.gmra.mxu0 %v163
    %v4656 = vpop.f32.mrf.mxu0
    %v4657 = vadd.f32 %v4644, %v4656
    %v4658 = vpop.f32.mrf.mxu0
    %4659 = vdwg.mxu0
    %4660 = vmatpush.bf16.msra.mxu0 %v3202
    %4661 = vmatpush.bf16.msra.mxu0 %v3182
    %4662 = vmatpush.bf16.msra.mxu0 %v3162
    %4663 = vmatpush.bf16.msra.mxu0 %v3142
    %4664 = vmatpush.bf16.msra.mxu0 %v3122
    %4665 = vmatpush.bf16.msra.mxu0 %v3102
    %4666 = vmatpush.bf16.msra.mxu0 %v3082
    %4667 = vmatpush.bf16.msra.mxu0 %v3062
    %4668 = vmatmul.bf16.gmra.mxu0 %v164
    %v4669 = vpop.f32.mrf.mxu0
    %v4670 = vadd.f32 %v4657, %v4669
    %v4671 = vpop.f32.mrf.mxu0
    %4672 = vdwg.mxu0
    %4673 = vmatpush.bf16.msra.mxu0 %v3362
    %4674 = vmatpush.bf16.msra.mxu0 %v3342
    %4675 = vmatpush.bf16.msra.mxu0 %v3322
    %4676 = vmatpush.bf16.msra.mxu0 %v3302
    %4677 = vmatpush.bf16.msra.mxu0 %v3282
    %4678 = vmatpush.bf16.msra.mxu0 %v3262
    %4679 = vmatpush.bf16.msra.mxu0 %v3242
    %4680 = vmatpush.bf16.msra.mxu0 %v3222
    %4681 = vmatmul.bf16.gmra.mxu0 %v165
    %v4682 = vpop.f32.mrf.mxu0
    %v4683 = vadd.f32 %v4670, %v4682
    %v4684 = vpop.f32.mrf.mxu0
    %4685 = vdwg.mxu0
    %4686 = vmatpush.bf16.msra.mxu0 %v2883
    %4687 = vmatpush.bf16.msra.mxu0 %v2863
    %4688 = vmatpush.bf16.msra.mxu0 %v2843
    %4689 = vmatpush.bf16.msra.mxu0 %v2823
    %4690 = vmatpush.bf16.msra.mxu0 %v2803
    %4691 = vmatpush.bf16.msra.mxu0 %v2783
    %4692 = vmatpush.bf16.msra.mxu0 %v2763
    %4693 = vmatpush.bf16.msra.mxu0 %v2743
    %4694 = vmatmul.bf16.gmra.mxu0 %v162
    %v4695 = vpop.f32.mrf.mxu0
    %v4696 = vadd.f32 0.0, %v4695
    %v4697 = vpop.f32.mrf.mxu0
    %4698 = vdwg.mxu0
    %4699 = vmatpush.bf16.msra.mxu0 %v3043
    %4700 = vmatpush.bf16.msra.mxu0 %v3023
    %4701 = vmatpush.bf16.msra.mxu0 %v3003
    %4702 = vmatpush.bf16.msra.mxu0 %v2983
    %4703 = vmatpush.bf16.msra.mxu0 %v2963
    %4704 = vmatpush.bf16.msra.mxu0 %v2943
    %4705 = vmatpush.bf16.msra.mxu0 %v2923
    %4706 = vmatpush.bf16.msra.mxu0 %v2903
    %4707 = vmatmul.bf16.gmra.mxu0 %v163
    %v4708 = vpop.f32.mrf.mxu0
    %v4709 = vadd.f32 %v4696, %v4708
    %v4710 = vpop.f32.mrf.mxu0
    %4711 = vdwg.mxu0
    %4712 = vmatpush.bf16.msra.mxu0 %v3203
    %4713 = vmatpush.bf16.msra.mxu0 %v3183
    %4714 = vmatpush.bf16.msra.mxu0 %v3163
    %4715 = vmatpush.bf16.msra.mxu0 %v3143
    %4716 = vmatpush.bf16.msra.mxu0 %v3123
    %4717 = vmatpush.bf16.msra.mxu0 %v3103
    %4718 = vmatpush.bf16.msra.mxu0 %v3083
    %4719 = vmatpush.bf16.msra.mxu0 %v3063
    %4720 = vmatmul.bf16.gmra.mxu0 %v164
    %v4721 = vpop.f32.mrf.mxu0
    %v4722 = vadd.f32 %v4709, %v4721
    %v4723 = vpop.f32.mrf.mxu0
    %4724 = vdwg.mxu0
    %4725 = vmatpush.bf16.msra.mxu0 %v3363
    %4726 = vmatpush.bf16.msra.mxu0 %v3343
    %4727 = vmatpush.bf16.msra.mxu0 %v3323
    %4728 = vmatpush.bf16.msra.mxu0 %v3303
    %4729 = vmatpush.bf16.msra.mxu0 %v3283
    %4730 = vmatpush.bf16.msra.mxu0 %v3263
    %4731 = vmatpush.bf16.msra.mxu0 %v3243
    %4732 = vmatpush.bf16.msra.mxu0 %v3223
    %4733 = vmatmul.bf16.gmra.mxu0 %v165
    %v4734 = vpop.f32.mrf.mxu0
    %v4735 = vadd.f32 %v4722, %v4734
    %v4736 = vpop.f32.mrf.mxu0
    %4737 = vdwg.mxu0
    %4738 = vmatpush.bf16.msra.mxu0 %v2884
    %4739 = vmatpush.bf16.msra.mxu0 %v2864
    %4740 = vmatpush.bf16.msra.mxu0 %v2844
    %4741 = vmatpush.bf16.msra.mxu0 %v2824
    %4742 = vmatpush.bf16.msra.mxu0 %v2804
    %4743 = vmatpush.bf16.msra.mxu0 %v2784
    %4744 = vmatpush.bf16.msra.mxu0 %v2764
    %4745 = vmatpush.bf16.msra.mxu0 %v2744
    %4746 = vmatmul.bf16.gmra.mxu0 %v162
    %v4747 = vpop.f32.mrf.mxu0
    %v4748 = vadd.f32 0.0, %v4747
    %v4749 = vpop.f32.mrf.mxu0
    %4750 = vdwg.mxu0
    %4751 = vmatpush.bf16.msra.mxu0 %v3044
    %4752 = vmatpush.bf16.msra.mxu0 %v3024
    %4753 = vmatpush.bf16.msra.mxu0 %v3004
    %4754 = vmatpush.bf16.msra.mxu0 %v2984
    %4755 = vmatpush.bf16.msra.mxu0 %v2964
    %4756 = vmatpush.bf16.msra.mxu0 %v2944
    %4757 = vmatpush.bf16.msra.mxu0 %v2924
    %4758 = vmatpush.bf16.msra.mxu0 %v2904
    %4759 = vmatmul.bf16.gmra.mxu0 %v163
    %v4760 = vpop.f32.mrf.mxu0
    %v4761 = vadd.f32 %v4748, %v4760
    %v4762 = vpop.f32.mrf.mxu0
    %4763 = vdwg.mxu0
    %4764 = vmatpush.bf16.msra.mxu0 %v3204
    %4765 = vmatpush.bf16.msra.mxu0 %v3184
    %4766 = vmatpush.bf16.msra.mxu0 %v3164
    %4767 = vmatpush.bf16.msra.mxu0 %v3144
    %4768 = vmatpush.bf16.msra.mxu0 %v3124
    %4769 = vmatpush.bf16.msra.mxu0 %v3104
    %4770 = vmatpush.bf16.msra.mxu0 %v3084
    %4771 = vmatpush.bf16.msra.mxu0 %v3064
    %4772 = vmatmul.bf16.gmra.mxu0 %v164
    %v4773 = vpop.f32.mrf.mxu0
    %v4774 = vadd.f32 %v4761, %v4773
    %v4775 = vpop.f32.mrf.mxu0
    %4776 = vdwg.mxu0
    %4777 = vmatpush.bf16.msra.mxu0 %v3364
    %4778 = vmatpush.bf16.msra.mxu0 %v3344
    %4779 = vmatpush.bf16.msra.mxu0 %v3324
    %4780 = vmatpush.bf16.msra.mxu0 %v3304
    %4781 = vmatpush.bf16.msra.mxu0 %v3284
    %4782 = vmatpush.bf16.msra.mxu0 %v3264
    %4783 = vmatpush.bf16.msra.mxu0 %v3244
    %4784 = vmatpush.bf16.msra.mxu0 %v3224
    %4785 = vmatmul.bf16.gmra.mxu0 %v165
    %v4786 = vpop.f32.mrf.mxu0
    %v4787 = vadd.f32 %v4774, %v4786
    %v4788 = vpop.f32.mrf.mxu0
    %4789 = vdwg.mxu0
    %4790 = vmatpush.bf16.msra.mxu0 %v2885
    %4791 = vmatpush.bf16.msra.mxu0 %v2865
    %4792 = vmatpush.bf16.msra.mxu0 %v2845
    %4793 = vmatpush.bf16.msra.mxu0 %v2825
    %4794 = vmatpush.bf16.msra.mxu0 %v2805
    %4795 = vmatpush.bf16.msra.mxu0 %v2785
    %4796 = vmatpush.bf16.msra.mxu0 %v2765
    %4797 = vmatpush.bf16.msra.mxu0 %v2745
    %4798 = vmatmul.bf16.gmra.mxu0 %v162
    %v4799 = vpop.f32.mrf.mxu0
    %v4800 = vadd.f32 0.0, %v4799
    %v4801 = vpop.f32.mrf.mxu0
    %4802 = vdwg.mxu0
    %4803 = vmatpush.bf16.msra.mxu0 %v3045
    %4804 = vmatpush.bf16.msra.mxu0 %v3025
    %4805 = vmatpush.bf16.msra.mxu0 %v3005
    %4806 = vmatpush.bf16.msra.mxu0 %v2985
    %4807 = vmatpush.bf16.msra.mxu0 %v2965
    %4808 = vmatpush.bf16.msra.mxu0 %v2945
    %4809 = vmatpush.bf16.msra.mxu0 %v2925
    %4810 = vmatpush.bf16.msra.mxu0 %v2905
    %4811 = vmatmul.bf16.gmra.mxu0 %v163
    %v4812 = vpop.f32.mrf.mxu0
    %v4813 = vadd.f32 %v4800, %v4812
    %v4814 = vpop.f32.mrf.mxu0
    %4815 = vdwg.mxu0
    %4816 = vmatpush.bf16.msra.mxu0 %v3205
    %4817 = vmatpush.bf16.msra.mxu0 %v3185
    %4818 = vmatpush.bf16.msra.mxu0 %v3165
    %4819 = vmatpush.bf16.msra.mxu0 %v3145
    %4820 = vmatpush.bf16.msra.mxu0 %v3125
    %4821 = vmatpush.bf16.msra.mxu0 %v3105
    %4822 = vmatpush.bf16.msra.mxu0 %v3085
    %4823 = vmatpush.bf16.msra.mxu0 %v3065
    %4824 = vmatmul.bf16.gmra.mxu0 %v164
    %v4825 = vpop.f32.mrf.mxu0
    %v4826 = vadd.f32 %v4813, %v4825
    %v4827 = vpop.f32.mrf.mxu0
    %4828 = vdwg.mxu0
    %4829 = vmatpush.bf16.msra.mxu0 %v3365
    %4830 = vmatpush.bf16.msra.mxu0 %v3345
    %4831 = vmatpush.bf16.msra.mxu0 %v3325
    %4832 = vmatpush.bf16.msra.mxu0 %v3305
    %4833 = vmatpush.bf16.msra.mxu0 %v3285
    %4834 = vmatpush.bf16.msra.mxu0 %v3265
    %4835 = vmatpush.bf16.msra.mxu0 %v3245
    %4836 = vmatpush.bf16.msra.mxu0 %v3225
    %4837 = vmatmul.bf16.gmra.mxu0 %v165
    %v4838 = vpop.f32.mrf.mxu0
    %v4839 = vadd.f32 %v4826, %v4838
    %v4840 = vpop.f32.mrf.mxu0
    %4841 = vdwg.mxu0
    %4842 = vmatpush.bf16.msra.mxu0 %v2886
    %4843 = vmatpush.bf16.msra.mxu0 %v2866
    %4844 = vmatpush.bf16.msra.mxu0 %v2846
    %4845 = vmatpush.bf16.msra.mxu0 %v2826
    %4846 = vmatpush.bf16.msra.mxu0 %v2806
    %4847 = vmatpush.bf16.msra.mxu0 %v2786
    %4848 = vmatpush.bf16.msra.mxu0 %v2766
    %4849 = vmatpush.bf16.msra.mxu0 %v2746
    %4850 = vmatmul.bf16.gmra.mxu0 %v162
    %v4851 = vpop.f32.mrf.mxu0
    %v4852 = vadd.f32 0.0, %v4851
    %v4853 = vpop.f32.mrf.mxu0
    %4854 = vdwg.mxu0
    %4855 = vmatpush.bf16.msra.mxu0 %v3046
    %4856 = vmatpush.bf16.msra.mxu0 %v3026
    %4857 = vmatpush.bf16.msra.mxu0 %v3006
    %4858 = vmatpush.bf16.msra.mxu0 %v2986
    %4859 = vmatpush.bf16.msra.mxu0 %v2966
    %4860 = vmatpush.bf16.msra.mxu0 %v2946
    %4861 = vmatpush.bf16.msra.mxu0 %v2926
    %4862 = vmatpush.bf16.msra.mxu0 %v2906
    %4863 = vmatmul.bf16.gmra.mxu0 %v163
    %v4864 = vpop.f32.mrf.mxu0
    %v4865 = vadd.f32 %v4852, %v4864
    %v4866 = vpop.f32.mrf.mxu0
    %4867 = vdwg.mxu0
    %4868 = vmatpush.bf16.msra.mxu0 %v3206
    %4869 = vmatpush.bf16.msra.mxu0 %v3186
    %4870 = vmatpush.bf16.msra.mxu0 %v3166
    %4871 = vmatpush.bf16.msra.mxu0 %v3146
    %4872 = vmatpush.bf16.msra.mxu0 %v3126
    %4873 = vmatpush.bf16.msra.mxu0 %v3106
    %4874 = vmatpush.bf16.msra.mxu0 %v3086
    %4875 = vmatpush.bf16.msra.mxu0 %v3066
    %4876 = vmatmul.bf16.gmra.mxu0 %v164
    %v4877 = vpop.f32.mrf.mxu0
    %v4878 = vadd.f32 %v4865, %v4877
    %v4879 = vpop.f32.mrf.mxu0
    %4880 = vdwg.mxu0
    %4881 = vmatpush.bf16.msra.mxu0 %v3366
    %4882 = vmatpush.bf16.msra.mxu0 %v3346
    %4883 = vmatpush.bf16.msra.mxu0 %v3326
    %4884 = vmatpush.bf16.msra.mxu0 %v3306
    %4885 = vmatpush.bf16.msra.mxu0 %v3286
    %4886 = vmatpush.bf16.msra.mxu0 %v3266
    %4887 = vmatpush.bf16.msra.mxu0 %v3246
    %4888 = vmatpush.bf16.msra.mxu0 %v3226
    %4889 = vmatmul.bf16.gmra.mxu0 %v165
    %v4890 = vpop.f32.mrf.mxu0
    %v4891 = vadd.f32 %v4878, %v4890
    %v4892 = vpop.f32.mrf.mxu0
    %4893 = vdwg.mxu0
    %4894 = vmatpush.bf16.msra.mxu0 %v2887
    %4895 = vmatpush.bf16.msra.mxu0 %v2867
    %4896 = vmatpush.bf16.msra.mxu0 %v2847
    %4897 = vmatpush.bf16.msra.mxu0 %v2827
    %4898 = vmatpush.bf16.msra.mxu0 %v2807
    %4899 = vmatpush.bf16.msra.mxu0 %v2787
    %4900 = vmatpush.bf16.msra.mxu0 %v2767
    %4901 = vmatpush.bf16.msra.mxu0 %v2747
    %4902 = vmatmul.bf16.gmra.mxu0 %v162
    %v4903 = vpop.f32.mrf.mxu0
    %v4904 = vadd.f32 0.0, %v4903
    %v4905 = vpop.f32.mrf.mxu0
    %4906 = vdwg.mxu0
    %4907 = vmatpush.bf16.msra.mxu0 %v3047
    %4908 = vmatpush.bf16.msra.mxu0 %v3027
    %4909 = vmatpush.bf16.msra.mxu0 %v3007
    %4910 = vmatpush.bf16.msra.mxu0 %v2987
    %4911 = vmatpush.bf16.msra.mxu0 %v2967
    %4912 = vmatpush.bf16.msra.mxu0 %v2947
    %4913 = vmatpush.bf16.msra.mxu0 %v2927
    %4914 = vmatpush.bf16.msra.mxu0 %v2907
    %4915 = vmatmul.bf16.gmra.mxu0 %v163
    %v4916 = vpop.f32.mrf.mxu0
    %v4917 = vadd.f32 %v4904, %v4916
    %v4918 = vpop.f32.mrf.mxu0
    %4919 = vdwg.mxu0
    %4920 = vmatpush.bf16.msra.mxu0 %v3207
    %4921 = vmatpush.bf16.msra.mxu0 %v3187
    %4922 = vmatpush.bf16.msra.mxu0 %v3167
    %4923 = vmatpush.bf16.msra.mxu0 %v3147
    %4924 = vmatpush.bf16.msra.mxu0 %v3127
    %4925 = vmatpush.bf16.msra.mxu0 %v3107
    %4926 = vmatpush.bf16.msra.mxu0 %v3087
    %4927 = vmatpush.bf16.msra.mxu0 %v3067
    %4928 = vmatmul.bf16.gmra.mxu0 %v164
    %v4929 = vpop.f32.mrf.mxu0
    %v4930 = vadd.f32 %v4917, %v4929
    %v4931 = vpop.f32.mrf.mxu0
    %4932 = vdwg.mxu0
    %4933 = vmatpush.bf16.msra.mxu0 %v3367
    %4934 = vmatpush.bf16.msra.mxu0 %v3347
    %4935 = vmatpush.bf16.msra.mxu0 %v3327
    %4936 = vmatpush.bf16.msra.mxu0 %v3307
    %4937 = vmatpush.bf16.msra.mxu0 %v3287
    %4938 = vmatpush.bf16.msra.mxu0 %v3267
    %4939 = vmatpush.bf16.msra.mxu0 %v3247
    %4940 = vmatpush.bf16.msra.mxu0 %v3227
    %4941 = vmatmul.bf16.gmra.mxu0 %v165
    %v4942 = vpop.f32.mrf.mxu0
    %v4943 = vadd.f32 %v4930, %v4942
    %v4944 = vpop.f32.mrf.mxu0
    %4945 = vdwg.mxu0
    %4946 = vmatpush.bf16.msra.mxu0 %v2888
    %4947 = vmatpush.bf16.msra.mxu0 %v2868
    %4948 = vmatpush.bf16.msra.mxu0 %v2848
    %4949 = vmatpush.bf16.msra.mxu0 %v2828
    %4950 = vmatpush.bf16.msra.mxu0 %v2808
    %4951 = vmatpush.bf16.msra.mxu0 %v2788
    %4952 = vmatpush.bf16.msra.mxu0 %v2768
    %4953 = vmatpush.bf16.msra.mxu0 %v2748
    %4954 = vmatmul.bf16.gmra.mxu0 %v162
    %v4955 = vpop.f32.mrf.mxu0
    %v4956 = vadd.f32 0.0, %v4955
    %v4957 = vpop.f32.mrf.mxu0
    %4958 = vdwg.mxu0
    %4959 = vmatpush.bf16.msra.mxu0 %v3048
    %4960 = vmatpush.bf16.msra.mxu0 %v3028
    %4961 = vmatpush.bf16.msra.mxu0 %v3008
    %4962 = vmatpush.bf16.msra.mxu0 %v2988
    %4963 = vmatpush.bf16.msra.mxu0 %v2968
    %4964 = vmatpush.bf16.msra.mxu0 %v2948
    %4965 = vmatpush.bf16.msra.mxu0 %v2928
    %4966 = vmatpush.bf16.msra.mxu0 %v2908
    %4967 = vmatmul.bf16.gmra.mxu0 %v163
    %v4968 = vpop.f32.mrf.mxu0
    %v4969 = vadd.f32 %v4956, %v4968
    %v4970 = vpop.f32.mrf.mxu0
    %4971 = vdwg.mxu0
    %4972 = vmatpush.bf16.msra.mxu0 %v3208
    %4973 = vmatpush.bf16.msra.mxu0 %v3188
    %4974 = vmatpush.bf16.msra.mxu0 %v3168
    %4975 = vmatpush.bf16.msra.mxu0 %v3148
    %4976 = vmatpush.bf16.msra.mxu0 %v3128
    %4977 = vmatpush.bf16.msra.mxu0 %v3108
    %4978 = vmatpush.bf16.msra.mxu0 %v3088
    %4979 = vmatpush.bf16.msra.mxu0 %v3068
    %4980 = vmatmul.bf16.gmra.mxu0 %v164
    %v4981 = vpop.f32.mrf.mxu0
    %v4982 = vadd.f32 %v4969, %v4981
    %v4983 = vpop.f32.mrf.mxu0
    %4984 = vdwg.mxu0
    %4985 = vmatpush.bf16.msra.mxu0 %v3368
    %4986 = vmatpush.bf16.msra.mxu0 %v3348
    %4987 = vmatpush.bf16.msra.mxu0 %v3328
    %4988 = vmatpush.bf16.msra.mxu0 %v3308
    %4989 = vmatpush.bf16.msra.mxu0 %v3288
    %4990 = vmatpush.bf16.msra.mxu0 %v3268
    %4991 = vmatpush.bf16.msra.mxu0 %v3248
    %4992 = vmatpush.bf16.msra.mxu0 %v3228
    %4993 = vmatmul.bf16.gmra.mxu0 %v165
    %v4994 = vpop.f32.mrf.mxu0
    %v4995 = vadd.f32 %v4982, %v4994
    %v4996 = vpop.f32.mrf.mxu0
    %4997 = vdwg.mxu0
    %4998 = vmatpush.bf16.msra.mxu0 %v2889
    %4999 = vmatpush.bf16.msra.mxu0 %v2869
    %5000 = vmatpush.bf16.msra.mxu0 %v2849
    %5001 = vmatpush.bf16.msra.mxu0 %v2829
    %5002 = vmatpush.bf16.msra.mxu0 %v2809
    %5003 = vmatpush.bf16.msra.mxu0 %v2789
    %5004 = vmatpush.bf16.msra.mxu0 %v2769
    %5005 = vmatpush.bf16.msra.mxu0 %v2749
    %5006 = vmatmul.bf16.gmra.mxu0 %v162
    %v5007 = vpop.f32.mrf.mxu0
    %v5008 = vadd.f32 0.0, %v5007
    %v5009 = vpop.f32.mrf.mxu0
    %5010 = vdwg.mxu0
    %5011 = vmatpush.bf16.msra.mxu0 %v3049
    %5012 = vmatpush.bf16.msra.mxu0 %v3029
    %5013 = vmatpush.bf16.msra.mxu0 %v3009
    %5014 = vmatpush.bf16.msra.mxu0 %v2989
    %5015 = vmatpush.bf16.msra.mxu0 %v2969
    %5016 = vmatpush.bf16.msra.mxu0 %v2949
    %5017 = vmatpush.bf16.msra.mxu0 %v2929
    %5018 = vmatpush.bf16.msra.mxu0 %v2909
    %5019 = vmatmul.bf16.gmra.mxu0 %v163
    %v5020 = vpop.f32.mrf.mxu0
    %v5021 = vadd.f32 %v5008, %v5020
    %v5022 = vpop.f32.mrf.mxu0
    %5023 = vdwg.mxu0
    %5024 = vmatpush.bf16.msra.mxu0 %v3209
    %5025 = vmatpush.bf16.msra.mxu0 %v3189
    %5026 = vmatpush.bf16.msra.mxu0 %v3169
    %5027 = vmatpush.bf16.msra.mxu0 %v3149
    %5028 = vmatpush.bf16.msra.mxu0 %v3129
    %5029 = vmatpush.bf16.msra.mxu0 %v3109
    %5030 = vmatpush.bf16.msra.mxu0 %v3089
    %5031 = vmatpush.bf16.msra.mxu0 %v3069
    %5032 = vmatmul.bf16.gmra.mxu0 %v164
    %v5033 = vpop.f32.mrf.mxu0
    %v5034 = vadd.f32 %v5021, %v5033
    %v5035 = vpop.f32.mrf.mxu0
    %5036 = vdwg.mxu0
    %5037 = vmatpush.bf16.msra.mxu0 %v3369
    %5038 = vmatpush.bf16.msra.mxu0 %v3349
    %5039 = vmatpush.bf16.msra.mxu0 %v3329
    %5040 = vmatpush.bf16.msra.mxu0 %v3309
    %5041 = vmatpush.bf16.msra.mxu0 %v3289
    %5042 = vmatpush.bf16.msra.mxu0 %v3269
    %5043 = vmatpush.bf16.msra.mxu0 %v3249
    %5044 = vmatpush.bf16.msra.mxu0 %v3229
    %5045 = vmatmul.bf16.gmra.mxu0 %v165
    %v5046 = vpop.f32.mrf.mxu0
    %v5047 = vadd.f32 %v5034, %v5046
    %v5048 = vpop.f32.mrf.mxu0
    %5049 = vdwg.mxu0
    %v5050 = vld [vmem:[#allocation4] sm:$0xff]
    %v5051 = vld [vmem:[#allocation4 + $0x8] sm:$0xff]
    %v5052 = vld [vmem:[#allocation4 + $0x10] sm:$0xff]
    %v5053 = vld [vmem:[#allocation4 + $0x18] sm:$0xff]
    %v5054 = vld [vmem:[#allocation4 + $0x20] sm:$0xff]
    %v5055 = vld [vmem:[#allocation4 + $0x28] sm:$0xff]
    %v5056 = vld [vmem:[#allocation4 + $0x30] sm:$0xff]
    %v5057 = vld [vmem:[#allocation4 + $0x38] sm:$0xff]
    %v5058 = vld [vmem:[#allocation4 + $0x40] sm:$0xff]
    %v5059 = vld [vmem:[#allocation4 + $0x48] sm:$0xff]
    %v5060 = vld [vmem:[#allocation4 + $0x50] sm:$0xff]
    %v5061 = vld [vmem:[#allocation4 + $0x58] sm:$0xff]
    %v5062 = vld [vmem:[#allocation4 + $0x60] sm:$0xff]
    %v5063 = vld [vmem:[#allocation4 + $0x68] sm:$0xff]
    %v5064 = vld [vmem:[#allocation4 + $0x70] sm:$0xff]
    %v5065 = vld [vmem:[#allocation4 + $0x78] sm:$0xff]
    %v5066 = vld [vmem:[#allocation4 + $0x80] sm:$0xff]
    %v5067 = vld [vmem:[#allocation4 + $0x88] sm:$0xff]
    %v5068 = vld [vmem:[#allocation4 + $0x90] sm:$0xff]
    %v5069 = vld [vmem:[#allocation4 + $0x98] sm:$0xff]
    %v5070 = vld [vmem:[#allocation4 + $0xa0] sm:$0xff]
    %v5071 = vld [vmem:[#allocation4 + $0xa8] sm:$0xff]
    %v5072 = vld [vmem:[#allocation4 + $0xb0] sm:$0xff]
    %v5073 = vld [vmem:[#allocation4 + $0xb8] sm:$0xff]
    %v5074 = vld [vmem:[#allocation4 + $0xc0] sm:$0xff]
    %v5075 = vld [vmem:[#allocation4 + $0xc8] sm:$0xff]
    %v5076 = vld [vmem:[#allocation4 + $0xd0] sm:$0xff]
    %v5077 = vld [vmem:[#allocation4 + $0xd8] sm:$0xff]
    %v5078 = vld [vmem:[#allocation4 + $0xe0] sm:$0xff]
    %v5079 = vld [vmem:[#allocation4 + $0xe8] sm:$0xff]
    %v5080 = vld [vmem:[#allocation4 + $0xf0] sm:$0xff]
    %v5081 = vld [vmem:[#allocation4 + $0xf8] sm:$0xff]
    %v5082 = vld [vmem:[#allocation4 + $0x100] sm:$0xff]
    %v5083 = vld [vmem:[#allocation4 + $0x108] sm:$0xff]
    %v5084 = vld [vmem:[#allocation4 + $0x110] sm:$0xff]
    %v5085 = vld [vmem:[#allocation4 + $0x118] sm:$0xff]
    %v5086 = vld [vmem:[#allocation4 + $0x120] sm:$0xff]
    %v5087 = vld [vmem:[#allocation4 + $0x128] sm:$0xff]
    %v5088 = vld [vmem:[#allocation4 + $0x130] sm:$0xff]
    %v5089 = vld [vmem:[#allocation4 + $0x138] sm:$0xff]
    %v5090 = vld [vmem:[#allocation4 + $0x140] sm:$0xff]
    %v5091 = vld [vmem:[#allocation4 + $0x148] sm:$0xff]
    %v5092 = vld [vmem:[#allocation4 + $0x150] sm:$0xff]
    %v5093 = vld [vmem:[#allocation4 + $0x158] sm:$0xff]
    %v5094 = vld [vmem:[#allocation4 + $0x160] sm:$0xff]
    %v5095 = vld [vmem:[#allocation4 + $0x168] sm:$0xff]
    %v5096 = vld [vmem:[#allocation4 + $0x170] sm:$0xff]
    %v5097 = vld [vmem:[#allocation4 + $0x178] sm:$0xff]
    %v5098 = vld [vmem:[#allocation4 + $0x180] sm:$0xff]
    %v5099 = vld [vmem:[#allocation4 + $0x188] sm:$0xff]
    %v5100 = vld [vmem:[#allocation4 + $0x190] sm:$0xff]
    %v5101 = vld [vmem:[#allocation4 + $0x198] sm:$0xff]
    %v5102 = vld [vmem:[#allocation4 + $0x1a0] sm:$0xff]
    %v5103 = vld [vmem:[#allocation4 + $0x1a8] sm:$0xff]
    %v5104 = vld [vmem:[#allocation4 + $0x1b0] sm:$0xff]
    %v5105 = vld [vmem:[#allocation4 + $0x1b8] sm:$0xff]
    %v5106 = vld [vmem:[#allocation4 + $0x1c0] sm:$0xff]
    %v5107 = vld [vmem:[#allocation4 + $0x1c8] sm:$0xff]
    %v5108 = vld [vmem:[#allocation4 + $0x1d0] sm:$0xff]
    %v5109 = vld [vmem:[#allocation4 + $0x1d8] sm:$0xff]
    %v5110 = vld [vmem:[#allocation4 + $0x1e0] sm:$0xff]
    %v5111 = vld [vmem:[#allocation4 + $0x1e8] sm:$0xff]
    %v5112 = vld [vmem:[#allocation4 + $0x1f0] sm:$0xff]
    %v5113 = vld [vmem:[#allocation4 + $0x1f8] sm:$0xff]
    %v5114 = vld [vmem:[#allocation4 + $0x200] sm:$0xff]
    %v5115 = vld [vmem:[#allocation4 + $0x208] sm:$0xff]
    %v5116 = vld [vmem:[#allocation4 + $0x210] sm:$0xff]
    %v5117 = vld [vmem:[#allocation4 + $0x218] sm:$0xff]
    %v5118 = vld [vmem:[#allocation4 + $0x220] sm:$0xff]
    %v5119 = vld [vmem:[#allocation4 + $0x228] sm:$0xff]
    %v5120 = vld [vmem:[#allocation4 + $0x230] sm:$0xff]
    %v5121 = vld [vmem:[#allocation4 + $0x238] sm:$0xff]
    %v5122 = vld [vmem:[#allocation4 + $0x240] sm:$0xff]
    %v5123 = vld [vmem:[#allocation4 + $0x248] sm:$0xff]
    %v5124 = vld [vmem:[#allocation4 + $0x250] sm:$0xff]
    %v5125 = vld [vmem:[#allocation4 + $0x258] sm:$0xff]
    %v5126 = vld [vmem:[#allocation4 + $0x260] sm:$0xff]
    %v5127 = vld [vmem:[#allocation4 + $0x268] sm:$0xff]
    %v5128 = vld [vmem:[#allocation4 + $0x270] sm:$0xff]
    %v5129 = vld [vmem:[#allocation4 + $0x278] sm:$0xff]
    %v5130 = vld [vmem:[#allocation4 + $0x280] sm:$0xff]
    %v5131 = vld [vmem:[#allocation4 + $0x288] sm:$0xff]
    %v5132 = vld [vmem:[#allocation4 + $0x290] sm:$0xff]
    %v5133 = vld [vmem:[#allocation4 + $0x298] sm:$0xff]
    %v5134 = vld [vmem:[#allocation4 + $0x2a0] sm:$0xff]
    %v5135 = vld [vmem:[#allocation4 + $0x2a8] sm:$0xff]
    %v5136 = vld [vmem:[#allocation4 + $0x2b0] sm:$0xff]
    %v5137 = vld [vmem:[#allocation4 + $0x2b8] sm:$0xff]
    %v5138 = vld [vmem:[#allocation4 + $0x2c0] sm:$0xff]
    %v5139 = vld [vmem:[#allocation4 + $0x2c8] sm:$0xff]
    %v5140 = vld [vmem:[#allocation4 + $0x2d0] sm:$0xff]
    %v5141 = vld [vmem:[#allocation4 + $0x2d8] sm:$0xff]
    %v5142 = vld [vmem:[#allocation4 + $0x2e0] sm:$0xff]
    %v5143 = vld [vmem:[#allocation4 + $0x2e8] sm:$0xff]
    %v5144 = vld [vmem:[#allocation4 + $0x2f0] sm:$0xff]
    %v5145 = vld [vmem:[#allocation4 + $0x2f8] sm:$0xff]
    %v5146 = vld [vmem:[#allocation4 + $0x300] sm:$0xff]
    %v5147 = vld [vmem:[#allocation4 + $0x308] sm:$0xff]
    %v5148 = vld [vmem:[#allocation4 + $0x310] sm:$0xff]
    %v5149 = vld [vmem:[#allocation4 + $0x318] sm:$0xff]
    %v5150 = vld [vmem:[#allocation4 + $0x320] sm:$0xff]
    %v5151 = vld [vmem:[#allocation4 + $0x328] sm:$0xff]
    %v5152 = vld [vmem:[#allocation4 + $0x330] sm:$0xff]
    %v5153 = vld [vmem:[#allocation4 + $0x338] sm:$0xff]
    %v5154 = vld [vmem:[#allocation4 + $0x340] sm:$0xff]
    %v5155 = vld [vmem:[#allocation4 + $0x348] sm:$0xff]
    %v5156 = vld [vmem:[#allocation4 + $0x350] sm:$0xff]
    %v5157 = vld [vmem:[#allocation4 + $0x358] sm:$0xff]
    %v5158 = vld [vmem:[#allocation4 + $0x360] sm:$0xff]
    %v5159 = vld [vmem:[#allocation4 + $0x368] sm:$0xff]
    %v5160 = vld [vmem:[#allocation4 + $0x370] sm:$0xff]
    %v5161 = vld [vmem:[#allocation4 + $0x378] sm:$0xff]
    %v5162 = vld [vmem:[#allocation4 + $0x380] sm:$0xff]
    %v5163 = vld [vmem:[#allocation4 + $0x388] sm:$0xff]
    %v5164 = vld [vmem:[#allocation4 + $0x390] sm:$0xff]
    %v5165 = vld [vmem:[#allocation4 + $0x398] sm:$0xff]
    %v5166 = vld [vmem:[#allocation4 + $0x3a0] sm:$0xff]
    %v5167 = vld [vmem:[#allocation4 + $0x3a8] sm:$0xff]
    %v5168 = vld [vmem:[#allocation4 + $0x3b0] sm:$0xff]
    %v5169 = vld [vmem:[#allocation4 + $0x3b8] sm:$0xff]
    %v5170 = vld [vmem:[#allocation4 + $0x3c0] sm:$0xff]
    %v5171 = vld [vmem:[#allocation4 + $0x3c8] sm:$0xff]
    %v5172 = vld [vmem:[#allocation4 + $0x3d0] sm:$0xff]
    %v5173 = vld [vmem:[#allocation4 + $0x3d8] sm:$0xff]
    %v5174 = vld [vmem:[#allocation4 + $0x3e0] sm:$0xff]
    %v5175 = vld [vmem:[#allocation4 + $0x3e8] sm:$0xff]
    %v5176 = vld [vmem:[#allocation4 + $0x3f0] sm:$0xff]
    %v5177 = vld [vmem:[#allocation4 + $0x3f8] sm:$0xff]
    %v5178 = vld [vmem:[#allocation4 + $0x400] sm:$0xff]
    %v5179 = vld [vmem:[#allocation4 + $0x408] sm:$0xff]
    %v5180 = vld [vmem:[#allocation4 + $0x410] sm:$0xff]
    %v5181 = vld [vmem:[#allocation4 + $0x418] sm:$0xff]
    %v5182 = vld [vmem:[#allocation4 + $0x420] sm:$0xff]
    %v5183 = vld [vmem:[#allocation4 + $0x428] sm:$0xff]
    %v5184 = vld [vmem:[#allocation4 + $0x430] sm:$0xff]
    %v5185 = vld [vmem:[#allocation4 + $0x438] sm:$0xff]
    %v5186 = vld [vmem:[#allocation4 + $0x440] sm:$0xff]
    %v5187 = vld [vmem:[#allocation4 + $0x448] sm:$0xff]
    %v5188 = vld [vmem:[#allocation4 + $0x450] sm:$0xff]
    %v5189 = vld [vmem:[#allocation4 + $0x458] sm:$0xff]
    %v5190 = vld [vmem:[#allocation4 + $0x460] sm:$0xff]
    %v5191 = vld [vmem:[#allocation4 + $0x468] sm:$0xff]
    %v5192 = vld [vmem:[#allocation4 + $0x470] sm:$0xff]
    %v5193 = vld [vmem:[#allocation4 + $0x478] sm:$0xff]
    %v5194 = vld [vmem:[#allocation4 + $0x480] sm:$0xff]
    %v5195 = vld [vmem:[#allocation4 + $0x488] sm:$0xff]
    %v5196 = vld [vmem:[#allocation4 + $0x490] sm:$0xff]
    %v5197 = vld [vmem:[#allocation4 + $0x498] sm:$0xff]
    %v5198 = vld [vmem:[#allocation4 + $0x4a0] sm:$0xff]
    %v5199 = vld [vmem:[#allocation4 + $0x4a8] sm:$0xff]
    %v5200 = vld [vmem:[#allocation4 + $0x4b0] sm:$0xff]
    %v5201 = vld [vmem:[#allocation4 + $0x4b8] sm:$0xff]
    %v5202 = vld [vmem:[#allocation4 + $0x4c0] sm:$0xff]
    %v5203 = vld [vmem:[#allocation4 + $0x4c8] sm:$0xff]
    %v5204 = vld [vmem:[#allocation4 + $0x4d0] sm:$0xff]
    %v5205 = vld [vmem:[#allocation4 + $0x4d8] sm:$0xff]
    %v5206 = vld [vmem:[#allocation4 + $0x4e0] sm:$0xff]
    %v5207 = vld [vmem:[#allocation4 + $0x4e8] sm:$0xff]
    %v5208 = vld [vmem:[#allocation4 + $0x4f0] sm:$0xff]
    %v5209 = vld [vmem:[#allocation4 + $0x4f8] sm:$0xff]
    %v5210 = vld [vmem:[#allocation4 + $0x500] sm:$0xff]
    %v5211 = vld [vmem:[#allocation4 + $0x508] sm:$0xff]
    %v5212 = vld [vmem:[#allocation4 + $0x510] sm:$0xff]
    %v5213 = vld [vmem:[#allocation4 + $0x518] sm:$0xff]
    %v5214 = vld [vmem:[#allocation4 + $0x520] sm:$0xff]
    %v5215 = vld [vmem:[#allocation4 + $0x528] sm:$0xff]
    %v5216 = vld [vmem:[#allocation4 + $0x530] sm:$0xff]
    %v5217 = vld [vmem:[#allocation4 + $0x538] sm:$0xff]
    %v5218 = vld [vmem:[#allocation4 + $0x540] sm:$0xff]
    %v5219 = vld [vmem:[#allocation4 + $0x548] sm:$0xff]
    %v5220 = vld [vmem:[#allocation4 + $0x550] sm:$0xff]
    %v5221 = vld [vmem:[#allocation4 + $0x558] sm:$0xff]
    %v5222 = vld [vmem:[#allocation4 + $0x560] sm:$0xff]
    %v5223 = vld [vmem:[#allocation4 + $0x568] sm:$0xff]
    %v5224 = vld [vmem:[#allocation4 + $0x570] sm:$0xff]
    %v5225 = vld [vmem:[#allocation4 + $0x578] sm:$0xff]
    %v5226 = vld [vmem:[#allocation4 + $0x580] sm:$0xff]
    %v5227 = vld [vmem:[#allocation4 + $0x588] sm:$0xff]
    %v5228 = vld [vmem:[#allocation4 + $0x590] sm:$0xff]
    %v5229 = vld [vmem:[#allocation4 + $0x598] sm:$0xff]
    %v5230 = vld [vmem:[#allocation4 + $0x5a0] sm:$0xff]
    %v5231 = vld [vmem:[#allocation4 + $0x5a8] sm:$0xff]
    %v5232 = vld [vmem:[#allocation4 + $0x5b0] sm:$0xff]
    %v5233 = vld [vmem:[#allocation4 + $0x5b8] sm:$0xff]
    %v5234 = vld [vmem:[#allocation4 + $0x5c0] sm:$0xff]
    %v5235 = vld [vmem:[#allocation4 + $0x5c8] sm:$0xff]
    %v5236 = vld [vmem:[#allocation4 + $0x5d0] sm:$0xff]
    %v5237 = vld [vmem:[#allocation4 + $0x5d8] sm:$0xff]
    %v5238 = vld [vmem:[#allocation4 + $0x5e0] sm:$0xff]
    %v5239 = vld [vmem:[#allocation4 + $0x5e8] sm:$0xff]
    %v5240 = vld [vmem:[#allocation4 + $0x5f0] sm:$0xff]
    %v5241 = vld [vmem:[#allocation4 + $0x5f8] sm:$0xff]
    %v5434 = vunpack.c.l.b16 %v5050
    %v5435 = vunpack.c.h.b16 %v5050
    %v5436 = vunpack.c.l.b16 %v5051
    %v5437 = vunpack.c.h.b16 %v5051
    %v5438 = vunpack.c.l.b16 %v5052
    %v5439 = vunpack.c.h.b16 %v5052
    %v5440 = vunpack.c.l.b16 %v5053
    %v5441 = vunpack.c.h.b16 %v5053
    %v5442 = vunpack.c.l.b16 %v5054
    %v5443 = vunpack.c.h.b16 %v5054
    %v5444 = vunpack.c.l.b16 %v5055
    %v5445 = vunpack.c.h.b16 %v5055
    %v5446 = vunpack.c.l.b16 %v5056
    %v5447 = vunpack.c.h.b16 %v5056
    %v5448 = vunpack.c.l.b16 %v5057
    %v5449 = vunpack.c.h.b16 %v5057
    %v5450 = vunpack.c.l.b16 %v5058
    %v5451 = vunpack.c.h.b16 %v5058
    %v5452 = vunpack.c.l.b16 %v5059
    %v5453 = vunpack.c.h.b16 %v5059
    %v5454 = vunpack.c.l.b16 %v5060
    %v5455 = vunpack.c.h.b16 %v5060
    %v5456 = vunpack.c.l.b16 %v5061
    %v5457 = vunpack.c.h.b16 %v5061
    %v5458 = vunpack.c.l.b16 %v5062
    %v5459 = vunpack.c.h.b16 %v5062
    %v5460 = vunpack.c.l.b16 %v5063
    %v5461 = vunpack.c.h.b16 %v5063
    %v5462 = vunpack.c.l.b16 %v5064
    %v5463 = vunpack.c.h.b16 %v5064
    %v5464 = vunpack.c.l.b16 %v5065
    %v5465 = vunpack.c.h.b16 %v5065
    %v5466 = vunpack.c.l.b16 %v5066
    %v5467 = vunpack.c.h.b16 %v5066
    %v5468 = vunpack.c.l.b16 %v5067
    %v5469 = vunpack.c.h.b16 %v5067
    %v5470 = vunpack.c.l.b16 %v5068
    %v5471 = vunpack.c.h.b16 %v5068
    %v5472 = vunpack.c.l.b16 %v5069
    %v5473 = vunpack.c.h.b16 %v5069
    %v5474 = vunpack.c.l.b16 %v5070
    %v5475 = vunpack.c.h.b16 %v5070
    %v5476 = vunpack.c.l.b16 %v5071
    %v5477 = vunpack.c.h.b16 %v5071
    %v5478 = vunpack.c.l.b16 %v5072
    %v5479 = vunpack.c.h.b16 %v5072
    %v5480 = vunpack.c.l.b16 %v5073
    %v5481 = vunpack.c.h.b16 %v5073
    %v5482 = vunpack.c.l.b16 %v5074
    %v5483 = vunpack.c.h.b16 %v5074
    %v5484 = vunpack.c.l.b16 %v5075
    %v5485 = vunpack.c.h.b16 %v5075
    %v5486 = vunpack.c.l.b16 %v5076
    %v5487 = vunpack.c.h.b16 %v5076
    %v5488 = vunpack.c.l.b16 %v5077
    %v5489 = vunpack.c.h.b16 %v5077
    %v5490 = vunpack.c.l.b16 %v5078
    %v5491 = vunpack.c.h.b16 %v5078
    %v5492 = vunpack.c.l.b16 %v5079
    %v5493 = vunpack.c.h.b16 %v5079
    %v5494 = vunpack.c.l.b16 %v5080
    %v5495 = vunpack.c.h.b16 %v5080
    %v5496 = vunpack.c.l.b16 %v5081
    %v5497 = vunpack.c.h.b16 %v5081
    %v5498 = vunpack.c.l.b16 %v5082
    %v5499 = vunpack.c.h.b16 %v5082
    %v5500 = vunpack.c.l.b16 %v5083
    %v5501 = vunpack.c.h.b16 %v5083
    %v5502 = vunpack.c.l.b16 %v5084
    %v5503 = vunpack.c.h.b16 %v5084
    %v5504 = vunpack.c.l.b16 %v5085
    %v5505 = vunpack.c.h.b16 %v5085
    %v5506 = vunpack.c.l.b16 %v5086
    %v5507 = vunpack.c.h.b16 %v5086
    %v5508 = vunpack.c.l.b16 %v5087
    %v5509 = vunpack.c.h.b16 %v5087
    %v5510 = vunpack.c.l.b16 %v5088
    %v5511 = vunpack.c.h.b16 %v5088
    %v5512 = vunpack.c.l.b16 %v5089
    %v5513 = vunpack.c.h.b16 %v5089
    %v5514 = vunpack.c.l.b16 %v5090
    %v5515 = vunpack.c.h.b16 %v5090
    %v5516 = vunpack.c.l.b16 %v5091
    %v5517 = vunpack.c.h.b16 %v5091
    %v5518 = vunpack.c.l.b16 %v5092
    %v5519 = vunpack.c.h.b16 %v5092
    %v5520 = vunpack.c.l.b16 %v5093
    %v5521 = vunpack.c.h.b16 %v5093
    %v5522 = vunpack.c.l.b16 %v5094
    %v5523 = vunpack.c.h.b16 %v5094
    %v5524 = vunpack.c.l.b16 %v5095
    %v5525 = vunpack.c.h.b16 %v5095
    %v5526 = vunpack.c.l.b16 %v5096
    %v5527 = vunpack.c.h.b16 %v5096
    %v5528 = vunpack.c.l.b16 %v5097
    %v5529 = vunpack.c.h.b16 %v5097
    %v5530 = vunpack.c.l.b16 %v5098
    %v5531 = vunpack.c.h.b16 %v5098
    %v5532 = vunpack.c.l.b16 %v5099
    %v5533 = vunpack.c.h.b16 %v5099
    %v5534 = vunpack.c.l.b16 %v5100
    %v5535 = vunpack.c.h.b16 %v5100
    %v5536 = vunpack.c.l.b16 %v5101
    %v5537 = vunpack.c.h.b16 %v5101
    %v5538 = vunpack.c.l.b16 %v5102
    %v5539 = vunpack.c.h.b16 %v5102
    %v5540 = vunpack.c.l.b16 %v5103
    %v5541 = vunpack.c.h.b16 %v5103
    %v5542 = vunpack.c.l.b16 %v5104
    %v5543 = vunpack.c.h.b16 %v5104
    %v5544 = vunpack.c.l.b16 %v5105
    %v5545 = vunpack.c.h.b16 %v5105
    %v5546 = vunpack.c.l.b16 %v5106
    %v5547 = vunpack.c.h.b16 %v5106
    %v5548 = vunpack.c.l.b16 %v5107
    %v5549 = vunpack.c.h.b16 %v5107
    %v5550 = vunpack.c.l.b16 %v5108
    %v5551 = vunpack.c.h.b16 %v5108
    %v5552 = vunpack.c.l.b16 %v5109
    %v5553 = vunpack.c.h.b16 %v5109
    %v5554 = vunpack.c.l.b16 %v5110
    %v5555 = vunpack.c.h.b16 %v5110
    %v5556 = vunpack.c.l.b16 %v5111
    %v5557 = vunpack.c.h.b16 %v5111
    %v5558 = vunpack.c.l.b16 %v5112
    %v5559 = vunpack.c.h.b16 %v5112
    %v5560 = vunpack.c.l.b16 %v5113
    %v5561 = vunpack.c.h.b16 %v5113
    %v5562 = vunpack.c.l.b16 %v5114
    %v5563 = vunpack.c.h.b16 %v5114
    %v5564 = vunpack.c.l.b16 %v5115
    %v5565 = vunpack.c.h.b16 %v5115
    %v5566 = vunpack.c.l.b16 %v5116
    %v5567 = vunpack.c.h.b16 %v5116
    %v5568 = vunpack.c.l.b16 %v5117
    %v5569 = vunpack.c.h.b16 %v5117
    %v5570 = vunpack.c.l.b16 %v5118
    %v5571 = vunpack.c.h.b16 %v5118
    %v5572 = vunpack.c.l.b16 %v5119
    %v5573 = vunpack.c.h.b16 %v5119
    %v5574 = vunpack.c.l.b16 %v5120
    %v5575 = vunpack.c.h.b16 %v5120
    %v5576 = vunpack.c.l.b16 %v5121
    %v5577 = vunpack.c.h.b16 %v5121
    %v5578 = vunpack.c.l.b16 %v5122
    %v5579 = vunpack.c.h.b16 %v5122
    %v5580 = vunpack.c.l.b16 %v5123
    %v5581 = vunpack.c.h.b16 %v5123
    %v5582 = vunpack.c.l.b16 %v5124
    %v5583 = vunpack.c.h.b16 %v5124
    %v5584 = vunpack.c.l.b16 %v5125
    %v5585 = vunpack.c.h.b16 %v5125
    %v5586 = vunpack.c.l.b16 %v5126
    %v5587 = vunpack.c.h.b16 %v5126
    %v5588 = vunpack.c.l.b16 %v5127
    %v5589 = vunpack.c.h.b16 %v5127
    %v5590 = vunpack.c.l.b16 %v5128
    %v5591 = vunpack.c.h.b16 %v5128
    %v5592 = vunpack.c.l.b16 %v5129
    %v5593 = vunpack.c.h.b16 %v5129
    %v5594 = vunpack.c.l.b16 %v5130
    %v5595 = vunpack.c.h.b16 %v5130
    %v5596 = vunpack.c.l.b16 %v5131
    %v5597 = vunpack.c.h.b16 %v5131
    %v5598 = vunpack.c.l.b16 %v5132
    %v5599 = vunpack.c.h.b16 %v5132
    %v5600 = vunpack.c.l.b16 %v5133
    %v5601 = vunpack.c.h.b16 %v5133
    %v5602 = vunpack.c.l.b16 %v5134
    %v5603 = vunpack.c.h.b16 %v5134
    %v5604 = vunpack.c.l.b16 %v5135
    %v5605 = vunpack.c.h.b16 %v5135
    %v5606 = vunpack.c.l.b16 %v5136
    %v5607 = vunpack.c.h.b16 %v5136
    %v5608 = vunpack.c.l.b16 %v5137
    %v5609 = vunpack.c.h.b16 %v5137
    %v5610 = vunpack.c.l.b16 %v5138
    %v5611 = vunpack.c.h.b16 %v5138
    %v5612 = vunpack.c.l.b16 %v5139
    %v5613 = vunpack.c.h.b16 %v5139
    %v5614 = vunpack.c.l.b16 %v5140
    %v5615 = vunpack.c.h.b16 %v5140
    %v5616 = vunpack.c.l.b16 %v5141
    %v5617 = vunpack.c.h.b16 %v5141
    %v5618 = vunpack.c.l.b16 %v5142
    %v5619 = vunpack.c.h.b16 %v5142
    %v5620 = vunpack.c.l.b16 %v5143
    %v5621 = vunpack.c.h.b16 %v5143
    %v5622 = vunpack.c.l.b16 %v5144
    %v5623 = vunpack.c.h.b16 %v5144
    %v5624 = vunpack.c.l.b16 %v5145
    %v5625 = vunpack.c.h.b16 %v5145
    %v5626 = vunpack.c.l.b16 %v5146
    %v5627 = vunpack.c.h.b16 %v5146
    %v5628 = vunpack.c.l.b16 %v5147
    %v5629 = vunpack.c.h.b16 %v5147
    %v5630 = vunpack.c.l.b16 %v5148
    %v5631 = vunpack.c.h.b16 %v5148
    %v5632 = vunpack.c.l.b16 %v5149
    %v5633 = vunpack.c.h.b16 %v5149
    %v5634 = vunpack.c.l.b16 %v5150
    %v5635 = vunpack.c.h.b16 %v5150
    %v5636 = vunpack.c.l.b16 %v5151
    %v5637 = vunpack.c.h.b16 %v5151
    %v5638 = vunpack.c.l.b16 %v5152
    %v5639 = vunpack.c.h.b16 %v5152
    %v5640 = vunpack.c.l.b16 %v5153
    %v5641 = vunpack.c.h.b16 %v5153
    %v5642 = vunpack.c.l.b16 %v5154
    %v5643 = vunpack.c.h.b16 %v5154
    %v5644 = vunpack.c.l.b16 %v5155
    %v5645 = vunpack.c.h.b16 %v5155
    %v5646 = vunpack.c.l.b16 %v5156
    %v5647 = vunpack.c.h.b16 %v5156
    %v5648 = vunpack.c.l.b16 %v5157
    %v5649 = vunpack.c.h.b16 %v5157
    %v5650 = vunpack.c.l.b16 %v5158
    %v5651 = vunpack.c.h.b16 %v5158
    %v5652 = vunpack.c.l.b16 %v5159
    %v5653 = vunpack.c.h.b16 %v5159
    %v5654 = vunpack.c.l.b16 %v5160
    %v5655 = vunpack.c.h.b16 %v5160
    %v5656 = vunpack.c.l.b16 %v5161
    %v5657 = vunpack.c.h.b16 %v5161
    %v5658 = vunpack.c.l.b16 %v5162
    %v5659 = vunpack.c.h.b16 %v5162
    %v5660 = vunpack.c.l.b16 %v5163
    %v5661 = vunpack.c.h.b16 %v5163
    %v5662 = vunpack.c.l.b16 %v5164
    %v5663 = vunpack.c.h.b16 %v5164
    %v5664 = vunpack.c.l.b16 %v5165
    %v5665 = vunpack.c.h.b16 %v5165
    %v5666 = vunpack.c.l.b16 %v5166
    %v5667 = vunpack.c.h.b16 %v5166
    %v5668 = vunpack.c.l.b16 %v5167
    %v5669 = vunpack.c.h.b16 %v5167
    %v5670 = vunpack.c.l.b16 %v5168
    %v5671 = vunpack.c.h.b16 %v5168
    %v5672 = vunpack.c.l.b16 %v5169
    %v5673 = vunpack.c.h.b16 %v5169
    %v5674 = vunpack.c.l.b16 %v5170
    %v5675 = vunpack.c.h.b16 %v5170
    %v5676 = vunpack.c.l.b16 %v5171
    %v5677 = vunpack.c.h.b16 %v5171
    %v5678 = vunpack.c.l.b16 %v5172
    %v5679 = vunpack.c.h.b16 %v5172
    %v5680 = vunpack.c.l.b16 %v5173
    %v5681 = vunpack.c.h.b16 %v5173
    %v5682 = vunpack.c.l.b16 %v5174
    %v5683 = vunpack.c.h.b16 %v5174
    %v5684 = vunpack.c.l.b16 %v5175
    %v5685 = vunpack.c.h.b16 %v5175
    %v5686 = vunpack.c.l.b16 %v5176
    %v5687 = vunpack.c.h.b16 %v5176
    %v5688 = vunpack.c.l.b16 %v5177
    %v5689 = vunpack.c.h.b16 %v5177
    %v5690 = vunpack.c.l.b16 %v5178
    %v5691 = vunpack.c.h.b16 %v5178
    %v5692 = vunpack.c.l.b16 %v5179
    %v5693 = vunpack.c.h.b16 %v5179
    %v5694 = vunpack.c.l.b16 %v5180
    %v5695 = vunpack.c.h.b16 %v5180
    %v5696 = vunpack.c.l.b16 %v5181
    %v5697 = vunpack.c.h.b16 %v5181
    %v5698 = vunpack.c.l.b16 %v5182
    %v5699 = vunpack.c.h.b16 %v5182
    %v5700 = vunpack.c.l.b16 %v5183
    %v5701 = vunpack.c.h.b16 %v5183
    %v5702 = vunpack.c.l.b16 %v5184
    %v5703 = vunpack.c.h.b16 %v5184
    %v5704 = vunpack.c.l.b16 %v5185
    %v5705 = vunpack.c.h.b16 %v5185
    %v5706 = vunpack.c.l.b16 %v5186
    %v5707 = vunpack.c.h.b16 %v5186
    %v5708 = vunpack.c.l.b16 %v5187
    %v5709 = vunpack.c.h.b16 %v5187
    %v5710 = vunpack.c.l.b16 %v5188
    %v5711 = vunpack.c.h.b16 %v5188
    %v5712 = vunpack.c.l.b16 %v5189
    %v5713 = vunpack.c.h.b16 %v5189
    %v5714 = vunpack.c.l.b16 %v5190
    %v5715 = vunpack.c.h.b16 %v5190
    %v5716 = vunpack.c.l.b16 %v5191
    %v5717 = vunpack.c.h.b16 %v5191
    %v5718 = vunpack.c.l.b16 %v5192
    %v5719 = vunpack.c.h.b16 %v5192
    %v5720 = vunpack.c.l.b16 %v5193
    %v5721 = vunpack.c.h.b16 %v5193
    %v5722 = vunpack.c.l.b16 %v5194
    %v5723 = vunpack.c.h.b16 %v5194
    %v5724 = vunpack.c.l.b16 %v5195
    %v5725 = vunpack.c.h.b16 %v5195
    %v5726 = vunpack.c.l.b16 %v5196
    %v5727 = vunpack.c.h.b16 %v5196
    %v5728 = vunpack.c.l.b16 %v5197
    %v5729 = vunpack.c.h.b16 %v5197
    %v5730 = vunpack.c.l.b16 %v5198
    %v5731 = vunpack.c.h.b16 %v5198
    %v5732 = vunpack.c.l.b16 %v5199
    %v5733 = vunpack.c.h.b16 %v5199
    %v5734 = vunpack.c.l.b16 %v5200
    %v5735 = vunpack.c.h.b16 %v5200
    %v5736 = vunpack.c.l.b16 %v5201
    %v5737 = vunpack.c.h.b16 %v5201
    %v5738 = vunpack.c.l.b16 %v5202
    %v5739 = vunpack.c.h.b16 %v5202
    %v5740 = vunpack.c.l.b16 %v5203
    %v5741 = vunpack.c.h.b16 %v5203
    %v5742 = vunpack.c.l.b16 %v5204
    %v5743 = vunpack.c.h.b16 %v5204
    %v5744 = vunpack.c.l.b16 %v5205
    %v5745 = vunpack.c.h.b16 %v5205
    %v5746 = vunpack.c.l.b16 %v5206
    %v5747 = vunpack.c.h.b16 %v5206
    %v5748 = vunpack.c.l.b16 %v5207
    %v5749 = vunpack.c.h.b16 %v5207
    %v5750 = vunpack.c.l.b16 %v5208
    %v5751 = vunpack.c.h.b16 %v5208
    %v5752 = vunpack.c.l.b16 %v5209
    %v5753 = vunpack.c.h.b16 %v5209
    %v5754 = vunpack.c.l.b16 %v5210
    %v5755 = vunpack.c.h.b16 %v5210
    %v5756 = vunpack.c.l.b16 %v5211
    %v5757 = vunpack.c.h.b16 %v5211
    %v5758 = vunpack.c.l.b16 %v5212
    %v5759 = vunpack.c.h.b16 %v5212
    %v5760 = vunpack.c.l.b16 %v5213
    %v5761 = vunpack.c.h.b16 %v5213
    %v5762 = vunpack.c.l.b16 %v5214
    %v5763 = vunpack.c.h.b16 %v5214
    %v5764 = vunpack.c.l.b16 %v5215
    %v5765 = vunpack.c.h.b16 %v5215
    %v5766 = vunpack.c.l.b16 %v5216
    %v5767 = vunpack.c.h.b16 %v5216
    %v5768 = vunpack.c.l.b16 %v5217
    %v5769 = vunpack.c.h.b16 %v5217
    %v5770 = vunpack.c.l.b16 %v5218
    %v5771 = vunpack.c.h.b16 %v5218
    %v5772 = vunpack.c.l.b16 %v5219
    %v5773 = vunpack.c.h.b16 %v5219
    %v5774 = vunpack.c.l.b16 %v5220
    %v5775 = vunpack.c.h.b16 %v5220
    %v5776 = vunpack.c.l.b16 %v5221
    %v5777 = vunpack.c.h.b16 %v5221
    %v5778 = vunpack.c.l.b16 %v5222
    %v5779 = vunpack.c.h.b16 %v5222
    %v5780 = vunpack.c.l.b16 %v5223
    %v5781 = vunpack.c.h.b16 %v5223
    %v5782 = vunpack.c.l.b16 %v5224
    %v5783 = vunpack.c.h.b16 %v5224
    %v5784 = vunpack.c.l.b16 %v5225
    %v5785 = vunpack.c.h.b16 %v5225
    %v5786 = vunpack.c.l.b16 %v5226
    %v5787 = vunpack.c.h.b16 %v5226
    %v5788 = vunpack.c.l.b16 %v5227
    %v5789 = vunpack.c.h.b16 %v5227
    %v5790 = vunpack.c.l.b16 %v5228
    %v5791 = vunpack.c.h.b16 %v5228
    %v5792 = vunpack.c.l.b16 %v5229
    %v5793 = vunpack.c.h.b16 %v5229
    %v5794 = vunpack.c.l.b16 %v5230
    %v5795 = vunpack.c.h.b16 %v5230
    %v5796 = vunpack.c.l.b16 %v5231
    %v5797 = vunpack.c.h.b16 %v5231
    %v5798 = vunpack.c.l.b16 %v5232
    %v5799 = vunpack.c.h.b16 %v5232
    %v5800 = vunpack.c.l.b16 %v5233
    %v5801 = vunpack.c.h.b16 %v5233
    %v5802 = vunpack.c.l.b16 %v5234
    %v5803 = vunpack.c.h.b16 %v5234
    %v5804 = vunpack.c.l.b16 %v5235
    %v5805 = vunpack.c.h.b16 %v5235
    %v5806 = vunpack.c.l.b16 %v5236
    %v5807 = vunpack.c.h.b16 %v5236
    %v5808 = vunpack.c.l.b16 %v5237
    %v5809 = vunpack.c.h.b16 %v5237
    %v5810 = vunpack.c.l.b16 %v5238
    %v5811 = vunpack.c.h.b16 %v5238
    %v5812 = vunpack.c.l.b16 %v5239
    %v5813 = vunpack.c.h.b16 %v5239
    %v5814 = vunpack.c.l.b16 %v5240
    %v5815 = vunpack.c.h.b16 %v5240
    %v5816 = vunpack.c.l.b16 %v5241
    %v5817 = vunpack.c.h.b16 %v5241
    %v5818 = vpack.c.b16 %v5446, %v5434
    %v5819 = vpack.c.b16 %v5447, %v5435
    %v5820 = vpack.c.b16 %v5448, %v5436
    %v5821 = vpack.c.b16 %v5449, %v5437
    %v5822 = vpack.c.b16 %v5450, %v5438
    %v5823 = vpack.c.b16 %v5451, %v5439
    %v5824 = vpack.c.b16 %v5452, %v5440
    %v5825 = vpack.c.b16 %v5453, %v5441
    %v5826 = vpack.c.b16 %v5454, %v5442
    %v5827 = vpack.c.b16 %v5455, %v5443
    %v5828 = vpack.c.b16 %v5456, %v5444
    %v5829 = vpack.c.b16 %v5457, %v5445
    %v5830 = vpack.c.b16 %v5470, %v5458
    %v5831 = vpack.c.b16 %v5471, %v5459
    %v5832 = vpack.c.b16 %v5472, %v5460
    %v5833 = vpack.c.b16 %v5473, %v5461
    %v5834 = vpack.c.b16 %v5474, %v5462
    %v5835 = vpack.c.b16 %v5475, %v5463
    %v5836 = vpack.c.b16 %v5476, %v5464
    %v5837 = vpack.c.b16 %v5477, %v5465
    %v5838 = vpack.c.b16 %v5478, %v5466
    %v5839 = vpack.c.b16 %v5479, %v5467
    %v5840 = vpack.c.b16 %v5480, %v5468
    %v5841 = vpack.c.b16 %v5481, %v5469
    %v5842 = vpack.c.b16 %v5494, %v5482
    %v5843 = vpack.c.b16 %v5495, %v5483
    %v5844 = vpack.c.b16 %v5496, %v5484
    %v5845 = vpack.c.b16 %v5497, %v5485
    %v5846 = vpack.c.b16 %v5498, %v5486
    %v5847 = vpack.c.b16 %v5499, %v5487
    %v5848 = vpack.c.b16 %v5500, %v5488
    %v5849 = vpack.c.b16 %v5501, %v5489
    %v5850 = vpack.c.b16 %v5502, %v5490
    %v5851 = vpack.c.b16 %v5503, %v5491
    %v5852 = vpack.c.b16 %v5504, %v5492
    %v5853 = vpack.c.b16 %v5505, %v5493
    %v5854 = vpack.c.b16 %v5518, %v5506
    %v5855 = vpack.c.b16 %v5519, %v5507
    %v5856 = vpack.c.b16 %v5520, %v5508
    %v5857 = vpack.c.b16 %v5521, %v5509
    %v5858 = vpack.c.b16 %v5522, %v5510
    %v5859 = vpack.c.b16 %v5523, %v5511
    %v5860 = vpack.c.b16 %v5524, %v5512
    %v5861 = vpack.c.b16 %v5525, %v5513
    %v5862 = vpack.c.b16 %v5526, %v5514
    %v5863 = vpack.c.b16 %v5527, %v5515
    %v5864 = vpack.c.b16 %v5528, %v5516
    %v5865 = vpack.c.b16 %v5529, %v5517
    %v5866 = vpack.c.b16 %v5542, %v5530
    %v5867 = vpack.c.b16 %v5543, %v5531
    %v5868 = vpack.c.b16 %v5544, %v5532
    %v5869 = vpack.c.b16 %v5545, %v5533
    %v5870 = vpack.c.b16 %v5546, %v5534
    %v5871 = vpack.c.b16 %v5547, %v5535
    %v5872 = vpack.c.b16 %v5548, %v5536
    %v5873 = vpack.c.b16 %v5549, %v5537
    %v5874 = vpack.c.b16 %v5550, %v5538
    %v5875 = vpack.c.b16 %v5551, %v5539
    %v5876 = vpack.c.b16 %v5552, %v5540
    %v5877 = vpack.c.b16 %v5553, %v5541
    %v5878 = vpack.c.b16 %v5566, %v5554
    %v5879 = vpack.c.b16 %v5567, %v5555
    %v5880 = vpack.c.b16 %v5568, %v5556
    %v5881 = vpack.c.b16 %v5569, %v5557
    %v5882 = vpack.c.b16 %v5570, %v5558
    %v5883 = vpack.c.b16 %v5571, %v5559
    %v5884 = vpack.c.b16 %v5572, %v5560
    %v5885 = vpack.c.b16 %v5573, %v5561
    %v5886 = vpack.c.b16 %v5574, %v5562
    %v5887 = vpack.c.b16 %v5575, %v5563
    %v5888 = vpack.c.b16 %v5576, %v5564
    %v5889 = vpack.c.b16 %v5577, %v5565
    %v5890 = vpack.c.b16 %v5590, %v5578
    %v5891 = vpack.c.b16 %v5591, %v5579
    %v5892 = vpack.c.b16 %v5592, %v5580
    %v5893 = vpack.c.b16 %v5593, %v5581
    %v5894 = vpack.c.b16 %v5594, %v5582
    %v5895 = vpack.c.b16 %v5595, %v5583
    %v5896 = vpack.c.b16 %v5596, %v5584
    %v5897 = vpack.c.b16 %v5597, %v5585
    %v5898 = vpack.c.b16 %v5598, %v5586
    %v5899 = vpack.c.b16 %v5599, %v5587
    %v5900 = vpack.c.b16 %v5600, %v5588
    %v5901 = vpack.c.b16 %v5601, %v5589
    %v5902 = vpack.c.b16 %v5614, %v5602
    %v5903 = vpack.c.b16 %v5615, %v5603
    %v5904 = vpack.c.b16 %v5616, %v5604
    %v5905 = vpack.c.b16 %v5617, %v5605
    %v5906 = vpack.c.b16 %v5618, %v5606
    %v5907 = vpack.c.b16 %v5619, %v5607
    %v5908 = vpack.c.b16 %v5620, %v5608
    %v5909 = vpack.c.b16 %v5621, %v5609
    %v5910 = vpack.c.b16 %v5622, %v5610
    %v5911 = vpack.c.b16 %v5623, %v5611
    %v5912 = vpack.c.b16 %v5624, %v5612
    %v5913 = vpack.c.b16 %v5625, %v5613
    %v5914 = vpack.c.b16 %v5638, %v5626
    %v5915 = vpack.c.b16 %v5639, %v5627
    %v5916 = vpack.c.b16 %v5640, %v5628
    %v5917 = vpack.c.b16 %v5641, %v5629
    %v5918 = vpack.c.b16 %v5642, %v5630
    %v5919 = vpack.c.b16 %v5643, %v5631
    %v5920 = vpack.c.b16 %v5644, %v5632
    %v5921 = vpack.c.b16 %v5645, %v5633
    %v5922 = vpack.c.b16 %v5646, %v5634
    %v5923 = vpack.c.b16 %v5647, %v5635
    %v5924 = vpack.c.b16 %v5648, %v5636
    %v5925 = vpack.c.b16 %v5649, %v5637
    %v5926 = vpack.c.b16 %v5662, %v5650
    %v5927 = vpack.c.b16 %v5663, %v5651
    %v5928 = vpack.c.b16 %v5664, %v5652
    %v5929 = vpack.c.b16 %v5665, %v5653
    %v5930 = vpack.c.b16 %v5666, %v5654
    %v5931 = vpack.c.b16 %v5667, %v5655
    %v5932 = vpack.c.b16 %v5668, %v5656
    %v5933 = vpack.c.b16 %v5669, %v5657
    %v5934 = vpack.c.b16 %v5670, %v5658
    %v5935 = vpack.c.b16 %v5671, %v5659
    %v5936 = vpack.c.b16 %v5672, %v5660
    %v5937 = vpack.c.b16 %v5673, %v5661
    %v5938 = vpack.c.b16 %v5686, %v5674
    %v5939 = vpack.c.b16 %v5687, %v5675
    %v5940 = vpack.c.b16 %v5688, %v5676
    %v5941 = vpack.c.b16 %v5689, %v5677
    %v5942 = vpack.c.b16 %v5690, %v5678
    %v5943 = vpack.c.b16 %v5691, %v5679
    %v5944 = vpack.c.b16 %v5692, %v5680
    %v5945 = vpack.c.b16 %v5693, %v5681
    %v5946 = vpack.c.b16 %v5694, %v5682
    %v5947 = vpack.c.b16 %v5695, %v5683
    %v5948 = vpack.c.b16 %v5696, %v5684
    %v5949 = vpack.c.b16 %v5697, %v5685
    %v5950 = vpack.c.b16 %v5710, %v5698
    %v5951 = vpack.c.b16 %v5711, %v5699
    %v5952 = vpack.c.b16 %v5712, %v5700
    %v5953 = vpack.c.b16 %v5713, %v5701
    %v5954 = vpack.c.b16 %v5714, %v5702
    %v5955 = vpack.c.b16 %v5715, %v5703
    %v5956 = vpack.c.b16 %v5716, %v5704
    %v5957 = vpack.c.b16 %v5717, %v5705
    %v5958 = vpack.c.b16 %v5718, %v5706
    %v5959 = vpack.c.b16 %v5719, %v5707
    %v5960 = vpack.c.b16 %v5720, %v5708
    %v5961 = vpack.c.b16 %v5721, %v5709
    %v5962 = vpack.c.b16 %v5734, %v5722
    %v5963 = vpack.c.b16 %v5735, %v5723
    %v5964 = vpack.c.b16 %v5736, %v5724
    %v5965 = vpack.c.b16 %v5737, %v5725
    %v5966 = vpack.c.b16 %v5738, %v5726
    %v5967 = vpack.c.b16 %v5739, %v5727
    %v5968 = vpack.c.b16 %v5740, %v5728
    %v5969 = vpack.c.b16 %v5741, %v5729
    %v5970 = vpack.c.b16 %v5742, %v5730
    %v5971 = vpack.c.b16 %v5743, %v5731
    %v5972 = vpack.c.b16 %v5744, %v5732
    %v5973 = vpack.c.b16 %v5745, %v5733
    %v5974 = vpack.c.b16 %v5758, %v5746
    %v5975 = vpack.c.b16 %v5759, %v5747
    %v5976 = vpack.c.b16 %v5760, %v5748
    %v5977 = vpack.c.b16 %v5761, %v5749
    %v5978 = vpack.c.b16 %v5762, %v5750
    %v5979 = vpack.c.b16 %v5763, %v5751
    %v5980 = vpack.c.b16 %v5764, %v5752
    %v5981 = vpack.c.b16 %v5765, %v5753
    %v5982 = vpack.c.b16 %v5766, %v5754
    %v5983 = vpack.c.b16 %v5767, %v5755
    %v5984 = vpack.c.b16 %v5768, %v5756
    %v5985 = vpack.c.b16 %v5769, %v5757
    %v5986 = vpack.c.b16 %v5782, %v5770
    %v5987 = vpack.c.b16 %v5783, %v5771
    %v5988 = vpack.c.b16 %v5784, %v5772
    %v5989 = vpack.c.b16 %v5785, %v5773
    %v5990 = vpack.c.b16 %v5786, %v5774
    %v5991 = vpack.c.b16 %v5787, %v5775
    %v5992 = vpack.c.b16 %v5788, %v5776
    %v5993 = vpack.c.b16 %v5789, %v5777
    %v5994 = vpack.c.b16 %v5790, %v5778
    %v5995 = vpack.c.b16 %v5791, %v5779
    %v5996 = vpack.c.b16 %v5792, %v5780
    %v5997 = vpack.c.b16 %v5793, %v5781
    %v5998 = vpack.c.b16 %v5806, %v5794
    %v5999 = vpack.c.b16 %v5807, %v5795
    %v6000 = vpack.c.b16 %v5808, %v5796
    %v6001 = vpack.c.b16 %v5809, %v5797
    %v6002 = vpack.c.b16 %v5810, %v5798
    %v6003 = vpack.c.b16 %v5811, %v5799
    %v6004 = vpack.c.b16 %v5812, %v5800
    %v6005 = vpack.c.b16 %v5813, %v5801
    %v6006 = vpack.c.b16 %v5814, %v5802
    %v6007 = vpack.c.b16 %v5815, %v5803
    %v6008 = vpack.c.b16 %v5816, %v5804
    %v6009 = vpack.c.b16 %v5817, %v5805
    %6202 = vmatpush.bf16.msra.mxu0 %v5902
    %6203 = vmatpush.bf16.msra.mxu0 %v5890
    %6204 = vmatpush.bf16.msra.mxu0 %v5878
    %6205 = vmatpush.bf16.msra.mxu0 %v5866
    %6206 = vmatpush.bf16.msra.mxu0 %v5854
    %6207 = vmatpush.bf16.msra.mxu0 %v5842
    %6208 = vmatpush.bf16.msra.mxu0 %v5830
    %6209 = vmatpush.bf16.msra.mxu0 %v5818
    %6210 = vmatmul.bf16.gmra.mxu0 %v156
    %v6211 = vpop.f32.mrf.mxu0
    %v6212 = vadd.f32 %v4059, %v6211
    %v6213 = vpop.f32.mrf.mxu0
    %6214 = vdwg.mxu0
    %6215 = vmatpush.bf16.msra.mxu0 %v5998
    %6216 = vmatpush.bf16.msra.mxu0 %v5986
    %6217 = vmatpush.bf16.msra.mxu0 %v5974
    %6218 = vmatpush.bf16.msra.mxu0 %v5962
    %6219 = vmatpush.bf16.msra.mxu0 %v5950
    %6220 = vmatpush.bf16.msra.mxu0 %v5938
    %6221 = vmatpush.bf16.msra.mxu0 %v5926
    %6222 = vmatpush.bf16.msra.mxu0 %v5914
    %6223 = vmatmul.bf16.gmra.mxu0 %v157
    %v6224 = vpop.f32.mrf.mxu0
    %v6225 = vadd.f32 %v6212, %v6224
    %v6226 = vpop.f32.mrf.mxu0
    %6227 = vdwg.mxu0
    %6228 = vmatpush.bf16.msra.mxu0 %v5903
    %6229 = vmatpush.bf16.msra.mxu0 %v5891
    %6230 = vmatpush.bf16.msra.mxu0 %v5879
    %6231 = vmatpush.bf16.msra.mxu0 %v5867
    %6232 = vmatpush.bf16.msra.mxu0 %v5855
    %6233 = vmatpush.bf16.msra.mxu0 %v5843
    %6234 = vmatpush.bf16.msra.mxu0 %v5831
    %6235 = vmatpush.bf16.msra.mxu0 %v5819
    %6236 = vmatmul.bf16.gmra.mxu0 %v156
    %v6237 = vpop.f32.mrf.mxu0
    %v6238 = vadd.f32 %v4111, %v6237
    %v6239 = vpop.f32.mrf.mxu0
    %6240 = vdwg.mxu0
    %6241 = vmatpush.bf16.msra.mxu0 %v5999
    %6242 = vmatpush.bf16.msra.mxu0 %v5987
    %6243 = vmatpush.bf16.msra.mxu0 %v5975
    %6244 = vmatpush.bf16.msra.mxu0 %v5963
    %6245 = vmatpush.bf16.msra.mxu0 %v5951
    %6246 = vmatpush.bf16.msra.mxu0 %v5939
    %6247 = vmatpush.bf16.msra.mxu0 %v5927
    %6248 = vmatpush.bf16.msra.mxu0 %v5915
    %6249 = vmatmul.bf16.gmra.mxu0 %v157
    %v6250 = vpop.f32.mrf.mxu0
    %v6251 = vadd.f32 %v6238, %v6250
    %v6252 = vpop.f32.mrf.mxu0
    %6253 = vdwg.mxu0
    %6254 = vmatpush.bf16.msra.mxu0 %v5904
    %6255 = vmatpush.bf16.msra.mxu0 %v5892
    %6256 = vmatpush.bf16.msra.mxu0 %v5880
    %6257 = vmatpush.bf16.msra.mxu0 %v5868
    %6258 = vmatpush.bf16.msra.mxu0 %v5856
    %6259 = vmatpush.bf16.msra.mxu0 %v5844
    %6260 = vmatpush.bf16.msra.mxu0 %v5832
    %6261 = vmatpush.bf16.msra.mxu0 %v5820
    %6262 = vmatmul.bf16.gmra.mxu0 %v156
    %v6263 = vpop.f32.mrf.mxu0
    %v6264 = vadd.f32 %v4163, %v6263
    %v6265 = vpop.f32.mrf.mxu0
    %6266 = vdwg.mxu0
    %6267 = vmatpush.bf16.msra.mxu0 %v6000
    %6268 = vmatpush.bf16.msra.mxu0 %v5988
    %6269 = vmatpush.bf16.msra.mxu0 %v5976
    %6270 = vmatpush.bf16.msra.mxu0 %v5964
    %6271 = vmatpush.bf16.msra.mxu0 %v5952
    %6272 = vmatpush.bf16.msra.mxu0 %v5940
    %6273 = vmatpush.bf16.msra.mxu0 %v5928
    %6274 = vmatpush.bf16.msra.mxu0 %v5916
    %6275 = vmatmul.bf16.gmra.mxu0 %v157
    %v6276 = vpop.f32.mrf.mxu0
    %v6277 = vadd.f32 %v6264, %v6276
    %v6278 = vpop.f32.mrf.mxu0
    %6279 = vdwg.mxu0
    %6280 = vmatpush.bf16.msra.mxu0 %v5905
    %6281 = vmatpush.bf16.msra.mxu0 %v5893
    %6282 = vmatpush.bf16.msra.mxu0 %v5881
    %6283 = vmatpush.bf16.msra.mxu0 %v5869
    %6284 = vmatpush.bf16.msra.mxu0 %v5857
    %6285 = vmatpush.bf16.msra.mxu0 %v5845
    %6286 = vmatpush.bf16.msra.mxu0 %v5833
    %6287 = vmatpush.bf16.msra.mxu0 %v5821
    %6288 = vmatmul.bf16.gmra.mxu0 %v156
    %v6289 = vpop.f32.mrf.mxu0
    %v6290 = vadd.f32 %v4215, %v6289
    %v6291 = vpop.f32.mrf.mxu0
    %6292 = vdwg.mxu0
    %6293 = vmatpush.bf16.msra.mxu0 %v6001
    %6294 = vmatpush.bf16.msra.mxu0 %v5989
    %6295 = vmatpush.bf16.msra.mxu0 %v5977
    %6296 = vmatpush.bf16.msra.mxu0 %v5965
    %6297 = vmatpush.bf16.msra.mxu0 %v5953
    %6298 = vmatpush.bf16.msra.mxu0 %v5941
    %6299 = vmatpush.bf16.msra.mxu0 %v5929
    %6300 = vmatpush.bf16.msra.mxu0 %v5917
    %6301 = vmatmul.bf16.gmra.mxu0 %v157
    %v6302 = vpop.f32.mrf.mxu0
    %v6303 = vadd.f32 %v6290, %v6302
    %v6304 = vpop.f32.mrf.mxu0
    %6305 = vdwg.mxu0
    %6306 = vmatpush.bf16.msra.mxu0 %v5906
    %6307 = vmatpush.bf16.msra.mxu0 %v5894
    %6308 = vmatpush.bf16.msra.mxu0 %v5882
    %6309 = vmatpush.bf16.msra.mxu0 %v5870
    %6310 = vmatpush.bf16.msra.mxu0 %v5858
    %6311 = vmatpush.bf16.msra.mxu0 %v5846
    %6312 = vmatpush.bf16.msra.mxu0 %v5834
    %6313 = vmatpush.bf16.msra.mxu0 %v5822
    %6314 = vmatmul.bf16.gmra.mxu0 %v156
    %v6315 = vpop.f32.mrf.mxu0
    %v6316 = vadd.f32 %v4267, %v6315
    %v6317 = vpop.f32.mrf.mxu0
    %6318 = vdwg.mxu0
    %6319 = vmatpush.bf16.msra.mxu0 %v6002
    %6320 = vmatpush.bf16.msra.mxu0 %v5990
    %6321 = vmatpush.bf16.msra.mxu0 %v5978
    %6322 = vmatpush.bf16.msra.mxu0 %v5966
    %6323 = vmatpush.bf16.msra.mxu0 %v5954
    %6324 = vmatpush.bf16.msra.mxu0 %v5942
    %6325 = vmatpush.bf16.msra.mxu0 %v5930
    %6326 = vmatpush.bf16.msra.mxu0 %v5918
    %6327 = vmatmul.bf16.gmra.mxu0 %v157
    %v6328 = vpop.f32.mrf.mxu0
    %v6329 = vadd.f32 %v6316, %v6328
    %v6330 = vpop.f32.mrf.mxu0
    %6331 = vdwg.mxu0
    %6332 = vmatpush.bf16.msra.mxu0 %v5907
    %6333 = vmatpush.bf16.msra.mxu0 %v5895
    %6334 = vmatpush.bf16.msra.mxu0 %v5883
    %6335 = vmatpush.bf16.msra.mxu0 %v5871
    %6336 = vmatpush.bf16.msra.mxu0 %v5859
    %6337 = vmatpush.bf16.msra.mxu0 %v5847
    %6338 = vmatpush.bf16.msra.mxu0 %v5835
    %6339 = vmatpush.bf16.msra.mxu0 %v5823
    %6340 = vmatmul.bf16.gmra.mxu0 %v156
    %v6341 = vpop.f32.mrf.mxu0
    %v6342 = vadd.f32 %v4319, %v6341
    %v6343 = vpop.f32.mrf.mxu0
    %6344 = vdwg.mxu0
    %6345 = vmatpush.bf16.msra.mxu0 %v6003
    %6346 = vmatpush.bf16.msra.mxu0 %v5991
    %6347 = vmatpush.bf16.msra.mxu0 %v5979
    %6348 = vmatpush.bf16.msra.mxu0 %v5967
    %6349 = vmatpush.bf16.msra.mxu0 %v5955
    %6350 = vmatpush.bf16.msra.mxu0 %v5943
    %6351 = vmatpush.bf16.msra.mxu0 %v5931
    %6352 = vmatpush.bf16.msra.mxu0 %v5919
    %6353 = vmatmul.bf16.gmra.mxu0 %v157
    %v6354 = vpop.f32.mrf.mxu0
    %v6355 = vadd.f32 %v6342, %v6354
    %v6356 = vpop.f32.mrf.mxu0
    %6357 = vdwg.mxu0
    %6358 = vmatpush.bf16.msra.mxu0 %v5908
    %6359 = vmatpush.bf16.msra.mxu0 %v5896
    %6360 = vmatpush.bf16.msra.mxu0 %v5884
    %6361 = vmatpush.bf16.msra.mxu0 %v5872
    %6362 = vmatpush.bf16.msra.mxu0 %v5860
    %6363 = vmatpush.bf16.msra.mxu0 %v5848
    %6364 = vmatpush.bf16.msra.mxu0 %v5836
    %6365 = vmatpush.bf16.msra.mxu0 %v5824
    %6366 = vmatmul.bf16.gmra.mxu0 %v156
    %v6367 = vpop.f32.mrf.mxu0
    %v6368 = vadd.f32 %v4371, %v6367
    %v6369 = vpop.f32.mrf.mxu0
    %6370 = vdwg.mxu0
    %6371 = vmatpush.bf16.msra.mxu0 %v6004
    %6372 = vmatpush.bf16.msra.mxu0 %v5992
    %6373 = vmatpush.bf16.msra.mxu0 %v5980
    %6374 = vmatpush.bf16.msra.mxu0 %v5968
    %6375 = vmatpush.bf16.msra.mxu0 %v5956
    %6376 = vmatpush.bf16.msra.mxu0 %v5944
    %6377 = vmatpush.bf16.msra.mxu0 %v5932
    %6378 = vmatpush.bf16.msra.mxu0 %v5920
    %6379 = vmatmul.bf16.gmra.mxu0 %v157
    %v6380 = vpop.f32.mrf.mxu0
    %v6381 = vadd.f32 %v6368, %v6380
    %v6382 = vpop.f32.mrf.mxu0
    %6383 = vdwg.mxu0
    %6384 = vmatpush.bf16.msra.mxu0 %v5909
    %6385 = vmatpush.bf16.msra.mxu0 %v5897
    %6386 = vmatpush.bf16.msra.mxu0 %v5885
    %6387 = vmatpush.bf16.msra.mxu0 %v5873
    %6388 = vmatpush.bf16.msra.mxu0 %v5861
    %6389 = vmatpush.bf16.msra.mxu0 %v5849
    %6390 = vmatpush.bf16.msra.mxu0 %v5837
    %6391 = vmatpush.bf16.msra.mxu0 %v5825
    %6392 = vmatmul.bf16.gmra.mxu0 %v156
    %v6393 = vpop.f32.mrf.mxu0
    %v6394 = vadd.f32 %v4423, %v6393
    %v6395 = vpop.f32.mrf.mxu0
    %6396 = vdwg.mxu0
    %6397 = vmatpush.bf16.msra.mxu0 %v6005
    %6398 = vmatpush.bf16.msra.mxu0 %v5993
    %6399 = vmatpush.bf16.msra.mxu0 %v5981
    %6400 = vmatpush.bf16.msra.mxu0 %v5969
    %6401 = vmatpush.bf16.msra.mxu0 %v5957
    %6402 = vmatpush.bf16.msra.mxu0 %v5945
    %6403 = vmatpush.bf16.msra.mxu0 %v5933
    %6404 = vmatpush.bf16.msra.mxu0 %v5921
    %6405 = vmatmul.bf16.gmra.mxu0 %v157
    %v6406 = vpop.f32.mrf.mxu0
    %v6407 = vadd.f32 %v6394, %v6406
    %v6408 = vpop.f32.mrf.mxu0
    %6409 = vdwg.mxu0
    %6410 = vmatpush.bf16.msra.mxu0 %v5910
    %6411 = vmatpush.bf16.msra.mxu0 %v5898
    %6412 = vmatpush.bf16.msra.mxu0 %v5886
    %6413 = vmatpush.bf16.msra.mxu0 %v5874
    %6414 = vmatpush.bf16.msra.mxu0 %v5862
    %6415 = vmatpush.bf16.msra.mxu0 %v5850
    %6416 = vmatpush.bf16.msra.mxu0 %v5838
    %6417 = vmatpush.bf16.msra.mxu0 %v5826
    %6418 = vmatmul.bf16.gmra.mxu0 %v156
    %v6419 = vpop.f32.mrf.mxu0
    %v6420 = vadd.f32 %v4475, %v6419
    %v6421 = vpop.f32.mrf.mxu0
    %6422 = vdwg.mxu0
    %6423 = vmatpush.bf16.msra.mxu0 %v6006
    %6424 = vmatpush.bf16.msra.mxu0 %v5994
    %6425 = vmatpush.bf16.msra.mxu0 %v5982
    %6426 = vmatpush.bf16.msra.mxu0 %v5970
    %6427 = vmatpush.bf16.msra.mxu0 %v5958
    %6428 = vmatpush.bf16.msra.mxu0 %v5946
    %6429 = vmatpush.bf16.msra.mxu0 %v5934
    %6430 = vmatpush.bf16.msra.mxu0 %v5922
    %6431 = vmatmul.bf16.gmra.mxu0 %v157
    %v6432 = vpop.f32.mrf.mxu0
    %v6433 = vadd.f32 %v6420, %v6432
    %v6434 = vpop.f32.mrf.mxu0
    %6435 = vdwg.mxu0
    %6436 = vmatpush.bf16.msra.mxu0 %v5911
    %6437 = vmatpush.bf16.msra.mxu0 %v5899
    %6438 = vmatpush.bf16.msra.mxu0 %v5887
    %6439 = vmatpush.bf16.msra.mxu0 %v5875
    %6440 = vmatpush.bf16.msra.mxu0 %v5863
    %6441 = vmatpush.bf16.msra.mxu0 %v5851
    %6442 = vmatpush.bf16.msra.mxu0 %v5839
    %6443 = vmatpush.bf16.msra.mxu0 %v5827
    %6444 = vmatmul.bf16.gmra.mxu0 %v156
    %v6445 = vpop.f32.mrf.mxu0
    %v6446 = vadd.f32 %v4527, %v6445
    %v6447 = vpop.f32.mrf.mxu0
    %6448 = vdwg.mxu0
    %6449 = vmatpush.bf16.msra.mxu0 %v6007
    %6450 = vmatpush.bf16.msra.mxu0 %v5995
    %6451 = vmatpush.bf16.msra.mxu0 %v5983
    %6452 = vmatpush.bf16.msra.mxu0 %v5971
    %6453 = vmatpush.bf16.msra.mxu0 %v5959
    %6454 = vmatpush.bf16.msra.mxu0 %v5947
    %6455 = vmatpush.bf16.msra.mxu0 %v5935
    %6456 = vmatpush.bf16.msra.mxu0 %v5923
    %6457 = vmatmul.bf16.gmra.mxu0 %v157
    %v6458 = vpop.f32.mrf.mxu0
    %v6459 = vadd.f32 %v6446, %v6458
    %v6460 = vpop.f32.mrf.mxu0
    %6461 = vdwg.mxu0
    %6462 = vmatpush.bf16.msra.mxu0 %v5912
    %6463 = vmatpush.bf16.msra.mxu0 %v5900
    %6464 = vmatpush.bf16.msra.mxu0 %v5888
    %6465 = vmatpush.bf16.msra.mxu0 %v5876
    %6466 = vmatpush.bf16.msra.mxu0 %v5864
    %6467 = vmatpush.bf16.msra.mxu0 %v5852
    %6468 = vmatpush.bf16.msra.mxu0 %v5840
    %6469 = vmatpush.bf16.msra.mxu0 %v5828
    %6470 = vmatmul.bf16.gmra.mxu0 %v156
    %v6471 = vpop.f32.mrf.mxu0
    %v6472 = vadd.f32 %v4579, %v6471
    %v6473 = vpop.f32.mrf.mxu0
    %6474 = vdwg.mxu0
    %6475 = vmatpush.bf16.msra.mxu0 %v6008
    %6476 = vmatpush.bf16.msra.mxu0 %v5996
    %6477 = vmatpush.bf16.msra.mxu0 %v5984
    %6478 = vmatpush.bf16.msra.mxu0 %v5972
    %6479 = vmatpush.bf16.msra.mxu0 %v5960
    %6480 = vmatpush.bf16.msra.mxu0 %v5948
    %6481 = vmatpush.bf16.msra.mxu0 %v5936
    %6482 = vmatpush.bf16.msra.mxu0 %v5924
    %6483 = vmatmul.bf16.gmra.mxu0 %v157
    %v6484 = vpop.f32.mrf.mxu0
    %v6485 = vadd.f32 %v6472, %v6484
    %v6486 = vpop.f32.mrf.mxu0
    %6487 = vdwg.mxu0
    %6488 = vmatpush.bf16.msra.mxu0 %v5913
    %6489 = vmatpush.bf16.msra.mxu0 %v5901
    %6490 = vmatpush.bf16.msra.mxu0 %v5889
    %6491 = vmatpush.bf16.msra.mxu0 %v5877
    %6492 = vmatpush.bf16.msra.mxu0 %v5865
    %6493 = vmatpush.bf16.msra.mxu0 %v5853
    %6494 = vmatpush.bf16.msra.mxu0 %v5841
    %6495 = vmatpush.bf16.msra.mxu0 %v5829
    %6496 = vmatmul.bf16.gmra.mxu0 %v156
    %v6497 = vpop.f32.mrf.mxu0
    %v6498 = vadd.f32 %v4631, %v6497
    %v6499 = vpop.f32.mrf.mxu0
    %6500 = vdwg.mxu0
    %6501 = vmatpush.bf16.msra.mxu0 %v6009
    %6502 = vmatpush.bf16.msra.mxu0 %v5997
    %6503 = vmatpush.bf16.msra.mxu0 %v5985
    %6504 = vmatpush.bf16.msra.mxu0 %v5973
    %6505 = vmatpush.bf16.msra.mxu0 %v5961
    %6506 = vmatpush.bf16.msra.mxu0 %v5949
    %6507 = vmatpush.bf16.msra.mxu0 %v5937
    %6508 = vmatpush.bf16.msra.mxu0 %v5925
    %6509 = vmatmul.bf16.gmra.mxu0 %v157
    %v6510 = vpop.f32.mrf.mxu0
    %v6511 = vadd.f32 %v6498, %v6510
    %v6512 = vpop.f32.mrf.mxu0
    %6513 = vdwg.mxu0
    %v6514 = vld [vmem:[#allocation9] sm:$0xff]
    %v6515 = vld [vmem:[#allocation9 + $0x8] sm:$0xf]
    %v6518 = vperm.slane %v6514, 0
    %v6519 = vperm.slane %v6514, 1
    %v6520 = vperm.slane %v6514, 2
    %v6521 = vperm.slane %v6514, 3
    %v6522 = vperm.slane %v6514, 4
    %v6523 = vperm.slane %v6514, 5
    %v6524 = vperm.slane %v6514, 6
    %v6525 = vperm.slane %v6514, 7
    %v6526 = vperm.slane %v6515, 0
    %v6527 = vperm.slane %v6515, 1
    %v6528 = vperm.slane %v6515, 2
    %v6529 = vperm.slane %v6515, 3
    %v6542 = vadd.f32 %v6225, %v6518
    %v6543 = vadd.f32 %v6251, %v6519
    %v6544 = vadd.f32 %v6277, %v6520
    %v6545 = vadd.f32 %v6303, %v6521
    %v6546 = vadd.f32 %v6329, %v6522
    %v6547 = vadd.f32 %v6355, %v6523
    %v6548 = vadd.f32 %v6381, %v6524
    %v6549 = vadd.f32 %v6407, %v6525
    %v6550 = vadd.f32 %v6433, %v6526
    %v6551 = vadd.f32 %v6459, %v6527
    %v6552 = vadd.f32 %v6485, %v6528
    %v6553 = vadd.f32 %v6511, %v6529
    %v6554 = vpack.c.bf16 %v166, %v166
    %v6555 = vpack.c.bf16 %v167, %v167
    %v6556 = vpack.c.bf16 %v168, %v168
    %v6557 = vpack.c.bf16 %v169, %v169
    %v6558 = vld [vmem:[#allocation7] sm:$0xff]
    %v6559 = vld [vmem:[#allocation7 + $0x8] sm:$0xff]
    %v6560 = vld [vmem:[#allocation7 + $0x10] sm:$0xff]
    %v6561 = vld [vmem:[#allocation7 + $0x18] sm:$0xff]
    %v6562 = vld [vmem:[#allocation7 + $0x20] sm:$0xff]
    %v6563 = vld [vmem:[#allocation7 + $0x28] sm:$0xff]
    %v6564 = vld [vmem:[#allocation7 + $0x30] sm:$0xff]
    %v6565 = vld [vmem:[#allocation7 + $0x38] sm:$0xff]
    %v6566 = vld [vmem:[#allocation7 + $0x40] sm:$0xff]
    %v6567 = vld [vmem:[#allocation7 + $0x48] sm:$0xff]
    %v6568 = vld [vmem:[#allocation7 + $0x50] sm:$0xff]
    %v6569 = vld [vmem:[#allocation7 + $0x58] sm:$0xff]
    %v6570 = vld [vmem:[#allocation7 + $0x60] sm:$0xff]
    %v6571 = vld [vmem:[#allocation7 + $0x68] sm:$0xff]
    %v6572 = vld [vmem:[#allocation7 + $0x70] sm:$0xff]
    %v6573 = vld [vmem:[#allocation7 + $0x78] sm:$0xff]
    %v6574 = vld [vmem:[#allocation7 + $0x80] sm:$0xff]
    %v6575 = vld [vmem:[#allocation7 + $0x88] sm:$0xff]
    %v6576 = vld [vmem:[#allocation7 + $0x90] sm:$0xff]
    %v6577 = vld [vmem:[#allocation7 + $0x98] sm:$0xff]
    %v6578 = vld [vmem:[#allocation7 + $0xa0] sm:$0xff]
    %v6579 = vld [vmem:[#allocation7 + $0xa8] sm:$0xff]
    %v6580 = vld [vmem:[#allocation7 + $0xb0] sm:$0xff]
    %v6581 = vld [vmem:[#allocation7 + $0xb8] sm:$0xff]
    %v6582 = vld [vmem:[#allocation7 + $0xc0] sm:$0xff]
    %v6583 = vld [vmem:[#allocation7 + $0xc8] sm:$0xff]
    %v6584 = vld [vmem:[#allocation7 + $0xd0] sm:$0xff]
    %v6585 = vld [vmem:[#allocation7 + $0xd8] sm:$0xff]
    %v6586 = vld [vmem:[#allocation7 + $0xe0] sm:$0xff]
    %v6587 = vld [vmem:[#allocation7 + $0xe8] sm:$0xff]
    %v6588 = vld [vmem:[#allocation7 + $0xf0] sm:$0xff]
    %v6589 = vld [vmem:[#allocation7 + $0xf8] sm:$0xff]
    %v6590 = vld [vmem:[#allocation7 + $0x100] sm:$0xff]
    %v6591 = vld [vmem:[#allocation7 + $0x108] sm:$0xff]
    %v6592 = vld [vmem:[#allocation7 + $0x110] sm:$0xff]
    %v6593 = vld [vmem:[#allocation7 + $0x118] sm:$0xff]
    %v6594 = vld [vmem:[#allocation7 + $0x120] sm:$0xff]
    %v6595 = vld [vmem:[#allocation7 + $0x128] sm:$0xff]
    %v6596 = vld [vmem:[#allocation7 + $0x130] sm:$0xff]
    %v6597 = vld [vmem:[#allocation7 + $0x138] sm:$0xff]
    %v6598 = vld [vmem:[#allocation7 + $0x140] sm:$0xff]
    %v6599 = vld [vmem:[#allocation7 + $0x148] sm:$0xff]
    %v6600 = vld [vmem:[#allocation7 + $0x150] sm:$0xff]
    %v6601 = vld [vmem:[#allocation7 + $0x158] sm:$0xff]
    %v6602 = vld [vmem:[#allocation7 + $0x160] sm:$0xff]
    %v6603 = vld [vmem:[#allocation7 + $0x168] sm:$0xff]
    %v6604 = vld [vmem:[#allocation7 + $0x170] sm:$0xff]
    %v6605 = vld [vmem:[#allocation7 + $0x178] sm:$0xff]
    %v6606 = vld [vmem:[#allocation7 + $0x180] sm:$0xff]
    %v6607 = vld [vmem:[#allocation7 + $0x188] sm:$0xff]
    %v6608 = vld [vmem:[#allocation7 + $0x190] sm:$0xff]
    %v6609 = vld [vmem:[#allocation7 + $0x198] sm:$0xff]
    %v6610 = vld [vmem:[#allocation7 + $0x1a0] sm:$0xff]
    %v6611 = vld [vmem:[#allocation7 + $0x1a8] sm:$0xff]
    %v6612 = vld [vmem:[#allocation7 + $0x1b0] sm:$0xff]
    %v6613 = vld [vmem:[#allocation7 + $0x1b8] sm:$0xff]
    %v6614 = vld [vmem:[#allocation7 + $0x1c0] sm:$0xff]
    %v6615 = vld [vmem:[#allocation7 + $0x1c8] sm:$0xff]
    %v6616 = vld [vmem:[#allocation7 + $0x1d0] sm:$0xff]
    %v6617 = vld [vmem:[#allocation7 + $0x1d8] sm:$0xff]
    %v6618 = vld [vmem:[#allocation7 + $0x1e0] sm:$0xff]
    %v6619 = vld [vmem:[#allocation7 + $0x1e8] sm:$0xff]
    %v6620 = vld [vmem:[#allocation7 + $0x1f0] sm:$0xff]
    %v6621 = vld [vmem:[#allocation7 + $0x1f8] sm:$0xff]
    %v6622 = vld [vmem:[#allocation7 + $0x200] sm:$0xff]
    %v6623 = vld [vmem:[#allocation7 + $0x208] sm:$0xff]
    %v6624 = vld [vmem:[#allocation7 + $0x210] sm:$0xff]
    %v6625 = vld [vmem:[#allocation7 + $0x218] sm:$0xff]
    %v6626 = vld [vmem:[#allocation7 + $0x220] sm:$0xff]
    %v6627 = vld [vmem:[#allocation7 + $0x228] sm:$0xff]
    %v6628 = vld [vmem:[#allocation7 + $0x230] sm:$0xff]
    %v6629 = vld [vmem:[#allocation7 + $0x238] sm:$0xff]
    %v6630 = vld [vmem:[#allocation7 + $0x240] sm:$0xff]
    %v6631 = vld [vmem:[#allocation7 + $0x248] sm:$0xff]
    %v6632 = vld [vmem:[#allocation7 + $0x250] sm:$0xff]
    %v6633 = vld [vmem:[#allocation7 + $0x258] sm:$0xff]
    %v6634 = vld [vmem:[#allocation7 + $0x260] sm:$0xff]
    %v6635 = vld [vmem:[#allocation7 + $0x268] sm:$0xff]
    %v6636 = vld [vmem:[#allocation7 + $0x270] sm:$0xff]
    %v6637 = vld [vmem:[#allocation7 + $0x278] sm:$0xff]
    %v6638 = vld [vmem:[#allocation7 + $0x280] sm:$0xff]
    %v6639 = vld [vmem:[#allocation7 + $0x288] sm:$0xff]
    %v6640 = vld [vmem:[#allocation7 + $0x290] sm:$0xff]
    %v6641 = vld [vmem:[#allocation7 + $0x298] sm:$0xff]
    %v6642 = vld [vmem:[#allocation7 + $0x2a0] sm:$0xff]
    %v6643 = vld [vmem:[#allocation7 + $0x2a8] sm:$0xff]
    %v6644 = vld [vmem:[#allocation7 + $0x2b0] sm:$0xff]
    %v6645 = vld [vmem:[#allocation7 + $0x2b8] sm:$0xff]
    %v6646 = vld [vmem:[#allocation7 + $0x2c0] sm:$0xff]
    %v6647 = vld [vmem:[#allocation7 + $0x2c8] sm:$0xff]
    %v6648 = vld [vmem:[#allocation7 + $0x2d0] sm:$0xff]
    %v6649 = vld [vmem:[#allocation7 + $0x2d8] sm:$0xff]
    %v6650 = vld [vmem:[#allocation7 + $0x2e0] sm:$0xff]
    %v6651 = vld [vmem:[#allocation7 + $0x2e8] sm:$0xff]
    %v6652 = vld [vmem:[#allocation7 + $0x2f0] sm:$0xff]
    %v6653 = vld [vmem:[#allocation7 + $0x2f8] sm:$0xff]
    %v6654 = vld [vmem:[#allocation7 + $0x300] sm:$0xff]
    %v6655 = vld [vmem:[#allocation7 + $0x308] sm:$0xff]
    %v6656 = vld [vmem:[#allocation7 + $0x310] sm:$0xff]
    %v6657 = vld [vmem:[#allocation7 + $0x318] sm:$0xff]
    %v6658 = vld [vmem:[#allocation7 + $0x320] sm:$0xff]
    %v6659 = vld [vmem:[#allocation7 + $0x328] sm:$0xff]
    %v6660 = vld [vmem:[#allocation7 + $0x330] sm:$0xff]
    %v6661 = vld [vmem:[#allocation7 + $0x338] sm:$0xff]
    %v6662 = vld [vmem:[#allocation7 + $0x340] sm:$0xff]
    %v6663 = vld [vmem:[#allocation7 + $0x348] sm:$0xff]
    %v6664 = vld [vmem:[#allocation7 + $0x350] sm:$0xff]
    %v6665 = vld [vmem:[#allocation7 + $0x358] sm:$0xff]
    %v6666 = vld [vmem:[#allocation7 + $0x360] sm:$0xff]
    %v6667 = vld [vmem:[#allocation7 + $0x368] sm:$0xff]
    %v6668 = vld [vmem:[#allocation7 + $0x370] sm:$0xff]
    %v6669 = vld [vmem:[#allocation7 + $0x378] sm:$0xff]
    %v6670 = vld [vmem:[#allocation7 + $0x380] sm:$0xff]
    %v6671 = vld [vmem:[#allocation7 + $0x388] sm:$0xff]
    %v6672 = vld [vmem:[#allocation7 + $0x390] sm:$0xff]
    %v6673 = vld [vmem:[#allocation7 + $0x398] sm:$0xff]
    %v6674 = vld [vmem:[#allocation7 + $0x3a0] sm:$0xff]
    %v6675 = vld [vmem:[#allocation7 + $0x3a8] sm:$0xff]
    %v6676 = vld [vmem:[#allocation7 + $0x3b0] sm:$0xff]
    %v6677 = vld [vmem:[#allocation7 + $0x3b8] sm:$0xff]
    %v6678 = vld [vmem:[#allocation7 + $0x3c0] sm:$0xff]
    %v6679 = vld [vmem:[#allocation7 + $0x3c8] sm:$0xff]
    %v6680 = vld [vmem:[#allocation7 + $0x3d0] sm:$0xff]
    %v6681 = vld [vmem:[#allocation7 + $0x3d8] sm:$0xff]
    %v6682 = vld [vmem:[#allocation7 + $0x3e0] sm:$0xff]
    %v6683 = vld [vmem:[#allocation7 + $0x3e8] sm:$0xff]
    %v6684 = vld [vmem:[#allocation7 + $0x3f0] sm:$0xff]
    %v6685 = vld [vmem:[#allocation7 + $0x3f8] sm:$0xff]
    %v6686 = vld [vmem:[#allocation7 + $0x400] sm:$0xff]
    %v6687 = vld [vmem:[#allocation7 + $0x408] sm:$0xff]
    %v6688 = vld [vmem:[#allocation7 + $0x410] sm:$0xff]
    %v6689 = vld [vmem:[#allocation7 + $0x418] sm:$0xff]
    %v6690 = vld [vmem:[#allocation7 + $0x420] sm:$0xff]
    %v6691 = vld [vmem:[#allocation7 + $0x428] sm:$0xff]
    %v6692 = vld [vmem:[#allocation7 + $0x430] sm:$0xff]
    %v6693 = vld [vmem:[#allocation7 + $0x438] sm:$0xff]
    %v6694 = vld [vmem:[#allocation7 + $0x440] sm:$0xff]
    %v6695 = vld [vmem:[#allocation7 + $0x448] sm:$0xff]
    %v6696 = vld [vmem:[#allocation7 + $0x450] sm:$0xff]
    %v6697 = vld [vmem:[#allocation7 + $0x458] sm:$0xff]
    %v6698 = vld [vmem:[#allocation7 + $0x460] sm:$0xff]
    %v6699 = vld [vmem:[#allocation7 + $0x468] sm:$0xff]
    %v6700 = vld [vmem:[#allocation7 + $0x470] sm:$0xff]
    %v6701 = vld [vmem:[#allocation7 + $0x478] sm:$0xff]
    %v6702 = vld [vmem:[#allocation7 + $0x480] sm:$0xff]
    %v6703 = vld [vmem:[#allocation7 + $0x488] sm:$0xff]
    %v6704 = vld [vmem:[#allocation7 + $0x490] sm:$0xff]
    %v6705 = vld [vmem:[#allocation7 + $0x498] sm:$0xff]
    %v6706 = vld [vmem:[#allocation7 + $0x4a0] sm:$0xff]
    %v6707 = vld [vmem:[#allocation7 + $0x4a8] sm:$0xff]
    %v6708 = vld [vmem:[#allocation7 + $0x4b0] sm:$0xff]
    %v6709 = vld [vmem:[#allocation7 + $0x4b8] sm:$0xff]
    %v6710 = vld [vmem:[#allocation7 + $0x4c0] sm:$0xff]
    %v6711 = vld [vmem:[#allocation7 + $0x4c8] sm:$0xff]
    %v6712 = vld [vmem:[#allocation7 + $0x4d0] sm:$0xff]
    %v6713 = vld [vmem:[#allocation7 + $0x4d8] sm:$0xff]
    %v6714 = vld [vmem:[#allocation7 + $0x4e0] sm:$0xff]
    %v6715 = vld [vmem:[#allocation7 + $0x4e8] sm:$0xff]
    %v6716 = vld [vmem:[#allocation7 + $0x4f0] sm:$0xff]
    %v6717 = vld [vmem:[#allocation7 + $0x4f8] sm:$0xff]
    %v6718 = vld [vmem:[#allocation7 + $0x500] sm:$0xff]
    %v6719 = vld [vmem:[#allocation7 + $0x508] sm:$0xff]
    %v6720 = vld [vmem:[#allocation7 + $0x510] sm:$0xff]
    %v6721 = vld [vmem:[#allocation7 + $0x518] sm:$0xff]
    %v6722 = vld [vmem:[#allocation7 + $0x520] sm:$0xff]
    %v6723 = vld [vmem:[#allocation7 + $0x528] sm:$0xff]
    %v6724 = vld [vmem:[#allocation7 + $0x530] sm:$0xff]
    %v6725 = vld [vmem:[#allocation7 + $0x538] sm:$0xff]
    %v6726 = vld [vmem:[#allocation7 + $0x540] sm:$0xff]
    %v6727 = vld [vmem:[#allocation7 + $0x548] sm:$0xff]
    %v6728 = vld [vmem:[#allocation7 + $0x550] sm:$0xff]
    %v6729 = vld [vmem:[#allocation7 + $0x558] sm:$0xff]
    %v6730 = vld [vmem:[#allocation7 + $0x560] sm:$0xff]
    %v6731 = vld [vmem:[#allocation7 + $0x568] sm:$0xff]
    %v6732 = vld [vmem:[#allocation7 + $0x570] sm:$0xff]
    %v6733 = vld [vmem:[#allocation7 + $0x578] sm:$0xff]
    %v6734 = vld [vmem:[#allocation7 + $0x580] sm:$0xff]
    %v6735 = vld [vmem:[#allocation7 + $0x588] sm:$0xff]
    %v6736 = vld [vmem:[#allocation7 + $0x590] sm:$0xff]
    %v6737 = vld [vmem:[#allocation7 + $0x598] sm:$0xff]
    %v6738 = vld [vmem:[#allocation7 + $0x5a0] sm:$0xff]
    %v6739 = vld [vmem:[#allocation7 + $0x5a8] sm:$0xff]
    %v6740 = vld [vmem:[#allocation7 + $0x5b0] sm:$0xff]
    %v6741 = vld [vmem:[#allocation7 + $0x5b8] sm:$0xff]
    %v6742 = vld [vmem:[#allocation7 + $0x5c0] sm:$0xff]
    %v6743 = vld [vmem:[#allocation7 + $0x5c8] sm:$0xff]
    %v6744 = vld [vmem:[#allocation7 + $0x5d0] sm:$0xff]
    %v6745 = vld [vmem:[#allocation7 + $0x5d8] sm:$0xff]
    %v6746 = vld [vmem:[#allocation7 + $0x5e0] sm:$0xff]
    %v6747 = vld [vmem:[#allocation7 + $0x5e8] sm:$0xff]
    %v6748 = vld [vmem:[#allocation7 + $0x5f0] sm:$0xff]
    %v6749 = vld [vmem:[#allocation7 + $0x5f8] sm:$0xff]
    %v6750 = vld [vmem:[#allocation7 + $0x600] sm:$0xff]
    %v6751 = vld [vmem:[#allocation7 + $0x608] sm:$0xff]
    %v6752 = vld [vmem:[#allocation7 + $0x610] sm:$0xff]
    %v6753 = vld [vmem:[#allocation7 + $0x618] sm:$0xff]
    %v6754 = vld [vmem:[#allocation7 + $0x620] sm:$0xff]
    %v6755 = vld [vmem:[#allocation7 + $0x628] sm:$0xff]
    %v6756 = vld [vmem:[#allocation7 + $0x630] sm:$0xff]
    %v6757 = vld [vmem:[#allocation7 + $0x638] sm:$0xff]
    %v6758 = vld [vmem:[#allocation7 + $0x640] sm:$0xff]
    %v6759 = vld [vmem:[#allocation7 + $0x648] sm:$0xff]
    %v6760 = vld [vmem:[#allocation7 + $0x650] sm:$0xff]
    %v6761 = vld [vmem:[#allocation7 + $0x658] sm:$0xff]
    %v6762 = vld [vmem:[#allocation7 + $0x660] sm:$0xff]
    %v6763 = vld [vmem:[#allocation7 + $0x668] sm:$0xff]
    %v6764 = vld [vmem:[#allocation7 + $0x670] sm:$0xff]
    %v6765 = vld [vmem:[#allocation7 + $0x678] sm:$0xff]
    %v6766 = vld [vmem:[#allocation7 + $0x680] sm:$0xff]
    %v6767 = vld [vmem:[#allocation7 + $0x688] sm:$0xff]
    %v6768 = vld [vmem:[#allocation7 + $0x690] sm:$0xff]
    %v6769 = vld [vmem:[#allocation7 + $0x698] sm:$0xff]
    %v6770 = vld [vmem:[#allocation7 + $0x6a0] sm:$0xff]
    %v6771 = vld [vmem:[#allocation7 + $0x6a8] sm:$0xff]
    %v6772 = vld [vmem:[#allocation7 + $0x6b0] sm:$0xff]
    %v6773 = vld [vmem:[#allocation7 + $0x6b8] sm:$0xff]
    %v6774 = vld [vmem:[#allocation7 + $0x6c0] sm:$0xff]
    %v6775 = vld [vmem:[#allocation7 + $0x6c8] sm:$0xff]
    %v6776 = vld [vmem:[#allocation7 + $0x6d0] sm:$0xff]
    %v6777 = vld [vmem:[#allocation7 + $0x6d8] sm:$0xff]
    %v6778 = vld [vmem:[#allocation7 + $0x6e0] sm:$0xff]
    %v6779 = vld [vmem:[#allocation7 + $0x6e8] sm:$0xff]
    %v6780 = vld [vmem:[#allocation7 + $0x6f0] sm:$0xff]
    %v6781 = vld [vmem:[#allocation7 + $0x6f8] sm:$0xff]
    %v6782 = vld [vmem:[#allocation7 + $0x700] sm:$0xff]
    %v6783 = vld [vmem:[#allocation7 + $0x708] sm:$0xff]
    %v6784 = vld [vmem:[#allocation7 + $0x710] sm:$0xff]
    %v6785 = vld [vmem:[#allocation7 + $0x718] sm:$0xff]
    %v6786 = vld [vmem:[#allocation7 + $0x720] sm:$0xff]
    %v6787 = vld [vmem:[#allocation7 + $0x728] sm:$0xff]
    %v6788 = vld [vmem:[#allocation7 + $0x730] sm:$0xff]
    %v6789 = vld [vmem:[#allocation7 + $0x738] sm:$0xff]
    %v6790 = vld [vmem:[#allocation7 + $0x740] sm:$0xff]
    %v6791 = vld [vmem:[#allocation7 + $0x748] sm:$0xff]
    %v6792 = vld [vmem:[#allocation7 + $0x750] sm:$0xff]
    %v6793 = vld [vmem:[#allocation7 + $0x758] sm:$0xff]
    %v6794 = vld [vmem:[#allocation7 + $0x760] sm:$0xff]
    %v6795 = vld [vmem:[#allocation7 + $0x768] sm:$0xff]
    %v6796 = vld [vmem:[#allocation7 + $0x770] sm:$0xff]
    %v6797 = vld [vmem:[#allocation7 + $0x778] sm:$0xff]
    %v6798 = vld [vmem:[#allocation7 + $0x780] sm:$0xff]
    %v6799 = vld [vmem:[#allocation7 + $0x788] sm:$0xff]
    %v6800 = vld [vmem:[#allocation7 + $0x790] sm:$0xff]
    %v6801 = vld [vmem:[#allocation7 + $0x798] sm:$0xff]
    %v6802 = vld [vmem:[#allocation7 + $0x7a0] sm:$0xff]
    %v6803 = vld [vmem:[#allocation7 + $0x7a8] sm:$0xff]
    %v6804 = vld [vmem:[#allocation7 + $0x7b0] sm:$0xff]
    %v6805 = vld [vmem:[#allocation7 + $0x7b8] sm:$0xff]
    %v6806 = vld [vmem:[#allocation7 + $0x7c0] sm:$0xff]
    %v6807 = vld [vmem:[#allocation7 + $0x7c8] sm:$0xff]
    %v6808 = vld [vmem:[#allocation7 + $0x7d0] sm:$0xff]
    %v6809 = vld [vmem:[#allocation7 + $0x7d8] sm:$0xff]
    %v6810 = vld [vmem:[#allocation7 + $0x7e0] sm:$0xff]
    %v6811 = vld [vmem:[#allocation7 + $0x7e8] sm:$0xff]
    %v6812 = vld [vmem:[#allocation7 + $0x7f0] sm:$0xff]
    %v6813 = vld [vmem:[#allocation7 + $0x7f8] sm:$0xff]
    %v6814 = vld [vmem:[#allocation7 + $0x800] sm:$0xff]
    %v6815 = vld [vmem:[#allocation7 + $0x808] sm:$0xff]
    %v6816 = vld [vmem:[#allocation7 + $0x810] sm:$0xff]
    %v6817 = vld [vmem:[#allocation7 + $0x818] sm:$0xff]
    %v6818 = vld [vmem:[#allocation7 + $0x820] sm:$0xff]
    %v6819 = vld [vmem:[#allocation7 + $0x828] sm:$0xff]
    %v6820 = vld [vmem:[#allocation7 + $0x830] sm:$0xff]
    %v6821 = vld [vmem:[#allocation7 + $0x838] sm:$0xff]
    %v6822 = vld [vmem:[#allocation7 + $0x840] sm:$0xff]
    %v6823 = vld [vmem:[#allocation7 + $0x848] sm:$0xff]
    %v6824 = vld [vmem:[#allocation7 + $0x850] sm:$0xff]
    %v6825 = vld [vmem:[#allocation7 + $0x858] sm:$0xff]
    %v6826 = vld [vmem:[#allocation7 + $0x860] sm:$0xff]
    %v6827 = vld [vmem:[#allocation7 + $0x868] sm:$0xff]
    %v6828 = vld [vmem:[#allocation7 + $0x870] sm:$0xff]
    %v6829 = vld [vmem:[#allocation7 + $0x878] sm:$0xff]
    %v6830 = vld [vmem:[#allocation7 + $0x880] sm:$0xff]
    %v6831 = vld [vmem:[#allocation7 + $0x888] sm:$0xff]
    %v6832 = vld [vmem:[#allocation7 + $0x890] sm:$0xff]
    %v6833 = vld [vmem:[#allocation7 + $0x898] sm:$0xff]
    %v6834 = vld [vmem:[#allocation7 + $0x8a0] sm:$0xff]
    %v6835 = vld [vmem:[#allocation7 + $0x8a8] sm:$0xff]
    %v6836 = vld [vmem:[#allocation7 + $0x8b0] sm:$0xff]
    %v6837 = vld [vmem:[#allocation7 + $0x8b8] sm:$0xff]
    %v6838 = vld [vmem:[#allocation7 + $0x8c0] sm:$0xff]
    %v6839 = vld [vmem:[#allocation7 + $0x8c8] sm:$0xff]
    %v6840 = vld [vmem:[#allocation7 + $0x8d0] sm:$0xff]
    %v6841 = vld [vmem:[#allocation7 + $0x8d8] sm:$0xff]
    %v6842 = vld [vmem:[#allocation7 + $0x8e0] sm:$0xff]
    %v6843 = vld [vmem:[#allocation7 + $0x8e8] sm:$0xff]
    %v6844 = vld [vmem:[#allocation7 + $0x8f0] sm:$0xff]
    %v6845 = vld [vmem:[#allocation7 + $0x8f8] sm:$0xff]
    %v6846 = vld [vmem:[#allocation7 + $0x900] sm:$0xff]
    %v6847 = vld [vmem:[#allocation7 + $0x908] sm:$0xff]
    %v6848 = vld [vmem:[#allocation7 + $0x910] sm:$0xff]
    %v6849 = vld [vmem:[#allocation7 + $0x918] sm:$0xff]
    %v6850 = vld [vmem:[#allocation7 + $0x920] sm:$0xff]
    %v6851 = vld [vmem:[#allocation7 + $0x928] sm:$0xff]
    %v6852 = vld [vmem:[#allocation7 + $0x930] sm:$0xff]
    %v6853 = vld [vmem:[#allocation7 + $0x938] sm:$0xff]
    %v6854 = vld [vmem:[#allocation7 + $0x940] sm:$0xff]
    %v6855 = vld [vmem:[#allocation7 + $0x948] sm:$0xff]
    %v6856 = vld [vmem:[#allocation7 + $0x950] sm:$0xff]
    %v6857 = vld [vmem:[#allocation7 + $0x958] sm:$0xff]
    %v6858 = vld [vmem:[#allocation7 + $0x960] sm:$0xff]
    %v6859 = vld [vmem:[#allocation7 + $0x968] sm:$0xff]
    %v6860 = vld [vmem:[#allocation7 + $0x970] sm:$0xff]
    %v6861 = vld [vmem:[#allocation7 + $0x978] sm:$0xff]
    %v6862 = vld [vmem:[#allocation7 + $0x980] sm:$0xff]
    %v6863 = vld [vmem:[#allocation7 + $0x988] sm:$0xff]
    %v6864 = vld [vmem:[#allocation7 + $0x990] sm:$0xff]
    %v6865 = vld [vmem:[#allocation7 + $0x998] sm:$0xff]
    %v6866 = vld [vmem:[#allocation7 + $0x9a0] sm:$0xff]
    %v6867 = vld [vmem:[#allocation7 + $0x9a8] sm:$0xff]
    %v6868 = vld [vmem:[#allocation7 + $0x9b0] sm:$0xff]
    %v6869 = vld [vmem:[#allocation7 + $0x9b8] sm:$0xff]
    %v6870 = vld [vmem:[#allocation7 + $0x9c0] sm:$0xff]
    %v6871 = vld [vmem:[#allocation7 + $0x9c8] sm:$0xff]
    %v6872 = vld [vmem:[#allocation7 + $0x9d0] sm:$0xff]
    %v6873 = vld [vmem:[#allocation7 + $0x9d8] sm:$0xff]
    %v6874 = vld [vmem:[#allocation7 + $0x9e0] sm:$0xff]
    %v6875 = vld [vmem:[#allocation7 + $0x9e8] sm:$0xff]
    %v6876 = vld [vmem:[#allocation7 + $0x9f0] sm:$0xff]
    %v6877 = vld [vmem:[#allocation7 + $0x9f8] sm:$0xff]
    %v6878 = vld [vmem:[#allocation7 + $0xa00] sm:$0xff]
    %v6879 = vld [vmem:[#allocation7 + $0xa08] sm:$0xff]
    %v6880 = vld [vmem:[#allocation7 + $0xa10] sm:$0xff]
    %v6881 = vld [vmem:[#allocation7 + $0xa18] sm:$0xff]
    %v6882 = vld [vmem:[#allocation7 + $0xa20] sm:$0xff]
    %v6883 = vld [vmem:[#allocation7 + $0xa28] sm:$0xff]
    %v6884 = vld [vmem:[#allocation7 + $0xa30] sm:$0xff]
    %v6885 = vld [vmem:[#allocation7 + $0xa38] sm:$0xff]
    %v6886 = vld [vmem:[#allocation7 + $0xa40] sm:$0xff]
    %v6887 = vld [vmem:[#allocation7 + $0xa48] sm:$0xff]
    %v6888 = vld [vmem:[#allocation7 + $0xa50] sm:$0xff]
    %v6889 = vld [vmem:[#allocation7 + $0xa58] sm:$0xff]
    %v6890 = vld [vmem:[#allocation7 + $0xa60] sm:$0xff]
    %v6891 = vld [vmem:[#allocation7 + $0xa68] sm:$0xff]
    %v6892 = vld [vmem:[#allocation7 + $0xa70] sm:$0xff]
    %v6893 = vld [vmem:[#allocation7 + $0xa78] sm:$0xff]
    %v6894 = vld [vmem:[#allocation7 + $0xa80] sm:$0xff]
    %v6895 = vld [vmem:[#allocation7 + $0xa88] sm:$0xff]
    %v6896 = vld [vmem:[#allocation7 + $0xa90] sm:$0xff]
    %v6897 = vld [vmem:[#allocation7 + $0xa98] sm:$0xff]
    %v6898 = vld [vmem:[#allocation7 + $0xaa0] sm:$0xff]
    %v6899 = vld [vmem:[#allocation7 + $0xaa8] sm:$0xff]
    %v6900 = vld [vmem:[#allocation7 + $0xab0] sm:$0xff]
    %v6901 = vld [vmem:[#allocation7 + $0xab8] sm:$0xff]
    %v6902 = vld [vmem:[#allocation7 + $0xac0] sm:$0xff]
    %v6903 = vld [vmem:[#allocation7 + $0xac8] sm:$0xff]
    %v6904 = vld [vmem:[#allocation7 + $0xad0] sm:$0xff]
    %v6905 = vld [vmem:[#allocation7 + $0xad8] sm:$0xff]
    %v6906 = vld [vmem:[#allocation7 + $0xae0] sm:$0xff]
    %v6907 = vld [vmem:[#allocation7 + $0xae8] sm:$0xff]
    %v6908 = vld [vmem:[#allocation7 + $0xaf0] sm:$0xff]
    %v6909 = vld [vmem:[#allocation7 + $0xaf8] sm:$0xff]
    %v6910 = vld [vmem:[#allocation7 + $0xb00] sm:$0xff]
    %v6911 = vld [vmem:[#allocation7 + $0xb08] sm:$0xff]
    %v6912 = vld [vmem:[#allocation7 + $0xb10] sm:$0xff]
    %v6913 = vld [vmem:[#allocation7 + $0xb18] sm:$0xff]
    %v6914 = vld [vmem:[#allocation7 + $0xb20] sm:$0xff]
    %v6915 = vld [vmem:[#allocation7 + $0xb28] sm:$0xff]
    %v6916 = vld [vmem:[#allocation7 + $0xb30] sm:$0xff]
    %v6917 = vld [vmem:[#allocation7 + $0xb38] sm:$0xff]
    %v6918 = vld [vmem:[#allocation7 + $0xb40] sm:$0xff]
    %v6919 = vld [vmem:[#allocation7 + $0xb48] sm:$0xff]
    %v6920 = vld [vmem:[#allocation7 + $0xb50] sm:$0xff]
    %v6921 = vld [vmem:[#allocation7 + $0xb58] sm:$0xff]
    %v6922 = vld [vmem:[#allocation7 + $0xb60] sm:$0xff]
    %v6923 = vld [vmem:[#allocation7 + $0xb68] sm:$0xff]
    %v6924 = vld [vmem:[#allocation7 + $0xb70] sm:$0xff]
    %v6925 = vld [vmem:[#allocation7 + $0xb78] sm:$0xff]
    %v6926 = vld [vmem:[#allocation7 + $0xb80] sm:$0xff]
    %v6927 = vld [vmem:[#allocation7 + $0xb88] sm:$0xff]
    %v6928 = vld [vmem:[#allocation7 + $0xb90] sm:$0xff]
    %v6929 = vld [vmem:[#allocation7 + $0xb98] sm:$0xff]
    %v6930 = vld [vmem:[#allocation7 + $0xba0] sm:$0xff]
    %v6931 = vld [vmem:[#allocation7 + $0xba8] sm:$0xff]
    %v6932 = vld [vmem:[#allocation7 + $0xbb0] sm:$0xff]
    %v6933 = vld [vmem:[#allocation7 + $0xbb8] sm:$0xff]
    %v6934 = vld [vmem:[#allocation7 + $0xbc0] sm:$0xff]
    %v6935 = vld [vmem:[#allocation7 + $0xbc8] sm:$0xff]
    %v6936 = vld [vmem:[#allocation7 + $0xbd0] sm:$0xff]
    %v6937 = vld [vmem:[#allocation7 + $0xbd8] sm:$0xff]
    %v6938 = vld [vmem:[#allocation7 + $0xbe0] sm:$0xff]
    %v6939 = vld [vmem:[#allocation7 + $0xbe8] sm:$0xff]
    %v6940 = vld [vmem:[#allocation7 + $0xbf0] sm:$0xff]
    %v6941 = vld [vmem:[#allocation7 + $0xbf8] sm:$0xff]
    %v6942 = vld [vmem:[#allocation10] sm:$0xff]
    %v6943 = vld [vmem:[#allocation10 + $0x8] sm:$0xf]
    %v6946 = vperm.slane %v6942, 0
    %v6947 = vperm.slane %v6942, 1
    %v6948 = vperm.slane %v6942, 2
    %v6949 = vperm.slane %v6942, 3
    %v6950 = vperm.slane %v6942, 4
    %v6951 = vperm.slane %v6942, 5
    %v6952 = vperm.slane %v6942, 6
    %v6953 = vperm.slane %v6942, 7
    %v6954 = vperm.slane %v6943, 0
    %v6955 = vperm.slane %v6943, 1
    %v6956 = vperm.slane %v6943, 2
    %v6957 = vperm.slane %v6943, 3
    %v7354 = vunpack.c.l.b16 %v6558
    %v7355 = vunpack.c.h.b16 %v6558
    %v7356 = vunpack.c.l.b16 %v6559
    %v7357 = vunpack.c.h.b16 %v6559
    %v7358 = vunpack.c.l.b16 %v6560
    %v7359 = vunpack.c.h.b16 %v6560
    %v7360 = vunpack.c.l.b16 %v6561
    %v7361 = vunpack.c.h.b16 %v6561
    %v7362 = vunpack.c.l.b16 %v6562
    %v7363 = vunpack.c.h.b16 %v6562
    %v7364 = vunpack.c.l.b16 %v6563
    %v7365 = vunpack.c.h.b16 %v6563
    %v7366 = vunpack.c.l.b16 %v6564
    %v7367 = vunpack.c.h.b16 %v6564
    %v7368 = vunpack.c.l.b16 %v6565
    %v7369 = vunpack.c.h.b16 %v6565
    %v7370 = vunpack.c.l.b16 %v6566
    %v7371 = vunpack.c.h.b16 %v6566
    %v7372 = vunpack.c.l.b16 %v6567
    %v7373 = vunpack.c.h.b16 %v6567
    %v7374 = vunpack.c.l.b16 %v6568
    %v7375 = vunpack.c.h.b16 %v6568
    %v7376 = vunpack.c.l.b16 %v6569
    %v7377 = vunpack.c.h.b16 %v6569
    %v7378 = vunpack.c.l.b16 %v6570
    %v7379 = vunpack.c.h.b16 %v6570
    %v7380 = vunpack.c.l.b16 %v6571
    %v7381 = vunpack.c.h.b16 %v6571
    %v7382 = vunpack.c.l.b16 %v6572
    %v7383 = vunpack.c.h.b16 %v6572
    %v7384 = vunpack.c.l.b16 %v6573
    %v7385 = vunpack.c.h.b16 %v6573
    %v7386 = vunpack.c.l.b16 %v6574
    %v7387 = vunpack.c.h.b16 %v6574
    %v7388 = vunpack.c.l.b16 %v6575
    %v7389 = vunpack.c.h.b16 %v6575
    %v7390 = vunpack.c.l.b16 %v6576
    %v7391 = vunpack.c.h.b16 %v6576
    %v7392 = vunpack.c.l.b16 %v6577
    %v7393 = vunpack.c.h.b16 %v6577
    %v7394 = vunpack.c.l.b16 %v6578
    %v7395 = vunpack.c.h.b16 %v6578
    %v7396 = vunpack.c.l.b16 %v6579
    %v7397 = vunpack.c.h.b16 %v6579
    %v7398 = vunpack.c.l.b16 %v6580
    %v7399 = vunpack.c.h.b16 %v6580
    %v7400 = vunpack.c.l.b16 %v6581
    %v7401 = vunpack.c.h.b16 %v6581
    %v7402 = vunpack.c.l.b16 %v6582
    %v7403 = vunpack.c.h.b16 %v6582
    %v7404 = vunpack.c.l.b16 %v6583
    %v7405 = vunpack.c.h.b16 %v6583
    %v7406 = vunpack.c.l.b16 %v6584
    %v7407 = vunpack.c.h.b16 %v6584
    %v7408 = vunpack.c.l.b16 %v6585
    %v7409 = vunpack.c.h.b16 %v6585
    %v7410 = vunpack.c.l.b16 %v6586
    %v7411 = vunpack.c.h.b16 %v6586
    %v7412 = vunpack.c.l.b16 %v6587
    %v7413 = vunpack.c.h.b16 %v6587
    %v7414 = vunpack.c.l.b16 %v6588
    %v7415 = vunpack.c.h.b16 %v6588
    %v7416 = vunpack.c.l.b16 %v6589
    %v7417 = vunpack.c.h.b16 %v6589
    %v7418 = vunpack.c.l.b16 %v6590
    %v7419 = vunpack.c.h.b16 %v6590
    %v7420 = vunpack.c.l.b16 %v6591
    %v7421 = vunpack.c.h.b16 %v6591
    %v7422 = vunpack.c.l.b16 %v6592
    %v7423 = vunpack.c.h.b16 %v6592
    %v7424 = vunpack.c.l.b16 %v6593
    %v7425 = vunpack.c.h.b16 %v6593
    %v7426 = vunpack.c.l.b16 %v6594
    %v7427 = vunpack.c.h.b16 %v6594
    %v7428 = vunpack.c.l.b16 %v6595
    %v7429 = vunpack.c.h.b16 %v6595
    %v7430 = vunpack.c.l.b16 %v6596
    %v7431 = vunpack.c.h.b16 %v6596
    %v7432 = vunpack.c.l.b16 %v6597
    %v7433 = vunpack.c.h.b16 %v6597
    %v7434 = vunpack.c.l.b16 %v6598
    %v7435 = vunpack.c.h.b16 %v6598
    %v7436 = vunpack.c.l.b16 %v6599
    %v7437 = vunpack.c.h.b16 %v6599
    %v7438 = vunpack.c.l.b16 %v6600
    %v7439 = vunpack.c.h.b16 %v6600
    %v7440 = vunpack.c.l.b16 %v6601
    %v7441 = vunpack.c.h.b16 %v6601
    %v7442 = vunpack.c.l.b16 %v6602
    %v7443 = vunpack.c.h.b16 %v6602
    %v7444 = vunpack.c.l.b16 %v6603
    %v7445 = vunpack.c.h.b16 %v6603
    %v7446 = vunpack.c.l.b16 %v6604
    %v7447 = vunpack.c.h.b16 %v6604
    %v7448 = vunpack.c.l.b16 %v6605
    %v7449 = vunpack.c.h.b16 %v6605
    %v7450 = vunpack.c.l.b16 %v6606
    %v7451 = vunpack.c.h.b16 %v6606
    %v7452 = vunpack.c.l.b16 %v6607
    %v7453 = vunpack.c.h.b16 %v6607
    %v7454 = vunpack.c.l.b16 %v6608
    %v7455 = vunpack.c.h.b16 %v6608
    %v7456 = vunpack.c.l.b16 %v6609
    %v7457 = vunpack.c.h.b16 %v6609
    %v7458 = vunpack.c.l.b16 %v6610
    %v7459 = vunpack.c.h.b16 %v6610
    %v7460 = vunpack.c.l.b16 %v6611
    %v7461 = vunpack.c.h.b16 %v6611
    %v7462 = vunpack.c.l.b16 %v6612
    %v7463 = vunpack.c.h.b16 %v6612
    %v7464 = vunpack.c.l.b16 %v6613
    %v7465 = vunpack.c.h.b16 %v6613
    %v7466 = vunpack.c.l.b16 %v6614
    %v7467 = vunpack.c.h.b16 %v6614
    %v7468 = vunpack.c.l.b16 %v6615
    %v7469 = vunpack.c.h.b16 %v6615
    %v7470 = vunpack.c.l.b16 %v6616
    %v7471 = vunpack.c.h.b16 %v6616
    %v7472 = vunpack.c.l.b16 %v6617
    %v7473 = vunpack.c.h.b16 %v6617
    %v7474 = vunpack.c.l.b16 %v6618
    %v7475 = vunpack.c.h.b16 %v6618
    %v7476 = vunpack.c.l.b16 %v6619
    %v7477 = vunpack.c.h.b16 %v6619
    %v7478 = vunpack.c.l.b16 %v6620
    %v7479 = vunpack.c.h.b16 %v6620
    %v7480 = vunpack.c.l.b16 %v6621
    %v7481 = vunpack.c.h.b16 %v6621
    %v7482 = vunpack.c.l.b16 %v6622
    %v7483 = vunpack.c.h.b16 %v6622
    %v7484 = vunpack.c.l.b16 %v6623
    %v7485 = vunpack.c.h.b16 %v6623
    %v7486 = vunpack.c.l.b16 %v6624
    %v7487 = vunpack.c.h.b16 %v6624
    %v7488 = vunpack.c.l.b16 %v6625
    %v7489 = vunpack.c.h.b16 %v6625
    %v7490 = vunpack.c.l.b16 %v6626
    %v7491 = vunpack.c.h.b16 %v6626
    %v7492 = vunpack.c.l.b16 %v6627
    %v7493 = vunpack.c.h.b16 %v6627
    %v7494 = vunpack.c.l.b16 %v6628
    %v7495 = vunpack.c.h.b16 %v6628
    %v7496 = vunpack.c.l.b16 %v6629
    %v7497 = vunpack.c.h.b16 %v6629
    %v7498 = vunpack.c.l.b16 %v6630
    %v7499 = vunpack.c.h.b16 %v6630
    %v7500 = vunpack.c.l.b16 %v6631
    %v7501 = vunpack.c.h.b16 %v6631
    %v7502 = vunpack.c.l.b16 %v6632
    %v7503 = vunpack.c.h.b16 %v6632
    %v7504 = vunpack.c.l.b16 %v6633
    %v7505 = vunpack.c.h.b16 %v6633
    %v7506 = vunpack.c.l.b16 %v6634
    %v7507 = vunpack.c.h.b16 %v6634
    %v7508 = vunpack.c.l.b16 %v6635
    %v7509 = vunpack.c.h.b16 %v6635
    %v7510 = vunpack.c.l.b16 %v6636
    %v7511 = vunpack.c.h.b16 %v6636
    %v7512 = vunpack.c.l.b16 %v6637
    %v7513 = vunpack.c.h.b16 %v6637
    %v7514 = vunpack.c.l.b16 %v6638
    %v7515 = vunpack.c.h.b16 %v6638
    %v7516 = vunpack.c.l.b16 %v6639
    %v7517 = vunpack.c.h.b16 %v6639
    %v7518 = vunpack.c.l.b16 %v6640
    %v7519 = vunpack.c.h.b16 %v6640
    %v7520 = vunpack.c.l.b16 %v6641
    %v7521 = vunpack.c.h.b16 %v6641
    %v7522 = vunpack.c.l.b16 %v6642
    %v7523 = vunpack.c.h.b16 %v6642
    %v7524 = vunpack.c.l.b16 %v6643
    %v7525 = vunpack.c.h.b16 %v6643
    %v7526 = vunpack.c.l.b16 %v6644
    %v7527 = vunpack.c.h.b16 %v6644
    %v7528 = vunpack.c.l.b16 %v6645
    %v7529 = vunpack.c.h.b16 %v6645
    %v7530 = vunpack.c.l.b16 %v6646
    %v7531 = vunpack.c.h.b16 %v6646
    %v7532 = vunpack.c.l.b16 %v6647
    %v7533 = vunpack.c.h.b16 %v6647
    %v7534 = vunpack.c.l.b16 %v6648
    %v7535 = vunpack.c.h.b16 %v6648
    %v7536 = vunpack.c.l.b16 %v6649
    %v7537 = vunpack.c.h.b16 %v6649
    %v7538 = vunpack.c.l.b16 %v6650
    %v7539 = vunpack.c.h.b16 %v6650
    %v7540 = vunpack.c.l.b16 %v6651
    %v7541 = vunpack.c.h.b16 %v6651
    %v7542 = vunpack.c.l.b16 %v6652
    %v7543 = vunpack.c.h.b16 %v6652
    %v7544 = vunpack.c.l.b16 %v6653
    %v7545 = vunpack.c.h.b16 %v6653
    %v7546 = vunpack.c.l.b16 %v6654
    %v7547 = vunpack.c.h.b16 %v6654
    %v7548 = vunpack.c.l.b16 %v6655
    %v7549 = vunpack.c.h.b16 %v6655
    %v7550 = vunpack.c.l.b16 %v6656
    %v7551 = vunpack.c.h.b16 %v6656
    %v7552 = vunpack.c.l.b16 %v6657
    %v7553 = vunpack.c.h.b16 %v6657
    %v7554 = vunpack.c.l.b16 %v6658
    %v7555 = vunpack.c.h.b16 %v6658
    %v7556 = vunpack.c.l.b16 %v6659
    %v7557 = vunpack.c.h.b16 %v6659
    %v7558 = vunpack.c.l.b16 %v6660
    %v7559 = vunpack.c.h.b16 %v6660
    %v7560 = vunpack.c.l.b16 %v6661
    %v7561 = vunpack.c.h.b16 %v6661
    %v7562 = vunpack.c.l.b16 %v6662
    %v7563 = vunpack.c.h.b16 %v6662
    %v7564 = vunpack.c.l.b16 %v6663
    %v7565 = vunpack.c.h.b16 %v6663
    %v7566 = vunpack.c.l.b16 %v6664
    %v7567 = vunpack.c.h.b16 %v6664
    %v7568 = vunpack.c.l.b16 %v6665
    %v7569 = vunpack.c.h.b16 %v6665
    %v7570 = vunpack.c.l.b16 %v6666
    %v7571 = vunpack.c.h.b16 %v6666
    %v7572 = vunpack.c.l.b16 %v6667
    %v7573 = vunpack.c.h.b16 %v6667
    %v7574 = vunpack.c.l.b16 %v6668
    %v7575 = vunpack.c.h.b16 %v6668
    %v7576 = vunpack.c.l.b16 %v6669
    %v7577 = vunpack.c.h.b16 %v6669
    %v7578 = vunpack.c.l.b16 %v6670
    %v7579 = vunpack.c.h.b16 %v6670
    %v7580 = vunpack.c.l.b16 %v6671
    %v7581 = vunpack.c.h.b16 %v6671
    %v7582 = vunpack.c.l.b16 %v6672
    %v7583 = vunpack.c.h.b16 %v6672
    %v7584 = vunpack.c.l.b16 %v6673
    %v7585 = vunpack.c.h.b16 %v6673
    %v7586 = vunpack.c.l.b16 %v6674
    %v7587 = vunpack.c.h.b16 %v6674
    %v7588 = vunpack.c.l.b16 %v6675
    %v7589 = vunpack.c.h.b16 %v6675
    %v7590 = vunpack.c.l.b16 %v6676
    %v7591 = vunpack.c.h.b16 %v6676
    %v7592 = vunpack.c.l.b16 %v6677
    %v7593 = vunpack.c.h.b16 %v6677
    %v7594 = vunpack.c.l.b16 %v6678
    %v7595 = vunpack.c.h.b16 %v6678
    %v7596 = vunpack.c.l.b16 %v6679
    %v7597 = vunpack.c.h.b16 %v6679
    %v7598 = vunpack.c.l.b16 %v6680
    %v7599 = vunpack.c.h.b16 %v6680
    %v7600 = vunpack.c.l.b16 %v6681
    %v7601 = vunpack.c.h.b16 %v6681
    %v7602 = vunpack.c.l.b16 %v6682
    %v7603 = vunpack.c.h.b16 %v6682
    %v7604 = vunpack.c.l.b16 %v6683
    %v7605 = vunpack.c.h.b16 %v6683
    %v7606 = vunpack.c.l.b16 %v6684
    %v7607 = vunpack.c.h.b16 %v6684
    %v7608 = vunpack.c.l.b16 %v6685
    %v7609 = vunpack.c.h.b16 %v6685
    %v7610 = vunpack.c.l.b16 %v6686
    %v7611 = vunpack.c.h.b16 %v6686
    %v7612 = vunpack.c.l.b16 %v6687
    %v7613 = vunpack.c.h.b16 %v6687
    %v7614 = vunpack.c.l.b16 %v6688
    %v7615 = vunpack.c.h.b16 %v6688
    %v7616 = vunpack.c.l.b16 %v6689
    %v7617 = vunpack.c.h.b16 %v6689
    %v7618 = vunpack.c.l.b16 %v6690
    %v7619 = vunpack.c.h.b16 %v6690
    %v7620 = vunpack.c.l.b16 %v6691
    %v7621 = vunpack.c.h.b16 %v6691
    %v7622 = vunpack.c.l.b16 %v6692
    %v7623 = vunpack.c.h.b16 %v6692
    %v7624 = vunpack.c.l.b16 %v6693
    %v7625 = vunpack.c.h.b16 %v6693
    %v7626 = vunpack.c.l.b16 %v6694
    %v7627 = vunpack.c.h.b16 %v6694
    %v7628 = vunpack.c.l.b16 %v6695
    %v7629 = vunpack.c.h.b16 %v6695
    %v7630 = vunpack.c.l.b16 %v6696
    %v7631 = vunpack.c.h.b16 %v6696
    %v7632 = vunpack.c.l.b16 %v6697
    %v7633 = vunpack.c.h.b16 %v6697
    %v7634 = vunpack.c.l.b16 %v6698
    %v7635 = vunpack.c.h.b16 %v6698
    %v7636 = vunpack.c.l.b16 %v6699
    %v7637 = vunpack.c.h.b16 %v6699
    %v7638 = vunpack.c.l.b16 %v6700
    %v7639 = vunpack.c.h.b16 %v6700
    %v7640 = vunpack.c.l.b16 %v6701
    %v7641 = vunpack.c.h.b16 %v6701
    %v7642 = vunpack.c.l.b16 %v6702
    %v7643 = vunpack.c.h.b16 %v6702
    %v7644 = vunpack.c.l.b16 %v6703
    %v7645 = vunpack.c.h.b16 %v6703
    %v7646 = vunpack.c.l.b16 %v6704
    %v7647 = vunpack.c.h.b16 %v6704
    %v7648 = vunpack.c.l.b16 %v6705
    %v7649 = vunpack.c.h.b16 %v6705
    %v7650 = vunpack.c.l.b16 %v6706
    %v7651 = vunpack.c.h.b16 %v6706
    %v7652 = vunpack.c.l.b16 %v6707
    %v7653 = vunpack.c.h.b16 %v6707
    %v7654 = vunpack.c.l.b16 %v6708
    %v7655 = vunpack.c.h.b16 %v6708
    %v7656 = vunpack.c.l.b16 %v6709
    %v7657 = vunpack.c.h.b16 %v6709
    %v7658 = vunpack.c.l.b16 %v6710
    %v7659 = vunpack.c.h.b16 %v6710
    %v7660 = vunpack.c.l.b16 %v6711
    %v7661 = vunpack.c.h.b16 %v6711
    %v7662 = vunpack.c.l.b16 %v6712
    %v7663 = vunpack.c.h.b16 %v6712
    %v7664 = vunpack.c.l.b16 %v6713
    %v7665 = vunpack.c.h.b16 %v6713
    %v7666 = vunpack.c.l.b16 %v6714
    %v7667 = vunpack.c.h.b16 %v6714
    %v7668 = vunpack.c.l.b16 %v6715
    %v7669 = vunpack.c.h.b16 %v6715
    %v7670 = vunpack.c.l.b16 %v6716
    %v7671 = vunpack.c.h.b16 %v6716
    %v7672 = vunpack.c.l.b16 %v6717
    %v7673 = vunpack.c.h.b16 %v6717
    %v7674 = vunpack.c.l.b16 %v6718
    %v7675 = vunpack.c.h.b16 %v6718
    %v7676 = vunpack.c.l.b16 %v6719
    %v7677 = vunpack.c.h.b16 %v6719
    %v7678 = vunpack.c.l.b16 %v6720
    %v7679 = vunpack.c.h.b16 %v6720
    %v7680 = vunpack.c.l.b16 %v6721
    %v7681 = vunpack.c.h.b16 %v6721
    %v7682 = vunpack.c.l.b16 %v6722
    %v7683 = vunpack.c.h.b16 %v6722
    %v7684 = vunpack.c.l.b16 %v6723
    %v7685 = vunpack.c.h.b16 %v6723
    %v7686 = vunpack.c.l.b16 %v6724
    %v7687 = vunpack.c.h.b16 %v6724
    %v7688 = vunpack.c.l.b16 %v6725
    %v7689 = vunpack.c.h.b16 %v6725
    %v7690 = vunpack.c.l.b16 %v6726
    %v7691 = vunpack.c.h.b16 %v6726
    %v7692 = vunpack.c.l.b16 %v6727
    %v7693 = vunpack.c.h.b16 %v6727
    %v7694 = vunpack.c.l.b16 %v6728
    %v7695 = vunpack.c.h.b16 %v6728
    %v7696 = vunpack.c.l.b16 %v6729
    %v7697 = vunpack.c.h.b16 %v6729
    %v7698 = vunpack.c.l.b16 %v6730
    %v7699 = vunpack.c.h.b16 %v6730
    %v7700 = vunpack.c.l.b16 %v6731
    %v7701 = vunpack.c.h.b16 %v6731
    %v7702 = vunpack.c.l.b16 %v6732
    %v7703 = vunpack.c.h.b16 %v6732
    %v7704 = vunpack.c.l.b16 %v6733
    %v7705 = vunpack.c.h.b16 %v6733
    %v7706 = vunpack.c.l.b16 %v6734
    %v7707 = vunpack.c.h.b16 %v6734
    %v7708 = vunpack.c.l.b16 %v6735
    %v7709 = vunpack.c.h.b16 %v6735
    %v7710 = vunpack.c.l.b16 %v6736
    %v7711 = vunpack.c.h.b16 %v6736
    %v7712 = vunpack.c.l.b16 %v6737
    %v7713 = vunpack.c.h.b16 %v6737
    %v7714 = vunpack.c.l.b16 %v6738
    %v7715 = vunpack.c.h.b16 %v6738
    %v7716 = vunpack.c.l.b16 %v6739
    %v7717 = vunpack.c.h.b16 %v6739
    %v7718 = vunpack.c.l.b16 %v6740
    %v7719 = vunpack.c.h.b16 %v6740
    %v7720 = vunpack.c.l.b16 %v6741
    %v7721 = vunpack.c.h.b16 %v6741
    %v7722 = vunpack.c.l.b16 %v6742
    %v7723 = vunpack.c.h.b16 %v6742
    %v7724 = vunpack.c.l.b16 %v6743
    %v7725 = vunpack.c.h.b16 %v6743
    %v7726 = vunpack.c.l.b16 %v6744
    %v7727 = vunpack.c.h.b16 %v6744
    %v7728 = vunpack.c.l.b16 %v6745
    %v7729 = vunpack.c.h.b16 %v6745
    %v7730 = vunpack.c.l.b16 %v6746
    %v7731 = vunpack.c.h.b16 %v6746
    %v7732 = vunpack.c.l.b16 %v6747
    %v7733 = vunpack.c.h.b16 %v6747
    %v7734 = vunpack.c.l.b16 %v6748
    %v7735 = vunpack.c.h.b16 %v6748
    %v7736 = vunpack.c.l.b16 %v6749
    %v7737 = vunpack.c.h.b16 %v6749
    %v7738 = vunpack.c.l.b16 %v6750
    %v7739 = vunpack.c.h.b16 %v6750
    %v7740 = vunpack.c.l.b16 %v6751
    %v7741 = vunpack.c.h.b16 %v6751
    %v7742 = vunpack.c.l.b16 %v6752
    %v7743 = vunpack.c.h.b16 %v6752
    %v7744 = vunpack.c.l.b16 %v6753
    %v7745 = vunpack.c.h.b16 %v6753
    %v7746 = vunpack.c.l.b16 %v6754
    %v7747 = vunpack.c.h.b16 %v6754
    %v7748 = vunpack.c.l.b16 %v6755
    %v7749 = vunpack.c.h.b16 %v6755
    %v7750 = vunpack.c.l.b16 %v6756
    %v7751 = vunpack.c.h.b16 %v6756
    %v7752 = vunpack.c.l.b16 %v6757
    %v7753 = vunpack.c.h.b16 %v6757
    %v7754 = vunpack.c.l.b16 %v6758
    %v7755 = vunpack.c.h.b16 %v6758
    %v7756 = vunpack.c.l.b16 %v6759
    %v7757 = vunpack.c.h.b16 %v6759
    %v7758 = vunpack.c.l.b16 %v6760
    %v7759 = vunpack.c.h.b16 %v6760
    %v7760 = vunpack.c.l.b16 %v6761
    %v7761 = vunpack.c.h.b16 %v6761
    %v7762 = vunpack.c.l.b16 %v6762
    %v7763 = vunpack.c.h.b16 %v6762
    %v7764 = vunpack.c.l.b16 %v6763
    %v7765 = vunpack.c.h.b16 %v6763
    %v7766 = vunpack.c.l.b16 %v6764
    %v7767 = vunpack.c.h.b16 %v6764
    %v7768 = vunpack.c.l.b16 %v6765
    %v7769 = vunpack.c.h.b16 %v6765
    %v7770 = vunpack.c.l.b16 %v6766
    %v7771 = vunpack.c.h.b16 %v6766
    %v7772 = vunpack.c.l.b16 %v6767
    %v7773 = vunpack.c.h.b16 %v6767
    %v7774 = vunpack.c.l.b16 %v6768
    %v7775 = vunpack.c.h.b16 %v6768
    %v7776 = vunpack.c.l.b16 %v6769
    %v7777 = vunpack.c.h.b16 %v6769
    %v7778 = vunpack.c.l.b16 %v6770
    %v7779 = vunpack.c.h.b16 %v6770
    %v7780 = vunpack.c.l.b16 %v6771
    %v7781 = vunpack.c.h.b16 %v6771
    %v7782 = vunpack.c.l.b16 %v6772
    %v7783 = vunpack.c.h.b16 %v6772
    %v7784 = vunpack.c.l.b16 %v6773
    %v7785 = vunpack.c.h.b16 %v6773
    %v7786 = vunpack.c.l.b16 %v6774
    %v7787 = vunpack.c.h.b16 %v6774
    %v7788 = vunpack.c.l.b16 %v6775
    %v7789 = vunpack.c.h.b16 %v6775
    %v7790 = vunpack.c.l.b16 %v6776
    %v7791 = vunpack.c.h.b16 %v6776
    %v7792 = vunpack.c.l.b16 %v6777
    %v7793 = vunpack.c.h.b16 %v6777
    %v7794 = vunpack.c.l.b16 %v6778
    %v7795 = vunpack.c.h.b16 %v6778
    %v7796 = vunpack.c.l.b16 %v6779
    %v7797 = vunpack.c.h.b16 %v6779
    %v7798 = vunpack.c.l.b16 %v6780
    %v7799 = vunpack.c.h.b16 %v6780
    %v7800 = vunpack.c.l.b16 %v6781
    %v7801 = vunpack.c.h.b16 %v6781
    %v7802 = vunpack.c.l.b16 %v6782
    %v7803 = vunpack.c.h.b16 %v6782
    %v7804 = vunpack.c.l.b16 %v6783
    %v7805 = vunpack.c.h.b16 %v6783
    %v7806 = vunpack.c.l.b16 %v6784
    %v7807 = vunpack.c.h.b16 %v6784
    %v7808 = vunpack.c.l.b16 %v6785
    %v7809 = vunpack.c.h.b16 %v6785
    %v7810 = vunpack.c.l.b16 %v6786
    %v7811 = vunpack.c.h.b16 %v6786
    %v7812 = vunpack.c.l.b16 %v6787
    %v7813 = vunpack.c.h.b16 %v6787
    %v7814 = vunpack.c.l.b16 %v6788
    %v7815 = vunpack.c.h.b16 %v6788
    %v7816 = vunpack.c.l.b16 %v6789
    %v7817 = vunpack.c.h.b16 %v6789
    %v7818 = vunpack.c.l.b16 %v6790
    %v7819 = vunpack.c.h.b16 %v6790
    %v7820 = vunpack.c.l.b16 %v6791
    %v7821 = vunpack.c.h.b16 %v6791
    %v7822 = vunpack.c.l.b16 %v6792
    %v7823 = vunpack.c.h.b16 %v6792
    %v7824 = vunpack.c.l.b16 %v6793
    %v7825 = vunpack.c.h.b16 %v6793
    %v7826 = vunpack.c.l.b16 %v6794
    %v7827 = vunpack.c.h.b16 %v6794
    %v7828 = vunpack.c.l.b16 %v6795
    %v7829 = vunpack.c.h.b16 %v6795
    %v7830 = vunpack.c.l.b16 %v6796
    %v7831 = vunpack.c.h.b16 %v6796
    %v7832 = vunpack.c.l.b16 %v6797
    %v7833 = vunpack.c.h.b16 %v6797
    %v7834 = vunpack.c.l.b16 %v6798
    %v7835 = vunpack.c.h.b16 %v6798
    %v7836 = vunpack.c.l.b16 %v6799
    %v7837 = vunpack.c.h.b16 %v6799
    %v7838 = vunpack.c.l.b16 %v6800
    %v7839 = vunpack.c.h.b16 %v6800
    %v7840 = vunpack.c.l.b16 %v6801
    %v7841 = vunpack.c.h.b16 %v6801
    %v7842 = vunpack.c.l.b16 %v6802
    %v7843 = vunpack.c.h.b16 %v6802
    %v7844 = vunpack.c.l.b16 %v6803
    %v7845 = vunpack.c.h.b16 %v6803
    %v7846 = vunpack.c.l.b16 %v6804
    %v7847 = vunpack.c.h.b16 %v6804
    %v7848 = vunpack.c.l.b16 %v6805
    %v7849 = vunpack.c.h.b16 %v6805
    %v7850 = vunpack.c.l.b16 %v6806
    %v7851 = vunpack.c.h.b16 %v6806
    %v7852 = vunpack.c.l.b16 %v6807
    %v7853 = vunpack.c.h.b16 %v6807
    %v7854 = vunpack.c.l.b16 %v6808
    %v7855 = vunpack.c.h.b16 %v6808
    %v7856 = vunpack.c.l.b16 %v6809
    %v7857 = vunpack.c.h.b16 %v6809
    %v7858 = vunpack.c.l.b16 %v6810
    %v7859 = vunpack.c.h.b16 %v6810
    %v7860 = vunpack.c.l.b16 %v6811
    %v7861 = vunpack.c.h.b16 %v6811
    %v7862 = vunpack.c.l.b16 %v6812
    %v7863 = vunpack.c.h.b16 %v6812
    %v7864 = vunpack.c.l.b16 %v6813
    %v7865 = vunpack.c.h.b16 %v6813
    %v7866 = vunpack.c.l.b16 %v6814
    %v7867 = vunpack.c.h.b16 %v6814
    %v7868 = vunpack.c.l.b16 %v6815
    %v7869 = vunpack.c.h.b16 %v6815
    %v7870 = vunpack.c.l.b16 %v6816
    %v7871 = vunpack.c.h.b16 %v6816
    %v7872 = vunpack.c.l.b16 %v6817
    %v7873 = vunpack.c.h.b16 %v6817
    %v7874 = vunpack.c.l.b16 %v6818
    %v7875 = vunpack.c.h.b16 %v6818
    %v7876 = vunpack.c.l.b16 %v6819
    %v7877 = vunpack.c.h.b16 %v6819
    %v7878 = vunpack.c.l.b16 %v6820
    %v7879 = vunpack.c.h.b16 %v6820
    %v7880 = vunpack.c.l.b16 %v6821
    %v7881 = vunpack.c.h.b16 %v6821
    %v7882 = vunpack.c.l.b16 %v6822
    %v7883 = vunpack.c.h.b16 %v6822
    %v7884 = vunpack.c.l.b16 %v6823
    %v7885 = vunpack.c.h.b16 %v6823
    %v7886 = vunpack.c.l.b16 %v6824
    %v7887 = vunpack.c.h.b16 %v6824
    %v7888 = vunpack.c.l.b16 %v6825
    %v7889 = vunpack.c.h.b16 %v6825
    %v7890 = vunpack.c.l.b16 %v6826
    %v7891 = vunpack.c.h.b16 %v6826
    %v7892 = vunpack.c.l.b16 %v6827
    %v7893 = vunpack.c.h.b16 %v6827
    %v7894 = vunpack.c.l.b16 %v6828
    %v7895 = vunpack.c.h.b16 %v6828
    %v7896 = vunpack.c.l.b16 %v6829
    %v7897 = vunpack.c.h.b16 %v6829
    %v7898 = vunpack.c.l.b16 %v6830
    %v7899 = vunpack.c.h.b16 %v6830
    %v7900 = vunpack.c.l.b16 %v6831
    %v7901 = vunpack.c.h.b16 %v6831
    %v7902 = vunpack.c.l.b16 %v6832
    %v7903 = vunpack.c.h.b16 %v6832
    %v7904 = vunpack.c.l.b16 %v6833
    %v7905 = vunpack.c.h.b16 %v6833
    %v7906 = vunpack.c.l.b16 %v6834
    %v7907 = vunpack.c.h.b16 %v6834
    %v7908 = vunpack.c.l.b16 %v6835
    %v7909 = vunpack.c.h.b16 %v6835
    %v7910 = vunpack.c.l.b16 %v6836
    %v7911 = vunpack.c.h.b16 %v6836
    %v7912 = vunpack.c.l.b16 %v6837
    %v7913 = vunpack.c.h.b16 %v6837
    %v7914 = vunpack.c.l.b16 %v6838
    %v7915 = vunpack.c.h.b16 %v6838
    %v7916 = vunpack.c.l.b16 %v6839
    %v7917 = vunpack.c.h.b16 %v6839
    %v7918 = vunpack.c.l.b16 %v6840
    %v7919 = vunpack.c.h.b16 %v6840
    %v7920 = vunpack.c.l.b16 %v6841
    %v7921 = vunpack.c.h.b16 %v6841
    %v7922 = vunpack.c.l.b16 %v6842
    %v7923 = vunpack.c.h.b16 %v6842
    %v7924 = vunpack.c.l.b16 %v6843
    %v7925 = vunpack.c.h.b16 %v6843
    %v7926 = vunpack.c.l.b16 %v6844
    %v7927 = vunpack.c.h.b16 %v6844
    %v7928 = vunpack.c.l.b16 %v6845
    %v7929 = vunpack.c.h.b16 %v6845
    %v7930 = vunpack.c.l.b16 %v6846
    %v7931 = vunpack.c.h.b16 %v6846
    %v7932 = vunpack.c.l.b16 %v6847
    %v7933 = vunpack.c.h.b16 %v6847
    %v7934 = vunpack.c.l.b16 %v6848
    %v7935 = vunpack.c.h.b16 %v6848
    %v7936 = vunpack.c.l.b16 %v6849
    %v7937 = vunpack.c.h.b16 %v6849
    %v7938 = vunpack.c.l.b16 %v6850
    %v7939 = vunpack.c.h.b16 %v6850
    %v7940 = vunpack.c.l.b16 %v6851
    %v7941 = vunpack.c.h.b16 %v6851
    %v7942 = vunpack.c.l.b16 %v6852
    %v7943 = vunpack.c.h.b16 %v6852
    %v7944 = vunpack.c.l.b16 %v6853
    %v7945 = vunpack.c.h.b16 %v6853
    %v7946 = vunpack.c.l.b16 %v6854
    %v7947 = vunpack.c.h.b16 %v6854
    %v7948 = vunpack.c.l.b16 %v6855
    %v7949 = vunpack.c.h.b16 %v6855
    %v7950 = vunpack.c.l.b16 %v6856
    %v7951 = vunpack.c.h.b16 %v6856
    %v7952 = vunpack.c.l.b16 %v6857
    %v7953 = vunpack.c.h.b16 %v6857
    %v7954 = vunpack.c.l.b16 %v6858
    %v7955 = vunpack.c.h.b16 %v6858
    %v7956 = vunpack.c.l.b16 %v6859
    %v7957 = vunpack.c.h.b16 %v6859
    %v7958 = vunpack.c.l.b16 %v6860
    %v7959 = vunpack.c.h.b16 %v6860
    %v7960 = vunpack.c.l.b16 %v6861
    %v7961 = vunpack.c.h.b16 %v6861
    %v7962 = vunpack.c.l.b16 %v6862
    %v7963 = vunpack.c.h.b16 %v6862
    %v7964 = vunpack.c.l.b16 %v6863
    %v7965 = vunpack.c.h.b16 %v6863
    %v7966 = vunpack.c.l.b16 %v6864
    %v7967 = vunpack.c.h.b16 %v6864
    %v7968 = vunpack.c.l.b16 %v6865
    %v7969 = vunpack.c.h.b16 %v6865
    %v7970 = vunpack.c.l.b16 %v6866
    %v7971 = vunpack.c.h.b16 %v6866
    %v7972 = vunpack.c.l.b16 %v6867
    %v7973 = vunpack.c.h.b16 %v6867
    %v7974 = vunpack.c.l.b16 %v6868
    %v7975 = vunpack.c.h.b16 %v6868
    %v7976 = vunpack.c.l.b16 %v6869
    %v7977 = vunpack.c.h.b16 %v6869
    %v7978 = vunpack.c.l.b16 %v6870
    %v7979 = vunpack.c.h.b16 %v6870
    %v7980 = vunpack.c.l.b16 %v6871
    %v7981 = vunpack.c.h.b16 %v6871
    %v7982 = vunpack.c.l.b16 %v6872
    %v7983 = vunpack.c.h.b16 %v6872
    %v7984 = vunpack.c.l.b16 %v6873
    %v7985 = vunpack.c.h.b16 %v6873
    %v7986 = vunpack.c.l.b16 %v6874
    %v7987 = vunpack.c.h.b16 %v6874
    %v7988 = vunpack.c.l.b16 %v6875
    %v7989 = vunpack.c.h.b16 %v6875
    %v7990 = vunpack.c.l.b16 %v6876
    %v7991 = vunpack.c.h.b16 %v6876
    %v7992 = vunpack.c.l.b16 %v6877
    %v7993 = vunpack.c.h.b16 %v6877
    %v7994 = vunpack.c.l.b16 %v6878
    %v7995 = vunpack.c.h.b16 %v6878
    %v7996 = vunpack.c.l.b16 %v6879
    %v7997 = vunpack.c.h.b16 %v6879
    %v7998 = vunpack.c.l.b16 %v6880
    %v7999 = vunpack.c.h.b16 %v6880
    %v8000 = vunpack.c.l.b16 %v6881
    %v8001 = vunpack.c.h.b16 %v6881
    %v8002 = vunpack.c.l.b16 %v6882
    %v8003 = vunpack.c.h.b16 %v6882
    %v8004 = vunpack.c.l.b16 %v6883
    %v8005 = vunpack.c.h.b16 %v6883
    %v8006 = vunpack.c.l.b16 %v6884
    %v8007 = vunpack.c.h.b16 %v6884
    %v8008 = vunpack.c.l.b16 %v6885
    %v8009 = vunpack.c.h.b16 %v6885
    %v8010 = vunpack.c.l.b16 %v6886
    %v8011 = vunpack.c.h.b16 %v6886
    %v8012 = vunpack.c.l.b16 %v6887
    %v8013 = vunpack.c.h.b16 %v6887
    %v8014 = vunpack.c.l.b16 %v6888
    %v8015 = vunpack.c.h.b16 %v6888
    %v8016 = vunpack.c.l.b16 %v6889
    %v8017 = vunpack.c.h.b16 %v6889
    %v8018 = vunpack.c.l.b16 %v6890
    %v8019 = vunpack.c.h.b16 %v6890
    %v8020 = vunpack.c.l.b16 %v6891
    %v8021 = vunpack.c.h.b16 %v6891
    %v8022 = vunpack.c.l.b16 %v6892
    %v8023 = vunpack.c.h.b16 %v6892
    %v8024 = vunpack.c.l.b16 %v6893
    %v8025 = vunpack.c.h.b16 %v6893
    %v8026 = vunpack.c.l.b16 %v6894
    %v8027 = vunpack.c.h.b16 %v6894
    %v8028 = vunpack.c.l.b16 %v6895
    %v8029 = vunpack.c.h.b16 %v6895
    %v8030 = vunpack.c.l.b16 %v6896
    %v8031 = vunpack.c.h.b16 %v6896
    %v8032 = vunpack.c.l.b16 %v6897
    %v8033 = vunpack.c.h.b16 %v6897
    %v8034 = vunpack.c.l.b16 %v6898
    %v8035 = vunpack.c.h.b16 %v6898
    %v8036 = vunpack.c.l.b16 %v6899
    %v8037 = vunpack.c.h.b16 %v6899
    %v8038 = vunpack.c.l.b16 %v6900
    %v8039 = vunpack.c.h.b16 %v6900
    %v8040 = vunpack.c.l.b16 %v6901
    %v8041 = vunpack.c.h.b16 %v6901
    %v8042 = vunpack.c.l.b16 %v6902
    %v8043 = vunpack.c.h.b16 %v6902
    %v8044 = vunpack.c.l.b16 %v6903
    %v8045 = vunpack.c.h.b16 %v6903
    %v8046 = vunpack.c.l.b16 %v6904
    %v8047 = vunpack.c.h.b16 %v6904
    %v8048 = vunpack.c.l.b16 %v6905
    %v8049 = vunpack.c.h.b16 %v6905
    %v8050 = vunpack.c.l.b16 %v6906
    %v8051 = vunpack.c.h.b16 %v6906
    %v8052 = vunpack.c.l.b16 %v6907
    %v8053 = vunpack.c.h.b16 %v6907
    %v8054 = vunpack.c.l.b16 %v6908
    %v8055 = vunpack.c.h.b16 %v6908
    %v8056 = vunpack.c.l.b16 %v6909
    %v8057 = vunpack.c.h.b16 %v6909
    %v8058 = vunpack.c.l.b16 %v6910
    %v8059 = vunpack.c.h.b16 %v6910
    %v8060 = vunpack.c.l.b16 %v6911
    %v8061 = vunpack.c.h.b16 %v6911
    %v8062 = vunpack.c.l.b16 %v6912
    %v8063 = vunpack.c.h.b16 %v6912
    %v8064 = vunpack.c.l.b16 %v6913
    %v8065 = vunpack.c.h.b16 %v6913
    %v8066 = vunpack.c.l.b16 %v6914
    %v8067 = vunpack.c.h.b16 %v6914
    %v8068 = vunpack.c.l.b16 %v6915
    %v8069 = vunpack.c.h.b16 %v6915
    %v8070 = vunpack.c.l.b16 %v6916
    %v8071 = vunpack.c.h.b16 %v6916
    %v8072 = vunpack.c.l.b16 %v6917
    %v8073 = vunpack.c.h.b16 %v6917
    %v8074 = vunpack.c.l.b16 %v6918
    %v8075 = vunpack.c.h.b16 %v6918
    %v8076 = vunpack.c.l.b16 %v6919
    %v8077 = vunpack.c.h.b16 %v6919
    %v8078 = vunpack.c.l.b16 %v6920
    %v8079 = vunpack.c.h.b16 %v6920
    %v8080 = vunpack.c.l.b16 %v6921
    %v8081 = vunpack.c.h.b16 %v6921
    %v8082 = vunpack.c.l.b16 %v6922
    %v8083 = vunpack.c.h.b16 %v6922
    %v8084 = vunpack.c.l.b16 %v6923
    %v8085 = vunpack.c.h.b16 %v6923
    %v8086 = vunpack.c.l.b16 %v6924
    %v8087 = vunpack.c.h.b16 %v6924
    %v8088 = vunpack.c.l.b16 %v6925
    %v8089 = vunpack.c.h.b16 %v6925
    %v8090 = vunpack.c.l.b16 %v6926
    %v8091 = vunpack.c.h.b16 %v6926
    %v8092 = vunpack.c.l.b16 %v6927
    %v8093 = vunpack.c.h.b16 %v6927
    %v8094 = vunpack.c.l.b16 %v6928
    %v8095 = vunpack.c.h.b16 %v6928
    %v8096 = vunpack.c.l.b16 %v6929
    %v8097 = vunpack.c.h.b16 %v6929
    %v8098 = vunpack.c.l.b16 %v6930
    %v8099 = vunpack.c.h.b16 %v6930
    %v8100 = vunpack.c.l.b16 %v6931
    %v8101 = vunpack.c.h.b16 %v6931
    %v8102 = vunpack.c.l.b16 %v6932
    %v8103 = vunpack.c.h.b16 %v6932
    %v8104 = vunpack.c.l.b16 %v6933
    %v8105 = vunpack.c.h.b16 %v6933
    %v8106 = vunpack.c.l.b16 %v6934
    %v8107 = vunpack.c.h.b16 %v6934
    %v8108 = vunpack.c.l.b16 %v6935
    %v8109 = vunpack.c.h.b16 %v6935
    %v8110 = vunpack.c.l.b16 %v6936
    %v8111 = vunpack.c.h.b16 %v6936
    %v8112 = vunpack.c.l.b16 %v6937
    %v8113 = vunpack.c.h.b16 %v6937
    %v8114 = vunpack.c.l.b16 %v6938
    %v8115 = vunpack.c.h.b16 %v6938
    %v8116 = vunpack.c.l.b16 %v6939
    %v8117 = vunpack.c.h.b16 %v6939
    %v8118 = vunpack.c.l.b16 %v6940
    %v8119 = vunpack.c.h.b16 %v6940
    %v8120 = vunpack.c.l.b16 %v6941
    %v8121 = vunpack.c.h.b16 %v6941
    %v8122 = vpack.c.b16 %v7366, %v7354
    %v8123 = vpack.c.b16 %v7367, %v7355
    %v8124 = vpack.c.b16 %v7368, %v7356
    %v8125 = vpack.c.b16 %v7369, %v7357
    %v8126 = vpack.c.b16 %v7370, %v7358
    %v8127 = vpack.c.b16 %v7371, %v7359
    %v8128 = vpack.c.b16 %v7372, %v7360
    %v8129 = vpack.c.b16 %v7373, %v7361
    %v8130 = vpack.c.b16 %v7374, %v7362
    %v8131 = vpack.c.b16 %v7375, %v7363
    %v8132 = vpack.c.b16 %v7376, %v7364
    %v8133 = vpack.c.b16 %v7377, %v7365
    %v8134 = vpack.c.b16 %v7390, %v7378
    %v8135 = vpack.c.b16 %v7391, %v7379
    %v8136 = vpack.c.b16 %v7392, %v7380
    %v8137 = vpack.c.b16 %v7393, %v7381
    %v8138 = vpack.c.b16 %v7394, %v7382
    %v8139 = vpack.c.b16 %v7395, %v7383
    %v8140 = vpack.c.b16 %v7396, %v7384
    %v8141 = vpack.c.b16 %v7397, %v7385
    %v8142 = vpack.c.b16 %v7398, %v7386
    %v8143 = vpack.c.b16 %v7399, %v7387
    %v8144 = vpack.c.b16 %v7400, %v7388
    %v8145 = vpack.c.b16 %v7401, %v7389
    %v8146 = vpack.c.b16 %v7414, %v7402
    %v8147 = vpack.c.b16 %v7415, %v7403
    %v8148 = vpack.c.b16 %v7416, %v7404
    %v8149 = vpack.c.b16 %v7417, %v7405
    %v8150 = vpack.c.b16 %v7418, %v7406
    %v8151 = vpack.c.b16 %v7419, %v7407
    %v8152 = vpack.c.b16 %v7420, %v7408
    %v8153 = vpack.c.b16 %v7421, %v7409
    %v8154 = vpack.c.b16 %v7422, %v7410
    %v8155 = vpack.c.b16 %v7423, %v7411
    %v8156 = vpack.c.b16 %v7424, %v7412
    %v8157 = vpack.c.b16 %v7425, %v7413
    %v8158 = vpack.c.b16 %v7438, %v7426
    %v8159 = vpack.c.b16 %v7439, %v7427
    %v8160 = vpack.c.b16 %v7440, %v7428
    %v8161 = vpack.c.b16 %v7441, %v7429
    %v8162 = vpack.c.b16 %v7442, %v7430
    %v8163 = vpack.c.b16 %v7443, %v7431
    %v8164 = vpack.c.b16 %v7444, %v7432
    %v8165 = vpack.c.b16 %v7445, %v7433
    %v8166 = vpack.c.b16 %v7446, %v7434
    %v8167 = vpack.c.b16 %v7447, %v7435
    %v8168 = vpack.c.b16 %v7448, %v7436
    %v8169 = vpack.c.b16 %v7449, %v7437
    %v8170 = vpack.c.b16 %v7462, %v7450
    %v8171 = vpack.c.b16 %v7463, %v7451
    %v8172 = vpack.c.b16 %v7464, %v7452
    %v8173 = vpack.c.b16 %v7465, %v7453
    %v8174 = vpack.c.b16 %v7466, %v7454
    %v8175 = vpack.c.b16 %v7467, %v7455
    %v8176 = vpack.c.b16 %v7468, %v7456
    %v8177 = vpack.c.b16 %v7469, %v7457
    %v8178 = vpack.c.b16 %v7470, %v7458
    %v8179 = vpack.c.b16 %v7471, %v7459
    %v8180 = vpack.c.b16 %v7472, %v7460
    %v8181 = vpack.c.b16 %v7473, %v7461
    %v8182 = vpack.c.b16 %v7486, %v7474
    %v8183 = vpack.c.b16 %v7487, %v7475
    %v8184 = vpack.c.b16 %v7488, %v7476
    %v8185 = vpack.c.b16 %v7489, %v7477
    %v8186 = vpack.c.b16 %v7490, %v7478
    %v8187 = vpack.c.b16 %v7491, %v7479
    %v8188 = vpack.c.b16 %v7492, %v7480
    %v8189 = vpack.c.b16 %v7493, %v7481
    %v8190 = vpack.c.b16 %v7494, %v7482
    %v8191 = vpack.c.b16 %v7495, %v7483
    %v8192 = vpack.c.b16 %v7496, %v7484
    %v8193 = vpack.c.b16 %v7497, %v7485
    %v8194 = vpack.c.b16 %v7510, %v7498
    %v8195 = vpack.c.b16 %v7511, %v7499
    %v8196 = vpack.c.b16 %v7512, %v7500
    %v8197 = vpack.c.b16 %v7513, %v7501
    %v8198 = vpack.c.b16 %v7514, %v7502
    %v8199 = vpack.c.b16 %v7515, %v7503
    %v8200 = vpack.c.b16 %v7516, %v7504
    %v8201 = vpack.c.b16 %v7517, %v7505
    %v8202 = vpack.c.b16 %v7518, %v7506
    %v8203 = vpack.c.b16 %v7519, %v7507
    %v8204 = vpack.c.b16 %v7520, %v7508
    %v8205 = vpack.c.b16 %v7521, %v7509
    %v8206 = vpack.c.b16 %v7534, %v7522
    %v8207 = vpack.c.b16 %v7535, %v7523
    %v8208 = vpack.c.b16 %v7536, %v7524
    %v8209 = vpack.c.b16 %v7537, %v7525
    %v8210 = vpack.c.b16 %v7538, %v7526
    %v8211 = vpack.c.b16 %v7539, %v7527
    %v8212 = vpack.c.b16 %v7540, %v7528
    %v8213 = vpack.c.b16 %v7541, %v7529
    %v8214 = vpack.c.b16 %v7542, %v7530
    %v8215 = vpack.c.b16 %v7543, %v7531
    %v8216 = vpack.c.b16 %v7544, %v7532
    %v8217 = vpack.c.b16 %v7545, %v7533
    %v8218 = vpack.c.b16 %v7558, %v7546
    %v8219 = vpack.c.b16 %v7559, %v7547
    %v8220 = vpack.c.b16 %v7560, %v7548
    %v8221 = vpack.c.b16 %v7561, %v7549
    %v8222 = vpack.c.b16 %v7562, %v7550
    %v8223 = vpack.c.b16 %v7563, %v7551
    %v8224 = vpack.c.b16 %v7564, %v7552
    %v8225 = vpack.c.b16 %v7565, %v7553
    %v8226 = vpack.c.b16 %v7566, %v7554
    %v8227 = vpack.c.b16 %v7567, %v7555
    %v8228 = vpack.c.b16 %v7568, %v7556
    %v8229 = vpack.c.b16 %v7569, %v7557
    %v8230 = vpack.c.b16 %v7582, %v7570
    %v8231 = vpack.c.b16 %v7583, %v7571
    %v8232 = vpack.c.b16 %v7584, %v7572
    %v8233 = vpack.c.b16 %v7585, %v7573
    %v8234 = vpack.c.b16 %v7586, %v7574
    %v8235 = vpack.c.b16 %v7587, %v7575
    %v8236 = vpack.c.b16 %v7588, %v7576
    %v8237 = vpack.c.b16 %v7589, %v7577
    %v8238 = vpack.c.b16 %v7590, %v7578
    %v8239 = vpack.c.b16 %v7591, %v7579
    %v8240 = vpack.c.b16 %v7592, %v7580
    %v8241 = vpack.c.b16 %v7593, %v7581
    %v8242 = vpack.c.b16 %v7606, %v7594
    %v8243 = vpack.c.b16 %v7607, %v7595
    %v8244 = vpack.c.b16 %v7608, %v7596
    %v8245 = vpack.c.b16 %v7609, %v7597
    %v8246 = vpack.c.b16 %v7610, %v7598
    %v8247 = vpack.c.b16 %v7611, %v7599
    %v8248 = vpack.c.b16 %v7612, %v7600
    %v8249 = vpack.c.b16 %v7613, %v7601
    %v8250 = vpack.c.b16 %v7614, %v7602
    %v8251 = vpack.c.b16 %v7615, %v7603
    %v8252 = vpack.c.b16 %v7616, %v7604
    %v8253 = vpack.c.b16 %v7617, %v7605
    %v8254 = vpack.c.b16 %v7630, %v7618
    %v8255 = vpack.c.b16 %v7631, %v7619
    %v8256 = vpack.c.b16 %v7632, %v7620
    %v8257 = vpack.c.b16 %v7633, %v7621
    %v8258 = vpack.c.b16 %v7634, %v7622
    %v8259 = vpack.c.b16 %v7635, %v7623
    %v8260 = vpack.c.b16 %v7636, %v7624
    %v8261 = vpack.c.b16 %v7637, %v7625
    %v8262 = vpack.c.b16 %v7638, %v7626
    %v8263 = vpack.c.b16 %v7639, %v7627
    %v8264 = vpack.c.b16 %v7640, %v7628
    %v8265 = vpack.c.b16 %v7641, %v7629
    %v8266 = vpack.c.b16 %v7654, %v7642
    %v8267 = vpack.c.b16 %v7655, %v7643
    %v8268 = vpack.c.b16 %v7656, %v7644
    %v8269 = vpack.c.b16 %v7657, %v7645
    %v8270 = vpack.c.b16 %v7658, %v7646
    %v8271 = vpack.c.b16 %v7659, %v7647
    %v8272 = vpack.c.b16 %v7660, %v7648
    %v8273 = vpack.c.b16 %v7661, %v7649
    %v8274 = vpack.c.b16 %v7662, %v7650
    %v8275 = vpack.c.b16 %v7663, %v7651
    %v8276 = vpack.c.b16 %v7664, %v7652
    %v8277 = vpack.c.b16 %v7665, %v7653
    %v8278 = vpack.c.b16 %v7678, %v7666
    %v8279 = vpack.c.b16 %v7679, %v7667
    %v8280 = vpack.c.b16 %v7680, %v7668
    %v8281 = vpack.c.b16 %v7681, %v7669
    %v8282 = vpack.c.b16 %v7682, %v7670
    %v8283 = vpack.c.b16 %v7683, %v7671
    %v8284 = vpack.c.b16 %v7684, %v7672
    %v8285 = vpack.c.b16 %v7685, %v7673
    %v8286 = vpack.c.b16 %v7686, %v7674
    %v8287 = vpack.c.b16 %v7687, %v7675
    %v8288 = vpack.c.b16 %v7688, %v7676
    %v8289 = vpack.c.b16 %v7689, %v7677
    %v8290 = vpack.c.b16 %v7702, %v7690
    %v8291 = vpack.c.b16 %v7703, %v7691
    %v8292 = vpack.c.b16 %v7704, %v7692
    %v8293 = vpack.c.b16 %v7705, %v7693
    %v8294 = vpack.c.b16 %v7706, %v7694
    %v8295 = vpack.c.b16 %v7707, %v7695
    %v8296 = vpack.c.b16 %v7708, %v7696
    %v8297 = vpack.c.b16 %v7709, %v7697
    %v8298 = vpack.c.b16 %v7710, %v7698
    %v8299 = vpack.c.b16 %v7711, %v7699
    %v8300 = vpack.c.b16 %v7712, %v7700
    %v8301 = vpack.c.b16 %v7713, %v7701
    %v8302 = vpack.c.b16 %v7726, %v7714
    %v8303 = vpack.c.b16 %v7727, %v7715
    %v8304 = vpack.c.b16 %v7728, %v7716
    %v8305 = vpack.c.b16 %v7729, %v7717
    %v8306 = vpack.c.b16 %v7730, %v7718
    %v8307 = vpack.c.b16 %v7731, %v7719
    %v8308 = vpack.c.b16 %v7732, %v7720
    %v8309 = vpack.c.b16 %v7733, %v7721
    %v8310 = vpack.c.b16 %v7734, %v7722
    %v8311 = vpack.c.b16 %v7735, %v7723
    %v8312 = vpack.c.b16 %v7736, %v7724
    %v8313 = vpack.c.b16 %v7737, %v7725
    %v8314 = vpack.c.b16 %v7750, %v7738
    %v8315 = vpack.c.b16 %v7751, %v7739
    %v8316 = vpack.c.b16 %v7752, %v7740
    %v8317 = vpack.c.b16 %v7753, %v7741
    %v8318 = vpack.c.b16 %v7754, %v7742
    %v8319 = vpack.c.b16 %v7755, %v7743
    %v8320 = vpack.c.b16 %v7756, %v7744
    %v8321 = vpack.c.b16 %v7757, %v7745
    %v8322 = vpack.c.b16 %v7758, %v7746
    %v8323 = vpack.c.b16 %v7759, %v7747
    %v8324 = vpack.c.b16 %v7760, %v7748
    %v8325 = vpack.c.b16 %v7761, %v7749
    %v8326 = vpack.c.b16 %v7774, %v7762
    %v8327 = vpack.c.b16 %v7775, %v7763
    %v8328 = vpack.c.b16 %v7776, %v7764
    %v8329 = vpack.c.b16 %v7777, %v7765
    %v8330 = vpack.c.b16 %v7778, %v7766
    %v8331 = vpack.c.b16 %v7779, %v7767
    %v8332 = vpack.c.b16 %v7780, %v7768
    %v8333 = vpack.c.b16 %v7781, %v7769
    %v8334 = vpack.c.b16 %v7782, %v7770
    %v8335 = vpack.c.b16 %v7783, %v7771
    %v8336 = vpack.c.b16 %v7784, %v7772
    %v8337 = vpack.c.b16 %v7785, %v7773
    %v8338 = vpack.c.b16 %v7798, %v7786
    %v8339 = vpack.c.b16 %v7799, %v7787
    %v8340 = vpack.c.b16 %v7800, %v7788
    %v8341 = vpack.c.b16 %v7801, %v7789
    %v8342 = vpack.c.b16 %v7802, %v7790
    %v8343 = vpack.c.b16 %v7803, %v7791
    %v8344 = vpack.c.b16 %v7804, %v7792
    %v8345 = vpack.c.b16 %v7805, %v7793
    %v8346 = vpack.c.b16 %v7806, %v7794
    %v8347 = vpack.c.b16 %v7807, %v7795
    %v8348 = vpack.c.b16 %v7808, %v7796
    %v8349 = vpack.c.b16 %v7809, %v7797
    %v8350 = vpack.c.b16 %v7822, %v7810
    %v8351 = vpack.c.b16 %v7823, %v7811
    %v8352 = vpack.c.b16 %v7824, %v7812
    %v8353 = vpack.c.b16 %v7825, %v7813
    %v8354 = vpack.c.b16 %v7826, %v7814
    %v8355 = vpack.c.b16 %v7827, %v7815
    %v8356 = vpack.c.b16 %v7828, %v7816
    %v8357 = vpack.c.b16 %v7829, %v7817
    %v8358 = vpack.c.b16 %v7830, %v7818
    %v8359 = vpack.c.b16 %v7831, %v7819
    %v8360 = vpack.c.b16 %v7832, %v7820
    %v8361 = vpack.c.b16 %v7833, %v7821
    %v8362 = vpack.c.b16 %v7846, %v7834
    %v8363 = vpack.c.b16 %v7847, %v7835
    %v8364 = vpack.c.b16 %v7848, %v7836
    %v8365 = vpack.c.b16 %v7849, %v7837
    %v8366 = vpack.c.b16 %v7850, %v7838
    %v8367 = vpack.c.b16 %v7851, %v7839
    %v8368 = vpack.c.b16 %v7852, %v7840
    %v8369 = vpack.c.b16 %v7853, %v7841
    %v8370 = vpack.c.b16 %v7854, %v7842
    %v8371 = vpack.c.b16 %v7855, %v7843
    %v8372 = vpack.c.b16 %v7856, %v7844
    %v8373 = vpack.c.b16 %v7857, %v7845
    %v8374 = vpack.c.b16 %v7870, %v7858
    %v8375 = vpack.c.b16 %v7871, %v7859
    %v8376 = vpack.c.b16 %v7872, %v7860
    %v8377 = vpack.c.b16 %v7873, %v7861
    %v8378 = vpack.c.b16 %v7874, %v7862
    %v8379 = vpack.c.b16 %v7875, %v7863
    %v8380 = vpack.c.b16 %v7876, %v7864
    %v8381 = vpack.c.b16 %v7877, %v7865
    %v8382 = vpack.c.b16 %v7878, %v7866
    %v8383 = vpack.c.b16 %v7879, %v7867
    %v8384 = vpack.c.b16 %v7880, %v7868
    %v8385 = vpack.c.b16 %v7881, %v7869
    %v8386 = vpack.c.b16 %v7894, %v7882
    %v8387 = vpack.c.b16 %v7895, %v7883
    %v8388 = vpack.c.b16 %v7896, %v7884
    %v8389 = vpack.c.b16 %v7897, %v7885
    %v8390 = vpack.c.b16 %v7898, %v7886
    %v8391 = vpack.c.b16 %v7899, %v7887
    %v8392 = vpack.c.b16 %v7900, %v7888
    %v8393 = vpack.c.b16 %v7901, %v7889
    %v8394 = vpack.c.b16 %v7902, %v7890
    %v8395 = vpack.c.b16 %v7903, %v7891
    %v8396 = vpack.c.b16 %v7904, %v7892
    %v8397 = vpack.c.b16 %v7905, %v7893
    %v8398 = vpack.c.b16 %v7918, %v7906
    %v8399 = vpack.c.b16 %v7919, %v7907
    %v8400 = vpack.c.b16 %v7920, %v7908
    %v8401 = vpack.c.b16 %v7921, %v7909
    %v8402 = vpack.c.b16 %v7922, %v7910
    %v8403 = vpack.c.b16 %v7923, %v7911
    %v8404 = vpack.c.b16 %v7924, %v7912
    %v8405 = vpack.c.b16 %v7925, %v7913
    %v8406 = vpack.c.b16 %v7926, %v7914
    %v8407 = vpack.c.b16 %v7927, %v7915
    %v8408 = vpack.c.b16 %v7928, %v7916
    %v8409 = vpack.c.b16 %v7929, %v7917
    %v8410 = vpack.c.b16 %v7942, %v7930
    %v8411 = vpack.c.b16 %v7943, %v7931
    %v8412 = vpack.c.b16 %v7944, %v7932
    %v8413 = vpack.c.b16 %v7945, %v7933
    %v8414 = vpack.c.b16 %v7946, %v7934
    %v8415 = vpack.c.b16 %v7947, %v7935
    %v8416 = vpack.c.b16 %v7948, %v7936
    %v8417 = vpack.c.b16 %v7949, %v7937
    %v8418 = vpack.c.b16 %v7950, %v7938
    %v8419 = vpack.c.b16 %v7951, %v7939
    %v8420 = vpack.c.b16 %v7952, %v7940
    %v8421 = vpack.c.b16 %v7953, %v7941
    %v8422 = vpack.c.b16 %v7966, %v7954
    %v8423 = vpack.c.b16 %v7967, %v7955
    %v8424 = vpack.c.b16 %v7968, %v7956
    %v8425 = vpack.c.b16 %v7969, %v7957
    %v8426 = vpack.c.b16 %v7970, %v7958
    %v8427 = vpack.c.b16 %v7971, %v7959
    %v8428 = vpack.c.b16 %v7972, %v7960
    %v8429 = vpack.c.b16 %v7973, %v7961
    %v8430 = vpack.c.b16 %v7974, %v7962
    %v8431 = vpack.c.b16 %v7975, %v7963
    %v8432 = vpack.c.b16 %v7976, %v7964
    %v8433 = vpack.c.b16 %v7977, %v7965
    %v8434 = vpack.c.b16 %v7990, %v7978
    %v8435 = vpack.c.b16 %v7991, %v7979
    %v8436 = vpack.c.b16 %v7992, %v7980
    %v8437 = vpack.c.b16 %v7993, %v7981
    %v8438 = vpack.c.b16 %v7994, %v7982
    %v8439 = vpack.c.b16 %v7995, %v7983
    %v8440 = vpack.c.b16 %v7996, %v7984
    %v8441 = vpack.c.b16 %v7997, %v7985
    %v8442 = vpack.c.b16 %v7998, %v7986
    %v8443 = vpack.c.b16 %v7999, %v7987
    %v8444 = vpack.c.b16 %v8000, %v7988
    %v8445 = vpack.c.b16 %v8001, %v7989
    %v8446 = vpack.c.b16 %v8014, %v8002
    %v8447 = vpack.c.b16 %v8015, %v8003
    %v8448 = vpack.c.b16 %v8016, %v8004
    %v8449 = vpack.c.b16 %v8017, %v8005
    %v8450 = vpack.c.b16 %v8018, %v8006
    %v8451 = vpack.c.b16 %v8019, %v8007
    %v8452 = vpack.c.b16 %v8020, %v8008
    %v8453 = vpack.c.b16 %v8021, %v8009
    %v8454 = vpack.c.b16 %v8022, %v8010
    %v8455 = vpack.c.b16 %v8023, %v8011
    %v8456 = vpack.c.b16 %v8024, %v8012
    %v8457 = vpack.c.b16 %v8025, %v8013
    %v8458 = vpack.c.b16 %v8038, %v8026
    %v8459 = vpack.c.b16 %v8039, %v8027
    %v8460 = vpack.c.b16 %v8040, %v8028
    %v8461 = vpack.c.b16 %v8041, %v8029
    %v8462 = vpack.c.b16 %v8042, %v8030
    %v8463 = vpack.c.b16 %v8043, %v8031
    %v8464 = vpack.c.b16 %v8044, %v8032
    %v8465 = vpack.c.b16 %v8045, %v8033
    %v8466 = vpack.c.b16 %v8046, %v8034
    %v8467 = vpack.c.b16 %v8047, %v8035
    %v8468 = vpack.c.b16 %v8048, %v8036
    %v8469 = vpack.c.b16 %v8049, %v8037
    %v8470 = vpack.c.b16 %v8062, %v8050
    %v8471 = vpack.c.b16 %v8063, %v8051
    %v8472 = vpack.c.b16 %v8064, %v8052
    %v8473 = vpack.c.b16 %v8065, %v8053
    %v8474 = vpack.c.b16 %v8066, %v8054
    %v8475 = vpack.c.b16 %v8067, %v8055
    %v8476 = vpack.c.b16 %v8068, %v8056
    %v8477 = vpack.c.b16 %v8069, %v8057
    %v8478 = vpack.c.b16 %v8070, %v8058
    %v8479 = vpack.c.b16 %v8071, %v8059
    %v8480 = vpack.c.b16 %v8072, %v8060
    %v8481 = vpack.c.b16 %v8073, %v8061
    %v8482 = vpack.c.b16 %v8086, %v8074
    %v8483 = vpack.c.b16 %v8087, %v8075
    %v8484 = vpack.c.b16 %v8088, %v8076
    %v8485 = vpack.c.b16 %v8089, %v8077
    %v8486 = vpack.c.b16 %v8090, %v8078
    %v8487 = vpack.c.b16 %v8091, %v8079
    %v8488 = vpack.c.b16 %v8092, %v8080
    %v8489 = vpack.c.b16 %v8093, %v8081
    %v8490 = vpack.c.b16 %v8094, %v8082
    %v8491 = vpack.c.b16 %v8095, %v8083
    %v8492 = vpack.c.b16 %v8096, %v8084
    %v8493 = vpack.c.b16 %v8097, %v8085
    %v8494 = vpack.c.b16 %v8110, %v8098
    %v8495 = vpack.c.b16 %v8111, %v8099
    %v8496 = vpack.c.b16 %v8112, %v8100
    %v8497 = vpack.c.b16 %v8113, %v8101
    %v8498 = vpack.c.b16 %v8114, %v8102
    %v8499 = vpack.c.b16 %v8115, %v8103
    %v8500 = vpack.c.b16 %v8116, %v8104
    %v8501 = vpack.c.b16 %v8117, %v8105
    %v8502 = vpack.c.b16 %v8118, %v8106
    %v8503 = vpack.c.b16 %v8119, %v8107
    %v8504 = vpack.c.b16 %v8120, %v8108
    %v8505 = vpack.c.b16 %v8121, %v8109
    %8890 = vmatpush.bf16.msra.mxu0 %v8206
    %8891 = vmatpush.bf16.msra.mxu0 %v8194
    %8892 = vmatpush.bf16.msra.mxu0 %v8182
    %8893 = vmatpush.bf16.msra.mxu0 %v8170
    %8894 = vmatpush.bf16.msra.mxu0 %v8158
    %8895 = vmatpush.bf16.msra.mxu0 %v8146
    %8896 = vmatpush.bf16.msra.mxu0 %v8134
    %8897 = vmatpush.bf16.msra.mxu0 %v8122
    %8898 = vmatmul.bf16.gmra.mxu0 %v6554
    %v8899 = vpop.f32.mrf.mxu0
    %v8900 = vadd.f32 %v6946, %v8899
    %v8901 = vpop.f32.mrf.mxu0
    %8902 = vdwg.mxu0
    %8903 = vmatpush.bf16.msra.mxu0 %v8302
    %8904 = vmatpush.bf16.msra.mxu0 %v8290
    %8905 = vmatpush.bf16.msra.mxu0 %v8278
    %8906 = vmatpush.bf16.msra.mxu0 %v8266
    %8907 = vmatpush.bf16.msra.mxu0 %v8254
    %8908 = vmatpush.bf16.msra.mxu0 %v8242
    %8909 = vmatpush.bf16.msra.mxu0 %v8230
    %8910 = vmatpush.bf16.msra.mxu0 %v8218
    %8911 = vmatmul.bf16.gmra.mxu0 %v6555
    %v8912 = vpop.f32.mrf.mxu0
    %v8913 = vadd.f32 %v8900, %v8912
    %v8914 = vpop.f32.mrf.mxu0
    %8915 = vdwg.mxu0
    %8916 = vmatpush.bf16.msra.mxu0 %v8398
    %8917 = vmatpush.bf16.msra.mxu0 %v8386
    %8918 = vmatpush.bf16.msra.mxu0 %v8374
    %8919 = vmatpush.bf16.msra.mxu0 %v8362
    %8920 = vmatpush.bf16.msra.mxu0 %v8350
    %8921 = vmatpush.bf16.msra.mxu0 %v8338
    %8922 = vmatpush.bf16.msra.mxu0 %v8326
    %8923 = vmatpush.bf16.msra.mxu0 %v8314
    %8924 = vmatmul.bf16.gmra.mxu0 %v6556
    %v8925 = vpop.f32.mrf.mxu0
    %v8926 = vadd.f32 %v8913, %v8925
    %v8927 = vpop.f32.mrf.mxu0
    %8928 = vdwg.mxu0
    %8929 = vmatpush.bf16.msra.mxu0 %v8494
    %8930 = vmatpush.bf16.msra.mxu0 %v8482
    %8931 = vmatpush.bf16.msra.mxu0 %v8470
    %8932 = vmatpush.bf16.msra.mxu0 %v8458
    %8933 = vmatpush.bf16.msra.mxu0 %v8446
    %8934 = vmatpush.bf16.msra.mxu0 %v8434
    %8935 = vmatpush.bf16.msra.mxu0 %v8422
    %8936 = vmatpush.bf16.msra.mxu0 %v8410
    %8937 = vmatmul.bf16.gmra.mxu0 %v6557
    %v8938 = vpop.f32.mrf.mxu0
    %v8939 = vadd.f32 %v8926, %v8938
    %v8940 = vpop.f32.mrf.mxu0
    %8941 = vdwg.mxu0
    %8942 = vmatpush.bf16.msra.mxu0 %v8207
    %8943 = vmatpush.bf16.msra.mxu0 %v8195
    %8944 = vmatpush.bf16.msra.mxu0 %v8183
    %8945 = vmatpush.bf16.msra.mxu0 %v8171
    %8946 = vmatpush.bf16.msra.mxu0 %v8159
    %8947 = vmatpush.bf16.msra.mxu0 %v8147
    %8948 = vmatpush.bf16.msra.mxu0 %v8135
    %8949 = vmatpush.bf16.msra.mxu0 %v8123
    %8950 = vmatmul.bf16.gmra.mxu0 %v6554
    %v8951 = vpop.f32.mrf.mxu0
    %v8952 = vadd.f32 %v6947, %v8951
    %v8953 = vpop.f32.mrf.mxu0
    %8954 = vdwg.mxu0
    %8955 = vmatpush.bf16.msra.mxu0 %v8303
    %8956 = vmatpush.bf16.msra.mxu0 %v8291
    %8957 = vmatpush.bf16.msra.mxu0 %v8279
    %8958 = vmatpush.bf16.msra.mxu0 %v8267
    %8959 = vmatpush.bf16.msra.mxu0 %v8255
    %8960 = vmatpush.bf16.msra.mxu0 %v8243
    %8961 = vmatpush.bf16.msra.mxu0 %v8231
    %8962 = vmatpush.bf16.msra.mxu0 %v8219
    %8963 = vmatmul.bf16.gmra.mxu0 %v6555
    %v8964 = vpop.f32.mrf.mxu0
    %v8965 = vadd.f32 %v8952, %v8964
    %v8966 = vpop.f32.mrf.mxu0
    %8967 = vdwg.mxu0
    %8968 = vmatpush.bf16.msra.mxu0 %v8399
    %8969 = vmatpush.bf16.msra.mxu0 %v8387
    %8970 = vmatpush.bf16.msra.mxu0 %v8375
    %8971 = vmatpush.bf16.msra.mxu0 %v8363
    %8972 = vmatpush.bf16.msra.mxu0 %v8351
    %8973 = vmatpush.bf16.msra.mxu0 %v8339
    %8974 = vmatpush.bf16.msra.mxu0 %v8327
    %8975 = vmatpush.bf16.msra.mxu0 %v8315
    %8976 = vmatmul.bf16.gmra.mxu0 %v6556
    %v8977 = vpop.f32.mrf.mxu0
    %v8978 = vadd.f32 %v8965, %v8977
    %v8979 = vpop.f32.mrf.mxu0
    %8980 = vdwg.mxu0
    %8981 = vmatpush.bf16.msra.mxu0 %v8495
    %8982 = vmatpush.bf16.msra.mxu0 %v8483
    %8983 = vmatpush.bf16.msra.mxu0 %v8471
    %8984 = vmatpush.bf16.msra.mxu0 %v8459
    %8985 = vmatpush.bf16.msra.mxu0 %v8447
    %8986 = vmatpush.bf16.msra.mxu0 %v8435
    %8987 = vmatpush.bf16.msra.mxu0 %v8423
    %8988 = vmatpush.bf16.msra.mxu0 %v8411
    %8989 = vmatmul.bf16.gmra.mxu0 %v6557
    %v8990 = vpop.f32.mrf.mxu0
    %v8991 = vadd.f32 %v8978, %v8990
    %v8992 = vpop.f32.mrf.mxu0
    %8993 = vdwg.mxu0
    %8994 = vmatpush.bf16.msra.mxu0 %v8208
    %8995 = vmatpush.bf16.msra.mxu0 %v8196
    %8996 = vmatpush.bf16.msra.mxu0 %v8184
    %8997 = vmatpush.bf16.msra.mxu0 %v8172
    %8998 = vmatpush.bf16.msra.mxu0 %v8160
    %8999 = vmatpush.bf16.msra.mxu0 %v8148
    %9000 = vmatpush.bf16.msra.mxu0 %v8136
    %9001 = vmatpush.bf16.msra.mxu0 %v8124
    %9002 = vmatmul.bf16.gmra.mxu0 %v6554
    %v9003 = vpop.f32.mrf.mxu0
    %v9004 = vadd.f32 %v6948, %v9003
    %v9005 = vpop.f32.mrf.mxu0
    %9006 = vdwg.mxu0
    %9007 = vmatpush.bf16.msra.mxu0 %v8304
    %9008 = vmatpush.bf16.msra.mxu0 %v8292
    %9009 = vmatpush.bf16.msra.mxu0 %v8280
    %9010 = vmatpush.bf16.msra.mxu0 %v8268
    %9011 = vmatpush.bf16.msra.mxu0 %v8256
    %9012 = vmatpush.bf16.msra.mxu0 %v8244
    %9013 = vmatpush.bf16.msra.mxu0 %v8232
    %9014 = vmatpush.bf16.msra.mxu0 %v8220
    %9015 = vmatmul.bf16.gmra.mxu0 %v6555
    %v9016 = vpop.f32.mrf.mxu0
    %v9017 = vadd.f32 %v9004, %v9016
    %v9018 = vpop.f32.mrf.mxu0
    %9019 = vdwg.mxu0
    %9020 = vmatpush.bf16.msra.mxu0 %v8400
    %9021 = vmatpush.bf16.msra.mxu0 %v8388
    %9022 = vmatpush.bf16.msra.mxu0 %v8376
    %9023 = vmatpush.bf16.msra.mxu0 %v8364
    %9024 = vmatpush.bf16.msra.mxu0 %v8352
    %9025 = vmatpush.bf16.msra.mxu0 %v8340
    %9026 = vmatpush.bf16.msra.mxu0 %v8328
    %9027 = vmatpush.bf16.msra.mxu0 %v8316
    %9028 = vmatmul.bf16.gmra.mxu0 %v6556
    %v9029 = vpop.f32.mrf.mxu0
    %v9030 = vadd.f32 %v9017, %v9029
    %v9031 = vpop.f32.mrf.mxu0
    %9032 = vdwg.mxu0
    %9033 = vmatpush.bf16.msra.mxu0 %v8496
    %9034 = vmatpush.bf16.msra.mxu0 %v8484
    %9035 = vmatpush.bf16.msra.mxu0 %v8472
    %9036 = vmatpush.bf16.msra.mxu0 %v8460
    %9037 = vmatpush.bf16.msra.mxu0 %v8448
    %9038 = vmatpush.bf16.msra.mxu0 %v8436
    %9039 = vmatpush.bf16.msra.mxu0 %v8424
    %9040 = vmatpush.bf16.msra.mxu0 %v8412
    %9041 = vmatmul.bf16.gmra.mxu0 %v6557
    %v9042 = vpop.f32.mrf.mxu0
    %v9043 = vadd.f32 %v9030, %v9042
    %v9044 = vpop.f32.mrf.mxu0
    %9045 = vdwg.mxu0
    %9046 = vmatpush.bf16.msra.mxu0 %v8209
    %9047 = vmatpush.bf16.msra.mxu0 %v8197
    %9048 = vmatpush.bf16.msra.mxu0 %v8185
    %9049 = vmatpush.bf16.msra.mxu0 %v8173
    %9050 = vmatpush.bf16.msra.mxu0 %v8161
    %9051 = vmatpush.bf16.msra.mxu0 %v8149
    %9052 = vmatpush.bf16.msra.mxu0 %v8137
    %9053 = vmatpush.bf16.msra.mxu0 %v8125
    %9054 = vmatmul.bf16.gmra.mxu0 %v6554
    %v9055 = vpop.f32.mrf.mxu0
    %v9056 = vadd.f32 %v6949, %v9055
    %v9057 = vpop.f32.mrf.mxu0
    %9058 = vdwg.mxu0
    %9059 = vmatpush.bf16.msra.mxu0 %v8305
    %9060 = vmatpush.bf16.msra.mxu0 %v8293
    %9061 = vmatpush.bf16.msra.mxu0 %v8281
    %9062 = vmatpush.bf16.msra.mxu0 %v8269
    %9063 = vmatpush.bf16.msra.mxu0 %v8257
    %9064 = vmatpush.bf16.msra.mxu0 %v8245
    %9065 = vmatpush.bf16.msra.mxu0 %v8233
    %9066 = vmatpush.bf16.msra.mxu0 %v8221
    %9067 = vmatmul.bf16.gmra.mxu0 %v6555
    %v9068 = vpop.f32.mrf.mxu0
    %v9069 = vadd.f32 %v9056, %v9068
    %v9070 = vpop.f32.mrf.mxu0
    %9071 = vdwg.mxu0
    %9072 = vmatpush.bf16.msra.mxu0 %v8401
    %9073 = vmatpush.bf16.msra.mxu0 %v8389
    %9074 = vmatpush.bf16.msra.mxu0 %v8377
    %9075 = vmatpush.bf16.msra.mxu0 %v8365
    %9076 = vmatpush.bf16.msra.mxu0 %v8353
    %9077 = vmatpush.bf16.msra.mxu0 %v8341
    %9078 = vmatpush.bf16.msra.mxu0 %v8329
    %9079 = vmatpush.bf16.msra.mxu0 %v8317
    %9080 = vmatmul.bf16.gmra.mxu0 %v6556
    %v9081 = vpop.f32.mrf.mxu0
    %v9082 = vadd.f32 %v9069, %v9081
    %v9083 = vpop.f32.mrf.mxu0
    %9084 = vdwg.mxu0
    %9085 = vmatpush.bf16.msra.mxu0 %v8497
    %9086 = vmatpush.bf16.msra.mxu0 %v8485
    %9087 = vmatpush.bf16.msra.mxu0 %v8473
    %9088 = vmatpush.bf16.msra.mxu0 %v8461
    %9089 = vmatpush.bf16.msra.mxu0 %v8449
    %9090 = vmatpush.bf16.msra.mxu0 %v8437
    %9091 = vmatpush.bf16.msra.mxu0 %v8425
    %9092 = vmatpush.bf16.msra.mxu0 %v8413
    %9093 = vmatmul.bf16.gmra.mxu0 %v6557
    %v9094 = vpop.f32.mrf.mxu0
    %v9095 = vadd.f32 %v9082, %v9094
    %v9096 = vpop.f32.mrf.mxu0
    %9097 = vdwg.mxu0
    %9098 = vmatpush.bf16.msra.mxu0 %v8210
    %9099 = vmatpush.bf16.msra.mxu0 %v8198
    %9100 = vmatpush.bf16.msra.mxu0 %v8186
    %9101 = vmatpush.bf16.msra.mxu0 %v8174
    %9102 = vmatpush.bf16.msra.mxu0 %v8162
    %9103 = vmatpush.bf16.msra.mxu0 %v8150
    %9104 = vmatpush.bf16.msra.mxu0 %v8138
    %9105 = vmatpush.bf16.msra.mxu0 %v8126
    %9106 = vmatmul.bf16.gmra.mxu0 %v6554
    %v9107 = vpop.f32.mrf.mxu0
    %v9108 = vadd.f32 %v6950, %v9107
    %v9109 = vpop.f32.mrf.mxu0
    %9110 = vdwg.mxu0
    %9111 = vmatpush.bf16.msra.mxu0 %v8306
    %9112 = vmatpush.bf16.msra.mxu0 %v8294
    %9113 = vmatpush.bf16.msra.mxu0 %v8282
    %9114 = vmatpush.bf16.msra.mxu0 %v8270
    %9115 = vmatpush.bf16.msra.mxu0 %v8258
    %9116 = vmatpush.bf16.msra.mxu0 %v8246
    %9117 = vmatpush.bf16.msra.mxu0 %v8234
    %9118 = vmatpush.bf16.msra.mxu0 %v8222
    %9119 = vmatmul.bf16.gmra.mxu0 %v6555
    %v9120 = vpop.f32.mrf.mxu0
    %v9121 = vadd.f32 %v9108, %v9120
    %v9122 = vpop.f32.mrf.mxu0
    %9123 = vdwg.mxu0
    %9124 = vmatpush.bf16.msra.mxu0 %v8402
    %9125 = vmatpush.bf16.msra.mxu0 %v8390
    %9126 = vmatpush.bf16.msra.mxu0 %v8378
    %9127 = vmatpush.bf16.msra.mxu0 %v8366
    %9128 = vmatpush.bf16.msra.mxu0 %v8354
    %9129 = vmatpush.bf16.msra.mxu0 %v8342
    %9130 = vmatpush.bf16.msra.mxu0 %v8330
    %9131 = vmatpush.bf16.msra.mxu0 %v8318
    %9132 = vmatmul.bf16.gmra.mxu0 %v6556
    %v9133 = vpop.f32.mrf.mxu0
    %v9134 = vadd.f32 %v9121, %v9133
    %v9135 = vpop.f32.mrf.mxu0
    %9136 = vdwg.mxu0
    %9137 = vmatpush.bf16.msra.mxu0 %v8498
    %9138 = vmatpush.bf16.msra.mxu0 %v8486
    %9139 = vmatpush.bf16.msra.mxu0 %v8474
    %9140 = vmatpush.bf16.msra.mxu0 %v8462
    %9141 = vmatpush.bf16.msra.mxu0 %v8450
    %9142 = vmatpush.bf16.msra.mxu0 %v8438
    %9143 = vmatpush.bf16.msra.mxu0 %v8426
    %9144 = vmatpush.bf16.msra.mxu0 %v8414
    %9145 = vmatmul.bf16.gmra.mxu0 %v6557
    %v9146 = vpop.f32.mrf.mxu0
    %v9147 = vadd.f32 %v9134, %v9146
    %v9148 = vpop.f32.mrf.mxu0
    %9149 = vdwg.mxu0
    %9150 = vmatpush.bf16.msra.mxu0 %v8211
    %9151 = vmatpush.bf16.msra.mxu0 %v8199
    %9152 = vmatpush.bf16.msra.mxu0 %v8187
    %9153 = vmatpush.bf16.msra.mxu0 %v8175
    %9154 = vmatpush.bf16.msra.mxu0 %v8163
    %9155 = vmatpush.bf16.msra.mxu0 %v8151
    %9156 = vmatpush.bf16.msra.mxu0 %v8139
    %9157 = vmatpush.bf16.msra.mxu0 %v8127
    %9158 = vmatmul.bf16.gmra.mxu0 %v6554
    %v9159 = vpop.f32.mrf.mxu0
    %v9160 = vadd.f32 %v6951, %v9159
    %v9161 = vpop.f32.mrf.mxu0
    %9162 = vdwg.mxu0
    %9163 = vmatpush.bf16.msra.mxu0 %v8307
    %9164 = vmatpush.bf16.msra.mxu0 %v8295
    %9165 = vmatpush.bf16.msra.mxu0 %v8283
    %9166 = vmatpush.bf16.msra.mxu0 %v8271
    %9167 = vmatpush.bf16.msra.mxu0 %v8259
    %9168 = vmatpush.bf16.msra.mxu0 %v8247
    %9169 = vmatpush.bf16.msra.mxu0 %v8235
    %9170 = vmatpush.bf16.msra.mxu0 %v8223
    %9171 = vmatmul.bf16.gmra.mxu0 %v6555
    %v9172 = vpop.f32.mrf.mxu0
    %v9173 = vadd.f32 %v9160, %v9172
    %v9174 = vpop.f32.mrf.mxu0
    %9175 = vdwg.mxu0
    %9176 = vmatpush.bf16.msra.mxu0 %v8403
    %9177 = vmatpush.bf16.msra.mxu0 %v8391
    %9178 = vmatpush.bf16.msra.mxu0 %v8379
    %9179 = vmatpush.bf16.msra.mxu0 %v8367
    %9180 = vmatpush.bf16.msra.mxu0 %v8355
    %9181 = vmatpush.bf16.msra.mxu0 %v8343
    %9182 = vmatpush.bf16.msra.mxu0 %v8331
    %9183 = vmatpush.bf16.msra.mxu0 %v8319
    %9184 = vmatmul.bf16.gmra.mxu0 %v6556
    %v9185 = vpop.f32.mrf.mxu0
    %v9186 = vadd.f32 %v9173, %v9185
    %v9187 = vpop.f32.mrf.mxu0
    %9188 = vdwg.mxu0
    %9189 = vmatpush.bf16.msra.mxu0 %v8499
    %9190 = vmatpush.bf16.msra.mxu0 %v8487
    %9191 = vmatpush.bf16.msra.mxu0 %v8475
    %9192 = vmatpush.bf16.msra.mxu0 %v8463
    %9193 = vmatpush.bf16.msra.mxu0 %v8451
    %9194 = vmatpush.bf16.msra.mxu0 %v8439
    %9195 = vmatpush.bf16.msra.mxu0 %v8427
    %9196 = vmatpush.bf16.msra.mxu0 %v8415
    %9197 = vmatmul.bf16.gmra.mxu0 %v6557
    %v9198 = vpop.f32.mrf.mxu0
    %v9199 = vadd.f32 %v9186, %v9198
    %v9200 = vpop.f32.mrf.mxu0
    %9201 = vdwg.mxu0
    %9202 = vmatpush.bf16.msra.mxu0 %v8212
    %9203 = vmatpush.bf16.msra.mxu0 %v8200
    %9204 = vmatpush.bf16.msra.mxu0 %v8188
    %9205 = vmatpush.bf16.msra.mxu0 %v8176
    %9206 = vmatpush.bf16.msra.mxu0 %v8164
    %9207 = vmatpush.bf16.msra.mxu0 %v8152
    %9208 = vmatpush.bf16.msra.mxu0 %v8140
    %9209 = vmatpush.bf16.msra.mxu0 %v8128
    %9210 = vmatmul.bf16.gmra.mxu0 %v6554
    %v9211 = vpop.f32.mrf.mxu0
    %v9212 = vadd.f32 %v6952, %v9211
    %v9213 = vpop.f32.mrf.mxu0
    %9214 = vdwg.mxu0
    %9215 = vmatpush.bf16.msra.mxu0 %v8308
    %9216 = vmatpush.bf16.msra.mxu0 %v8296
    %9217 = vmatpush.bf16.msra.mxu0 %v8284
    %9218 = vmatpush.bf16.msra.mxu0 %v8272
    %9219 = vmatpush.bf16.msra.mxu0 %v8260
    %9220 = vmatpush.bf16.msra.mxu0 %v8248
    %9221 = vmatpush.bf16.msra.mxu0 %v8236
    %9222 = vmatpush.bf16.msra.mxu0 %v8224
    %9223 = vmatmul.bf16.gmra.mxu0 %v6555
    %v9224 = vpop.f32.mrf.mxu0
    %v9225 = vadd.f32 %v9212, %v9224
    %v9226 = vpop.f32.mrf.mxu0
    %9227 = vdwg.mxu0
    %9228 = vmatpush.bf16.msra.mxu0 %v8404
    %9229 = vmatpush.bf16.msra.mxu0 %v8392
    %9230 = vmatpush.bf16.msra.mxu0 %v8380
    %9231 = vmatpush.bf16.msra.mxu0 %v8368
    %9232 = vmatpush.bf16.msra.mxu0 %v8356
    %9233 = vmatpush.bf16.msra.mxu0 %v8344
    %9234 = vmatpush.bf16.msra.mxu0 %v8332
    %9235 = vmatpush.bf16.msra.mxu0 %v8320
    %9236 = vmatmul.bf16.gmra.mxu0 %v6556
    %v9237 = vpop.f32.mrf.mxu0
    %v9238 = vadd.f32 %v9225, %v9237
    %v9239 = vpop.f32.mrf.mxu0
    %9240 = vdwg.mxu0
    %9241 = vmatpush.bf16.msra.mxu0 %v8500
    %9242 = vmatpush.bf16.msra.mxu0 %v8488
    %9243 = vmatpush.bf16.msra.mxu0 %v8476
    %9244 = vmatpush.bf16.msra.mxu0 %v8464
    %9245 = vmatpush.bf16.msra.mxu0 %v8452
    %9246 = vmatpush.bf16.msra.mxu0 %v8440
    %9247 = vmatpush.bf16.msra.mxu0 %v8428
    %9248 = vmatpush.bf16.msra.mxu0 %v8416
    %9249 = vmatmul.bf16.gmra.mxu0 %v6557
    %v9250 = vpop.f32.mrf.mxu0
    %v9251 = vadd.f32 %v9238, %v9250
    %v9252 = vpop.f32.mrf.mxu0
    %9253 = vdwg.mxu0
    %9254 = vmatpush.bf16.msra.mxu0 %v8213
    %9255 = vmatpush.bf16.msra.mxu0 %v8201
    %9256 = vmatpush.bf16.msra.mxu0 %v8189
    %9257 = vmatpush.bf16.msra.mxu0 %v8177
    %9258 = vmatpush.bf16.msra.mxu0 %v8165
    %9259 = vmatpush.bf16.msra.mxu0 %v8153
    %9260 = vmatpush.bf16.msra.mxu0 %v8141
    %9261 = vmatpush.bf16.msra.mxu0 %v8129
    %9262 = vmatmul.bf16.gmra.mxu0 %v6554
    %v9263 = vpop.f32.mrf.mxu0
    %v9264 = vadd.f32 %v6953, %v9263
    %v9265 = vpop.f32.mrf.mxu0
    %9266 = vdwg.mxu0
    %9267 = vmatpush.bf16.msra.mxu0 %v8309
    %9268 = vmatpush.bf16.msra.mxu0 %v8297
    %9269 = vmatpush.bf16.msra.mxu0 %v8285
    %9270 = vmatpush.bf16.msra.mxu0 %v8273
    %9271 = vmatpush.bf16.msra.mxu0 %v8261
    %9272 = vmatpush.bf16.msra.mxu0 %v8249
    %9273 = vmatpush.bf16.msra.mxu0 %v8237
    %9274 = vmatpush.bf16.msra.mxu0 %v8225
    %9275 = vmatmul.bf16.gmra.mxu0 %v6555
    %v9276 = vpop.f32.mrf.mxu0
    %v9277 = vadd.f32 %v9264, %v9276
    %v9278 = vpop.f32.mrf.mxu0
    %9279 = vdwg.mxu0
    %9280 = vmatpush.bf16.msra.mxu0 %v8405
    %9281 = vmatpush.bf16.msra.mxu0 %v8393
    %9282 = vmatpush.bf16.msra.mxu0 %v8381
    %9283 = vmatpush.bf16.msra.mxu0 %v8369
    %9284 = vmatpush.bf16.msra.mxu0 %v8357
    %9285 = vmatpush.bf16.msra.mxu0 %v8345
    %9286 = vmatpush.bf16.msra.mxu0 %v8333
    %9287 = vmatpush.bf16.msra.mxu0 %v8321
    %9288 = vmatmul.bf16.gmra.mxu0 %v6556
    %v9289 = vpop.f32.mrf.mxu0
    %v9290 = vadd.f32 %v9277, %v9289
    %v9291 = vpop.f32.mrf.mxu0
    %9292 = vdwg.mxu0
    %9293 = vmatpush.bf16.msra.mxu0 %v8501
    %9294 = vmatpush.bf16.msra.mxu0 %v8489
    %9295 = vmatpush.bf16.msra.mxu0 %v8477
    %9296 = vmatpush.bf16.msra.mxu0 %v8465
    %9297 = vmatpush.bf16.msra.mxu0 %v8453
    %9298 = vmatpush.bf16.msra.mxu0 %v8441
    %9299 = vmatpush.bf16.msra.mxu0 %v8429
    %9300 = vmatpush.bf16.msra.mxu0 %v8417
    %9301 = vmatmul.bf16.gmra.mxu0 %v6557
    %v9302 = vpop.f32.mrf.mxu0
    %v9303 = vadd.f32 %v9290, %v9302
    %v9304 = vpop.f32.mrf.mxu0
    %9305 = vdwg.mxu0
    %9306 = vmatpush.bf16.msra.mxu0 %v8214
    %9307 = vmatpush.bf16.msra.mxu0 %v8202
    %9308 = vmatpush.bf16.msra.mxu0 %v8190
    %9309 = vmatpush.bf16.msra.mxu0 %v8178
    %9310 = vmatpush.bf16.msra.mxu0 %v8166
    %9311 = vmatpush.bf16.msra.mxu0 %v8154
    %9312 = vmatpush.bf16.msra.mxu0 %v8142
    %9313 = vmatpush.bf16.msra.mxu0 %v8130
    %9314 = vmatmul.bf16.gmra.mxu0 %v6554
    %v9315 = vpop.f32.mrf.mxu0
    %v9316 = vadd.f32 %v6954, %v9315
    %v9317 = vpop.f32.mrf.mxu0
    %9318 = vdwg.mxu0
    %9319 = vmatpush.bf16.msra.mxu0 %v8310
    %9320 = vmatpush.bf16.msra.mxu0 %v8298
    %9321 = vmatpush.bf16.msra.mxu0 %v8286
    %9322 = vmatpush.bf16.msra.mxu0 %v8274
    %9323 = vmatpush.bf16.msra.mxu0 %v8262
    %9324 = vmatpush.bf16.msra.mxu0 %v8250
    %9325 = vmatpush.bf16.msra.mxu0 %v8238
    %9326 = vmatpush.bf16.msra.mxu0 %v8226
    %9327 = vmatmul.bf16.gmra.mxu0 %v6555
    %v9328 = vpop.f32.mrf.mxu0
    %v9329 = vadd.f32 %v9316, %v9328
    %v9330 = vpop.f32.mrf.mxu0
    %9331 = vdwg.mxu0
    %9332 = vmatpush.bf16.msra.mxu0 %v8406
    %9333 = vmatpush.bf16.msra.mxu0 %v8394
    %9334 = vmatpush.bf16.msra.mxu0 %v8382
    %9335 = vmatpush.bf16.msra.mxu0 %v8370
    %9336 = vmatpush.bf16.msra.mxu0 %v8358
    %9337 = vmatpush.bf16.msra.mxu0 %v8346
    %9338 = vmatpush.bf16.msra.mxu0 %v8334
    %9339 = vmatpush.bf16.msra.mxu0 %v8322
    %9340 = vmatmul.bf16.gmra.mxu0 %v6556
    %v9341 = vpop.f32.mrf.mxu0
    %v9342 = vadd.f32 %v9329, %v9341
    %v9343 = vpop.f32.mrf.mxu0
    %9344 = vdwg.mxu0
    %9345 = vmatpush.bf16.msra.mxu0 %v8502
    %9346 = vmatpush.bf16.msra.mxu0 %v8490
    %9347 = vmatpush.bf16.msra.mxu0 %v8478
    %9348 = vmatpush.bf16.msra.mxu0 %v8466
    %9349 = vmatpush.bf16.msra.mxu0 %v8454
    %9350 = vmatpush.bf16.msra.mxu0 %v8442
    %9351 = vmatpush.bf16.msra.mxu0 %v8430
    %9352 = vmatpush.bf16.msra.mxu0 %v8418
    %9353 = vmatmul.bf16.gmra.mxu0 %v6557
    %v9354 = vpop.f32.mrf.mxu0
    %v9355 = vadd.f32 %v9342, %v9354
    %v9356 = vpop.f32.mrf.mxu0
    %9357 = vdwg.mxu0
    %9358 = vmatpush.bf16.msra.mxu0 %v8215
    %9359 = vmatpush.bf16.msra.mxu0 %v8203
    %9360 = vmatpush.bf16.msra.mxu0 %v8191
    %9361 = vmatpush.bf16.msra.mxu0 %v8179
    %9362 = vmatpush.bf16.msra.mxu0 %v8167
    %9363 = vmatpush.bf16.msra.mxu0 %v8155
    %9364 = vmatpush.bf16.msra.mxu0 %v8143
    %9365 = vmatpush.bf16.msra.mxu0 %v8131
    %9366 = vmatmul.bf16.gmra.mxu0 %v6554
    %v9367 = vpop.f32.mrf.mxu0
    %v9368 = vadd.f32 %v6955, %v9367
    %v9369 = vpop.f32.mrf.mxu0
    %9370 = vdwg.mxu0
    %9371 = vmatpush.bf16.msra.mxu0 %v8311
    %9372 = vmatpush.bf16.msra.mxu0 %v8299
    %9373 = vmatpush.bf16.msra.mxu0 %v8287
    %9374 = vmatpush.bf16.msra.mxu0 %v8275
    %9375 = vmatpush.bf16.msra.mxu0 %v8263
    %9376 = vmatpush.bf16.msra.mxu0 %v8251
    %9377 = vmatpush.bf16.msra.mxu0 %v8239
    %9378 = vmatpush.bf16.msra.mxu0 %v8227
    %9379 = vmatmul.bf16.gmra.mxu0 %v6555
    %v9380 = vpop.f32.mrf.mxu0
    %v9381 = vadd.f32 %v9368, %v9380
    %v9382 = vpop.f32.mrf.mxu0
    %9383 = vdwg.mxu0
    %9384 = vmatpush.bf16.msra.mxu0 %v8407
    %9385 = vmatpush.bf16.msra.mxu0 %v8395
    %9386 = vmatpush.bf16.msra.mxu0 %v8383
    %9387 = vmatpush.bf16.msra.mxu0 %v8371
    %9388 = vmatpush.bf16.msra.mxu0 %v8359
    %9389 = vmatpush.bf16.msra.mxu0 %v8347
    %9390 = vmatpush.bf16.msra.mxu0 %v8335
    %9391 = vmatpush.bf16.msra.mxu0 %v8323
    %9392 = vmatmul.bf16.gmra.mxu0 %v6556
    %v9393 = vpop.f32.mrf.mxu0
    %v9394 = vadd.f32 %v9381, %v9393
    %v9395 = vpop.f32.mrf.mxu0
    %9396 = vdwg.mxu0
    %9397 = vmatpush.bf16.msra.mxu0 %v8503
    %9398 = vmatpush.bf16.msra.mxu0 %v8491
    %9399 = vmatpush.bf16.msra.mxu0 %v8479
    %9400 = vmatpush.bf16.msra.mxu0 %v8467
    %9401 = vmatpush.bf16.msra.mxu0 %v8455
    %9402 = vmatpush.bf16.msra.mxu0 %v8443
    %9403 = vmatpush.bf16.msra.mxu0 %v8431
    %9404 = vmatpush.bf16.msra.mxu0 %v8419
    %9405 = vmatmul.bf16.gmra.mxu0 %v6557
    %v9406 = vpop.f32.mrf.mxu0
    %v9407 = vadd.f32 %v9394, %v9406
    %v9408 = vpop.f32.mrf.mxu0
    %9409 = vdwg.mxu0
    %9410 = vmatpush.bf16.msra.mxu0 %v8216
    %9411 = vmatpush.bf16.msra.mxu0 %v8204
    %9412 = vmatpush.bf16.msra.mxu0 %v8192
    %9413 = vmatpush.bf16.msra.mxu0 %v8180
    %9414 = vmatpush.bf16.msra.mxu0 %v8168
    %9415 = vmatpush.bf16.msra.mxu0 %v8156
    %9416 = vmatpush.bf16.msra.mxu0 %v8144
    %9417 = vmatpush.bf16.msra.mxu0 %v8132
    %9418 = vmatmul.bf16.gmra.mxu0 %v6554
    %v9419 = vpop.f32.mrf.mxu0
    %v9420 = vadd.f32 %v6956, %v9419
    %v9421 = vpop.f32.mrf.mxu0
    %9422 = vdwg.mxu0
    %9423 = vmatpush.bf16.msra.mxu0 %v8312
    %9424 = vmatpush.bf16.msra.mxu0 %v8300
    %9425 = vmatpush.bf16.msra.mxu0 %v8288
    %9426 = vmatpush.bf16.msra.mxu0 %v8276
    %9427 = vmatpush.bf16.msra.mxu0 %v8264
    %9428 = vmatpush.bf16.msra.mxu0 %v8252
    %9429 = vmatpush.bf16.msra.mxu0 %v8240
    %9430 = vmatpush.bf16.msra.mxu0 %v8228
    %9431 = vmatmul.bf16.gmra.mxu0 %v6555
    %v9432 = vpop.f32.mrf.mxu0
    %v9433 = vadd.f32 %v9420, %v9432
    %v9434 = vpop.f32.mrf.mxu0
    %9435 = vdwg.mxu0
    %9436 = vmatpush.bf16.msra.mxu0 %v8408
    %9437 = vmatpush.bf16.msra.mxu0 %v8396
    %9438 = vmatpush.bf16.msra.mxu0 %v8384
    %9439 = vmatpush.bf16.msra.mxu0 %v8372
    %9440 = vmatpush.bf16.msra.mxu0 %v8360
    %9441 = vmatpush.bf16.msra.mxu0 %v8348
    %9442 = vmatpush.bf16.msra.mxu0 %v8336
    %9443 = vmatpush.bf16.msra.mxu0 %v8324
    %9444 = vmatmul.bf16.gmra.mxu0 %v6556
    %v9445 = vpop.f32.mrf.mxu0
    %v9446 = vadd.f32 %v9433, %v9445
    %v9447 = vpop.f32.mrf.mxu0
    %9448 = vdwg.mxu0
    %9449 = vmatpush.bf16.msra.mxu0 %v8504
    %9450 = vmatpush.bf16.msra.mxu0 %v8492
    %9451 = vmatpush.bf16.msra.mxu0 %v8480
    %9452 = vmatpush.bf16.msra.mxu0 %v8468
    %9453 = vmatpush.bf16.msra.mxu0 %v8456
    %9454 = vmatpush.bf16.msra.mxu0 %v8444
    %9455 = vmatpush.bf16.msra.mxu0 %v8432
    %9456 = vmatpush.bf16.msra.mxu0 %v8420
    %9457 = vmatmul.bf16.gmra.mxu0 %v6557
    %v9458 = vpop.f32.mrf.mxu0
    %v9459 = vadd.f32 %v9446, %v9458
    %v9460 = vpop.f32.mrf.mxu0
    %9461 = vdwg.mxu0
    %9462 = vmatpush.bf16.msra.mxu0 %v8217
    %9463 = vmatpush.bf16.msra.mxu0 %v8205
    %9464 = vmatpush.bf16.msra.mxu0 %v8193
    %9465 = vmatpush.bf16.msra.mxu0 %v8181
    %9466 = vmatpush.bf16.msra.mxu0 %v8169
    %9467 = vmatpush.bf16.msra.mxu0 %v8157
    %9468 = vmatpush.bf16.msra.mxu0 %v8145
    %9469 = vmatpush.bf16.msra.mxu0 %v8133
    %9470 = vmatmul.bf16.gmra.mxu0 %v6554
    %v9471 = vpop.f32.mrf.mxu0
    %v9472 = vadd.f32 %v6957, %v9471
    %v9473 = vpop.f32.mrf.mxu0
    %9474 = vdwg.mxu0
    %9475 = vmatpush.bf16.msra.mxu0 %v8313
    %9476 = vmatpush.bf16.msra.mxu0 %v8301
    %9477 = vmatpush.bf16.msra.mxu0 %v8289
    %9478 = vmatpush.bf16.msra.mxu0 %v8277
    %9479 = vmatpush.bf16.msra.mxu0 %v8265
    %9480 = vmatpush.bf16.msra.mxu0 %v8253
    %9481 = vmatpush.bf16.msra.mxu0 %v8241
    %9482 = vmatpush.bf16.msra.mxu0 %v8229
    %9483 = vmatmul.bf16.gmra.mxu0 %v6555
    %v9484 = vpop.f32.mrf.mxu0
    %v9485 = vadd.f32 %v9472, %v9484
    %v9486 = vpop.f32.mrf.mxu0
    %9487 = vdwg.mxu0
    %9488 = vmatpush.bf16.msra.mxu0 %v8409
    %9489 = vmatpush.bf16.msra.mxu0 %v8397
    %9490 = vmatpush.bf16.msra.mxu0 %v8385
    %9491 = vmatpush.bf16.msra.mxu0 %v8373
    %9492 = vmatpush.bf16.msra.mxu0 %v8361
    %9493 = vmatpush.bf16.msra.mxu0 %v8349
    %9494 = vmatpush.bf16.msra.mxu0 %v8337
    %9495 = vmatpush.bf16.msra.mxu0 %v8325
    %9496 = vmatmul.bf16.gmra.mxu0 %v6556
    %v9497 = vpop.f32.mrf.mxu0
    %v9498 = vadd.f32 %v9485, %v9497
    %v9499 = vpop.f32.mrf.mxu0
    %9500 = vdwg.mxu0
    %9501 = vmatpush.bf16.msra.mxu0 %v8505
    %9502 = vmatpush.bf16.msra.mxu0 %v8493
    %9503 = vmatpush.bf16.msra.mxu0 %v8481
    %9504 = vmatpush.bf16.msra.mxu0 %v8469
    %9505 = vmatpush.bf16.msra.mxu0 %v8457
    %9506 = vmatpush.bf16.msra.mxu0 %v8445
    %9507 = vmatpush.bf16.msra.mxu0 %v8433
    %9508 = vmatpush.bf16.msra.mxu0 %v8421
    %9509 = vmatmul.bf16.gmra.mxu0 %v6557
    %v9510 = vpop.f32.mrf.mxu0
    %v9511 = vadd.f32 %v9498, %v9510
    %v9512 = vpop.f32.mrf.mxu0
    %9513 = vdwg.mxu0
    %v9514 = vadd.f32 %v6542, %v8939
    %v9515 = vadd.f32 %v6543, %v8991
    %v9516 = vadd.f32 %v6544, %v9043
    %v9517 = vadd.f32 %v6545, %v9095
    %v9518 = vxor.u32 %v9514, 2147483648
    %v9519 = vxor.u32 %v9515, 2147483648
    %v9520 = vxor.u32 %v9516, 2147483648
    %v9521 = vxor.u32 %v9517, 2147483648
    %v9522 = vmul.f32 %v9518, 1.442695
    %v9523 = vpow.pop %v9522
    %v9524 = vmul.f32 %v9519, 1.442695
    %v9525 = vpow.pop %v9524
    %v9526 = vmul.f32 %v9520, 1.442695
    %v9527 = vpow.pop %v9526
    %v9528 = vmul.f32 %v9521, 1.442695
    %v9529 = vpow.pop %v9528
    %v9530 = vadd.f32 %v9523, 1.0
    %v9531 = vadd.f32 %v9525, 1.0
    %v9532 = vadd.f32 %v9527, 1.0
    %v9533 = vadd.f32 %v9529, 1.0
    %v9534 = vrcp.pop %v9530
    %v9535 = vmul.f32 %v9530, %v9534
    %v9536 = vsub.f32 1.0, %v9535
    %v9537 = vmul.f32 %v9534, %v9536
    %v9538 = vadd.f32 %v9534, %v9537
    %vm9539 = vweird.f32 %v9530
    %vm9540 = vweird.f32 %v9534
    %vm9541 = vmor %vm9539, %vm9540
    %v9542 = vsel %vm9541, %v9534, %v9538
    %v9543 = vand.u32 2147483647, %v9530
    %vm9544 = vcmp.eq.f32.partialorder %v9543, 8.507059e+37
    %v9545 = vand.u32 %v9530, 2147483648
    %v9546 = vor.u32 1.1754944e-38, %v9545
    %v9547 = vsel %vm9544, %v9546, %v9542
    %v9548 = vmul.f32 1.0, %v9547
    %v9549 = vrcp.pop %v9531
    %v9550 = vmul.f32 %v9531, %v9549
    %v9551 = vsub.f32 1.0, %v9550
    %v9552 = vmul.f32 %v9549, %v9551
    %v9553 = vadd.f32 %v9549, %v9552
    %vm9554 = vweird.f32 %v9531
    %vm9555 = vweird.f32 %v9549
    %vm9556 = vmor %vm9554, %vm9555
    %v9557 = vsel %vm9556, %v9549, %v9553
    %v9558 = vand.u32 2147483647, %v9531
    %vm9559 = vcmp.eq.f32.partialorder %v9558, 8.507059e+37
    %v9560 = vand.u32 %v9531, 2147483648
    %v9561 = vor.u32 1.1754944e-38, %v9560
    %v9562 = vsel %vm9559, %v9561, %v9557
    %v9563 = vmul.f32 1.0, %v9562
    %v9564 = vrcp.pop %v9532
    %v9565 = vmul.f32 %v9532, %v9564
    %v9566 = vsub.f32 1.0, %v9565
    %v9567 = vmul.f32 %v9564, %v9566
    %v9568 = vadd.f32 %v9564, %v9567
    %vm9569 = vweird.f32 %v9532
    %vm9570 = vweird.f32 %v9564
    %vm9571 = vmor %vm9569, %vm9570
    %v9572 = vsel %vm9571, %v9564, %v9568
    %v9573 = vand.u32 2147483647, %v9532
    %vm9574 = vcmp.eq.f32.partialorder %v9573, 8.507059e+37
    %v9575 = vand.u32 %v9532, 2147483648
    %v9576 = vor.u32 1.1754944e-38, %v9575
    %v9577 = vsel %vm9574, %v9576, %v9572
    %v9578 = vmul.f32 1.0, %v9577
    %v9579 = vrcp.pop %v9533
    %v9580 = vmul.f32 %v9533, %v9579
    %v9581 = vsub.f32 1.0, %v9580
    %v9582 = vmul.f32 %v9579, %v9581
    %v9583 = vadd.f32 %v9579, %v9582
    %vm9584 = vweird.f32 %v9533
    %vm9585 = vweird.f32 %v9579
    %vm9586 = vmor %vm9584, %vm9585
    %v9587 = vsel %vm9586, %v9579, %v9583
    %v9588 = vand.u32 2147483647, %v9533
    %vm9589 = vcmp.eq.f32.partialorder %v9588, 8.507059e+37
    %v9590 = vand.u32 %v9533, 2147483648
    %v9591 = vor.u32 1.1754944e-38, %v9590
    %v9592 = vsel %vm9589, %v9591, %v9587
    %v9593 = vmul.f32 1.0, %v9592
    %v9594 = vadd.f32 %v6546, %v9147
    %v9595 = vadd.f32 %v6547, %v9199
    %v9596 = vadd.f32 %v6548, %v9251
    %v9597 = vadd.f32 %v6549, %v9303
    %v9598 = vxor.u32 %v9594, 2147483648
    %v9599 = vxor.u32 %v9595, 2147483648
    %v9600 = vxor.u32 %v9596, 2147483648
    %v9601 = vxor.u32 %v9597, 2147483648
    %v9602 = vmul.f32 %v9598, 1.442695
    %v9603 = vpow.pop %v9602
    %v9604 = vmul.f32 %v9599, 1.442695
    %v9605 = vpow.pop %v9604
    %v9606 = vmul.f32 %v9600, 1.442695
    %v9607 = vpow.pop %v9606
    %v9608 = vmul.f32 %v9601, 1.442695
    %v9609 = vpow.pop %v9608
    %v9610 = vadd.f32 %v9603, 1.0
    %v9611 = vadd.f32 %v9605, 1.0
    %v9612 = vadd.f32 %v9607, 1.0
    %v9613 = vadd.f32 %v9609, 1.0
    %v9614 = vrcp.pop %v9610
    %v9615 = vmul.f32 %v9610, %v9614
    %v9616 = vsub.f32 1.0, %v9615
    %v9617 = vmul.f32 %v9614, %v9616
    %v9618 = vadd.f32 %v9614, %v9617
    %vm9619 = vweird.f32 %v9610
    %vm9620 = vweird.f32 %v9614
    %vm9621 = vmor %vm9619, %vm9620
    %v9622 = vsel %vm9621, %v9614, %v9618
    %v9623 = vand.u32 2147483647, %v9610
    %vm9624 = vcmp.eq.f32.partialorder %v9623, 8.507059e+37
    %v9625 = vand.u32 %v9610, 2147483648
    %v9626 = vor.u32 1.1754944e-38, %v9625
    %v9627 = vsel %vm9624, %v9626, %v9622
    %v9628 = vmul.f32 1.0, %v9627
    %v9629 = vrcp.pop %v9611
    %v9630 = vmul.f32 %v9611, %v9629
    %v9631 = vsub.f32 1.0, %v9630
    %v9632 = vmul.f32 %v9629, %v9631
    %v9633 = vadd.f32 %v9629, %v9632
    %vm9634 = vweird.f32 %v9611
    %vm9635 = vweird.f32 %v9629
    %vm9636 = vmor %vm9634, %vm9635
    %v9637 = vsel %vm9636, %v9629, %v9633
    %v9638 = vand.u32 2147483647, %v9611
    %vm9639 = vcmp.eq.f32.partialorder %v9638, 8.507059e+37
    %v9640 = vand.u32 %v9611, 2147483648
    %v9641 = vor.u32 1.1754944e-38, %v9640
    %v9642 = vsel %vm9639, %v9641, %v9637
    %v9643 = vmul.f32 1.0, %v9642
    %v9644 = vrcp.pop %v9612
    %v9645 = vmul.f32 %v9612, %v9644
    %v9646 = vsub.f32 1.0, %v9645
    %v9647 = vmul.f32 %v9644, %v9646
    %v9648 = vadd.f32 %v9644, %v9647
    %vm9649 = vweird.f32 %v9612
    %vm9650 = vweird.f32 %v9644
    %vm9651 = vmor %vm9649, %vm9650
    %v9652 = vsel %vm9651, %v9644, %v9648
    %v9653 = vand.u32 2147483647, %v9612
    %vm9654 = vcmp.eq.f32.partialorder %v9653, 8.507059e+37
    %v9655 = vand.u32 %v9612, 2147483648
    %v9656 = vor.u32 1.1754944e-38, %v9655
    %v9657 = vsel %vm9654, %v9656, %v9652
    %v9658 = vmul.f32 1.0, %v9657
    %v9659 = vrcp.pop %v9613
    %v9660 = vmul.f32 %v9613, %v9659
    %v9661 = vsub.f32 1.0, %v9660
    %v9662 = vmul.f32 %v9659, %v9661
    %v9663 = vadd.f32 %v9659, %v9662
    %vm9664 = vweird.f32 %v9613
    %vm9665 = vweird.f32 %v9659
    %vm9666 = vmor %vm9664, %vm9665
    %v9667 = vsel %vm9666, %v9659, %v9663
    %v9668 = vand.u32 2147483647, %v9613
    %vm9669 = vcmp.eq.f32.partialorder %v9668, 8.507059e+37
    %v9670 = vand.u32 %v9613, 2147483648
    %v9671 = vor.u32 1.1754944e-38, %v9670
    %v9672 = vsel %vm9669, %v9671, %v9667
    %v9673 = vmul.f32 1.0, %v9672
    %v9674 = vmul.f32 %v9548, %v9355
    %v9675 = vmul.f32 %v9563, %v9407
    %v9676 = vmul.f32 %v9578, %v9459
    %v9677 = vmul.f32 %v9593, %v9511
    %v9678 = vadd.f32 %v6550, %v9674
    %v9679 = vadd.f32 %v6551, %v9675
    %v9680 = vadd.f32 %v6552, %v9676
    %v9681 = vadd.f32 %v6553, %v9677
    %v9682 = vtanh.pop %v9678
    %v9683 = vtanh.pop %v9679
    %v9684 = vtanh.pop %v9680
    %v9685 = vtanh.pop %v9681
    %v9686 = vsub.f32 1.0, %v9628
    %v9687 = vsub.f32 1.0, %v9643
    %v9688 = vsub.f32 1.0, %v9658
    %v9689 = vsub.f32 1.0, %v9673
    %v9690 = vmul.f32 %v9686, %v9682
    %v9691 = vmul.f32 %v9687, %v9683
    %v9692 = vmul.f32 %v9688, %v9684
    %v9693 = vmul.f32 %v9689, %v9685
    %v9694 = vmul.f32 %v9628, %v166
    %v9695 = vmul.f32 %v9643, %v167
    %v9696 = vmul.f32 %v9658, %v168
    %v9697 = vmul.f32 %v9673, %v169
    %v9698 = vadd.f32 %v9690, %v9694
    %v9699 = vadd.f32 %v9691, %v9695
    %v9700 = vadd.f32 %v9692, %v9696
    %v9701 = vadd.f32 %v9693, %v9697
    %9702 = vst [vmem:[%s11] sm:$0xff] %v9698
    %9703 = vst [vmem:[%s11 + $0x8] sm:$0xff] %v9699
    %9704 = vst [vmem:[%s11 + $0x10] sm:$0xff] %v9700
    %9705 = vst [vmem:[%s11 + $0x18] sm:$0xff] %v9701
    %v9706 = vpack.c.bf16 %v9698, %v9698
    %v9707 = vpack.c.bf16 %v9699, %v9699
    %v9708 = vpack.c.bf16 %v9700, %v9700
    %v9709 = vpack.c.bf16 %v9701, %v9701
    %v9710 = vld [vmem:[#allocation12] sm:$0xff]
    %v9711 = vld [vmem:[#allocation12 + $0x8] sm:$0xff]
    %v9712 = vld [vmem:[#allocation12 + $0x10] sm:$0xff]
    %v9713 = vld [vmem:[#allocation12 + $0x18] sm:$0xff]
    %v9714 = vld [vmem:[#allocation12 + $0x20] sm:$0xff]
    %v9715 = vld [vmem:[#allocation12 + $0x28] sm:$0xff]
    %v9716 = vld [vmem:[#allocation12 + $0x30] sm:$0xff]
    %v9717 = vld [vmem:[#allocation12 + $0x38] sm:$0xff]
    %v9718 = vld [vmem:[#allocation12 + $0x40] sm:$0xff]
    %v9719 = vld [vmem:[#allocation12 + $0x48] sm:$0xff]
    %v9720 = vld [vmem:[#allocation12 + $0x50] sm:$0xff]
    %v9721 = vld [vmem:[#allocation12 + $0x58] sm:$0xff]
    %v9722 = vld [vmem:[#allocation12 + $0x60] sm:$0xff]
    %v9723 = vld [vmem:[#allocation12 + $0x68] sm:$0xff]
    %v9724 = vld [vmem:[#allocation12 + $0x70] sm:$0xff]
    %v9725 = vld [vmem:[#allocation12 + $0x78] sm:$0xff]
    %v9726 = vld [vmem:[#allocation12 + $0x80] sm:$0xff]
    %v9727 = vld [vmem:[#allocation12 + $0x88] sm:$0xff]
    %v9728 = vld [vmem:[#allocation12 + $0x90] sm:$0xff]
    %v9729 = vld [vmem:[#allocation12 + $0x98] sm:$0xff]
    %v9730 = vld [vmem:[#allocation12 + $0xa0] sm:$0xff]
    %v9731 = vld [vmem:[#allocation12 + $0xa8] sm:$0xff]
    %v9732 = vld [vmem:[#allocation12 + $0xb0] sm:$0xff]
    %v9733 = vld [vmem:[#allocation12 + $0xb8] sm:$0xff]
    %v9734 = vld [vmem:[#allocation12 + $0xc0] sm:$0xff]
    %v9735 = vld [vmem:[#allocation12 + $0xc8] sm:$0xff]
    %v9736 = vld [vmem:[#allocation12 + $0xd0] sm:$0xff]
    %v9737 = vld [vmem:[#allocation12 + $0xd8] sm:$0xff]
    %v9738 = vld [vmem:[#allocation12 + $0xe0] sm:$0xff]
    %v9739 = vld [vmem:[#allocation12 + $0xe8] sm:$0xff]
    %v9740 = vld [vmem:[#allocation12 + $0xf0] sm:$0xff]
    %v9741 = vld [vmem:[#allocation12 + $0xf8] sm:$0xff]
    %v9742 = vld [vmem:[#allocation12 + $0x100] sm:$0xff]
    %v9743 = vld [vmem:[#allocation12 + $0x108] sm:$0xff]
    %v9744 = vld [vmem:[#allocation12 + $0x110] sm:$0xff]
    %v9745 = vld [vmem:[#allocation12 + $0x118] sm:$0xff]
    %v9746 = vld [vmem:[#allocation12 + $0x120] sm:$0xff]
    %v9747 = vld [vmem:[#allocation12 + $0x128] sm:$0xff]
    %v9748 = vld [vmem:[#allocation12 + $0x130] sm:$0xff]
    %v9749 = vld [vmem:[#allocation12 + $0x138] sm:$0xff]
    %v9750 = vld [vmem:[#allocation12 + $0x140] sm:$0xff]
    %v9751 = vld [vmem:[#allocation12 + $0x148] sm:$0xff]
    %v9752 = vld [vmem:[#allocation12 + $0x150] sm:$0xff]
    %v9753 = vld [vmem:[#allocation12 + $0x158] sm:$0xff]
    %v9754 = vld [vmem:[#allocation12 + $0x160] sm:$0xff]
    %v9755 = vld [vmem:[#allocation12 + $0x168] sm:$0xff]
    %v9756 = vld [vmem:[#allocation12 + $0x170] sm:$0xff]
    %v9757 = vld [vmem:[#allocation12 + $0x178] sm:$0xff]
    %v9758 = vld [vmem:[#allocation12 + $0x180] sm:$0xff]
    %v9759 = vld [vmem:[#allocation12 + $0x188] sm:$0xff]
    %v9760 = vld [vmem:[#allocation12 + $0x190] sm:$0xff]
    %v9761 = vld [vmem:[#allocation12 + $0x198] sm:$0xff]
    %v9762 = vld [vmem:[#allocation12 + $0x1a0] sm:$0xff]
    %v9763 = vld [vmem:[#allocation12 + $0x1a8] sm:$0xff]
    %v9764 = vld [vmem:[#allocation12 + $0x1b0] sm:$0xff]
    %v9765 = vld [vmem:[#allocation12 + $0x1b8] sm:$0xff]
    %v9766 = vld [vmem:[#allocation12 + $0x1c0] sm:$0xff]
    %v9767 = vld [vmem:[#allocation12 + $0x1c8] sm:$0xff]
    %v9768 = vld [vmem:[#allocation12 + $0x1d0] sm:$0xff]
    %v9769 = vld [vmem:[#allocation12 + $0x1d8] sm:$0xff]
    %v9770 = vld [vmem:[#allocation12 + $0x1e0] sm:$0xff]
    %v9771 = vld [vmem:[#allocation12 + $0x1e8] sm:$0xff]
    %v9772 = vld [vmem:[#allocation12 + $0x1f0] sm:$0xff]
    %v9773 = vld [vmem:[#allocation12 + $0x1f8] sm:$0xff]
    %v9774 = vld [vmem:[#allocation12 + $0x200] sm:$0xff]
    %v9775 = vld [vmem:[#allocation12 + $0x208] sm:$0xff]
    %v9776 = vld [vmem:[#allocation12 + $0x210] sm:$0xff]
    %v9777 = vld [vmem:[#allocation12 + $0x218] sm:$0xff]
    %v9778 = vld [vmem:[#allocation12 + $0x220] sm:$0xff]
    %v9779 = vld [vmem:[#allocation12 + $0x228] sm:$0xff]
    %v9780 = vld [vmem:[#allocation12 + $0x230] sm:$0xff]
    %v9781 = vld [vmem:[#allocation12 + $0x238] sm:$0xff]
    %v9782 = vld [vmem:[#allocation12 + $0x240] sm:$0xff]
    %v9783 = vld [vmem:[#allocation12 + $0x248] sm:$0xff]
    %v9784 = vld [vmem:[#allocation12 + $0x250] sm:$0xff]
    %v9785 = vld [vmem:[#allocation12 + $0x258] sm:$0xff]
    %v9786 = vld [vmem:[#allocation12 + $0x260] sm:$0xff]
    %v9787 = vld [vmem:[#allocation12 + $0x268] sm:$0xff]
    %v9788 = vld [vmem:[#allocation12 + $0x270] sm:$0xff]
    %v9789 = vld [vmem:[#allocation12 + $0x278] sm:$0xff]
    %v9790 = vld [vmem:[#allocation12 + $0x280] sm:$0xff]
    %v9791 = vld [vmem:[#allocation12 + $0x288] sm:$0xff]
    %v9792 = vld [vmem:[#allocation12 + $0x290] sm:$0xff]
    %v9793 = vld [vmem:[#allocation12 + $0x298] sm:$0xff]
    %v9794 = vld [vmem:[#allocation12 + $0x2a0] sm:$0xff]
    %v9795 = vld [vmem:[#allocation12 + $0x2a8] sm:$0xff]
    %v9796 = vld [vmem:[#allocation12 + $0x2b0] sm:$0xff]
    %v9797 = vld [vmem:[#allocation12 + $0x2b8] sm:$0xff]
    %v9798 = vld [vmem:[#allocation12 + $0x2c0] sm:$0xff]
    %v9799 = vld [vmem:[#allocation12 + $0x2c8] sm:$0xff]
    %v9800 = vld [vmem:[#allocation12 + $0x2d0] sm:$0xff]
    %v9801 = vld [vmem:[#allocation12 + $0x2d8] sm:$0xff]
    %v9802 = vld [vmem:[#allocation12 + $0x2e0] sm:$0xff]
    %v9803 = vld [vmem:[#allocation12 + $0x2e8] sm:$0xff]
    %v9804 = vld [vmem:[#allocation12 + $0x2f0] sm:$0xff]
    %v9805 = vld [vmem:[#allocation12 + $0x2f8] sm:$0xff]
    %v9806 = vld [vmem:[#allocation12 + $0x300] sm:$0xff]
    %v9807 = vld [vmem:[#allocation12 + $0x308] sm:$0xff]
    %v9808 = vld [vmem:[#allocation12 + $0x310] sm:$0xff]
    %v9809 = vld [vmem:[#allocation12 + $0x318] sm:$0xff]
    %v9810 = vld [vmem:[#allocation12 + $0x320] sm:$0xff]
    %v9811 = vld [vmem:[#allocation12 + $0x328] sm:$0xff]
    %v9812 = vld [vmem:[#allocation12 + $0x330] sm:$0xff]
    %v9813 = vld [vmem:[#allocation12 + $0x338] sm:$0xff]
    %v9814 = vld [vmem:[#allocation12 + $0x340] sm:$0xff]
    %v9815 = vld [vmem:[#allocation12 + $0x348] sm:$0xff]
    %v9816 = vld [vmem:[#allocation12 + $0x350] sm:$0xff]
    %v9817 = vld [vmem:[#allocation12 + $0x358] sm:$0xff]
    %v9818 = vld [vmem:[#allocation12 + $0x360] sm:$0xff]
    %v9819 = vld [vmem:[#allocation12 + $0x368] sm:$0xff]
    %v9820 = vld [vmem:[#allocation12 + $0x370] sm:$0xff]
    %v9821 = vld [vmem:[#allocation12 + $0x378] sm:$0xff]
    %v9822 = vld [vmem:[#allocation12 + $0x380] sm:$0xff]
    %v9823 = vld [vmem:[#allocation12 + $0x388] sm:$0xff]
    %v9824 = vld [vmem:[#allocation12 + $0x390] sm:$0xff]
    %v9825 = vld [vmem:[#allocation12 + $0x398] sm:$0xff]
    %v9826 = vld [vmem:[#allocation12 + $0x3a0] sm:$0xff]
    %v9827 = vld [vmem:[#allocation12 + $0x3a8] sm:$0xff]
    %v9828 = vld [vmem:[#allocation12 + $0x3b0] sm:$0xff]
    %v9829 = vld [vmem:[#allocation12 + $0x3b8] sm:$0xff]
    %v9830 = vld [vmem:[#allocation12 + $0x3c0] sm:$0xff]
    %v9831 = vld [vmem:[#allocation12 + $0x3c8] sm:$0xff]
    %v9832 = vld [vmem:[#allocation12 + $0x3d0] sm:$0xff]
    %v9833 = vld [vmem:[#allocation12 + $0x3d8] sm:$0xff]
    %v9834 = vld [vmem:[#allocation12 + $0x3e0] sm:$0xff]
    %v9835 = vld [vmem:[#allocation12 + $0x3e8] sm:$0xff]
    %v9836 = vld [vmem:[#allocation12 + $0x3f0] sm:$0xff]
    %v9837 = vld [vmem:[#allocation12 + $0x3f8] sm:$0xff]
    %v9838 = vld [vmem:[#allocation12 + $0x400] sm:$0xff]
    %v9839 = vld [vmem:[#allocation12 + $0x408] sm:$0xff]
    %v9840 = vld [vmem:[#allocation12 + $0x410] sm:$0xff]
    %v9841 = vld [vmem:[#allocation12 + $0x418] sm:$0xff]
    %v9842 = vld [vmem:[#allocation12 + $0x420] sm:$0xff]
    %v9843 = vld [vmem:[#allocation12 + $0x428] sm:$0xff]
    %v9844 = vld [vmem:[#allocation12 + $0x430] sm:$0xff]
    %v9845 = vld [vmem:[#allocation12 + $0x438] sm:$0xff]
    %v9846 = vld [vmem:[#allocation12 + $0x440] sm:$0xff]
    %v9847 = vld [vmem:[#allocation12 + $0x448] sm:$0xff]
    %v9848 = vld [vmem:[#allocation12 + $0x450] sm:$0xff]
    %v9849 = vld [vmem:[#allocation12 + $0x458] sm:$0xff]
    %v9850 = vld [vmem:[#allocation12 + $0x460] sm:$0xff]
    %v9851 = vld [vmem:[#allocation12 + $0x468] sm:$0xff]
    %v9852 = vld [vmem:[#allocation12 + $0x470] sm:$0xff]
    %v9853 = vld [vmem:[#allocation12 + $0x478] sm:$0xff]
    %v9854 = vld [vmem:[#allocation12 + $0x480] sm:$0xff]
    %v9855 = vld [vmem:[#allocation12 + $0x488] sm:$0xff]
    %v9856 = vld [vmem:[#allocation12 + $0x490] sm:$0xff]
    %v9857 = vld [vmem:[#allocation12 + $0x498] sm:$0xff]
    %v9858 = vld [vmem:[#allocation12 + $0x4a0] sm:$0xff]
    %v9859 = vld [vmem:[#allocation12 + $0x4a8] sm:$0xff]
    %v9860 = vld [vmem:[#allocation12 + $0x4b0] sm:$0xff]
    %v9861 = vld [vmem:[#allocation12 + $0x4b8] sm:$0xff]
    %v9862 = vld [vmem:[#allocation12 + $0x4c0] sm:$0xff]
    %v9863 = vld [vmem:[#allocation12 + $0x4c8] sm:$0xff]
    %v9864 = vld [vmem:[#allocation12 + $0x4d0] sm:$0xff]
    %v9865 = vld [vmem:[#allocation12 + $0x4d8] sm:$0xff]
    %v9866 = vld [vmem:[#allocation12 + $0x4e0] sm:$0xff]
    %v9867 = vld [vmem:[#allocation12 + $0x4e8] sm:$0xff]
    %v9868 = vld [vmem:[#allocation12 + $0x4f0] sm:$0xff]
    %v9869 = vld [vmem:[#allocation12 + $0x4f8] sm:$0xff]
    %v9870 = vld [vmem:[#allocation12 + $0x500] sm:$0xff]
    %v9871 = vld [vmem:[#allocation12 + $0x508] sm:$0xff]
    %v9872 = vld [vmem:[#allocation12 + $0x510] sm:$0xff]
    %v9873 = vld [vmem:[#allocation12 + $0x518] sm:$0xff]
    %v9874 = vld [vmem:[#allocation12 + $0x520] sm:$0xff]
    %v9875 = vld [vmem:[#allocation12 + $0x528] sm:$0xff]
    %v9876 = vld [vmem:[#allocation12 + $0x530] sm:$0xff]
    %v9877 = vld [vmem:[#allocation12 + $0x538] sm:$0xff]
    %v9878 = vld [vmem:[#allocation12 + $0x540] sm:$0xff]
    %v9879 = vld [vmem:[#allocation12 + $0x548] sm:$0xff]
    %v9880 = vld [vmem:[#allocation12 + $0x550] sm:$0xff]
    %v9881 = vld [vmem:[#allocation12 + $0x558] sm:$0xff]
    %v9882 = vld [vmem:[#allocation12 + $0x560] sm:$0xff]
    %v9883 = vld [vmem:[#allocation12 + $0x568] sm:$0xff]
    %v9884 = vld [vmem:[#allocation12 + $0x570] sm:$0xff]
    %v9885 = vld [vmem:[#allocation12 + $0x578] sm:$0xff]
    %v9886 = vld [vmem:[#allocation12 + $0x580] sm:$0xff]
    %v9887 = vld [vmem:[#allocation12 + $0x588] sm:$0xff]
    %v9888 = vld [vmem:[#allocation12 + $0x590] sm:$0xff]
    %v9889 = vld [vmem:[#allocation12 + $0x598] sm:$0xff]
    %v9890 = vld [vmem:[#allocation12 + $0x5a0] sm:$0xff]
    %v9891 = vld [vmem:[#allocation12 + $0x5a8] sm:$0xff]
    %v9892 = vld [vmem:[#allocation12 + $0x5b0] sm:$0xff]
    %v9893 = vld [vmem:[#allocation12 + $0x5b8] sm:$0xff]
    %v9894 = vld [vmem:[#allocation12 + $0x5c0] sm:$0xff]
    %v9895 = vld [vmem:[#allocation12 + $0x5c8] sm:$0xff]
    %v9896 = vld [vmem:[#allocation12 + $0x5d0] sm:$0xff]
    %v9897 = vld [vmem:[#allocation12 + $0x5d8] sm:$0xff]
    %v9898 = vld [vmem:[#allocation12 + $0x5e0] sm:$0xff]
    %v9899 = vld [vmem:[#allocation12 + $0x5e8] sm:$0xff]
    %v9900 = vld [vmem:[#allocation12 + $0x5f0] sm:$0xff]
    %v9901 = vld [vmem:[#allocation12 + $0x5f8] sm:$0xff]
    %v9902 = vld [vmem:[#allocation12 + $0x600] sm:$0xff]
    %v9903 = vld [vmem:[#allocation12 + $0x608] sm:$0xff]
    %v9904 = vld [vmem:[#allocation12 + $0x610] sm:$0xff]
    %v9905 = vld [vmem:[#allocation12 + $0x618] sm:$0xff]
    %v9906 = vld [vmem:[#allocation12 + $0x620] sm:$0xff]
    %v9907 = vld [vmem:[#allocation12 + $0x628] sm:$0xff]
    %v9908 = vld [vmem:[#allocation12 + $0x630] sm:$0xff]
    %v9909 = vld [vmem:[#allocation12 + $0x638] sm:$0xff]
    %v9910 = vld [vmem:[#allocation12 + $0x640] sm:$0xff]
    %v9911 = vld [vmem:[#allocation12 + $0x648] sm:$0xff]
    %v9912 = vld [vmem:[#allocation12 + $0x650] sm:$0xff]
    %v9913 = vld [vmem:[#allocation12 + $0x658] sm:$0xff]
    %v9914 = vld [vmem:[#allocation12 + $0x660] sm:$0xff]
    %v9915 = vld [vmem:[#allocation12 + $0x668] sm:$0xff]
    %v9916 = vld [vmem:[#allocation12 + $0x670] sm:$0xff]
    %v9917 = vld [vmem:[#allocation12 + $0x678] sm:$0xff]
    %v9918 = vld [vmem:[#allocation12 + $0x680] sm:$0xff]
    %v9919 = vld [vmem:[#allocation12 + $0x688] sm:$0xff]
    %v9920 = vld [vmem:[#allocation12 + $0x690] sm:$0xff]
    %v9921 = vld [vmem:[#allocation12 + $0x698] sm:$0xff]
    %v9922 = vld [vmem:[#allocation12 + $0x6a0] sm:$0xff]
    %v9923 = vld [vmem:[#allocation12 + $0x6a8] sm:$0xff]
    %v9924 = vld [vmem:[#allocation12 + $0x6b0] sm:$0xff]
    %v9925 = vld [vmem:[#allocation12 + $0x6b8] sm:$0xff]
    %v9926 = vld [vmem:[#allocation12 + $0x6c0] sm:$0xff]
    %v9927 = vld [vmem:[#allocation12 + $0x6c8] sm:$0xff]
    %v9928 = vld [vmem:[#allocation12 + $0x6d0] sm:$0xff]
    %v9929 = vld [vmem:[#allocation12 + $0x6d8] sm:$0xff]
    %v9930 = vld [vmem:[#allocation12 + $0x6e0] sm:$0xff]
    %v9931 = vld [vmem:[#allocation12 + $0x6e8] sm:$0xff]
    %v9932 = vld [vmem:[#allocation12 + $0x6f0] sm:$0xff]
    %v9933 = vld [vmem:[#allocation12 + $0x6f8] sm:$0xff]
    %v9934 = vld [vmem:[#allocation12 + $0x700] sm:$0xff]
    %v9935 = vld [vmem:[#allocation12 + $0x708] sm:$0xff]
    %v9936 = vld [vmem:[#allocation12 + $0x710] sm:$0xff]
    %v9937 = vld [vmem:[#allocation12 + $0x718] sm:$0xff]
    %v9938 = vld [vmem:[#allocation12 + $0x720] sm:$0xff]
    %v9939 = vld [vmem:[#allocation12 + $0x728] sm:$0xff]
    %v9940 = vld [vmem:[#allocation12 + $0x730] sm:$0xff]
    %v9941 = vld [vmem:[#allocation12 + $0x738] sm:$0xff]
    %v9942 = vld [vmem:[#allocation12 + $0x740] sm:$0xff]
    %v9943 = vld [vmem:[#allocation12 + $0x748] sm:$0xff]
    %v9944 = vld [vmem:[#allocation12 + $0x750] sm:$0xff]
    %v9945 = vld [vmem:[#allocation12 + $0x758] sm:$0xff]
    %v9946 = vld [vmem:[#allocation12 + $0x760] sm:$0xff]
    %v9947 = vld [vmem:[#allocation12 + $0x768] sm:$0xff]
    %v9948 = vld [vmem:[#allocation12 + $0x770] sm:$0xff]
    %v9949 = vld [vmem:[#allocation12 + $0x778] sm:$0xff]
    %v9950 = vld [vmem:[#allocation12 + $0x780] sm:$0xff]
    %v9951 = vld [vmem:[#allocation12 + $0x788] sm:$0xff]
    %v9952 = vld [vmem:[#allocation12 + $0x790] sm:$0xff]
    %v9953 = vld [vmem:[#allocation12 + $0x798] sm:$0xff]
    %v9954 = vld [vmem:[#allocation12 + $0x7a0] sm:$0xff]
    %v9955 = vld [vmem:[#allocation12 + $0x7a8] sm:$0xff]
    %v9956 = vld [vmem:[#allocation12 + $0x7b0] sm:$0xff]
    %v9957 = vld [vmem:[#allocation12 + $0x7b8] sm:$0xff]
    %v9958 = vld [vmem:[#allocation12 + $0x7c0] sm:$0xff]
    %v9959 = vld [vmem:[#allocation12 + $0x7c8] sm:$0xff]
    %v9960 = vld [vmem:[#allocation12 + $0x7d0] sm:$0xff]
    %v9961 = vld [vmem:[#allocation12 + $0x7d8] sm:$0xff]
    %v9962 = vld [vmem:[#allocation12 + $0x7e0] sm:$0xff]
    %v9963 = vld [vmem:[#allocation12 + $0x7e8] sm:$0xff]
    %v9964 = vld [vmem:[#allocation12 + $0x7f0] sm:$0xff]
    %v9965 = vld [vmem:[#allocation12 + $0x7f8] sm:$0xff]
    %v10222 = vunpack.c.l.b16 %v9710
    %v10223 = vunpack.c.h.b16 %v9710
    %v10224 = vunpack.c.l.b16 %v9711
    %v10225 = vunpack.c.h.b16 %v9711
    %v10226 = vunpack.c.l.b16 %v9712
    %v10227 = vunpack.c.h.b16 %v9712
    %v10228 = vunpack.c.l.b16 %v9713
    %v10229 = vunpack.c.h.b16 %v9713
    %v10230 = vunpack.c.l.b16 %v9714
    %v10231 = vunpack.c.h.b16 %v9714
    %v10232 = vunpack.c.l.b16 %v9715
    %v10233 = vunpack.c.h.b16 %v9715
    %v10234 = vunpack.c.l.b16 %v9716
    %v10235 = vunpack.c.h.b16 %v9716
    %v10236 = vunpack.c.l.b16 %v9717
    %v10237 = vunpack.c.h.b16 %v9717
    %v10238 = vunpack.c.l.b16 %v9718
    %v10239 = vunpack.c.h.b16 %v9718
    %v10240 = vunpack.c.l.b16 %v9719
    %v10241 = vunpack.c.h.b16 %v9719
    %v10242 = vunpack.c.l.b16 %v9720
    %v10243 = vunpack.c.h.b16 %v9720
    %v10244 = vunpack.c.l.b16 %v9721
    %v10245 = vunpack.c.h.b16 %v9721
    %v10246 = vunpack.c.l.b16 %v9722
    %v10247 = vunpack.c.h.b16 %v9722
    %v10248 = vunpack.c.l.b16 %v9723
    %v10249 = vunpack.c.h.b16 %v9723
    %v10250 = vunpack.c.l.b16 %v9724
    %v10251 = vunpack.c.h.b16 %v9724
    %v10252 = vunpack.c.l.b16 %v9725
    %v10253 = vunpack.c.h.b16 %v9725
    %v10254 = vunpack.c.l.b16 %v9726
    %v10255 = vunpack.c.h.b16 %v9726
    %v10256 = vunpack.c.l.b16 %v9727
    %v10257 = vunpack.c.h.b16 %v9727
    %v10258 = vunpack.c.l.b16 %v9728
    %v10259 = vunpack.c.h.b16 %v9728
    %v10260 = vunpack.c.l.b16 %v9729
    %v10261 = vunpack.c.h.b16 %v9729
    %v10262 = vunpack.c.l.b16 %v9730
    %v10263 = vunpack.c.h.b16 %v9730
    %v10264 = vunpack.c.l.b16 %v9731
    %v10265 = vunpack.c.h.b16 %v9731
    %v10266 = vunpack.c.l.b16 %v9732
    %v10267 = vunpack.c.h.b16 %v9732
    %v10268 = vunpack.c.l.b16 %v9733
    %v10269 = vunpack.c.h.b16 %v9733
    %v10270 = vunpack.c.l.b16 %v9734
    %v10271 = vunpack.c.h.b16 %v9734
    %v10272 = vunpack.c.l.b16 %v9735
    %v10273 = vunpack.c.h.b16 %v9735
    %v10274 = vunpack.c.l.b16 %v9736
    %v10275 = vunpack.c.h.b16 %v9736
    %v10276 = vunpack.c.l.b16 %v9737
    %v10277 = vunpack.c.h.b16 %v9737
    %v10278 = vunpack.c.l.b16 %v9738
    %v10279 = vunpack.c.h.b16 %v9738
    %v10280 = vunpack.c.l.b16 %v9739
    %v10281 = vunpack.c.h.b16 %v9739
    %v10282 = vunpack.c.l.b16 %v9740
    %v10283 = vunpack.c.h.b16 %v9740
    %v10284 = vunpack.c.l.b16 %v9741
    %v10285 = vunpack.c.h.b16 %v9741
    %v10286 = vunpack.c.l.b16 %v9742
    %v10287 = vunpack.c.h.b16 %v9742
    %v10288 = vunpack.c.l.b16 %v9743
    %v10289 = vunpack.c.h.b16 %v9743
    %v10290 = vunpack.c.l.b16 %v9744
    %v10291 = vunpack.c.h.b16 %v9744
    %v10292 = vunpack.c.l.b16 %v9745
    %v10293 = vunpack.c.h.b16 %v9745
    %v10294 = vunpack.c.l.b16 %v9746
    %v10295 = vunpack.c.h.b16 %v9746
    %v10296 = vunpack.c.l.b16 %v9747
    %v10297 = vunpack.c.h.b16 %v9747
    %v10298 = vunpack.c.l.b16 %v9748
    %v10299 = vunpack.c.h.b16 %v9748
    %v10300 = vunpack.c.l.b16 %v9749
    %v10301 = vunpack.c.h.b16 %v9749
    %v10302 = vunpack.c.l.b16 %v9750
    %v10303 = vunpack.c.h.b16 %v9750
    %v10304 = vunpack.c.l.b16 %v9751
    %v10305 = vunpack.c.h.b16 %v9751
    %v10306 = vunpack.c.l.b16 %v9752
    %v10307 = vunpack.c.h.b16 %v9752
    %v10308 = vunpack.c.l.b16 %v9753
    %v10309 = vunpack.c.h.b16 %v9753
    %v10310 = vunpack.c.l.b16 %v9754
    %v10311 = vunpack.c.h.b16 %v9754
    %v10312 = vunpack.c.l.b16 %v9755
    %v10313 = vunpack.c.h.b16 %v9755
    %v10314 = vunpack.c.l.b16 %v9756
    %v10315 = vunpack.c.h.b16 %v9756
    %v10316 = vunpack.c.l.b16 %v9757
    %v10317 = vunpack.c.h.b16 %v9757
    %v10318 = vunpack.c.l.b16 %v9758
    %v10319 = vunpack.c.h.b16 %v9758
    %v10320 = vunpack.c.l.b16 %v9759
    %v10321 = vunpack.c.h.b16 %v9759
    %v10322 = vunpack.c.l.b16 %v9760
    %v10323 = vunpack.c.h.b16 %v9760
    %v10324 = vunpack.c.l.b16 %v9761
    %v10325 = vunpack.c.h.b16 %v9761
    %v10326 = vunpack.c.l.b16 %v9762
    %v10327 = vunpack.c.h.b16 %v9762
    %v10328 = vunpack.c.l.b16 %v9763
    %v10329 = vunpack.c.h.b16 %v9763
    %v10330 = vunpack.c.l.b16 %v9764
    %v10331 = vunpack.c.h.b16 %v9764
    %v10332 = vunpack.c.l.b16 %v9765
    %v10333 = vunpack.c.h.b16 %v9765
    %v10334 = vunpack.c.l.b16 %v9766
    %v10335 = vunpack.c.h.b16 %v9766
    %v10336 = vunpack.c.l.b16 %v9767
    %v10337 = vunpack.c.h.b16 %v9767
    %v10338 = vunpack.c.l.b16 %v9768
    %v10339 = vunpack.c.h.b16 %v9768
    %v10340 = vunpack.c.l.b16 %v9769
    %v10341 = vunpack.c.h.b16 %v9769
    %v10342 = vunpack.c.l.b16 %v9770
    %v10343 = vunpack.c.h.b16 %v9770
    %v10344 = vunpack.c.l.b16 %v9771
    %v10345 = vunpack.c.h.b16 %v9771
    %v10346 = vunpack.c.l.b16 %v9772
    %v10347 = vunpack.c.h.b16 %v9772
    %v10348 = vunpack.c.l.b16 %v9773
    %v10349 = vunpack.c.h.b16 %v9773
    %v10350 = vunpack.c.l.b16 %v9774
    %v10351 = vunpack.c.h.b16 %v9774
    %v10352 = vunpack.c.l.b16 %v9775
    %v10353 = vunpack.c.h.b16 %v9775
    %v10354 = vunpack.c.l.b16 %v9776
    %v10355 = vunpack.c.h.b16 %v9776
    %v10356 = vunpack.c.l.b16 %v9777
    %v10357 = vunpack.c.h.b16 %v9777
    %v10358 = vunpack.c.l.b16 %v9778
    %v10359 = vunpack.c.h.b16 %v9778
    %v10360 = vunpack.c.l.b16 %v9779
    %v10361 = vunpack.c.h.b16 %v9779
    %v10362 = vunpack.c.l.b16 %v9780
    %v10363 = vunpack.c.h.b16 %v9780
    %v10364 = vunpack.c.l.b16 %v9781
    %v10365 = vunpack.c.h.b16 %v9781
    %v10366 = vunpack.c.l.b16 %v9782
    %v10367 = vunpack.c.h.b16 %v9782
    %v10368 = vunpack.c.l.b16 %v9783
    %v10369 = vunpack.c.h.b16 %v9783
    %v10370 = vunpack.c.l.b16 %v9784
    %v10371 = vunpack.c.h.b16 %v9784
    %v10372 = vunpack.c.l.b16 %v9785
    %v10373 = vunpack.c.h.b16 %v9785
    %v10374 = vunpack.c.l.b16 %v9786
    %v10375 = vunpack.c.h.b16 %v9786
    %v10376 = vunpack.c.l.b16 %v9787
    %v10377 = vunpack.c.h.b16 %v9787
    %v10378 = vunpack.c.l.b16 %v9788
    %v10379 = vunpack.c.h.b16 %v9788
    %v10380 = vunpack.c.l.b16 %v9789
    %v10381 = vunpack.c.h.b16 %v9789
    %v10382 = vunpack.c.l.b16 %v9790
    %v10383 = vunpack.c.h.b16 %v9790
    %v10384 = vunpack.c.l.b16 %v9791
    %v10385 = vunpack.c.h.b16 %v9791
    %v10386 = vunpack.c.l.b16 %v9792
    %v10387 = vunpack.c.h.b16 %v9792
    %v10388 = vunpack.c.l.b16 %v9793
    %v10389 = vunpack.c.h.b16 %v9793
    %v10390 = vunpack.c.l.b16 %v9794
    %v10391 = vunpack.c.h.b16 %v9794
    %v10392 = vunpack.c.l.b16 %v9795
    %v10393 = vunpack.c.h.b16 %v9795
    %v10394 = vunpack.c.l.b16 %v9796
    %v10395 = vunpack.c.h.b16 %v9796
    %v10396 = vunpack.c.l.b16 %v9797
    %v10397 = vunpack.c.h.b16 %v9797
    %v10398 = vunpack.c.l.b16 %v9798
    %v10399 = vunpack.c.h.b16 %v9798
    %v10400 = vunpack.c.l.b16 %v9799
    %v10401 = vunpack.c.h.b16 %v9799
    %v10402 = vunpack.c.l.b16 %v9800
    %v10403 = vunpack.c.h.b16 %v9800
    %v10404 = vunpack.c.l.b16 %v9801
    %v10405 = vunpack.c.h.b16 %v9801
    %v10406 = vunpack.c.l.b16 %v9802
    %v10407 = vunpack.c.h.b16 %v9802
    %v10408 = vunpack.c.l.b16 %v9803
    %v10409 = vunpack.c.h.b16 %v9803
    %v10410 = vunpack.c.l.b16 %v9804
    %v10411 = vunpack.c.h.b16 %v9804
    %v10412 = vunpack.c.l.b16 %v9805
    %v10413 = vunpack.c.h.b16 %v9805
    %v10414 = vunpack.c.l.b16 %v9806
    %v10415 = vunpack.c.h.b16 %v9806
    %v10416 = vunpack.c.l.b16 %v9807
    %v10417 = vunpack.c.h.b16 %v9807
    %v10418 = vunpack.c.l.b16 %v9808
    %v10419 = vunpack.c.h.b16 %v9808
    %v10420 = vunpack.c.l.b16 %v9809
    %v10421 = vunpack.c.h.b16 %v9809
    %v10422 = vunpack.c.l.b16 %v9810
    %v10423 = vunpack.c.h.b16 %v9810
    %v10424 = vunpack.c.l.b16 %v9811
    %v10425 = vunpack.c.h.b16 %v9811
    %v10426 = vunpack.c.l.b16 %v9812
    %v10427 = vunpack.c.h.b16 %v9812
    %v10428 = vunpack.c.l.b16 %v9813
    %v10429 = vunpack.c.h.b16 %v9813
    %v10430 = vunpack.c.l.b16 %v9814
    %v10431 = vunpack.c.h.b16 %v9814
    %v10432 = vunpack.c.l.b16 %v9815
    %v10433 = vunpack.c.h.b16 %v9815
    %v10434 = vunpack.c.l.b16 %v9816
    %v10435 = vunpack.c.h.b16 %v9816
    %v10436 = vunpack.c.l.b16 %v9817
    %v10437 = vunpack.c.h.b16 %v9817
    %v10438 = vunpack.c.l.b16 %v9818
    %v10439 = vunpack.c.h.b16 %v9818
    %v10440 = vunpack.c.l.b16 %v9819
    %v10441 = vunpack.c.h.b16 %v9819
    %v10442 = vunpack.c.l.b16 %v9820
    %v10443 = vunpack.c.h.b16 %v9820
    %v10444 = vunpack.c.l.b16 %v9821
    %v10445 = vunpack.c.h.b16 %v9821
    %v10446 = vunpack.c.l.b16 %v9822
    %v10447 = vunpack.c.h.b16 %v9822
    %v10448 = vunpack.c.l.b16 %v9823
    %v10449 = vunpack.c.h.b16 %v9823
    %v10450 = vunpack.c.l.b16 %v9824
    %v10451 = vunpack.c.h.b16 %v9824
    %v10452 = vunpack.c.l.b16 %v9825
    %v10453 = vunpack.c.h.b16 %v9825
    %v10454 = vunpack.c.l.b16 %v9826
    %v10455 = vunpack.c.h.b16 %v9826
    %v10456 = vunpack.c.l.b16 %v9827
    %v10457 = vunpack.c.h.b16 %v9827
    %v10458 = vunpack.c.l.b16 %v9828
    %v10459 = vunpack.c.h.b16 %v9828
    %v10460 = vunpack.c.l.b16 %v9829
    %v10461 = vunpack.c.h.b16 %v9829
    %v10462 = vunpack.c.l.b16 %v9830
    %v10463 = vunpack.c.h.b16 %v9830
    %v10464 = vunpack.c.l.b16 %v9831
    %v10465 = vunpack.c.h.b16 %v9831
    %v10466 = vunpack.c.l.b16 %v9832
    %v10467 = vunpack.c.h.b16 %v9832
    %v10468 = vunpack.c.l.b16 %v9833
    %v10469 = vunpack.c.h.b16 %v9833
    %v10470 = vunpack.c.l.b16 %v9834
    %v10471 = vunpack.c.h.b16 %v9834
    %v10472 = vunpack.c.l.b16 %v9835
    %v10473 = vunpack.c.h.b16 %v9835
    %v10474 = vunpack.c.l.b16 %v9836
    %v10475 = vunpack.c.h.b16 %v9836
    %v10476 = vunpack.c.l.b16 %v9837
    %v10477 = vunpack.c.h.b16 %v9837
    %v10478 = vunpack.c.l.b16 %v9838
    %v10479 = vunpack.c.h.b16 %v9838
    %v10480 = vunpack.c.l.b16 %v9839
    %v10481 = vunpack.c.h.b16 %v9839
    %v10482 = vunpack.c.l.b16 %v9840
    %v10483 = vunpack.c.h.b16 %v9840
    %v10484 = vunpack.c.l.b16 %v9841
    %v10485 = vunpack.c.h.b16 %v9841
    %v10486 = vunpack.c.l.b16 %v9842
    %v10487 = vunpack.c.h.b16 %v9842
    %v10488 = vunpack.c.l.b16 %v9843
    %v10489 = vunpack.c.h.b16 %v9843
    %v10490 = vunpack.c.l.b16 %v9844
    %v10491 = vunpack.c.h.b16 %v9844
    %v10492 = vunpack.c.l.b16 %v9845
    %v10493 = vunpack.c.h.b16 %v9845
    %v10494 = vunpack.c.l.b16 %v9846
    %v10495 = vunpack.c.h.b16 %v9846
    %v10496 = vunpack.c.l.b16 %v9847
    %v10497 = vunpack.c.h.b16 %v9847
    %v10498 = vunpack.c.l.b16 %v9848
    %v10499 = vunpack.c.h.b16 %v9848
    %v10500 = vunpack.c.l.b16 %v9849
    %v10501 = vunpack.c.h.b16 %v9849
    %v10502 = vunpack.c.l.b16 %v9850
    %v10503 = vunpack.c.h.b16 %v9850
    %v10504 = vunpack.c.l.b16 %v9851
    %v10505 = vunpack.c.h.b16 %v9851
    %v10506 = vunpack.c.l.b16 %v9852
    %v10507 = vunpack.c.h.b16 %v9852
    %v10508 = vunpack.c.l.b16 %v9853
    %v10509 = vunpack.c.h.b16 %v9853
    %v10510 = vunpack.c.l.b16 %v9854
    %v10511 = vunpack.c.h.b16 %v9854
    %v10512 = vunpack.c.l.b16 %v9855
    %v10513 = vunpack.c.h.b16 %v9855
    %v10514 = vunpack.c.l.b16 %v9856
    %v10515 = vunpack.c.h.b16 %v9856
    %v10516 = vunpack.c.l.b16 %v9857
    %v10517 = vunpack.c.h.b16 %v9857
    %v10518 = vunpack.c.l.b16 %v9858
    %v10519 = vunpack.c.h.b16 %v9858
    %v10520 = vunpack.c.l.b16 %v9859
    %v10521 = vunpack.c.h.b16 %v9859
    %v10522 = vunpack.c.l.b16 %v9860
    %v10523 = vunpack.c.h.b16 %v9860
    %v10524 = vunpack.c.l.b16 %v9861
    %v10525 = vunpack.c.h.b16 %v9861
    %v10526 = vunpack.c.l.b16 %v9862
    %v10527 = vunpack.c.h.b16 %v9862
    %v10528 = vunpack.c.l.b16 %v9863
    %v10529 = vunpack.c.h.b16 %v9863
    %v10530 = vunpack.c.l.b16 %v9864
    %v10531 = vunpack.c.h.b16 %v9864
    %v10532 = vunpack.c.l.b16 %v9865
    %v10533 = vunpack.c.h.b16 %v9865
    %v10534 = vunpack.c.l.b16 %v9866
    %v10535 = vunpack.c.h.b16 %v9866
    %v10536 = vunpack.c.l.b16 %v9867
    %v10537 = vunpack.c.h.b16 %v9867
    %v10538 = vunpack.c.l.b16 %v9868
    %v10539 = vunpack.c.h.b16 %v9868
    %v10540 = vunpack.c.l.b16 %v9869
    %v10541 = vunpack.c.h.b16 %v9869
    %v10542 = vunpack.c.l.b16 %v9870
    %v10543 = vunpack.c.h.b16 %v9870
    %v10544 = vunpack.c.l.b16 %v9871
    %v10545 = vunpack.c.h.b16 %v9871
    %v10546 = vunpack.c.l.b16 %v9872
    %v10547 = vunpack.c.h.b16 %v9872
    %v10548 = vunpack.c.l.b16 %v9873
    %v10549 = vunpack.c.h.b16 %v9873
    %v10550 = vunpack.c.l.b16 %v9874
    %v10551 = vunpack.c.h.b16 %v9874
    %v10552 = vunpack.c.l.b16 %v9875
    %v10553 = vunpack.c.h.b16 %v9875
    %v10554 = vunpack.c.l.b16 %v9876
    %v10555 = vunpack.c.h.b16 %v9876
    %v10556 = vunpack.c.l.b16 %v9877
    %v10557 = vunpack.c.h.b16 %v9877
    %v10558 = vunpack.c.l.b16 %v9878
    %v10559 = vunpack.c.h.b16 %v9878
    %v10560 = vunpack.c.l.b16 %v9879
    %v10561 = vunpack.c.h.b16 %v9879
    %v10562 = vunpack.c.l.b16 %v9880
    %v10563 = vunpack.c.h.b16 %v9880
    %v10564 = vunpack.c.l.b16 %v9881
    %v10565 = vunpack.c.h.b16 %v9881
    %v10566 = vunpack.c.l.b16 %v9882
    %v10567 = vunpack.c.h.b16 %v9882
    %v10568 = vunpack.c.l.b16 %v9883
    %v10569 = vunpack.c.h.b16 %v9883
    %v10570 = vunpack.c.l.b16 %v9884
    %v10571 = vunpack.c.h.b16 %v9884
    %v10572 = vunpack.c.l.b16 %v9885
    %v10573 = vunpack.c.h.b16 %v9885
    %v10574 = vunpack.c.l.b16 %v9886
    %v10575 = vunpack.c.h.b16 %v9886
    %v10576 = vunpack.c.l.b16 %v9887
    %v10577 = vunpack.c.h.b16 %v9887
    %v10578 = vunpack.c.l.b16 %v9888
    %v10579 = vunpack.c.h.b16 %v9888
    %v10580 = vunpack.c.l.b16 %v9889
    %v10581 = vunpack.c.h.b16 %v9889
    %v10582 = vunpack.c.l.b16 %v9890
    %v10583 = vunpack.c.h.b16 %v9890
    %v10584 = vunpack.c.l.b16 %v9891
    %v10585 = vunpack.c.h.b16 %v9891
    %v10586 = vunpack.c.l.b16 %v9892
    %v10587 = vunpack.c.h.b16 %v9892
    %v10588 = vunpack.c.l.b16 %v9893
    %v10589 = vunpack.c.h.b16 %v9893
    %v10590 = vunpack.c.l.b16 %v9894
    %v10591 = vunpack.c.h.b16 %v9894
    %v10592 = vunpack.c.l.b16 %v9895
    %v10593 = vunpack.c.h.b16 %v9895
    %v10594 = vunpack.c.l.b16 %v9896
    %v10595 = vunpack.c.h.b16 %v9896
    %v10596 = vunpack.c.l.b16 %v9897
    %v10597 = vunpack.c.h.b16 %v9897
    %v10598 = vunpack.c.l.b16 %v9898
    %v10599 = vunpack.c.h.b16 %v9898
    %v10600 = vunpack.c.l.b16 %v9899
    %v10601 = vunpack.c.h.b16 %v9899
    %v10602 = vunpack.c.l.b16 %v9900
    %v10603 = vunpack.c.h.b16 %v9900
    %v10604 = vunpack.c.l.b16 %v9901
    %v10605 = vunpack.c.h.b16 %v9901
    %v10606 = vunpack.c.l.b16 %v9902
    %v10607 = vunpack.c.h.b16 %v9902
    %v10608 = vunpack.c.l.b16 %v9903
    %v10609 = vunpack.c.h.b16 %v9903
    %v10610 = vunpack.c.l.b16 %v9904
    %v10611 = vunpack.c.h.b16 %v9904
    %v10612 = vunpack.c.l.b16 %v9905
    %v10613 = vunpack.c.h.b16 %v9905
    %v10614 = vunpack.c.l.b16 %v9906
    %v10615 = vunpack.c.h.b16 %v9906
    %v10616 = vunpack.c.l.b16 %v9907
    %v10617 = vunpack.c.h.b16 %v9907
    %v10618 = vunpack.c.l.b16 %v9908
    %v10619 = vunpack.c.h.b16 %v9908
    %v10620 = vunpack.c.l.b16 %v9909
    %v10621 = vunpack.c.h.b16 %v9909
    %v10622 = vunpack.c.l.b16 %v9910
    %v10623 = vunpack.c.h.b16 %v9910
    %v10624 = vunpack.c.l.b16 %v9911
    %v10625 = vunpack.c.h.b16 %v9911
    %v10626 = vunpack.c.l.b16 %v9912
    %v10627 = vunpack.c.h.b16 %v9912
    %v10628 = vunpack.c.l.b16 %v9913
    %v10629 = vunpack.c.h.b16 %v9913
    %v10630 = vunpack.c.l.b16 %v9914
    %v10631 = vunpack.c.h.b16 %v9914
    %v10632 = vunpack.c.l.b16 %v9915
    %v10633 = vunpack.c.h.b16 %v9915
    %v10634 = vunpack.c.l.b16 %v9916
    %v10635 = vunpack.c.h.b16 %v9916
    %v10636 = vunpack.c.l.b16 %v9917
    %v10637 = vunpack.c.h.b16 %v9917
    %v10638 = vunpack.c.l.b16 %v9918
    %v10639 = vunpack.c.h.b16 %v9918
    %v10640 = vunpack.c.l.b16 %v9919
    %v10641 = vunpack.c.h.b16 %v9919
    %v10642 = vunpack.c.l.b16 %v9920
    %v10643 = vunpack.c.h.b16 %v9920
    %v10644 = vunpack.c.l.b16 %v9921
    %v10645 = vunpack.c.h.b16 %v9921
    %v10646 = vunpack.c.l.b16 %v9922
    %v10647 = vunpack.c.h.b16 %v9922
    %v10648 = vunpack.c.l.b16 %v9923
    %v10649 = vunpack.c.h.b16 %v9923
    %v10650 = vunpack.c.l.b16 %v9924
    %v10651 = vunpack.c.h.b16 %v9924
    %v10652 = vunpack.c.l.b16 %v9925
    %v10653 = vunpack.c.h.b16 %v9925
    %v10654 = vunpack.c.l.b16 %v9926
    %v10655 = vunpack.c.h.b16 %v9926
    %v10656 = vunpack.c.l.b16 %v9927
    %v10657 = vunpack.c.h.b16 %v9927
    %v10658 = vunpack.c.l.b16 %v9928
    %v10659 = vunpack.c.h.b16 %v9928
    %v10660 = vunpack.c.l.b16 %v9929
    %v10661 = vunpack.c.h.b16 %v9929
    %v10662 = vunpack.c.l.b16 %v9930
    %v10663 = vunpack.c.h.b16 %v9930
    %v10664 = vunpack.c.l.b16 %v9931
    %v10665 = vunpack.c.h.b16 %v9931
    %v10666 = vunpack.c.l.b16 %v9932
    %v10667 = vunpack.c.h.b16 %v9932
    %v10668 = vunpack.c.l.b16 %v9933
    %v10669 = vunpack.c.h.b16 %v9933
    %v10670 = vunpack.c.l.b16 %v9934
    %v10671 = vunpack.c.h.b16 %v9934
    %v10672 = vunpack.c.l.b16 %v9935
    %v10673 = vunpack.c.h.b16 %v9935
    %v10674 = vunpack.c.l.b16 %v9936
    %v10675 = vunpack.c.h.b16 %v9936
    %v10676 = vunpack.c.l.b16 %v9937
    %v10677 = vunpack.c.h.b16 %v9937
    %v10678 = vunpack.c.l.b16 %v9938
    %v10679 = vunpack.c.h.b16 %v9938
    %v10680 = vunpack.c.l.b16 %v9939
    %v10681 = vunpack.c.h.b16 %v9939
    %v10682 = vunpack.c.l.b16 %v9940
    %v10683 = vunpack.c.h.b16 %v9940
    %v10684 = vunpack.c.l.b16 %v9941
    %v10685 = vunpack.c.h.b16 %v9941
    %v10686 = vunpack.c.l.b16 %v9942
    %v10687 = vunpack.c.h.b16 %v9942
    %v10688 = vunpack.c.l.b16 %v9943
    %v10689 = vunpack.c.h.b16 %v9943
    %v10690 = vunpack.c.l.b16 %v9944
    %v10691 = vunpack.c.h.b16 %v9944
    %v10692 = vunpack.c.l.b16 %v9945
    %v10693 = vunpack.c.h.b16 %v9945
    %v10694 = vunpack.c.l.b16 %v9946
    %v10695 = vunpack.c.h.b16 %v9946
    %v10696 = vunpack.c.l.b16 %v9947
    %v10697 = vunpack.c.h.b16 %v9947
    %v10698 = vunpack.c.l.b16 %v9948
    %v10699 = vunpack.c.h.b16 %v9948
    %v10700 = vunpack.c.l.b16 %v9949
    %v10701 = vunpack.c.h.b16 %v9949
    %v10702 = vunpack.c.l.b16 %v9950
    %v10703 = vunpack.c.h.b16 %v9950
    %v10704 = vunpack.c.l.b16 %v9951
    %v10705 = vunpack.c.h.b16 %v9951
    %v10706 = vunpack.c.l.b16 %v9952
    %v10707 = vunpack.c.h.b16 %v9952
    %v10708 = vunpack.c.l.b16 %v9953
    %v10709 = vunpack.c.h.b16 %v9953
    %v10710 = vunpack.c.l.b16 %v9954
    %v10711 = vunpack.c.h.b16 %v9954
    %v10712 = vunpack.c.l.b16 %v9955
    %v10713 = vunpack.c.h.b16 %v9955
    %v10714 = vunpack.c.l.b16 %v9956
    %v10715 = vunpack.c.h.b16 %v9956
    %v10716 = vunpack.c.l.b16 %v9957
    %v10717 = vunpack.c.h.b16 %v9957
    %v10718 = vunpack.c.l.b16 %v9958
    %v10719 = vunpack.c.h.b16 %v9958
    %v10720 = vunpack.c.l.b16 %v9959
    %v10721 = vunpack.c.h.b16 %v9959
    %v10722 = vunpack.c.l.b16 %v9960
    %v10723 = vunpack.c.h.b16 %v9960
    %v10724 = vunpack.c.l.b16 %v9961
    %v10725 = vunpack.c.h.b16 %v9961
    %v10726 = vunpack.c.l.b16 %v9962
    %v10727 = vunpack.c.h.b16 %v9962
    %v10728 = vunpack.c.l.b16 %v9963
    %v10729 = vunpack.c.h.b16 %v9963
    %v10730 = vunpack.c.l.b16 %v9964
    %v10731 = vunpack.c.h.b16 %v9964
    %v10732 = vunpack.c.l.b16 %v9965
    %v10733 = vunpack.c.h.b16 %v9965
    %v10734 = vpack.c.b16 %v10230, %v10222
    %v10735 = vpack.c.b16 %v10231, %v10223
    %v10736 = vpack.c.b16 %v10232, %v10224
    %v10737 = vpack.c.b16 %v10233, %v10225
    %v10738 = vpack.c.b16 %v10234, %v10226
    %v10739 = vpack.c.b16 %v10235, %v10227
    %v10740 = vpack.c.b16 %v10236, %v10228
    %v10741 = vpack.c.b16 %v10237, %v10229
    %v10742 = vpack.c.b16 %v10246, %v10238
    %v10743 = vpack.c.b16 %v10247, %v10239
    %v10744 = vpack.c.b16 %v10248, %v10240
    %v10745 = vpack.c.b16 %v10249, %v10241
    %v10746 = vpack.c.b16 %v10250, %v10242
    %v10747 = vpack.c.b16 %v10251, %v10243
    %v10748 = vpack.c.b16 %v10252, %v10244
    %v10749 = vpack.c.b16 %v10253, %v10245
    %v10750 = vpack.c.b16 %v10262, %v10254
    %v10751 = vpack.c.b16 %v10263, %v10255
    %v10752 = vpack.c.b16 %v10264, %v10256
    %v10753 = vpack.c.b16 %v10265, %v10257
    %v10754 = vpack.c.b16 %v10266, %v10258
    %v10755 = vpack.c.b16 %v10267, %v10259
    %v10756 = vpack.c.b16 %v10268, %v10260
    %v10757 = vpack.c.b16 %v10269, %v10261
    %v10758 = vpack.c.b16 %v10278, %v10270
    %v10759 = vpack.c.b16 %v10279, %v10271
    %v10760 = vpack.c.b16 %v10280, %v10272
    %v10761 = vpack.c.b16 %v10281, %v10273
    %v10762 = vpack.c.b16 %v10282, %v10274
    %v10763 = vpack.c.b16 %v10283, %v10275
    %v10764 = vpack.c.b16 %v10284, %v10276
    %v10765 = vpack.c.b16 %v10285, %v10277
    %v10766 = vpack.c.b16 %v10294, %v10286
    %v10767 = vpack.c.b16 %v10295, %v10287
    %v10768 = vpack.c.b16 %v10296, %v10288
    %v10769 = vpack.c.b16 %v10297, %v10289
    %v10770 = vpack.c.b16 %v10298, %v10290
    %v10771 = vpack.c.b16 %v10299, %v10291
    %v10772 = vpack.c.b16 %v10300, %v10292
    %v10773 = vpack.c.b16 %v10301, %v10293
    %v10774 = vpack.c.b16 %v10310, %v10302
    %v10775 = vpack.c.b16 %v10311, %v10303
    %v10776 = vpack.c.b16 %v10312, %v10304
    %v10777 = vpack.c.b16 %v10313, %v10305
    %v10778 = vpack.c.b16 %v10314, %v10306
    %v10779 = vpack.c.b16 %v10315, %v10307
    %v10780 = vpack.c.b16 %v10316, %v10308
    %v10781 = vpack.c.b16 %v10317, %v10309
    %v10782 = vpack.c.b16 %v10326, %v10318
    %v10783 = vpack.c.b16 %v10327, %v10319
    %v10784 = vpack.c.b16 %v10328, %v10320
    %v10785 = vpack.c.b16 %v10329, %v10321
    %v10786 = vpack.c.b16 %v10330, %v10322
    %v10787 = vpack.c.b16 %v10331, %v10323
    %v10788 = vpack.c.b16 %v10332, %v10324
    %v10789 = vpack.c.b16 %v10333, %v10325
    %v10790 = vpack.c.b16 %v10342, %v10334
    %v10791 = vpack.c.b16 %v10343, %v10335
    %v10792 = vpack.c.b16 %v10344, %v10336
    %v10793 = vpack.c.b16 %v10345, %v10337
    %v10794 = vpack.c.b16 %v10346, %v10338
    %v10795 = vpack.c.b16 %v10347, %v10339
    %v10796 = vpack.c.b16 %v10348, %v10340
    %v10797 = vpack.c.b16 %v10349, %v10341
    %v10798 = vpack.c.b16 %v10358, %v10350
    %v10799 = vpack.c.b16 %v10359, %v10351
    %v10800 = vpack.c.b16 %v10360, %v10352
    %v10801 = vpack.c.b16 %v10361, %v10353
    %v10802 = vpack.c.b16 %v10362, %v10354
    %v10803 = vpack.c.b16 %v10363, %v10355
    %v10804 = vpack.c.b16 %v10364, %v10356
    %v10805 = vpack.c.b16 %v10365, %v10357
    %v10806 = vpack.c.b16 %v10374, %v10366
    %v10807 = vpack.c.b16 %v10375, %v10367
    %v10808 = vpack.c.b16 %v10376, %v10368
    %v10809 = vpack.c.b16 %v10377, %v10369
    %v10810 = vpack.c.b16 %v10378, %v10370
    %v10811 = vpack.c.b16 %v10379, %v10371
    %v10812 = vpack.c.b16 %v10380, %v10372
    %v10813 = vpack.c.b16 %v10381, %v10373
    %v10814 = vpack.c.b16 %v10390, %v10382
    %v10815 = vpack.c.b16 %v10391, %v10383
    %v10816 = vpack.c.b16 %v10392, %v10384
    %v10817 = vpack.c.b16 %v10393, %v10385
    %v10818 = vpack.c.b16 %v10394, %v10386
    %v10819 = vpack.c.b16 %v10395, %v10387
    %v10820 = vpack.c.b16 %v10396, %v10388
    %v10821 = vpack.c.b16 %v10397, %v10389
    %v10822 = vpack.c.b16 %v10406, %v10398
    %v10823 = vpack.c.b16 %v10407, %v10399
    %v10824 = vpack.c.b16 %v10408, %v10400
    %v10825 = vpack.c.b16 %v10409, %v10401
    %v10826 = vpack.c.b16 %v10410, %v10402
    %v10827 = vpack.c.b16 %v10411, %v10403
    %v10828 = vpack.c.b16 %v10412, %v10404
    %v10829 = vpack.c.b16 %v10413, %v10405
    %v10830 = vpack.c.b16 %v10422, %v10414
    %v10831 = vpack.c.b16 %v10423, %v10415
    %v10832 = vpack.c.b16 %v10424, %v10416
    %v10833 = vpack.c.b16 %v10425, %v10417
    %v10834 = vpack.c.b16 %v10426, %v10418
    %v10835 = vpack.c.b16 %v10427, %v10419
    %v10836 = vpack.c.b16 %v10428, %v10420
    %v10837 = vpack.c.b16 %v10429, %v10421
    %v10838 = vpack.c.b16 %v10438, %v10430
    %v10839 = vpack.c.b16 %v10439, %v10431
    %v10840 = vpack.c.b16 %v10440, %v10432
    %v10841 = vpack.c.b16 %v10441, %v10433
    %v10842 = vpack.c.b16 %v10442, %v10434
    %v10843 = vpack.c.b16 %v10443, %v10435
    %v10844 = vpack.c.b16 %v10444, %v10436
    %v10845 = vpack.c.b16 %v10445, %v10437
    %v10846 = vpack.c.b16 %v10454, %v10446
    %v10847 = vpack.c.b16 %v10455, %v10447
    %v10848 = vpack.c.b16 %v10456, %v10448
    %v10849 = vpack.c.b16 %v10457, %v10449
    %v10850 = vpack.c.b16 %v10458, %v10450
    %v10851 = vpack.c.b16 %v10459, %v10451
    %v10852 = vpack.c.b16 %v10460, %v10452
    %v10853 = vpack.c.b16 %v10461, %v10453
    %v10854 = vpack.c.b16 %v10470, %v10462
    %v10855 = vpack.c.b16 %v10471, %v10463
    %v10856 = vpack.c.b16 %v10472, %v10464
    %v10857 = vpack.c.b16 %v10473, %v10465
    %v10858 = vpack.c.b16 %v10474, %v10466
    %v10859 = vpack.c.b16 %v10475, %v10467
    %v10860 = vpack.c.b16 %v10476, %v10468
    %v10861 = vpack.c.b16 %v10477, %v10469
    %v10862 = vpack.c.b16 %v10486, %v10478
    %v10863 = vpack.c.b16 %v10487, %v10479
    %v10864 = vpack.c.b16 %v10488, %v10480
    %v10865 = vpack.c.b16 %v10489, %v10481
    %v10866 = vpack.c.b16 %v10490, %v10482
    %v10867 = vpack.c.b16 %v10491, %v10483
    %v10868 = vpack.c.b16 %v10492, %v10484
    %v10869 = vpack.c.b16 %v10493, %v10485
    %v10870 = vpack.c.b16 %v10502, %v10494
    %v10871 = vpack.c.b16 %v10503, %v10495
    %v10872 = vpack.c.b16 %v10504, %v10496
    %v10873 = vpack.c.b16 %v10505, %v10497
    %v10874 = vpack.c.b16 %v10506, %v10498
    %v10875 = vpack.c.b16 %v10507, %v10499
    %v10876 = vpack.c.b16 %v10508, %v10500
    %v10877 = vpack.c.b16 %v10509, %v10501
    %v10878 = vpack.c.b16 %v10518, %v10510
    %v10879 = vpack.c.b16 %v10519, %v10511
    %v10880 = vpack.c.b16 %v10520, %v10512
    %v10881 = vpack.c.b16 %v10521, %v10513
    %v10882 = vpack.c.b16 %v10522, %v10514
    %v10883 = vpack.c.b16 %v10523, %v10515
    %v10884 = vpack.c.b16 %v10524, %v10516
    %v10885 = vpack.c.b16 %v10525, %v10517
    %v10886 = vpack.c.b16 %v10534, %v10526
    %v10887 = vpack.c.b16 %v10535, %v10527
    %v10888 = vpack.c.b16 %v10536, %v10528
    %v10889 = vpack.c.b16 %v10537, %v10529
    %v10890 = vpack.c.b16 %v10538, %v10530
    %v10891 = vpack.c.b16 %v10539, %v10531
    %v10892 = vpack.c.b16 %v10540, %v10532
    %v10893 = vpack.c.b16 %v10541, %v10533
    %v10894 = vpack.c.b16 %v10550, %v10542
    %v10895 = vpack.c.b16 %v10551, %v10543
    %v10896 = vpack.c.b16 %v10552, %v10544
    %v10897 = vpack.c.b16 %v10553, %v10545
    %v10898 = vpack.c.b16 %v10554, %v10546
    %v10899 = vpack.c.b16 %v10555, %v10547
    %v10900 = vpack.c.b16 %v10556, %v10548
    %v10901 = vpack.c.b16 %v10557, %v10549
    %v10902 = vpack.c.b16 %v10566, %v10558
    %v10903 = vpack.c.b16 %v10567, %v10559
    %v10904 = vpack.c.b16 %v10568, %v10560
    %v10905 = vpack.c.b16 %v10569, %v10561
    %v10906 = vpack.c.b16 %v10570, %v10562
    %v10907 = vpack.c.b16 %v10571, %v10563
    %v10908 = vpack.c.b16 %v10572, %v10564
    %v10909 = vpack.c.b16 %v10573, %v10565
    %v10910 = vpack.c.b16 %v10582, %v10574
    %v10911 = vpack.c.b16 %v10583, %v10575
    %v10912 = vpack.c.b16 %v10584, %v10576
    %v10913 = vpack.c.b16 %v10585, %v10577
    %v10914 = vpack.c.b16 %v10586, %v10578
    %v10915 = vpack.c.b16 %v10587, %v10579
    %v10916 = vpack.c.b16 %v10588, %v10580
    %v10917 = vpack.c.b16 %v10589, %v10581
    %v10918 = vpack.c.b16 %v10598, %v10590
    %v10919 = vpack.c.b16 %v10599, %v10591
    %v10920 = vpack.c.b16 %v10600, %v10592
    %v10921 = vpack.c.b16 %v10601, %v10593
    %v10922 = vpack.c.b16 %v10602, %v10594
    %v10923 = vpack.c.b16 %v10603, %v10595
    %v10924 = vpack.c.b16 %v10604, %v10596
    %v10925 = vpack.c.b16 %v10605, %v10597
    %v10926 = vpack.c.b16 %v10614, %v10606
    %v10927 = vpack.c.b16 %v10615, %v10607
    %v10928 = vpack.c.b16 %v10616, %v10608
    %v10929 = vpack.c.b16 %v10617, %v10609
    %v10930 = vpack.c.b16 %v10618, %v10610
    %v10931 = vpack.c.b16 %v10619, %v10611
    %v10932 = vpack.c.b16 %v10620, %v10612
    %v10933 = vpack.c.b16 %v10621, %v10613
    %v10934 = vpack.c.b16 %v10630, %v10622
    %v10935 = vpack.c.b16 %v10631, %v10623
    %v10936 = vpack.c.b16 %v10632, %v10624
    %v10937 = vpack.c.b16 %v10633, %v10625
    %v10938 = vpack.c.b16 %v10634, %v10626
    %v10939 = vpack.c.b16 %v10635, %v10627
    %v10940 = vpack.c.b16 %v10636, %v10628
    %v10941 = vpack.c.b16 %v10637, %v10629
    %v10942 = vpack.c.b16 %v10646, %v10638
    %v10943 = vpack.c.b16 %v10647, %v10639
    %v10944 = vpack.c.b16 %v10648, %v10640
    %v10945 = vpack.c.b16 %v10649, %v10641
    %v10946 = vpack.c.b16 %v10650, %v10642
    %v10947 = vpack.c.b16 %v10651, %v10643
    %v10948 = vpack.c.b16 %v10652, %v10644
    %v10949 = vpack.c.b16 %v10653, %v10645
    %v10950 = vpack.c.b16 %v10662, %v10654
    %v10951 = vpack.c.b16 %v10663, %v10655
    %v10952 = vpack.c.b16 %v10664, %v10656
    %v10953 = vpack.c.b16 %v10665, %v10657
    %v10954 = vpack.c.b16 %v10666, %v10658
    %v10955 = vpack.c.b16 %v10667, %v10659
    %v10956 = vpack.c.b16 %v10668, %v10660
    %v10957 = vpack.c.b16 %v10669, %v10661
    %v10958 = vpack.c.b16 %v10678, %v10670
    %v10959 = vpack.c.b16 %v10679, %v10671
    %v10960 = vpack.c.b16 %v10680, %v10672
    %v10961 = vpack.c.b16 %v10681, %v10673
    %v10962 = vpack.c.b16 %v10682, %v10674
    %v10963 = vpack.c.b16 %v10683, %v10675
    %v10964 = vpack.c.b16 %v10684, %v10676
    %v10965 = vpack.c.b16 %v10685, %v10677
    %v10966 = vpack.c.b16 %v10694, %v10686
    %v10967 = vpack.c.b16 %v10695, %v10687
    %v10968 = vpack.c.b16 %v10696, %v10688
    %v10969 = vpack.c.b16 %v10697, %v10689
    %v10970 = vpack.c.b16 %v10698, %v10690
    %v10971 = vpack.c.b16 %v10699, %v10691
    %v10972 = vpack.c.b16 %v10700, %v10692
    %v10973 = vpack.c.b16 %v10701, %v10693
    %v10974 = vpack.c.b16 %v10710, %v10702
    %v10975 = vpack.c.b16 %v10711, %v10703
    %v10976 = vpack.c.b16 %v10712, %v10704
    %v10977 = vpack.c.b16 %v10713, %v10705
    %v10978 = vpack.c.b16 %v10714, %v10706
    %v10979 = vpack.c.b16 %v10715, %v10707
    %v10980 = vpack.c.b16 %v10716, %v10708
    %v10981 = vpack.c.b16 %v10717, %v10709
    %v10982 = vpack.c.b16 %v10726, %v10718
    %v10983 = vpack.c.b16 %v10727, %v10719
    %v10984 = vpack.c.b16 %v10728, %v10720
    %v10985 = vpack.c.b16 %v10729, %v10721
    %v10986 = vpack.c.b16 %v10730, %v10722
    %v10987 = vpack.c.b16 %v10731, %v10723
    %v10988 = vpack.c.b16 %v10732, %v10724
    %v10989 = vpack.c.b16 %v10733, %v10725
    %11246 = vmatpush.bf16.msra.mxu0 %v10790
    %11247 = vmatpush.bf16.msra.mxu0 %v10782
    %11248 = vmatpush.bf16.msra.mxu0 %v10774
    %11249 = vmatpush.bf16.msra.mxu0 %v10766
    %11250 = vmatpush.bf16.msra.mxu0 %v10758
    %11251 = vmatpush.bf16.msra.mxu0 %v10750
    %11252 = vmatpush.bf16.msra.mxu0 %v10742
    %11253 = vmatpush.bf16.msra.mxu0 %v10734
    %11254 = vmatmul.bf16.gmra.mxu0 %v9706
    %v11255 = vpop.f32.mrf.mxu0
    %v11256 = vadd.f32 %v4683, %v11255
    %v11257 = vpop.f32.mrf.mxu0
    %11258 = vdwg.mxu0
    %11259 = vmatpush.bf16.msra.mxu0 %v10854
    %11260 = vmatpush.bf16.msra.mxu0 %v10846
    %11261 = vmatpush.bf16.msra.mxu0 %v10838
    %11262 = vmatpush.bf16.msra.mxu0 %v10830
    %11263 = vmatpush.bf16.msra.mxu0 %v10822
    %11264 = vmatpush.bf16.msra.mxu0 %v10814
    %11265 = vmatpush.bf16.msra.mxu0 %v10806
    %11266 = vmatpush.bf16.msra.mxu0 %v10798
    %11267 = vmatmul.bf16.gmra.mxu0 %v9707
    %v11268 = vpop.f32.mrf.mxu0
    %v11269 = vadd.f32 %v11256, %v11268
    %v11270 = vpop.f32.mrf.mxu0
    %11271 = vdwg.mxu0
    %11272 = vmatpush.bf16.msra.mxu0 %v10918
    %11273 = vmatpush.bf16.msra.mxu0 %v10910
    %11274 = vmatpush.bf16.msra.mxu0 %v10902
    %11275 = vmatpush.bf16.msra.mxu0 %v10894
    %11276 = vmatpush.bf16.msra.mxu0 %v10886
    %11277 = vmatpush.bf16.msra.mxu0 %v10878
    %11278 = vmatpush.bf16.msra.mxu0 %v10870
    %11279 = vmatpush.bf16.msra.mxu0 %v10862
    %11280 = vmatmul.bf16.gmra.mxu0 %v9708
    %v11281 = vpop.f32.mrf.mxu0
    %v11282 = vadd.f32 %v11269, %v11281
    %v11283 = vpop.f32.mrf.mxu0
    %11284 = vdwg.mxu0
    %11285 = vmatpush.bf16.msra.mxu0 %v10982
    %11286 = vmatpush.bf16.msra.mxu0 %v10974
    %11287 = vmatpush.bf16.msra.mxu0 %v10966
    %11288 = vmatpush.bf16.msra.mxu0 %v10958
    %11289 = vmatpush.bf16.msra.mxu0 %v10950
    %11290 = vmatpush.bf16.msra.mxu0 %v10942
    %11291 = vmatpush.bf16.msra.mxu0 %v10934
    %11292 = vmatpush.bf16.msra.mxu0 %v10926
    %11293 = vmatmul.bf16.gmra.mxu0 %v9709
    %v11294 = vpop.f32.mrf.mxu0
    %v11295 = vadd.f32 %v11282, %v11294
    %v11296 = vpop.f32.mrf.mxu0
    %11297 = vdwg.mxu0
    %11298 = vmatpush.bf16.msra.mxu0 %v10791
    %11299 = vmatpush.bf16.msra.mxu0 %v10783
    %11300 = vmatpush.bf16.msra.mxu0 %v10775
    %11301 = vmatpush.bf16.msra.mxu0 %v10767
    %11302 = vmatpush.bf16.msra.mxu0 %v10759
    %11303 = vmatpush.bf16.msra.mxu0 %v10751
    %11304 = vmatpush.bf16.msra.mxu0 %v10743
    %11305 = vmatpush.bf16.msra.mxu0 %v10735
    %11306 = vmatmul.bf16.gmra.mxu0 %v9706
    %v11307 = vpop.f32.mrf.mxu0
    %v11308 = vadd.f32 %v4735, %v11307
    %v11309 = vpop.f32.mrf.mxu0
    %11310 = vdwg.mxu0
    %11311 = vmatpush.bf16.msra.mxu0 %v10855
    %11312 = vmatpush.bf16.msra.mxu0 %v10847
    %11313 = vmatpush.bf16.msra.mxu0 %v10839
    %11314 = vmatpush.bf16.msra.mxu0 %v10831
    %11315 = vmatpush.bf16.msra.mxu0 %v10823
    %11316 = vmatpush.bf16.msra.mxu0 %v10815
    %11317 = vmatpush.bf16.msra.mxu0 %v10807
    %11318 = vmatpush.bf16.msra.mxu0 %v10799
    %11319 = vmatmul.bf16.gmra.mxu0 %v9707
    %v11320 = vpop.f32.mrf.mxu0
    %v11321 = vadd.f32 %v11308, %v11320
    %v11322 = vpop.f32.mrf.mxu0
    %11323 = vdwg.mxu0
    %11324 = vmatpush.bf16.msra.mxu0 %v10919
    %11325 = vmatpush.bf16.msra.mxu0 %v10911
    %11326 = vmatpush.bf16.msra.mxu0 %v10903
    %11327 = vmatpush.bf16.msra.mxu0 %v10895
    %11328 = vmatpush.bf16.msra.mxu0 %v10887
    %11329 = vmatpush.bf16.msra.mxu0 %v10879
    %11330 = vmatpush.bf16.msra.mxu0 %v10871
    %11331 = vmatpush.bf16.msra.mxu0 %v10863
    %11332 = vmatmul.bf16.gmra.mxu0 %v9708
    %v11333 = vpop.f32.mrf.mxu0
    %v11334 = vadd.f32 %v11321, %v11333
    %v11335 = vpop.f32.mrf.mxu0
    %11336 = vdwg.mxu0
    %11337 = vmatpush.bf16.msra.mxu0 %v10983
    %11338 = vmatpush.bf16.msra.mxu0 %v10975
    %11339 = vmatpush.bf16.msra.mxu0 %v10967
    %11340 = vmatpush.bf16.msra.mxu0 %v10959
    %11341 = vmatpush.bf16.msra.mxu0 %v10951
    %11342 = vmatpush.bf16.msra.mxu0 %v10943
    %11343 = vmatpush.bf16.msra.mxu0 %v10935
    %11344 = vmatpush.bf16.msra.mxu0 %v10927
    %11345 = vmatmul.bf16.gmra.mxu0 %v9709
    %v11346 = vpop.f32.mrf.mxu0
    %v11347 = vadd.f32 %v11334, %v11346
    %v11348 = vpop.f32.mrf.mxu0
    %11349 = vdwg.mxu0
    %11350 = vmatpush.bf16.msra.mxu0 %v10792
    %11351 = vmatpush.bf16.msra.mxu0 %v10784
    %11352 = vmatpush.bf16.msra.mxu0 %v10776
    %11353 = vmatpush.bf16.msra.mxu0 %v10768
    %11354 = vmatpush.bf16.msra.mxu0 %v10760
    %11355 = vmatpush.bf16.msra.mxu0 %v10752
    %11356 = vmatpush.bf16.msra.mxu0 %v10744
    %11357 = vmatpush.bf16.msra.mxu0 %v10736
    %11358 = vmatmul.bf16.gmra.mxu0 %v9706
    %v11359 = vpop.f32.mrf.mxu0
    %v11360 = vadd.f32 %v4787, %v11359
    %v11361 = vpop.f32.mrf.mxu0
    %11362 = vdwg.mxu0
    %11363 = vmatpush.bf16.msra.mxu0 %v10856
    %11364 = vmatpush.bf16.msra.mxu0 %v10848
    %11365 = vmatpush.bf16.msra.mxu0 %v10840
    %11366 = vmatpush.bf16.msra.mxu0 %v10832
    %11367 = vmatpush.bf16.msra.mxu0 %v10824
    %11368 = vmatpush.bf16.msra.mxu0 %v10816
    %11369 = vmatpush.bf16.msra.mxu0 %v10808
    %11370 = vmatpush.bf16.msra.mxu0 %v10800
    %11371 = vmatmul.bf16.gmra.mxu0 %v9707
    %v11372 = vpop.f32.mrf.mxu0
    %v11373 = vadd.f32 %v11360, %v11372
    %v11374 = vpop.f32.mrf.mxu0
    %11375 = vdwg.mxu0
    %11376 = vmatpush.bf16.msra.mxu0 %v10920
    %11377 = vmatpush.bf16.msra.mxu0 %v10912
    %11378 = vmatpush.bf16.msra.mxu0 %v10904
    %11379 = vmatpush.bf16.msra.mxu0 %v10896
    %11380 = vmatpush.bf16.msra.mxu0 %v10888
    %11381 = vmatpush.bf16.msra.mxu0 %v10880
    %11382 = vmatpush.bf16.msra.mxu0 %v10872
    %11383 = vmatpush.bf16.msra.mxu0 %v10864
    %11384 = vmatmul.bf16.gmra.mxu0 %v9708
    %v11385 = vpop.f32.mrf.mxu0
    %v11386 = vadd.f32 %v11373, %v11385
    %v11387 = vpop.f32.mrf.mxu0
    %11388 = vdwg.mxu0
    %11389 = vmatpush.bf16.msra.mxu0 %v10984
    %11390 = vmatpush.bf16.msra.mxu0 %v10976
    %11391 = vmatpush.bf16.msra.mxu0 %v10968
    %11392 = vmatpush.bf16.msra.mxu0 %v10960
    %11393 = vmatpush.bf16.msra.mxu0 %v10952
    %11394 = vmatpush.bf16.msra.mxu0 %v10944
    %11395 = vmatpush.bf16.msra.mxu0 %v10936
    %11396 = vmatpush.bf16.msra.mxu0 %v10928
    %11397 = vmatmul.bf16.gmra.mxu0 %v9709
    %v11398 = vpop.f32.mrf.mxu0
    %v11399 = vadd.f32 %v11386, %v11398
    %v11400 = vpop.f32.mrf.mxu0
    %11401 = vdwg.mxu0
    %11402 = vmatpush.bf16.msra.mxu0 %v10793
    %11403 = vmatpush.bf16.msra.mxu0 %v10785
    %11404 = vmatpush.bf16.msra.mxu0 %v10777
    %11405 = vmatpush.bf16.msra.mxu0 %v10769
    %11406 = vmatpush.bf16.msra.mxu0 %v10761
    %11407 = vmatpush.bf16.msra.mxu0 %v10753
    %11408 = vmatpush.bf16.msra.mxu0 %v10745
    %11409 = vmatpush.bf16.msra.mxu0 %v10737
    %11410 = vmatmul.bf16.gmra.mxu0 %v9706
    %v11411 = vpop.f32.mrf.mxu0
    %v11412 = vadd.f32 %v4839, %v11411
    %v11413 = vpop.f32.mrf.mxu0
    %11414 = vdwg.mxu0
    %11415 = vmatpush.bf16.msra.mxu0 %v10857
    %11416 = vmatpush.bf16.msra.mxu0 %v10849
    %11417 = vmatpush.bf16.msra.mxu0 %v10841
    %11418 = vmatpush.bf16.msra.mxu0 %v10833
    %11419 = vmatpush.bf16.msra.mxu0 %v10825
    %11420 = vmatpush.bf16.msra.mxu0 %v10817
    %11421 = vmatpush.bf16.msra.mxu0 %v10809
    %11422 = vmatpush.bf16.msra.mxu0 %v10801
    %11423 = vmatmul.bf16.gmra.mxu0 %v9707
    %v11424 = vpop.f32.mrf.mxu0
    %v11425 = vadd.f32 %v11412, %v11424
    %v11426 = vpop.f32.mrf.mxu0
    %11427 = vdwg.mxu0
    %11428 = vmatpush.bf16.msra.mxu0 %v10921
    %11429 = vmatpush.bf16.msra.mxu0 %v10913
    %11430 = vmatpush.bf16.msra.mxu0 %v10905
    %11431 = vmatpush.bf16.msra.mxu0 %v10897
    %11432 = vmatpush.bf16.msra.mxu0 %v10889
    %11433 = vmatpush.bf16.msra.mxu0 %v10881
    %11434 = vmatpush.bf16.msra.mxu0 %v10873
    %11435 = vmatpush.bf16.msra.mxu0 %v10865
    %11436 = vmatmul.bf16.gmra.mxu0 %v9708
    %v11437 = vpop.f32.mrf.mxu0
    %v11438 = vadd.f32 %v11425, %v11437
    %v11439 = vpop.f32.mrf.mxu0
    %11440 = vdwg.mxu0
    %11441 = vmatpush.bf16.msra.mxu0 %v10985
    %11442 = vmatpush.bf16.msra.mxu0 %v10977
    %11443 = vmatpush.bf16.msra.mxu0 %v10969
    %11444 = vmatpush.bf16.msra.mxu0 %v10961
    %11445 = vmatpush.bf16.msra.mxu0 %v10953
    %11446 = vmatpush.bf16.msra.mxu0 %v10945
    %11447 = vmatpush.bf16.msra.mxu0 %v10937
    %11448 = vmatpush.bf16.msra.mxu0 %v10929
    %11449 = vmatmul.bf16.gmra.mxu0 %v9709
    %v11450 = vpop.f32.mrf.mxu0
    %v11451 = vadd.f32 %v11438, %v11450
    %v11452 = vpop.f32.mrf.mxu0
    %11453 = vdwg.mxu0
    %11454 = vmatpush.bf16.msra.mxu0 %v10794
    %11455 = vmatpush.bf16.msra.mxu0 %v10786
    %11456 = vmatpush.bf16.msra.mxu0 %v10778
    %11457 = vmatpush.bf16.msra.mxu0 %v10770
    %11458 = vmatpush.bf16.msra.mxu0 %v10762
    %11459 = vmatpush.bf16.msra.mxu0 %v10754
    %11460 = vmatpush.bf16.msra.mxu0 %v10746
    %11461 = vmatpush.bf16.msra.mxu0 %v10738
    %11462 = vmatmul.bf16.gmra.mxu0 %v9706
    %v11463 = vpop.f32.mrf.mxu0
    %v11464 = vadd.f32 %v4891, %v11463
    %v11465 = vpop.f32.mrf.mxu0
    %11466 = vdwg.mxu0
    %11467 = vmatpush.bf16.msra.mxu0 %v10858
    %11468 = vmatpush.bf16.msra.mxu0 %v10850
    %11469 = vmatpush.bf16.msra.mxu0 %v10842
    %11470 = vmatpush.bf16.msra.mxu0 %v10834
    %11471 = vmatpush.bf16.msra.mxu0 %v10826
    %11472 = vmatpush.bf16.msra.mxu0 %v10818
    %11473 = vmatpush.bf16.msra.mxu0 %v10810
    %11474 = vmatpush.bf16.msra.mxu0 %v10802
    %11475 = vmatmul.bf16.gmra.mxu0 %v9707
    %v11476 = vpop.f32.mrf.mxu0
    %v11477 = vadd.f32 %v11464, %v11476
    %v11478 = vpop.f32.mrf.mxu0
    %11479 = vdwg.mxu0
    %11480 = vmatpush.bf16.msra.mxu0 %v10922
    %11481 = vmatpush.bf16.msra.mxu0 %v10914
    %11482 = vmatpush.bf16.msra.mxu0 %v10906
    %11483 = vmatpush.bf16.msra.mxu0 %v10898
    %11484 = vmatpush.bf16.msra.mxu0 %v10890
    %11485 = vmatpush.bf16.msra.mxu0 %v10882
    %11486 = vmatpush.bf16.msra.mxu0 %v10874
    %11487 = vmatpush.bf16.msra.mxu0 %v10866
    %11488 = vmatmul.bf16.gmra.mxu0 %v9708
    %v11489 = vpop.f32.mrf.mxu0
    %v11490 = vadd.f32 %v11477, %v11489
    %v11491 = vpop.f32.mrf.mxu0
    %11492 = vdwg.mxu0
    %11493 = vmatpush.bf16.msra.mxu0 %v10986
    %11494 = vmatpush.bf16.msra.mxu0 %v10978
    %11495 = vmatpush.bf16.msra.mxu0 %v10970
    %11496 = vmatpush.bf16.msra.mxu0 %v10962
    %11497 = vmatpush.bf16.msra.mxu0 %v10954
    %11498 = vmatpush.bf16.msra.mxu0 %v10946
    %11499 = vmatpush.bf16.msra.mxu0 %v10938
    %11500 = vmatpush.bf16.msra.mxu0 %v10930
    %11501 = vmatmul.bf16.gmra.mxu0 %v9709
    %v11502 = vpop.f32.mrf.mxu0
    %v11503 = vadd.f32 %v11490, %v11502
    %v11504 = vpop.f32.mrf.mxu0
    %11505 = vdwg.mxu0
    %11506 = vmatpush.bf16.msra.mxu0 %v10795
    %11507 = vmatpush.bf16.msra.mxu0 %v10787
    %11508 = vmatpush.bf16.msra.mxu0 %v10779
    %11509 = vmatpush.bf16.msra.mxu0 %v10771
    %11510 = vmatpush.bf16.msra.mxu0 %v10763
    %11511 = vmatpush.bf16.msra.mxu0 %v10755
    %11512 = vmatpush.bf16.msra.mxu0 %v10747
    %11513 = vmatpush.bf16.msra.mxu0 %v10739
    %11514 = vmatmul.bf16.gmra.mxu0 %v9706
    %v11515 = vpop.f32.mrf.mxu0
    %v11516 = vadd.f32 %v4943, %v11515
    %v11517 = vpop.f32.mrf.mxu0
    %11518 = vdwg.mxu0
    %11519 = vmatpush.bf16.msra.mxu0 %v10859
    %11520 = vmatpush.bf16.msra.mxu0 %v10851
    %11521 = vmatpush.bf16.msra.mxu0 %v10843
    %11522 = vmatpush.bf16.msra.mxu0 %v10835
    %11523 = vmatpush.bf16.msra.mxu0 %v10827
    %11524 = vmatpush.bf16.msra.mxu0 %v10819
    %11525 = vmatpush.bf16.msra.mxu0 %v10811
    %11526 = vmatpush.bf16.msra.mxu0 %v10803
    %11527 = vmatmul.bf16.gmra.mxu0 %v9707
    %v11528 = vpop.f32.mrf.mxu0
    %v11529 = vadd.f32 %v11516, %v11528
    %v11530 = vpop.f32.mrf.mxu0
    %11531 = vdwg.mxu0
    %11532 = vmatpush.bf16.msra.mxu0 %v10923
    %11533 = vmatpush.bf16.msra.mxu0 %v10915
    %11534 = vmatpush.bf16.msra.mxu0 %v10907
    %11535 = vmatpush.bf16.msra.mxu0 %v10899
    %11536 = vmatpush.bf16.msra.mxu0 %v10891
    %11537 = vmatpush.bf16.msra.mxu0 %v10883
    %11538 = vmatpush.bf16.msra.mxu0 %v10875
    %11539 = vmatpush.bf16.msra.mxu0 %v10867
    %11540 = vmatmul.bf16.gmra.mxu0 %v9708
    %v11541 = vpop.f32.mrf.mxu0
    %v11542 = vadd.f32 %v11529, %v11541
    %v11543 = vpop.f32.mrf.mxu0
    %11544 = vdwg.mxu0
    %11545 = vmatpush.bf16.msra.mxu0 %v10987
    %11546 = vmatpush.bf16.msra.mxu0 %v10979
    %11547 = vmatpush.bf16.msra.mxu0 %v10971
    %11548 = vmatpush.bf16.msra.mxu0 %v10963
    %11549 = vmatpush.bf16.msra.mxu0 %v10955
    %11550 = vmatpush.bf16.msra.mxu0 %v10947
    %11551 = vmatpush.bf16.msra.mxu0 %v10939
    %11552 = vmatpush.bf16.msra.mxu0 %v10931
    %11553 = vmatmul.bf16.gmra.mxu0 %v9709
    %v11554 = vpop.f32.mrf.mxu0
    %v11555 = vadd.f32 %v11542, %v11554
    %v11556 = vpop.f32.mrf.mxu0
    %11557 = vdwg.mxu0
    %11558 = vmatpush.bf16.msra.mxu0 %v10796
    %11559 = vmatpush.bf16.msra.mxu0 %v10788
    %11560 = vmatpush.bf16.msra.mxu0 %v10780
    %11561 = vmatpush.bf16.msra.mxu0 %v10772
    %11562 = vmatpush.bf16.msra.mxu0 %v10764
    %11563 = vmatpush.bf16.msra.mxu0 %v10756
    %11564 = vmatpush.bf16.msra.mxu0 %v10748
    %11565 = vmatpush.bf16.msra.mxu0 %v10740
    %11566 = vmatmul.bf16.gmra.mxu0 %v9706
    %v11567 = vpop.f32.mrf.mxu0
    %v11568 = vadd.f32 %v4995, %v11567
    %v11569 = vpop.f32.mrf.mxu0
    %11570 = vdwg.mxu0
    %11571 = vmatpush.bf16.msra.mxu0 %v10860
    %11572 = vmatpush.bf16.msra.mxu0 %v10852
    %11573 = vmatpush.bf16.msra.mxu0 %v10844
    %11574 = vmatpush.bf16.msra.mxu0 %v10836
    %11575 = vmatpush.bf16.msra.mxu0 %v10828
    %11576 = vmatpush.bf16.msra.mxu0 %v10820
    %11577 = vmatpush.bf16.msra.mxu0 %v10812
    %11578 = vmatpush.bf16.msra.mxu0 %v10804
    %11579 = vmatmul.bf16.gmra.mxu0 %v9707
    %v11580 = vpop.f32.mrf.mxu0
    %v11581 = vadd.f32 %v11568, %v11580
    %v11582 = vpop.f32.mrf.mxu0
    %11583 = vdwg.mxu0
    %11584 = vmatpush.bf16.msra.mxu0 %v10924
    %11585 = vmatpush.bf16.msra.mxu0 %v10916
    %11586 = vmatpush.bf16.msra.mxu0 %v10908
    %11587 = vmatpush.bf16.msra.mxu0 %v10900
    %11588 = vmatpush.bf16.msra.mxu0 %v10892
    %11589 = vmatpush.bf16.msra.mxu0 %v10884
    %11590 = vmatpush.bf16.msra.mxu0 %v10876
    %11591 = vmatpush.bf16.msra.mxu0 %v10868
    %11592 = vmatmul.bf16.gmra.mxu0 %v9708
    %v11593 = vpop.f32.mrf.mxu0
    %v11594 = vadd.f32 %v11581, %v11593
    %v11595 = vpop.f32.mrf.mxu0
    %11596 = vdwg.mxu0
    %11597 = vmatpush.bf16.msra.mxu0 %v10988
    %11598 = vmatpush.bf16.msra.mxu0 %v10980
    %11599 = vmatpush.bf16.msra.mxu0 %v10972
    %11600 = vmatpush.bf16.msra.mxu0 %v10964
    %11601 = vmatpush.bf16.msra.mxu0 %v10956
    %11602 = vmatpush.bf16.msra.mxu0 %v10948
    %11603 = vmatpush.bf16.msra.mxu0 %v10940
    %11604 = vmatpush.bf16.msra.mxu0 %v10932
    %11605 = vmatmul.bf16.gmra.mxu0 %v9709
    %v11606 = vpop.f32.mrf.mxu0
    %v11607 = vadd.f32 %v11594, %v11606
    %v11608 = vpop.f32.mrf.mxu0
    %11609 = vdwg.mxu0
    %11610 = vmatpush.bf16.msra.mxu0 %v10797
    %11611 = vmatpush.bf16.msra.mxu0 %v10789
    %11612 = vmatpush.bf16.msra.mxu0 %v10781
    %11613 = vmatpush.bf16.msra.mxu0 %v10773
    %11614 = vmatpush.bf16.msra.mxu0 %v10765
    %11615 = vmatpush.bf16.msra.mxu0 %v10757
    %11616 = vmatpush.bf16.msra.mxu0 %v10749
    %11617 = vmatpush.bf16.msra.mxu0 %v10741
    %11618 = vmatmul.bf16.gmra.mxu0 %v9706
    %v11619 = vpop.f32.mrf.mxu0
    %v11620 = vadd.f32 %v5047, %v11619
    %v11621 = vpop.f32.mrf.mxu0
    %11622 = vdwg.mxu0
    %11623 = vmatpush.bf16.msra.mxu0 %v10861
    %11624 = vmatpush.bf16.msra.mxu0 %v10853
    %11625 = vmatpush.bf16.msra.mxu0 %v10845
    %11626 = vmatpush.bf16.msra.mxu0 %v10837
    %11627 = vmatpush.bf16.msra.mxu0 %v10829
    %11628 = vmatpush.bf16.msra.mxu0 %v10821
    %11629 = vmatpush.bf16.msra.mxu0 %v10813
    %11630 = vmatpush.bf16.msra.mxu0 %v10805
    %11631 = vmatmul.bf16.gmra.mxu0 %v9707
    %v11632 = vpop.f32.mrf.mxu0
    %v11633 = vadd.f32 %v11620, %v11632
    %v11634 = vpop.f32.mrf.mxu0
    %11635 = vdwg.mxu0
    %11636 = vmatpush.bf16.msra.mxu0 %v10925
    %11637 = vmatpush.bf16.msra.mxu0 %v10917
    %11638 = vmatpush.bf16.msra.mxu0 %v10909
    %11639 = vmatpush.bf16.msra.mxu0 %v10901
    %11640 = vmatpush.bf16.msra.mxu0 %v10893
    %11641 = vmatpush.bf16.msra.mxu0 %v10885
    %11642 = vmatpush.bf16.msra.mxu0 %v10877
    %11643 = vmatpush.bf16.msra.mxu0 %v10869
    %11644 = vmatmul.bf16.gmra.mxu0 %v9708
    %v11645 = vpop.f32.mrf.mxu0
    %v11646 = vadd.f32 %v11633, %v11645
    %v11647 = vpop.f32.mrf.mxu0
    %11648 = vdwg.mxu0
    %11649 = vmatpush.bf16.msra.mxu0 %v10989
    %11650 = vmatpush.bf16.msra.mxu0 %v10981
    %11651 = vmatpush.bf16.msra.mxu0 %v10973
    %11652 = vmatpush.bf16.msra.mxu0 %v10965
    %11653 = vmatpush.bf16.msra.mxu0 %v10957
    %11654 = vmatpush.bf16.msra.mxu0 %v10949
    %11655 = vmatpush.bf16.msra.mxu0 %v10941
    %11656 = vmatpush.bf16.msra.mxu0 %v10933
    %11657 = vmatmul.bf16.gmra.mxu0 %v9709
    %v11658 = vpop.f32.mrf.mxu0
    %v11659 = vadd.f32 %v11646, %v11658
    %v11660 = vpop.f32.mrf.mxu0
    %11661 = vdwg.mxu0
    %v11662 = vld [vmem:[#allocation13] sm:$0xff]
    %v11664 = vperm.slane %v11662, 0
    %v11665 = vperm.slane %v11662, 1
    %v11666 = vperm.slane %v11662, 2
    %v11667 = vperm.slane %v11662, 3
    %v11668 = vperm.slane %v11662, 4
    %v11669 = vperm.slane %v11662, 5
    %v11670 = vperm.slane %v11662, 6
    %v11671 = vperm.slane %v11662, 7
    %v11680 = vadd.f32 %v11295, %v11664
    %v11681 = vadd.f32 %v11347, %v11665
    %v11682 = vadd.f32 %v11399, %v11666
    %v11683 = vadd.f32 %v11451, %v11667
    %v11684 = vadd.f32 %v11503, %v11668
    %v11685 = vadd.f32 %v11555, %v11669
    %v11686 = vadd.f32 %v11607, %v11670
    %v11687 = vadd.f32 %v11659, %v11671
    %11688 = vst [vmem:[%s10] sm:$0xff] %v11680
    %11689 = vst [vmem:[%s10 + $0x8] sm:$0xff] %v11681
    %11690 = vst [vmem:[%s10 + $0x10] sm:$0xff] %v11682
    %11691 = vst [vmem:[%s10 + $0x18] sm:$0xff] %v11683
    %11692 = vst [vmem:[%s10 + $0x20] sm:$0xff] %v11684
    %11693 = vst [vmem:[%s10 + $0x28] sm:$0xff] %v11685
    %11694 = vst [vmem:[%s10 + $0x30] sm:$0xff] %v11686
    %11695 = vst [vmem:[%s10 + $0x38] sm:$0xff] %v11687
    // Predicated region
    $region74: #{decoder_forward.1} parent=1 // pred_check
      _
    $region75: #{decoder_forward.1} parent=1 // pred_check_branch
      %11697 = sbr.rel (0) target = $region77
    $region76: #{decoder_forward.1} parent=1 // pred_region
      _
    $region77: #{decoder_forward.1} parent=1 // pred_fallthru
      _
    // Predicated region
    $region78: #{decoder_forward.1} parent=1 // pred_check
      _
    $region79: #{decoder_forward.1} parent=1 // pred_check_branch
      %11699 = sbr.rel (0) target = $region81
    $region80: #{decoder_forward.1} parent=1 // pred_region
      _
    $region81: #{decoder_forward.1} parent=1 // pred_fallthru
      _
    // Predicated region
    $region82: #{decoder_forward.1} parent=1 // pred_check
      _
    $region83: #{decoder_forward.1} parent=1 // pred_check_branch
      %11701 = sbr.rel (0) target = $region85
    $region84: #{decoder_forward.1} parent=1 // pred_region
      _
    $region85: #{decoder_forward.1} parent=1 // pred_fallthru
      _
    // Predicated region
    $region86: #{decoder_forward.1} parent=1 // pred_check
      _
    $region87: #{decoder_forward.1} parent=1 // pred_check_branch
      %11703 = sbr.rel (0) target = $region89
    $region88: #{decoder_forward.1} parent=1 // pred_region
      _
    $region89: #{decoder_forward.1} parent=1 // pred_fallthru
      _
    %11704 = vsyncpa [#allocation3], 1
    %11705 = vsyncpa [#allocation5], 1
    %11706 = vsyncpa [#allocation8], 1
    %11707 = vsyncpa [#allocation11], 1
    %11708 = vsyncpa [#allocation14], 1

</llo_original>
